<compile_context>
chip_gen: v7x
topology: tpu7x:2x2x1
jax: 0.10.0
libtpu: 0.0.40
codegen_flags: <defaults>
</compile_context>

<pallas_src>
import math
import functools

import jax
import jax.numpy as jnp
from jax.experimental import pallas as pl
from jax.experimental.pallas import tpu as pltpu


# ----------------------------------------------------------------------------
# Fully fused Middle_block kernel (grid = (1,), everything resident in VMEM)
# ----------------------------------------------------------------------------
def _middle_block_kernel(
    # --- inputs -------------------------------------------------------------
    x_ref, t_ref,
    # res1 params
    g1a_ref, be1a_ref, w1a_ref, b1a_ref, wta_ref, bta_ref,
    g2a_ref, be2a_ref, w2a_ref, b2a_ref,
    # attention params
    wqkv_ref, bqkv_ref, wo_ref, bo_ref,
    # res2 params
    g1b_ref, be1b_ref, w1b_ref, b1b_ref, wtb_ref, btb_ref,
    g2b_ref, be2b_ref, w2b_ref, b2b_ref,
    # --- outputs ------------------------------------------------------------
    o_ref,
    # --- scratch ------------------------------------------------------------
    pad_ref,
    *, B, H, W, C, eps, scale):
  S = H * W

  # ---------------- helpers -------------------------------------------------
  def gn_silu(h4, g_ref, b_ref):
    # GroupNorm(32, C) with C == 32 -> per-(batch, channel) stats over (H, W)
    # (biased variance, PyTorch eps), followed by SiLU.
    h3 = h4.reshape(B, S, C)
    mean = jnp.mean(h3, axis=1, keepdims=True)
    var = jnp.mean(jnp.square(h3 - mean), axis=1, keepdims=True)
    y = (h3 - mean) * jax.lax.rsqrt(var + eps) * g_ref[0] + b_ref[0]
    y = y * jax.nn.sigmoid(y)                       # SiLU
    return y.reshape(B, H, W, C)

  def conv3x3(h4, w_ref, b_ref):
    # 3x3 / stride 1 / pad 1 conv as a single im2col matmul.
    # Halo handled in-kernel: only the interior of the zero-initialised VMEM
    # scratch is written, so the border stays zero.
    pad_ref[:, 1:H + 1, 1:W + 1, :] = h4
    taps = [pad_ref[:, dy:dy + H, dx:dx + W, :]
            for dy in range(3) for dx in range(3)]
    col = jnp.concatenate(taps, axis=-1).reshape(B * S, 9 * C)   # (128, 288)
    y = jnp.dot(col, w_ref[...], preferred_element_type=jnp.float32) + b_ref[0]
    return y.reshape(B, H, W, C)

  def res_block(x4, temb, g1, be1, w1, b1, g2, be2, w2, b2):
    h = gn_silu(x4, g1, be1)                          # act1(norm1(input))
    h = conv3x3(h, w1, b1) + temb[:, None, None, :]   # conv1 + time_emb(t)
    h = gn_silu(h, g2, be2)                           # act1(norm2(dropout=id))
    return conv3x3(h, w2, b2) + x4                    # conv2 + identity shortcut

  def attention(h4):
    xs = h4.reshape(B * S, C)                         # == view(b,c,-1).transpose(2,1)
    # fused QKV projection: one (B*S, C) @ (C, 3C) matmul
    qkv = (jnp.dot(xs, wqkv_ref[...], preferred_element_type=jnp.float32)
           + bqkv_ref[0])                             # (B*S, 3C)
    q = qkv[:, 0 * C:1 * C].reshape(B, S, C)
    k = qkv[:, 1 * C:2 * C].reshape(B, S, C)
    v = qkv[:, 2 * C:3 * C].reshape(B, S, C)

    s = jnp.einsum("bqc,bkc->bqk", q, k,
                   preferred_element_type=jnp.float32) * scale    # (B, S, S)
    row = jax.lax.broadcasted_iota(jnp.int32, (S, S), 0)
    col = jax.lax.broadcasted_iota(jnp.int32, (S, S), 1)
    s = jnp.where((col <= row)[None, :, :], s, -jnp.inf)          # causal mask

    m = jnp.max(s, axis=-1, keepdims=True)
    p = jnp.exp(s - m)
    p = p * pl.reciprocal(jnp.sum(p, axis=-1, keepdims=True), approx=True)

    attn = jnp.einsum("bqk,bkc->bqc", p, v,
                      preferred_element_type=jnp.float32).reshape(B * S, C)
    proj = (jnp.dot(attn, wo_ref[...], preferred_element_type=jnp.float32)
            + bo_ref[0])
    return (xs + proj).reshape(B, H, W, C)            # residual: x + res

  # ---------------- body ----------------------------------------------------
  pad_ref[...] = jnp.zeros(pad_ref.shape, pad_ref.dtype)   # zero halo once

  x4 = x_ref[...].astype(jnp.float32)
  tv = t_ref[...].astype(jnp.float32)
  # time-embedding linears folded into the fused kernel
  temb1 = (jnp.dot(tv, wta_ref[...], preferred_element_type=jnp.float32)
           + bta_ref[0])                              # (B, C)
  temb2 = (jnp.dot(tv, wtb_ref[...], preferred_element_type=jnp.float32)
           + btb_ref[0])

  h = res_block(x4, temb1, g1a_ref, be1a_ref, w1a_ref, b1a_ref,
                g2a_ref, be2a_ref, w2a_ref, b2a_ref)
  h = attention(h)
  h = res_block(h, temb2, g1b_ref, be1b_ref, w1b_ref, b1b_ref,
                g2b_ref, be2b_ref, w2b_ref, b2b_ref)

  o_ref[...] = h.astype(o_ref.dtype)


def _full_spec(shape):
  n = len(shape)
  return pl.BlockSpec(shape, lambda *_, n=n: (0,) * n)


# ----------------------------------------------------------------------------
# Public wrapper: NCHW in/out (PyTorch convention), NHWC inside the kernel
# ----------------------------------------------------------------------------
def middle_block(x_nchw, t, params):
  """x_nchw: (B, C, H, W) f32, t: (B, T) f32 -> (B, C, H, W) f32."""
  B, C, H, W = x_nchw.shape
  # GroupNorm(32, C): in-kernel stats assume group size 1.
  assert C == 32  # TODO(synk): generalize GroupNorm to C > 32 (group size > 1)

  x = jnp.transpose(x_nchw, (0, 2, 3, 1))             # NCHW -> NHWC

  def cw(w):   # (3,3,Cin,Cout) HWIO -> (9*Cin, Cout); matches im2col tap order
    kh, kw, ci, co = w.shape
    return w.reshape(kh * kw * ci, co)

  def rv(v):   # (N,) -> (1, N)
    return v.reshape(1, -1)

  r1, at, r2 = params["res1"], params["attn"], params["res2"]
  operands = [
      x, t,
      rv(r1["gn1_g"]), rv(r1["gn1_b"]), cw(r1["w1"]), rv(r1["b1"]),
      r1["wt"], rv(r1["bt"]),
      rv(r1["gn2_g"]), rv(r1["gn2_b"]), cw(r1["w2"]), rv(r1["b2"]),
      at["wqkv"], rv(at["bqkv"]), at["wo"], rv(at["bo"]),
      rv(r2["gn1_g"]), rv(r2["gn1_b"]), cw(r2["w1"]), rv(r2["b1"]),
      r2["wt"], rv(r2["bt"]),
      rv(r2["gn2_g"]), rv(r2["gn2_b"]), cw(r2["w2"]), rv(r2["b2"]),
  ]

  out_nhwc = pl.pallas_call(
      functools.partial(_middle_block_kernel, B=B, H=H, W=W, C=C,
                        eps=1e-5, scale=1.0 / math.sqrt(C)),
      out_shape=jax.ShapeDtypeStruct((B, H, W, C), x.dtype),
      grid=(1,),
      in_specs=[_full_spec(a.shape) for a in operands],
      out_specs=_full_spec((B, H, W, C)),
      scratch_shapes=[pltpu.VMEM((B, H + 2, W + 2, C), jnp.float32)],
      compiler_params=pltpu.CompilerParams(
          dimension_semantics=("arbitrary",)),
  )(*operands)

  return jnp.transpose(out_nhwc, (0, 3, 1, 2))        # NHWC -> NCHW


# ----------------------------------------------------------------------------
# Deterministic synthetic parameters
# ----------------------------------------------------------------------------
def _init_res_params(key, C, T, s=0.05):
  ks = jax.random.split(key, 6)
  f32 = jnp.float32
  return dict(
      gn1_g=jnp.ones((C,), f32), gn1_b=jnp.zeros((C,), f32),
      w1=jax.random.normal(ks[0], (3, 3, C, C), f32) * s,
      b1=jax.random.normal(ks[1], (C,), f32) * s,
      wt=jax.random.normal(ks[2], (T, C), f32) * s,
      bt=jax.random.normal(ks[3], (C,), f32) * s,
      gn2_g=jnp.ones((C,), f32), gn2_b=jnp.zeros((C,), f32),
      w2=jax.random.normal(ks[4], (3, 3, C, C), f32) * s,
      b2=jax.random.normal(ks[5], (C,), f32) * s,
  )


def _init_attn_params(key, C, s=0.05):
  ks = jax.random.split(key, 4)
  f32 = jnp.float32
  return dict(
      wqkv=jax.random.normal(ks[0], (C, 3 * C), f32) * s,
      bqkv=jax.random.normal(ks[1], (3 * C,), f32) * s,
      wo=jax.random.normal(ks[2], (C, C), f32) * s,
      bo=jax.random.normal(ks[3], (C,), f32) * s,
  )


def init_params(key, C, T):
  k1, k2, k3 = jax.random.split(key, 3)
  return dict(res1=_init_res_params(k1, C, T),
              attn=_init_attn_params(k2, C),
              res2=_init_res_params(k3, C, T))


if __name__ == "__main__":
  B, C, H, W, T = 2, 32, 8, 8, 16          # C=32 so GroupNorm(32, C) is valid
  key = jax.random.PRNGKey(0)
  kx, kt, kp = jax.random.split(key, 3)
  x = jax.random.normal(kx, (B, C, H, W), jnp.float32)   # NCHW, like PyTorch
  t = jax.random.normal(kt, (B, T), jnp.float32)
  params = init_params(kp, C, T)

  out = jax.jit(middle_block)(x, t, params)
  jax.block_until_ready(out)
  assert out.shape == (B, C, H, W) and out.dtype == jnp.float32
  assert bool(jnp.all(jnp.isfinite(out)))
  print("KERNEL_OK")
</pallas_src>

<mosaic_0001>
module attributes {stable_mosaic.version = 11 : i64} {
  func.func @_middle_block_kernel(%arg0: i32, %arg1: memref<2x8x8x32xf32, #tpu.memory_space<vmem>>, %arg2: memref<2x16xf32, #tpu.memory_space<vmem>>, %arg3: memref<1x32xf32, #tpu.memory_space<vmem>>, %arg4: memref<1x32xf32, #tpu.memory_space<vmem>>, %arg5: memref<288x32xf32, #tpu.memory_space<vmem>>, %arg6: memref<1x32xf32, #tpu.memory_space<vmem>>, %arg7: memref<16x32xf32, #tpu.memory_space<vmem>>, %arg8: memref<1x32xf32, #tpu.memory_space<vmem>>, %arg9: memref<1x32xf32, #tpu.memory_space<vmem>>, %arg10: memref<1x32xf32, #tpu.memory_space<vmem>>, %arg11: memref<288x32xf32, #tpu.memory_space<vmem>>, %arg12: memref<1x32xf32, #tpu.memory_space<vmem>>, %arg13: memref<32x96xf32, #tpu.memory_space<vmem>>, %arg14: memref<1x96xf32, #tpu.memory_space<vmem>>, %arg15: memref<32x32xf32, #tpu.memory_space<vmem>>, %arg16: memref<1x32xf32, #tpu.memory_space<vmem>>, %arg17: memref<1x32xf32, #tpu.memory_space<vmem>>, %arg18: memref<1x32xf32, #tpu.memory_space<vmem>>, %arg19: memref<288x32xf32, #tpu.memory_space<vmem>>, %arg20: memref<1x32xf32, #tpu.memory_space<vmem>>, %arg21: memref<16x32xf32, #tpu.memory_space<vmem>>, %arg22: memref<1x32xf32, #tpu.memory_space<vmem>>, %arg23: memref<1x32xf32, #tpu.memory_space<vmem>>, %arg24: memref<1x32xf32, #tpu.memory_space<vmem>>, %arg25: memref<288x32xf32, #tpu.memory_space<vmem>>, %arg26: memref<1x32xf32, #tpu.memory_space<vmem>>, %arg27: memref<2x8x8x32xf32, #tpu.memory_space<vmem>>, %arg28: memref<2x10x10x32xf32, #tpu.memory_space<vmem>>) attributes {dimension_semantics = [#tpu.dimension_semantics<arbitrary>], iteration_bounds = array<i64: 1>, scalar_prefetch = 0 : i64, scratch_operands = 1 : i64, tpu.core_type = #tpu.core_type<tc>, window_params = [{pipeline_mode = #tpu.pipeline_mode<synchronous>, transform_indices = @transform_0, window_bounds = array<i64: 2, 8, 8, 32>}, {pipeline_mode = #tpu.pipeline_mode<synchronous>, transform_indices = @transform_1, window_bounds = array<i64: 2, 16>}, {pipeline_mode = #tpu.pipeline_mode<synchronous>, transform_indices = @transform_2, window_bounds = array<i64: 1, 32>}, {pipeline_mode = #tpu.pipeline_mode<synchronous>, transform_indices = @transform_3, window_bounds = array<i64: 1, 32>}, {pipeline_mode = #tpu.pipeline_mode<synchronous>, transform_indices = @transform_4, window_bounds = array<i64: 288, 32>}, {pipeline_mode = #tpu.pipeline_mode<synchronous>, transform_indices = @transform_5, window_bounds = array<i64: 1, 32>}, {pipeline_mode = #tpu.pipeline_mode<synchronous>, transform_indices = @transform_6, window_bounds = array<i64: 16, 32>}, {pipeline_mode = #tpu.pipeline_mode<synchronous>, transform_indices = @transform_7, window_bounds = array<i64: 1, 32>}, {pipeline_mode = #tpu.pipeline_mode<synchronous>, transform_indices = @transform_8, window_bounds = array<i64: 1, 32>}, {pipeline_mode = #tpu.pipeline_mode<synchronous>, transform_indices = @transform_9, window_bounds = array<i64: 1, 32>}, {pipeline_mode = #tpu.pipeline_mode<synchronous>, transform_indices = @transform_10, window_bounds = array<i64: 288, 32>}, {pipeline_mode = #tpu.pipeline_mode<synchronous>, transform_indices = @transform_11, window_bounds = array<i64: 1, 32>}, {pipeline_mode = #tpu.pipeline_mode<synchronous>, transform_indices = @transform_12, window_bounds = array<i64: 32, 96>}, {pipeline_mode = #tpu.pipeline_mode<synchronous>, transform_indices = @transform_13, window_bounds = array<i64: 1, 96>}, {pipeline_mode = #tpu.pipeline_mode<synchronous>, transform_indices = @transform_14, window_bounds = array<i64: 32, 32>}, {pipeline_mode = #tpu.pipeline_mode<synchronous>, transform_indices = @transform_15, window_bounds = array<i64: 1, 32>}, {pipeline_mode = #tpu.pipeline_mode<synchronous>, transform_indices = @transform_16, window_bounds = array<i64: 1, 32>}, {pipeline_mode = #tpu.pipeline_mode<synchronous>, transform_indices = @transform_17, window_bounds = array<i64: 1, 32>}, {pipeline_mode = #tpu.pipeline_mode<synchronous>, transform_indices = @transform_18, window_bounds = array<i64: 288, 32>}, {pipeline_mode = #tpu.pipeline_mode<synchronous>, transform_indices = @transform_19, window_bounds = array<i64: 1, 32>}, {pipeline_mode = #tpu.pipeline_mode<synchronous>, transform_indices = @transform_20, window_bounds = array<i64: 16, 32>}, {pipeline_mode = #tpu.pipeline_mode<synchronous>, transform_indices = @transform_21, window_bounds = array<i64: 1, 32>}, {pipeline_mode = #tpu.pipeline_mode<synchronous>, transform_indices = @transform_22, window_bounds = array<i64: 1, 32>}, {pipeline_mode = #tpu.pipeline_mode<synchronous>, transform_indices = @transform_23, window_bounds = array<i64: 1, 32>}, {pipeline_mode = #tpu.pipeline_mode<synchronous>, transform_indices = @transform_24, window_bounds = array<i64: 288, 32>}, {pipeline_mode = #tpu.pipeline_mode<synchronous>, transform_indices = @transform_25, window_bounds = array<i64: 1, 32>}, {pipeline_mode = #tpu.pipeline_mode<synchronous>, transform_indices = @transform_26, window_bounds = array<i64: 2, 8, 8, 32>}]} {
    %cst = arith.constant 0.000000e+00 : f32
    %0 = vector.broadcast %cst : f32 to vector<2x10x10x32xf32>
    %c0 = arith.constant 0 : index
    %c0_0 = arith.constant 0 : index
    %c0_1 = arith.constant 0 : index
    %c0_2 = arith.constant 0 : index
    %1 = vector.load %arg28[%c0, %c0_0, %c0_1, %c0_2] : memref<2x10x10x32xf32, #tpu.memory_space<vmem>>, vector<2x10x10x32xf32>
    tpu.vector_store %arg28[%c0, %c0_0, %c0_1, %c0_2], %0 {strides = array<i32>} : memref<2x10x10x32xf32, #tpu.memory_space<vmem>>, vector<2x10x10x32xf32>,
    %c0_3 = arith.constant 0 : index
    %c0_4 = arith.constant 0 : index
    %c0_5 = arith.constant 0 : index
    %c0_6 = arith.constant 0 : index
    %2 = vector.load %arg1[%c0_3, %c0_4, %c0_5, %c0_6] : memref<2x8x8x32xf32, #tpu.memory_space<vmem>>, vector<2x8x8x32xf32>
    %c0_7 = arith.constant 0 : index
    %c0_8 = arith.constant 0 : index
    %3 = vector.load %arg2[%c0_7, %c0_8] : memref<2x16xf32, #tpu.memory_space<vmem>>, vector<2x16xf32>
    %c0_9 = arith.constant 0 : index
    %c0_10 = arith.constant 0 : index
    %4 = vector.load %arg7[%c0_9, %c0_10] : memref<16x32xf32, #tpu.memory_space<vmem>>, vector<16x32xf32>
    %cst_11 = arith.constant dense<0.000000e+00> : vector<2x32xf32>
    %5 = tpu.matmul %3, %4, %cst_11 {dimension_numbers = #tpu.dot_dimension_numbers<[1], [0], [0], [1], [0, 0, 1, 1], [], []>} : vector<2x16xf32>, vector<16x32xf32>, vector<2x32xf32> -> vector<2x32xf32>
    %c0_12 = arith.constant 0 : index
    %c0_13 = arith.constant 0 : index
    %6 = vector.load %arg8[%c0_12, %c0_13] : memref<1x32xf32, #tpu.memory_space<vmem>>, vector<1x32xf32>
    %7 = vector.shape_cast %6 : vector<1x32xf32> to vector<32xf32>
    %8 = vector.shape_cast %7 : vector<32xf32> to vector<1x32xf32>
    %9 = vector.broadcast %8 : vector<1x32xf32> to vector<2x32xf32>
    %10 = arith.addf %5, %9 : vector<2x32xf32>
    %c0_14 = arith.constant 0 : index
    %c0_15 = arith.constant 0 : index
    %11 = vector.load %arg21[%c0_14, %c0_15] : memref<16x32xf32, #tpu.memory_space<vmem>>, vector<16x32xf32>
    %cst_16 = arith.constant dense<0.000000e+00> : vector<2x32xf32>
    %12 = tpu.matmul %3, %11, %cst_16 {dimension_numbers = #tpu.dot_dimension_numbers<[1], [0], [0], [1], [0, 0, 1, 1], [], []>} : vector<2x16xf32>, vector<16x32xf32>, vector<2x32xf32> -> vector<2x32xf32>
    %c0_17 = arith.constant 0 : index
    %c0_18 = arith.constant 0 : index
    %13 = vector.load %arg22[%c0_17, %c0_18] : memref<1x32xf32, #tpu.memory_space<vmem>>, vector<1x32xf32>
    %14 = vector.shape_cast %13 : vector<1x32xf32> to vector<32xf32>
    %15 = vector.shape_cast %14 : vector<32xf32> to vector<1x32xf32>
    %16 = vector.broadcast %15 : vector<1x32xf32> to vector<2x32xf32>
    %17 = arith.addf %12, %16 : vector<2x32xf32>
    %18 = vector.shape_cast %2 : vector<2x8x8x32xf32> to vector<2x64x32xf32>
    %cst_19 = arith.constant dense<0.000000e+00> : vector<2x32xf32>
    %19 = vector.multi_reduction <add>, %18, %cst_19 [1] : vector<2x64x32xf32> to vector<2x32xf32>
    %20 = vector.shape_cast %19 : vector<2x32xf32> to vector<2x1x32xf32>
    %cst_20 = arith.constant 6.400000e+01 : f32
    %21 = vector.broadcast %cst_20 : f32 to vector<2x1x32xf32>
    %22 = arith.divf %20, %21 : vector<2x1x32xf32>
    %23 = vector.broadcast %22 : vector<2x1x32xf32> to vector<2x64x32xf32>
    %24 = arith.subf %18, %23 : vector<2x64x32xf32>
    %25 = arith.mulf %24, %24 : vector<2x64x32xf32>
    %cst_21 = arith.constant dense<0.000000e+00> : vector<2x32xf32>
    %26 = vector.multi_reduction <add>, %25, %cst_21 [1] : vector<2x64x32xf32> to vector<2x32xf32>
    %27 = vector.shape_cast %26 : vector<2x32xf32> to vector<2x1x32xf32>
    %cst_22 = arith.constant 6.400000e+01 : f32
    %28 = vector.broadcast %cst_22 : f32 to vector<2x1x32xf32>
    %29 = arith.divf %27, %28 : vector<2x1x32xf32>
    %30 = vector.broadcast %22 : vector<2x1x32xf32> to vector<2x64x32xf32>
    %31 = arith.subf %18, %30 : vector<2x64x32xf32>
    %cst_23 = arith.constant 9.99999974E-6 : f32
    %32 = vector.broadcast %cst_23 : f32 to vector<2x1x32xf32>
    %33 = arith.addf %29, %32 : vector<2x1x32xf32>
    %34 = math.rsqrt %33 : vector<2x1x32xf32>
    %35 = vector.broadcast %34 : vector<2x1x32xf32> to vector<2x64x32xf32>
    %36 = arith.mulf %31, %35 : vector<2x64x32xf32>
    %c0_24 = arith.constant 0 : index
    %c0_25 = arith.constant 0 : index
    %37 = vector.load %arg3[%c0_24, %c0_25] : memref<1x32xf32, #tpu.memory_space<vmem>>, vector<1x32xf32>
    %38 = vector.shape_cast %37 : vector<1x32xf32> to vector<32xf32>
    %39 = vector.shape_cast %38 : vector<32xf32> to vector<1x1x32xf32>
    %40 = vector.broadcast %39 : vector<1x1x32xf32> to vector<2x64x32xf32>
    %41 = arith.mulf %36, %40 : vector<2x64x32xf32>
    %c0_26 = arith.constant 0 : index
    %c0_27 = arith.constant 0 : index
    %42 = vector.load %arg4[%c0_26, %c0_27] : memref<1x32xf32, #tpu.memory_space<vmem>>, vector<1x32xf32>
    %43 = vector.shape_cast %42 : vector<1x32xf32> to vector<32xf32>
    %44 = vector.shape_cast %43 : vector<32xf32> to vector<1x1x32xf32>
    %45 = vector.broadcast %44 : vector<1x1x32xf32> to vector<2x64x32xf32>
    %46 = arith.addf %41, %45 : vector<2x64x32xf32>
    %47 = arith.negf %46 : vector<2x64x32xf32>
    %48 = math.exp %47 : vector<2x64x32xf32>
    %cst_28 = arith.constant 1.000000e+00 : f32
    %49 = vector.broadcast %cst_28 : f32 to vector<2x64x32xf32>
    %50 = arith.addf %49, %48 : vector<2x64x32xf32>
    %51 = arith.divf %49, %50 : vector<2x64x32xf32>
    %52 = arith.mulf %46, %51 : vector<2x64x32xf32>
    %53 = vector.shape_cast %52 : vector<2x64x32xf32> to vector<2x8x8x32xf32>
    %c0_29 = arith.constant 0 : index
    %c1 = arith.constant 1 : index
    %c1_30 = arith.constant 1 : index
    %c0_31 = arith.constant 0 : index
    %54 = vector.load %arg28[%c0_29, %c1, %c1_30, %c0_31] : memref<2x10x10x32xf32, #tpu.memory_space<vmem>>, vector<2x8x8x32xf32>
    tpu.vector_store %arg28[%c0_29, %c1, %c1_30, %c0_31], %53 {strides = array<i32>} : memref<2x10x10x32xf32, #tpu.memory_space<vmem>>, vector<2x8x8x32xf32>,
    %c0_32 = arith.constant 0 : index
    %c0_33 = arith.constant 0 : index
    %c0_34 = arith.constant 0 : index
    %c0_35 = arith.constant 0 : index
    %55 = vector.load %arg28[%c0_32, %c0_33, %c0_34, %c0_35] : memref<2x10x10x32xf32, #tpu.memory_space<vmem>>, vector<2x8x8x32xf32>
    %c0_36 = arith.constant 0 : index
    %c0_37 = arith.constant 0 : index
    %c1_38 = arith.constant 1 : index
    %c0_39 = arith.constant 0 : index
    %56 = vector.load %arg28[%c0_36, %c0_37, %c1_38, %c0_39] : memref<2x10x10x32xf32, #tpu.memory_space<vmem>>, vector<2x8x8x32xf32>
    %c0_40 = arith.constant 0 : index
    %c0_41 = arith.constant 0 : index
    %c2 = arith.constant 2 : index
    %c0_42 = arith.constant 0 : index
    %57 = vector.load %arg28[%c0_40, %c0_41, %c2, %c0_42] : memref<2x10x10x32xf32, #tpu.memory_space<vmem>>, vector<2x8x8x32xf32>
    %c0_43 = arith.constant 0 : index
    %c1_44 = arith.constant 1 : index
    %c0_45 = arith.constant 0 : index
    %c0_46 = arith.constant 0 : index
    %58 = vector.load %arg28[%c0_43, %c1_44, %c0_45, %c0_46] : memref<2x10x10x32xf32, #tpu.memory_space<vmem>>, vector<2x8x8x32xf32>
    %c0_47 = arith.constant 0 : index
    %c1_48 = arith.constant 1 : index
    %c1_49 = arith.constant 1 : index
    %c0_50 = arith.constant 0 : index
    %59 = vector.load %arg28[%c0_47, %c1_48, %c1_49, %c0_50] : memref<2x10x10x32xf32, #tpu.memory_space<vmem>>, vector<2x8x8x32xf32>
    %c0_51 = arith.constant 0 : index
    %c1_52 = arith.constant 1 : index
    %c2_53 = arith.constant 2 : index
    %c0_54 = arith.constant 0 : index
    %60 = vector.load %arg28[%c0_51, %c1_52, %c2_53, %c0_54] : memref<2x10x10x32xf32, #tpu.memory_space<vmem>>, vector<2x8x8x32xf32>
    %c0_55 = arith.constant 0 : index
    %c2_56 = arith.constant 2 : index
    %c0_57 = arith.constant 0 : index
    %c0_58 = arith.constant 0 : index
    %61 = vector.load %arg28[%c0_55, %c2_56, %c0_57, %c0_58] : memref<2x10x10x32xf32, #tpu.memory_space<vmem>>, vector<2x8x8x32xf32>
    %c0_59 = arith.constant 0 : index
    %c2_60 = arith.constant 2 : index
    %c1_61 = arith.constant 1 : index
    %c0_62 = arith.constant 0 : index
    %62 = vector.load %arg28[%c0_59, %c2_60, %c1_61, %c0_62] : memref<2x10x10x32xf32, #tpu.memory_space<vmem>>, vector<2x8x8x32xf32>
    %c0_63 = arith.constant 0 : index
    %c2_64 = arith.constant 2 : index
    %c2_65 = arith.constant 2 : index
    %c0_66 = arith.constant 0 : index
    %63 = vector.load %arg28[%c0_63, %c2_64, %c2_65, %c0_66] : memref<2x10x10x32xf32, #tpu.memory_space<vmem>>, vector<2x8x8x32xf32>
    %64 = tpu.concatenate %55, %56, %57, %58, %59, %60, %61, %62, %63 in 3 : vector<2x8x8x32xf32>, vector<2x8x8x32xf32>, vector<2x8x8x32xf32>, vector<2x8x8x32xf32>, vector<2x8x8x32xf32>, vector<2x8x8x32xf32>, vector<2x8x8x32xf32>, vector<2x8x8x32xf32>, vector<2x8x8x32xf32> -> vector<2x8x8x288xf32>
    %65 = vector.shape_cast %64 : vector<2x8x8x288xf32> to vector<128x288xf32>
    %c0_67 = arith.constant 0 : index
    %c0_68 = arith.constant 0 : index
    %66 = vector.load %arg5[%c0_67, %c0_68] : memref<288x32xf32, #tpu.memory_space<vmem>>, vector<288x32xf32>
    %cst_69 = arith.constant dense<0.000000e+00> : vector<128x32xf32>
    %67 = tpu.matmul %65, %66, %cst_69 {dimension_numbers = #tpu.dot_dimension_numbers<[1], [0], [0], [1], [0, 0, 1, 1], [], []>} : vector<128x288xf32>, vector<288x32xf32>, vector<128x32xf32> -> vector<128x32xf32>
    %c0_70 = arith.constant 0 : index
    %c0_71 = arith.constant 0 : index
    %68 = vector.load %arg6[%c0_70, %c0_71] : memref<1x32xf32, #tpu.memory_space<vmem>>, vector<1x32xf32>
    %69 = vector.shape_cast %68 : vector<1x32xf32> to vector<32xf32>
    %70 = vector.shape_cast %69 : vector<32xf32> to vector<1x32xf32>
    %71 = vector.broadcast %70 : vector<1x32xf32> to vector<128x32xf32>
    %72 = arith.addf %67, %71 : vector<128x32xf32>
    %73 = vector.shape_cast %72 : vector<128x32xf32> to vector<2x8x8x32xf32>
    %74 = vector.shape_cast %10 : vector<2x32xf32> to vector<2x1x1x32xf32>
    %75 = vector.broadcast %74 : vector<2x1x1x32xf32> to vector<2x8x8x32xf32>
    %76 = arith.addf %73, %75 : vector<2x8x8x32xf32>
    %77 = vector.shape_cast %76 : vector<2x8x8x32xf32> to vector<2x64x32xf32>
    %cst_72 = arith.constant dense<0.000000e+00> : vector<2x32xf32>
    %78 = vector.multi_reduction <add>, %77, %cst_72 [1] : vector<2x64x32xf32> to vector<2x32xf32>
    %79 = vector.shape_cast %78 : vector<2x32xf32> to vector<2x1x32xf32>
    %cst_73 = arith.constant 6.400000e+01 : f32
    %80 = vector.broadcast %cst_73 : f32 to vector<2x1x32xf32>
    %81 = arith.divf %79, %80 : vector<2x1x32xf32>
    %82 = vector.broadcast %81 : vector<2x1x32xf32> to vector<2x64x32xf32>
    %83 = arith.subf %77, %82 : vector<2x64x32xf32>
    %84 = arith.mulf %83, %83 : vector<2x64x32xf32>
    %cst_74 = arith.constant dense<0.000000e+00> : vector<2x32xf32>
    %85 = vector.multi_reduction <add>, %84, %cst_74 [1] : vector<2x64x32xf32> to vector<2x32xf32>
    %86 = vector.shape_cast %85 : vector<2x32xf32> to vector<2x1x32xf32>
    %cst_75 = arith.constant 6.400000e+01 : f32
    %87 = vector.broadcast %cst_75 : f32 to vector<2x1x32xf32>
    %88 = arith.divf %86, %87 : vector<2x1x32xf32>
    %89 = vector.broadcast %81 : vector<2x1x32xf32> to vector<2x64x32xf32>
    %90 = arith.subf %77, %89 : vector<2x64x32xf32>
    %cst_76 = arith.constant 9.99999974E-6 : f32
    %91 = vector.broadcast %cst_76 : f32 to vector<2x1x32xf32>
    %92 = arith.addf %88, %91 : vector<2x1x32xf32>
    %93 = math.rsqrt %92 : vector<2x1x32xf32>
    %94 = vector.broadcast %93 : vector<2x1x32xf32> to vector<2x64x32xf32>
    %95 = arith.mulf %90, %94 : vector<2x64x32xf32>
    %c0_77 = arith.constant 0 : index
    %c0_78 = arith.constant 0 : index
    %96 = vector.load %arg9[%c0_77, %c0_78] : memref<1x32xf32, #tpu.memory_space<vmem>>, vector<1x32xf32>
    %97 = vector.shape_cast %96 : vector<1x32xf32> to vector<32xf32>
    %98 = vector.shape_cast %97 : vector<32xf32> to vector<1x1x32xf32>
    %99 = vector.broadcast %98 : vector<1x1x32xf32> to vector<2x64x32xf32>
    %100 = arith.mulf %95, %99 : vector<2x64x32xf32>
    %c0_79 = arith.constant 0 : index
    %c0_80 = arith.constant 0 : index
    %101 = vector.load %arg10[%c0_79, %c0_80] : memref<1x32xf32, #tpu.memory_space<vmem>>, vector<1x32xf32>
    %102 = vector.shape_cast %101 : vector<1x32xf32> to vector<32xf32>
    %103 = vector.shape_cast %102 : vector<32xf32> to vector<1x1x32xf32>
    %104 = vector.broadcast %103 : vector<1x1x32xf32> to vector<2x64x32xf32>
    %105 = arith.addf %100, %104 : vector<2x64x32xf32>
    %106 = arith.negf %105 : vector<2x64x32xf32>
    %107 = math.exp %106 : vector<2x64x32xf32>
    %cst_81 = arith.constant 1.000000e+00 : f32
    %108 = vector.broadcast %cst_81 : f32 to vector<2x64x32xf32>
    %109 = arith.addf %108, %107 : vector<2x64x32xf32>
    %110 = arith.divf %108, %109 : vector<2x64x32xf32>
    %111 = arith.mulf %105, %110 : vector<2x64x32xf32>
    %112 = vector.shape_cast %111 : vector<2x64x32xf32> to vector<2x8x8x32xf32>
    %c0_82 = arith.constant 0 : index
    %c1_83 = arith.constant 1 : index
    %c1_84 = arith.constant 1 : index
    %c0_85 = arith.constant 0 : index
    %113 = vector.load %arg28[%c0_82, %c1_83, %c1_84, %c0_85] : memref<2x10x10x32xf32, #tpu.memory_space<vmem>>, vector<2x8x8x32xf32>
    tpu.vector_store %arg28[%c0_82, %c1_83, %c1_84, %c0_85], %112 {strides = array<i32>} : memref<2x10x10x32xf32, #tpu.memory_space<vmem>>, vector<2x8x8x32xf32>,
    %c0_86 = arith.constant 0 : index
    %c0_87 = arith.constant 0 : index
    %c0_88 = arith.constant 0 : index
    %c0_89 = arith.constant 0 : index
    %114 = vector.load %arg28[%c0_86, %c0_87, %c0_88, %c0_89] : memref<2x10x10x32xf32, #tpu.memory_space<vmem>>, vector<2x8x8x32xf32>
    %c0_90 = arith.constant 0 : index
    %c0_91 = arith.constant 0 : index
    %c1_92 = arith.constant 1 : index
    %c0_93 = arith.constant 0 : index
    %115 = vector.load %arg28[%c0_90, %c0_91, %c1_92, %c0_93] : memref<2x10x10x32xf32, #tpu.memory_space<vmem>>, vector<2x8x8x32xf32>
    %c0_94 = arith.constant 0 : index
    %c0_95 = arith.constant 0 : index
    %c2_96 = arith.constant 2 : index
    %c0_97 = arith.constant 0 : index
    %116 = vector.load %arg28[%c0_94, %c0_95, %c2_96, %c0_97] : memref<2x10x10x32xf32, #tpu.memory_space<vmem>>, vector<2x8x8x32xf32>
    %c0_98 = arith.constant 0 : index
    %c1_99 = arith.constant 1 : index
    %c0_100 = arith.constant 0 : index
    %c0_101 = arith.constant 0 : index
    %117 = vector.load %arg28[%c0_98, %c1_99, %c0_100, %c0_101] : memref<2x10x10x32xf32, #tpu.memory_space<vmem>>, vector<2x8x8x32xf32>
    %c0_102 = arith.constant 0 : index
    %c1_103 = arith.constant 1 : index
    %c1_104 = arith.constant 1 : index
    %c0_105 = arith.constant 0 : index
    %118 = vector.load %arg28[%c0_102, %c1_103, %c1_104, %c0_105] : memref<2x10x10x32xf32, #tpu.memory_space<vmem>>, vector<2x8x8x32xf32>
    %c0_106 = arith.constant 0 : index
    %c1_107 = arith.constant 1 : index
    %c2_108 = arith.constant 2 : index
    %c0_109 = arith.constant 0 : index
    %119 = vector.load %arg28[%c0_106, %c1_107, %c2_108, %c0_109] : memref<2x10x10x32xf32, #tpu.memory_space<vmem>>, vector<2x8x8x32xf32>
    %c0_110 = arith.constant 0 : index
    %c2_111 = arith.constant 2 : index
    %c0_112 = arith.constant 0 : index
    %c0_113 = arith.constant 0 : index
    %120 = vector.load %arg28[%c0_110, %c2_111, %c0_112, %c0_113] : memref<2x10x10x32xf32, #tpu.memory_space<vmem>>, vector<2x8x8x32xf32>
    %c0_114 = arith.constant 0 : index
    %c2_115 = arith.constant 2 : index
    %c1_116 = arith.constant 1 : index
    %c0_117 = arith.constant 0 : index
    %121 = vector.load %arg28[%c0_114, %c2_115, %c1_116, %c0_117] : memref<2x10x10x32xf32, #tpu.memory_space<vmem>>, vector<2x8x8x32xf32>
    %c0_118 = arith.constant 0 : index
    %c2_119 = arith.constant 2 : index
    %c2_120 = arith.constant 2 : index
    %c0_121 = arith.constant 0 : index
    %122 = vector.load %arg28[%c0_118, %c2_119, %c2_120, %c0_121] : memref<2x10x10x32xf32, #tpu.memory_space<vmem>>, vector<2x8x8x32xf32>
    %123 = tpu.concatenate %114, %115, %116, %117, %118, %119, %120, %121, %122 in 3 : vector<2x8x8x32xf32>, vector<2x8x8x32xf32>, vector<2x8x8x32xf32>, vector<2x8x8x32xf32>, vector<2x8x8x32xf32>, vector<2x8x8x32xf32>, vector<2x8x8x32xf32>, vector<2x8x8x32xf32>, vector<2x8x8x32xf32> -> vector<2x8x8x288xf32>
    %124 = vector.shape_cast %123 : vector<2x8x8x288xf32> to vector<128x288xf32>
    %c0_122 = arith.constant 0 : index
    %c0_123 = arith.constant 0 : index
    %125 = vector.load %arg11[%c0_122, %c0_123] : memref<288x32xf32, #tpu.memory_space<vmem>>, vector<288x32xf32>
    %cst_124 = arith.constant dense<0.000000e+00> : vector<128x32xf32>
    %126 = tpu.matmul %124, %125, %cst_124 {dimension_numbers = #tpu.dot_dimension_numbers<[1], [0], [0], [1], [0, 0, 1, 1], [], []>} : vector<128x288xf32>, vector<288x32xf32>, vector<128x32xf32> -> vector<128x32xf32>
    %c0_125 = arith.constant 0 : index
    %c0_126 = arith.constant 0 : index
    %127 = vector.load %arg12[%c0_125, %c0_126] : memref<1x32xf32, #tpu.memory_space<vmem>>, vector<1x32xf32>
    %128 = vector.shape_cast %127 : vector<1x32xf32> to vector<32xf32>
    %129 = vector.shape_cast %128 : vector<32xf32> to vector<1x32xf32>
    %130 = vector.broadcast %129 : vector<1x32xf32> to vector<128x32xf32>
    %131 = arith.addf %126, %130 : vector<128x32xf32>
    %132 = vector.shape_cast %131 : vector<128x32xf32> to vector<2x8x8x32xf32>
    %133 = arith.addf %132, %2 : vector<2x8x8x32xf32>
    %134 = vector.shape_cast %133 : vector<2x8x8x32xf32> to vector<128x32xf32>
    %c0_127 = arith.constant 0 : index
    %c0_128 = arith.constant 0 : index
    %135 = vector.load %arg13[%c0_127, %c0_128] : memref<32x96xf32, #tpu.memory_space<vmem>>, vector<32x96xf32>
    %cst_129 = arith.constant dense<0.000000e+00> : vector<128x96xf32>
    %136 = tpu.matmul %134, %135, %cst_129 {dimension_numbers = #tpu.dot_dimension_numbers<[1], [0], [0], [1], [0, 0, 1, 1], [], []>} : vector<128x32xf32>, vector<32x96xf32>, vector<128x96xf32> -> vector<128x96xf32>
    %c0_130 = arith.constant 0 : index
    %c0_131 = arith.constant 0 : index
    %137 = vector.load %arg14[%c0_130, %c0_131] : memref<1x96xf32, #tpu.memory_space<vmem>>, vector<1x96xf32>
    %138 = vector.shape_cast %137 : vector<1x96xf32> to vector<96xf32>
    %139 = vector.shape_cast %138 : vector<96xf32> to vector<1x96xf32>
    %140 = vector.broadcast %139 : vector<1x96xf32> to vector<128x96xf32>
    %141 = arith.addf %136, %140 : vector<128x96xf32>
    %142 = vector.extract_strided_slice %141 {offsets = [0, 0], sizes = [128, 32], strides = [1, 1]} : vector<128x96xf32> to vector<128x32xf32>
    %143 = vector.shape_cast %142 : vector<128x32xf32> to vector<2x64x32xf32>
    %144 = vector.extract_strided_slice %141 {offsets = [0, 32], sizes = [128, 32], strides = [1, 1]} : vector<128x96xf32> to vector<128x32xf32>
    %145 = vector.shape_cast %144 : vector<128x32xf32> to vector<2x64x32xf32>
    %146 = vector.extract_strided_slice %141 {offsets = [0, 64], sizes = [128, 32], strides = [1, 1]} : vector<128x96xf32> to vector<128x32xf32>
    %147 = vector.shape_cast %146 : vector<128x32xf32> to vector<2x64x32xf32>
    "tpu.trace_start"() <{level = 10 : i32, message = "bqc,bkc->bqk"}> : () -> ()
    %cst_132 = arith.constant dense<0.000000e+00> : vector<2x64x64xf32>
    %148 = tpu.matmul %143, %145, %cst_132 {dimension_numbers = #tpu.dot_dimension_numbers<[2], [2], [1], [1], [0, 0, 0, 1, 1, 1], [0], [0]>} : vector<2x64x32xf32>, vector<2x64x32xf32>, vector<2x64x64xf32> -> vector<2x64x64xf32>
    "tpu.trace_stop"() : () -> ()
    %cst_133 = arith.constant 0.176776692 : f32
    %149 = vector.broadcast %cst_133 : f32 to vector<2x64x64xf32>
    %150 = arith.mulf %148, %149 : vector<2x64x64xf32>
    %151 = tpu.iota {dimensions = array<i32: 0>} : vector<64x64xi32>
    %152 = tpu.iota {dimensions = array<i32: 1>} : vector<64x64xi32>
    %153 = arith.cmpi sle, %152, %151 : vector<64x64xi32>
    %154 = vector.shape_cast %153 : vector<64x64xi1> to vector<1x64x64xi1>
    %cst_134 = arith.constant 0xFF800000 : f32
    %155 = vector.shape_cast %154 : vector<1x64x64xi1> to vector<1x64x64xi1>
    %156 = vector.broadcast %155 : vector<1x64x64xi1> to vector<2x64x64xi1>
    %157 = vector.broadcast %cst_134 : f32 to vector<2x64x64xf32>
    %158 = arith.select %156, %150, %157 : vector<2x64x64xi1>, vector<2x64x64xf32>
    %cst_135 = arith.constant dense<0xFF800000> : vector<2x64xf32>
    %159 = vector.multi_reduction <maximumf>, %158, %cst_135 [2] : vector<2x64x64xf32> to vector<2x64xf32>
    %160 = vector.shape_cast %159 : vector<2x64xf32> to vector<2x64x1xf32>
    %161 = vector.broadcast %160 : vector<2x64x1xf32> to vector<2x64x64xf32>
    %162 = arith.subf %158, %161 : vector<2x64x64xf32>
    %163 = math.exp %162 : vector<2x64x64xf32>
    %cst_136 = arith.constant dense<0.000000e+00> : vector<2x64xf32>
    %164 = vector.multi_reduction <add>, %163, %cst_136 [2] : vector<2x64x64xf32> to vector<2x64xf32>
    %165 = vector.shape_cast %164 : vector<2x64xf32> to vector<2x64x1xf32>
    %166 = tpu.reciprocal %165 {approx = true} : vector<2x64x1xf32> -> vector<2x64x1xf32>
    %167 = vector.broadcast %166 : vector<2x64x1xf32> to vector<2x64x64xf32>
    %168 = arith.mulf %163, %167 : vector<2x64x64xf32>
    "tpu.trace_start"() <{level = 10 : i32, message = "bqk,bkc->bqc"}> : () -> ()
    %cst_137 = arith.constant dense<0.000000e+00> : vector<2x64x32xf32>
    %169 = tpu.matmul %168, %147, %cst_137 {dimension_numbers = #tpu.dot_dimension_numbers<[2], [1], [1], [2], [0, 0, 0, 1, 1, 2], [0], [0]>} : vector<2x64x64xf32>, vector<2x64x32xf32>, vector<2x64x32xf32> -> vector<2x64x32xf32>
    "tpu.trace_stop"() : () -> ()
    %170 = vector.shape_cast %169 : vector<2x64x32xf32> to vector<128x32xf32>
    %c0_138 = arith.constant 0 : index
    %c0_139 = arith.constant 0 : index
    %171 = vector.load %arg15[%c0_138, %c0_139] : memref<32x32xf32, #tpu.memory_space<vmem>>, vector<32x32xf32>
    %cst_140 = arith.constant dense<0.000000e+00> : vector<128x32xf32>
    %172 = tpu.matmul %170, %171, %cst_140 {dimension_numbers = #tpu.dot_dimension_numbers<[1], [0], [0], [1], [0, 0, 1, 1], [], []>} : vector<128x32xf32>, vector<32x32xf32>, vector<128x32xf32> -> vector<128x32xf32>
    %c0_141 = arith.constant 0 : index
    %c0_142 = arith.constant 0 : index
    %173 = vector.load %arg16[%c0_141, %c0_142] : memref<1x32xf32, #tpu.memory_space<vmem>>, vector<1x32xf32>
    %174 = vector.shape_cast %173 : vector<1x32xf32> to vector<32xf32>
    %175 = vector.shape_cast %174 : vector<32xf32> to vector<1x32xf32>
    %176 = vector.broadcast %175 : vector<1x32xf32> to vector<128x32xf32>
    %177 = arith.addf %172, %176 : vector<128x32xf32>
    %178 = arith.addf %134, %177 : vector<128x32xf32>
    %179 = vector.shape_cast %178 : vector<128x32xf32> to vector<2x8x8x32xf32>
    %180 = vector.shape_cast %179 : vector<2x8x8x32xf32> to vector<2x64x32xf32>
    %cst_143 = arith.constant dense<0.000000e+00> : vector<2x32xf32>
    %181 = vector.multi_reduction <add>, %180, %cst_143 [1] : vector<2x64x32xf32> to vector<2x32xf32>
    %182 = vector.shape_cast %181 : vector<2x32xf32> to vector<2x1x32xf32>
    %cst_144 = arith.constant 6.400000e+01 : f32
    %183 = vector.broadcast %cst_144 : f32 to vector<2x1x32xf32>
    %184 = arith.divf %182, %183 : vector<2x1x32xf32>
    %185 = vector.broadcast %184 : vector<2x1x32xf32> to vector<2x64x32xf32>
    %186 = arith.subf %180, %185 : vector<2x64x32xf32>
    %187 = arith.mulf %186, %186 : vector<2x64x32xf32>
    %cst_145 = arith.constant dense<0.000000e+00> : vector<2x32xf32>
    %188 = vector.multi_reduction <add>, %187, %cst_145 [1] : vector<2x64x32xf32> to vector<2x32xf32>
    %189 = vector.shape_cast %188 : vector<2x32xf32> to vector<2x1x32xf32>
    %cst_146 = arith.constant 6.400000e+01 : f32
    %190 = vector.broadcast %cst_146 : f32 to vector<2x1x32xf32>
    %191 = arith.divf %189, %190 : vector<2x1x32xf32>
    %192 = vector.broadcast %184 : vector<2x1x32xf32> to vector<2x64x32xf32>
    %193 = arith.subf %180, %192 : vector<2x64x32xf32>
    %cst_147 = arith.constant 9.99999974E-6 : f32
    %194 = vector.broadcast %cst_147 : f32 to vector<2x1x32xf32>
    %195 = arith.addf %191, %194 : vector<2x1x32xf32>
    %196 = math.rsqrt %195 : vector<2x1x32xf32>
    %197 = vector.broadcast %196 : vector<2x1x32xf32> to vector<2x64x32xf32>
    %198 = arith.mulf %193, %197 : vector<2x64x32xf32>
    %c0_148 = arith.constant 0 : index
    %c0_149 = arith.constant 0 : index
    %199 = vector.load %arg17[%c0_148, %c0_149] : memref<1x32xf32, #tpu.memory_space<vmem>>, vector<1x32xf32>
    %200 = vector.shape_cast %199 : vector<1x32xf32> to vector<32xf32>
    %201 = vector.shape_cast %200 : vector<32xf32> to vector<1x1x32xf32>
    %202 = vector.broadcast %201 : vector<1x1x32xf32> to vector<2x64x32xf32>
    %203 = arith.mulf %198, %202 : vector<2x64x32xf32>
    %c0_150 = arith.constant 0 : index
    %c0_151 = arith.constant 0 : index
    %204 = vector.load %arg18[%c0_150, %c0_151] : memref<1x32xf32, #tpu.memory_space<vmem>>, vector<1x32xf32>
    %205 = vector.shape_cast %204 : vector<1x32xf32> to vector<32xf32>
    %206 = vector.shape_cast %205 : vector<32xf32> to vector<1x1x32xf32>
    %207 = vector.broadcast %206 : vector<1x1x32xf32> to vector<2x64x32xf32>
    %208 = arith.addf %203, %207 : vector<2x64x32xf32>
    %209 = arith.negf %208 : vector<2x64x32xf32>
    %210 = math.exp %209 : vector<2x64x32xf32>
    %cst_152 = arith.constant 1.000000e+00 : f32
    %211 = vector.broadcast %cst_152 : f32 to vector<2x64x32xf32>
    %212 = arith.addf %211, %210 : vector<2x64x32xf32>
    %213 = arith.divf %211, %212 : vector<2x64x32xf32>
    %214 = arith.mulf %208, %213 : vector<2x64x32xf32>
    %215 = vector.shape_cast %214 : vector<2x64x32xf32> to vector<2x8x8x32xf32>
    %c0_153 = arith.constant 0 : index
    %c1_154 = arith.constant 1 : index
    %c1_155 = arith.constant 1 : index
    %c0_156 = arith.constant 0 : index
    %216 = vector.load %arg28[%c0_153, %c1_154, %c1_155, %c0_156] : memref<2x10x10x32xf32, #tpu.memory_space<vmem>>, vector<2x8x8x32xf32>
    tpu.vector_store %arg28[%c0_153, %c1_154, %c1_155, %c0_156], %215 {strides = array<i32>} : memref<2x10x10x32xf32, #tpu.memory_space<vmem>>, vector<2x8x8x32xf32>,
    %c0_157 = arith.constant 0 : index
    %c0_158 = arith.constant 0 : index
    %c0_159 = arith.constant 0 : index
    %c0_160 = arith.constant 0 : index
    %217 = vector.load %arg28[%c0_157, %c0_158, %c0_159, %c0_160] : memref<2x10x10x32xf32, #tpu.memory_space<vmem>>, vector<2x8x8x32xf32>
    %c0_161 = arith.constant 0 : index
    %c0_162 = arith.constant 0 : index
    %c1_163 = arith.constant 1 : index
    %c0_164 = arith.constant 0 : index
    %218 = vector.load %arg28[%c0_161, %c0_162, %c1_163, %c0_164] : memref<2x10x10x32xf32, #tpu.memory_space<vmem>>, vector<2x8x8x32xf32>
    %c0_165 = arith.constant 0 : index
    %c0_166 = arith.constant 0 : index
    %c2_167 = arith.constant 2 : index
    %c0_168 = arith.constant 0 : index
    %219 = vector.load %arg28[%c0_165, %c0_166, %c2_167, %c0_168] : memref<2x10x10x32xf32, #tpu.memory_space<vmem>>, vector<2x8x8x32xf32>
    %c0_169 = arith.constant 0 : index
    %c1_170 = arith.constant 1 : index
    %c0_171 = arith.constant 0 : index
    %c0_172 = arith.constant 0 : index
    %220 = vector.load %arg28[%c0_169, %c1_170, %c0_171, %c0_172] : memref<2x10x10x32xf32, #tpu.memory_space<vmem>>, vector<2x8x8x32xf32>
    %c0_173 = arith.constant 0 : index
    %c1_174 = arith.constant 1 : index
    %c1_175 = arith.constant 1 : index
    %c0_176 = arith.constant 0 : index
    %221 = vector.load %arg28[%c0_173, %c1_174, %c1_175, %c0_176] : memref<2x10x10x32xf32, #tpu.memory_space<vmem>>, vector<2x8x8x32xf32>
    %c0_177 = arith.constant 0 : index
    %c1_178 = arith.constant 1 : index
    %c2_179 = arith.constant 2 : index
    %c0_180 = arith.constant 0 : index
    %222 = vector.load %arg28[%c0_177, %c1_178, %c2_179, %c0_180] : memref<2x10x10x32xf32, #tpu.memory_space<vmem>>, vector<2x8x8x32xf32>
    %c0_181 = arith.constant 0 : index
    %c2_182 = arith.constant 2 : index
    %c0_183 = arith.constant 0 : index
    %c0_184 = arith.constant 0 : index
    %223 = vector.load %arg28[%c0_181, %c2_182, %c0_183, %c0_184] : memref<2x10x10x32xf32, #tpu.memory_space<vmem>>, vector<2x8x8x32xf32>
    %c0_185 = arith.constant 0 : index
    %c2_186 = arith.constant 2 : index
    %c1_187 = arith.constant 1 : index
    %c0_188 = arith.constant 0 : index
    %224 = vector.load %arg28[%c0_185, %c2_186, %c1_187, %c0_188] : memref<2x10x10x32xf32, #tpu.memory_space<vmem>>, vector<2x8x8x32xf32>
    %c0_189 = arith.constant 0 : index
    %c2_190 = arith.constant 2 : index
    %c2_191 = arith.constant 2 : index
    %c0_192 = arith.constant 0 : index
    %225 = vector.load %arg28[%c0_189, %c2_190, %c2_191, %c0_192] : memref<2x10x10x32xf32, #tpu.memory_space<vmem>>, vector<2x8x8x32xf32>
    %226 = tpu.concatenate %217, %218, %219, %220, %221, %222, %223, %224, %225 in 3 : vector<2x8x8x32xf32>, vector<2x8x8x32xf32>, vector<2x8x8x32xf32>, vector<2x8x8x32xf32>, vector<2x8x8x32xf32>, vector<2x8x8x32xf32>, vector<2x8x8x32xf32>, vector<2x8x8x32xf32>, vector<2x8x8x32xf32> -> vector<2x8x8x288xf32>
    %227 = vector.shape_cast %226 : vector<2x8x8x288xf32> to vector<128x288xf32>
    %c0_193 = arith.constant 0 : index
    %c0_194 = arith.constant 0 : index
    %228 = vector.load %arg19[%c0_193, %c0_194] : memref<288x32xf32, #tpu.memory_space<vmem>>, vector<288x32xf32>
    %cst_195 = arith.constant dense<0.000000e+00> : vector<128x32xf32>
    %229 = tpu.matmul %227, %228, %cst_195 {dimension_numbers = #tpu.dot_dimension_numbers<[1], [0], [0], [1], [0, 0, 1, 1], [], []>} : vector<128x288xf32>, vector<288x32xf32>, vector<128x32xf32> -> vector<128x32xf32>
    %c0_196 = arith.constant 0 : index
    %c0_197 = arith.constant 0 : index
    %230 = vector.load %arg20[%c0_196, %c0_197] : memref<1x32xf32, #tpu.memory_space<vmem>>, vector<1x32xf32>
    %231 = vector.shape_cast %230 : vector<1x32xf32> to vector<32xf32>
    %232 = vector.shape_cast %231 : vector<32xf32> to vector<1x32xf32>
    %233 = vector.broadcast %232 : vector<1x32xf32> to vector<128x32xf32>
    %234 = arith.addf %229, %233 : vector<128x32xf32>
    %235 = vector.shape_cast %234 : vector<128x32xf32> to vector<2x8x8x32xf32>
    %236 = vector.shape_cast %17 : vector<2x32xf32> to vector<2x1x1x32xf32>
    %237 = vector.broadcast %236 : vector<2x1x1x32xf32> to vector<2x8x8x32xf32>
    %238 = arith.addf %235, %237 : vector<2x8x8x32xf32>
    %239 = vector.shape_cast %238 : vector<2x8x8x32xf32> to vector<2x64x32xf32>
    %cst_198 = arith.constant dense<0.000000e+00> : vector<2x32xf32>
    %240 = vector.multi_reduction <add>, %239, %cst_198 [1] : vector<2x64x32xf32> to vector<2x32xf32>
    %241 = vector.shape_cast %240 : vector<2x32xf32> to vector<2x1x32xf32>
    %cst_199 = arith.constant 6.400000e+01 : f32
    %242 = vector.broadcast %cst_199 : f32 to vector<2x1x32xf32>
    %243 = arith.divf %241, %242 : vector<2x1x32xf32>
    %244 = vector.broadcast %243 : vector<2x1x32xf32> to vector<2x64x32xf32>
    %245 = arith.subf %239, %244 : vector<2x64x32xf32>
    %246 = arith.mulf %245, %245 : vector<2x64x32xf32>
    %cst_200 = arith.constant dense<0.000000e+00> : vector<2x32xf32>
    %247 = vector.multi_reduction <add>, %246, %cst_200 [1] : vector<2x64x32xf32> to vector<2x32xf32>
    %248 = vector.shape_cast %247 : vector<2x32xf32> to vector<2x1x32xf32>
    %cst_201 = arith.constant 6.400000e+01 : f32
    %249 = vector.broadcast %cst_201 : f32 to vector<2x1x32xf32>
    %250 = arith.divf %248, %249 : vector<2x1x32xf32>
    %251 = vector.broadcast %243 : vector<2x1x32xf32> to vector<2x64x32xf32>
    %252 = arith.subf %239, %251 : vector<2x64x32xf32>
    %cst_202 = arith.constant 9.99999974E-6 : f32
    %253 = vector.broadcast %cst_202 : f32 to vector<2x1x32xf32>
    %254 = arith.addf %250, %253 : vector<2x1x32xf32>
    %255 = math.rsqrt %254 : vector<2x1x32xf32>
    %256 = vector.broadcast %255 : vector<2x1x32xf32> to vector<2x64x32xf32>
    %257 = arith.mulf %252, %256 : vector<2x64x32xf32>
    %c0_203 = arith.constant 0 : index
    %c0_204 = arith.constant 0 : index
    %258 = vector.load %arg23[%c0_203, %c0_204] : memref<1x32xf32, #tpu.memory_space<vmem>>, vector<1x32xf32>
    %259 = vector.shape_cast %258 : vector<1x32xf32> to vector<32xf32>
    %260 = vector.shape_cast %259 : vector<32xf32> to vector<1x1x32xf32>
    %261 = vector.broadcast %260 : vector<1x1x32xf32> to vector<2x64x32xf32>
    %262 = arith.mulf %257, %261 : vector<2x64x32xf32>
    %c0_205 = arith.constant 0 : index
    %c0_206 = arith.constant 0 : index
    %263 = vector.load %arg24[%c0_205, %c0_206] : memref<1x32xf32, #tpu.memory_space<vmem>>, vector<1x32xf32>
    %264 = vector.shape_cast %263 : vector<1x32xf32> to vector<32xf32>
    %265 = vector.shape_cast %264 : vector<32xf32> to vector<1x1x32xf32>
    %266 = vector.broadcast %265 : vector<1x1x32xf32> to vector<2x64x32xf32>
    %267 = arith.addf %262, %266 : vector<2x64x32xf32>
    %268 = arith.negf %267 : vector<2x64x32xf32>
    %269 = math.exp %268 : vector<2x64x32xf32>
    %cst_207 = arith.constant 1.000000e+00 : f32
    %270 = vector.broadcast %cst_207 : f32 to vector<2x64x32xf32>
    %271 = arith.addf %270, %269 : vector<2x64x32xf32>
    %272 = arith.divf %270, %271 : vector<2x64x32xf32>
    %273 = arith.mulf %267, %272 : vector<2x64x32xf32>
    %274 = vector.shape_cast %273 : vector<2x64x32xf32> to vector<2x8x8x32xf32>
    %c0_208 = arith.constant 0 : index
    %c1_209 = arith.constant 1 : index
    %c1_210 = arith.constant 1 : index
    %c0_211 = arith.constant 0 : index
    %275 = vector.load %arg28[%c0_208, %c1_209, %c1_210, %c0_211] : memref<2x10x10x32xf32, #tpu.memory_space<vmem>>, vector<2x8x8x32xf32>
    tpu.vector_store %arg28[%c0_208, %c1_209, %c1_210, %c0_211], %274 {strides = array<i32>} : memref<2x10x10x32xf32, #tpu.memory_space<vmem>>, vector<2x8x8x32xf32>,
    %c0_212 = arith.constant 0 : index
    %c0_213 = arith.constant 0 : index
    %c0_214 = arith.constant 0 : index
    %c0_215 = arith.constant 0 : index
    %276 = vector.load %arg28[%c0_212, %c0_213, %c0_214, %c0_215] : memref<2x10x10x32xf32, #tpu.memory_space<vmem>>, vector<2x8x8x32xf32>
    %c0_216 = arith.constant 0 : index
    %c0_217 = arith.constant 0 : index
    %c1_218 = arith.constant 1 : index
    %c0_219 = arith.constant 0 : index
    %277 = vector.load %arg28[%c0_216, %c0_217, %c1_218, %c0_219] : memref<2x10x10x32xf32, #tpu.memory_space<vmem>>, vector<2x8x8x32xf32>
    %c0_220 = arith.constant 0 : index
    %c0_221 = arith.constant 0 : index
    %c2_222 = arith.constant 2 : index
    %c0_223 = arith.constant 0 : index
    %278 = vector.load %arg28[%c0_220, %c0_221, %c2_222, %c0_223] : memref<2x10x10x32xf32, #tpu.memory_space<vmem>>, vector<2x8x8x32xf32>
    %c0_224 = arith.constant 0 : index
    %c1_225 = arith.constant 1 : index
    %c0_226 = arith.constant 0 : index
    %c0_227 = arith.constant 0 : index
    %279 = vector.load %arg28[%c0_224, %c1_225, %c0_226, %c0_227] : memref<2x10x10x32xf32, #tpu.memory_space<vmem>>, vector<2x8x8x32xf32>
    %c0_228 = arith.constant 0 : index
    %c1_229 = arith.constant 1 : index
    %c1_230 = arith.constant 1 : index
    %c0_231 = arith.constant 0 : index
    %280 = vector.load %arg28[%c0_228, %c1_229, %c1_230, %c0_231] : memref<2x10x10x32xf32, #tpu.memory_space<vmem>>, vector<2x8x8x32xf32>
    %c0_232 = arith.constant 0 : index
    %c1_233 = arith.constant 1 : index
    %c2_234 = arith.constant 2 : index
    %c0_235 = arith.constant 0 : index
    %281 = vector.load %arg28[%c0_232, %c1_233, %c2_234, %c0_235] : memref<2x10x10x32xf32, #tpu.memory_space<vmem>>, vector<2x8x8x32xf32>
    %c0_236 = arith.constant 0 : index
    %c2_237 = arith.constant 2 : index
    %c0_238 = arith.constant 0 : index
    %c0_239 = arith.constant 0 : index
    %282 = vector.load %arg28[%c0_236, %c2_237, %c0_238, %c0_239] : memref<2x10x10x32xf32, #tpu.memory_space<vmem>>, vector<2x8x8x32xf32>
    %c0_240 = arith.constant 0 : index
    %c2_241 = arith.constant 2 : index
    %c1_242 = arith.constant 1 : index
    %c0_243 = arith.constant 0 : index
    %283 = vector.load %arg28[%c0_240, %c2_241, %c1_242, %c0_243] : memref<2x10x10x32xf32, #tpu.memory_space<vmem>>, vector<2x8x8x32xf32>
    %c0_244 = arith.constant 0 : index
    %c2_245 = arith.constant 2 : index
    %c2_246 = arith.constant 2 : index
    %c0_247 = arith.constant 0 : index
    %284 = vector.load %arg28[%c0_244, %c2_245, %c2_246, %c0_247] : memref<2x10x10x32xf32, #tpu.memory_space<vmem>>, vector<2x8x8x32xf32>
    %285 = tpu.concatenate %276, %277, %278, %279, %280, %281, %282, %283, %284 in 3 : vector<2x8x8x32xf32>, vector<2x8x8x32xf32>, vector<2x8x8x32xf32>, vector<2x8x8x32xf32>, vector<2x8x8x32xf32>, vector<2x8x8x32xf32>, vector<2x8x8x32xf32>, vector<2x8x8x32xf32>, vector<2x8x8x32xf32> -> vector<2x8x8x288xf32>
    %286 = vector.shape_cast %285 : vector<2x8x8x288xf32> to vector<128x288xf32>
    %c0_248 = arith.constant 0 : index
    %c0_249 = arith.constant 0 : index
    %287 = vector.load %arg25[%c0_248, %c0_249] : memref<288x32xf32, #tpu.memory_space<vmem>>, vector<288x32xf32>
    %cst_250 = arith.constant dense<0.000000e+00> : vector<128x32xf32>
    %288 = tpu.matmul %286, %287, %cst_250 {dimension_numbers = #tpu.dot_dimension_numbers<[1], [0], [0], [1], [0, 0, 1, 1], [], []>} : vector<128x288xf32>, vector<288x32xf32>, vector<128x32xf32> -> vector<128x32xf32>
    %c0_251 = arith.constant 0 : index
    %c0_252 = arith.constant 0 : index
    %289 = vector.load %arg26[%c0_251, %c0_252] : memref<1x32xf32, #tpu.memory_space<vmem>>, vector<1x32xf32>
    %290 = vector.shape_cast %289 : vector<1x32xf32> to vector<32xf32>
    %291 = vector.shape_cast %290 : vector<32xf32> to vector<1x32xf32>
    %292 = vector.broadcast %291 : vector<1x32xf32> to vector<128x32xf32>
    %293 = arith.addf %288, %292 : vector<128x32xf32>
    %294 = vector.shape_cast %293 : vector<128x32xf32> to vector<2x8x8x32xf32>
    %295 = arith.addf %294, %179 : vector<2x8x8x32xf32>
    %c0_253 = arith.constant 0 : index
    %c0_254 = arith.constant 0 : index
    %c0_255 = arith.constant 0 : index
    %c0_256 = arith.constant 0 : index
    %296 = vector.load %arg27[%c0_253, %c0_254, %c0_255, %c0_256] : memref<2x8x8x32xf32, #tpu.memory_space<vmem>>, vector<2x8x8x32xf32>
    tpu.vector_store %arg27[%c0_253, %c0_254, %c0_255, %c0_256], %295 {strides = array<i32>} : memref<2x8x8x32xf32, #tpu.memory_space<vmem>>, vector<2x8x8x32xf32>,
    return
  }
  func.func @transform_0(%arg0: i32) -> (i32, i32, i32, i32) {
    %c0_i32 = arith.constant 0 : i32
    %c0_i32_0 = arith.constant 0 : i32
    %c0_i32_1 = arith.constant 0 : i32
    %c0_i32_2 = arith.constant 0 : i32
    %c0_i32_3 = arith.constant 0 : i32
    return %c0_i32, %c0_i32_0, %c0_i32_1, %c0_i32_2 : i32, i32, i32, i32
  }
  func.func @transform_1(%arg0: i32) -> (i32, i32) {
    %c0_i32 = arith.constant 0 : i32
    %c0_i32_0 = arith.constant 0 : i32
    %c0_i32_1 = arith.constant 0 : i32
    return %c0_i32, %c0_i32_0 : i32, i32
  }
  func.func @transform_2(%arg0: i32) -> (i32, i32) {
    %c0_i32 = arith.constant 0 : i32
    %c0_i32_0 = arith.constant 0 : i32
    %c0_i32_1 = arith.constant 0 : i32
    return %c0_i32, %c0_i32_0 : i32, i32
  }
  func.func @transform_3(%arg0: i32) -> (i32, i32) {
    %c0_i32 = arith.constant 0 : i32
    %c0_i32_0 = arith.constant 0 : i32
    %c0_i32_1 = arith.constant 0 : i32
    return %c0_i32, %c0_i32_0 : i32, i32
  }
  func.func @transform_4(%arg0: i32) -> (i32, i32) {
    %c0_i32 = arith.constant 0 : i32
    %c0_i32_0 = arith.constant 0 : i32
    %c0_i32_1 = arith.constant 0 : i32
    return %c0_i32, %c0_i32_0 : i32, i32
  }
  func.func @transform_5(%arg0: i32) -> (i32, i32) {
    %c0_i32 = arith.constant 0 : i32
    %c0_i32_0 = arith.constant 0 : i32
    %c0_i32_1 = arith.constant 0 : i32
    return %c0_i32, %c0_i32_0 : i32, i32
  }
  func.func @transform_6(%arg0: i32) -> (i32, i32) {
    %c0_i32 = arith.constant 0 : i32
    %c0_i32_0 = arith.constant 0 : i32
    %c0_i32_1 = arith.constant 0 : i32
    return %c0_i32, %c0_i32_0 : i32, i32
  }
  func.func @transform_7(%arg0: i32) -> (i32, i32) {
    %c0_i32 = arith.constant 0 : i32
    %c0_i32_0 = arith.constant 0 : i32
    %c0_i32_1 = arith.constant 0 : i32
    return %c0_i32, %c0_i32_0 : i32, i32
  }
  func.func @transform_8(%arg0: i32) -> (i32, i32) {
    %c0_i32 = arith.constant 0 : i32
    %c0_i32_0 = arith.constant 0 : i32
    %c0_i32_1 = arith.constant 0 : i32
    return %c0_i32, %c0_i32_0 : i32, i32
  }
  func.func @transform_9(%arg0: i32) -> (i32, i32) {
    %c0_i32 = arith.constant 0 : i32
    %c0_i32_0 = arith.constant 0 : i32
    %c0_i32_1 = arith.constant 0 : i32
    return %c0_i32, %c0_i32_0 : i32, i32
  }
  func.func @transform_10(%arg0: i32) -> (i32, i32) {
    %c0_i32 = arith.constant 0 : i32
    %c0_i32_0 = arith.constant 0 : i32
    %c0_i32_1 = arith.constant 0 : i32
    return %c0_i32, %c0_i32_0 : i32, i32
  }
  func.func @transform_11(%arg0: i32) -> (i32, i32) {
    %c0_i32 = arith.constant 0 : i32
    %c0_i32_0 = arith.constant 0 : i32
    %c0_i32_1 = arith.constant 0 : i32
    return %c0_i32, %c0_i32_0 : i32, i32
  }
  func.func @transform_12(%arg0: i32) -> (i32, i32) {
    %c0_i32 = arith.constant 0 : i32
    %c0_i32_0 = arith.constant 0 : i32
    %c0_i32_1 = arith.constant 0 : i32
    return %c0_i32, %c0_i32_0 : i32, i32
  }
  func.func @transform_13(%arg0: i32) -> (i32, i32) {
    %c0_i32 = arith.constant 0 : i32
    %c0_i32_0 = arith.constant 0 : i32
    %c0_i32_1 = arith.constant 0 : i32
    return %c0_i32, %c0_i32_0 : i32, i32
  }
  func.func @transform_14(%arg0: i32) -> (i32, i32) {
    %c0_i32 = arith.constant 0 : i32
    %c0_i32_0 = arith.constant 0 : i32
    %c0_i32_1 = arith.constant 0 : i32
    return %c0_i32, %c0_i32_0 : i32, i32
  }
  func.func @transform_15(%arg0: i32) -> (i32, i32) {
    %c0_i32 = arith.constant 0 : i32
    %c0_i32_0 = arith.constant 0 : i32
    %c0_i32_1 = arith.constant 0 : i32
    return %c0_i32, %c0_i32_0 : i32, i32
  }
  func.func @transform_16(%arg0: i32) -> (i32, i32) {
    %c0_i32 = arith.constant 0 : i32
    %c0_i32_0 = arith.constant 0 : i32
    %c0_i32_1 = arith.constant 0 : i32
    return %c0_i32, %c0_i32_0 : i32, i32
  }
  func.func @transform_17(%arg0: i32) -> (i32, i32) {
    %c0_i32 = arith.constant 0 : i32
    %c0_i32_0 = arith.constant 0 : i32
    %c0_i32_1 = arith.constant 0 : i32
    return %c0_i32, %c0_i32_0 : i32, i32
  }
  func.func @transform_18(%arg0: i32) -> (i32, i32) {
    %c0_i32 = arith.constant 0 : i32
    %c0_i32_0 = arith.constant 0 : i32
    %c0_i32_1 = arith.constant 0 : i32
    return %c0_i32, %c0_i32_0 : i32, i32
  }
  func.func @transform_19(%arg0: i32) -> (i32, i32) {
    %c0_i32 = arith.constant 0 : i32
    %c0_i32_0 = arith.constant 0 : i32
    %c0_i32_1 = arith.constant 0 : i32
    return %c0_i32, %c0_i32_0 : i32, i32
  }
  func.func @transform_20(%arg0: i32) -> (i32, i32) {
    %c0_i32 = arith.constant 0 : i32
    %c0_i32_0 = arith.constant 0 : i32
    %c0_i32_1 = arith.constant 0 : i32
    return %c0_i32, %c0_i32_0 : i32, i32
  }
  func.func @transform_21(%arg0: i32) -> (i32, i32) {
    %c0_i32 = arith.constant 0 : i32
    %c0_i32_0 = arith.constant 0 : i32
    %c0_i32_1 = arith.constant 0 : i32
    return %c0_i32, %c0_i32_0 : i32, i32
  }
  func.func @transform_22(%arg0: i32) -> (i32, i32) {
    %c0_i32 = arith.constant 0 : i32
    %c0_i32_0 = arith.constant 0 : i32
    %c0_i32_1 = arith.constant 0 : i32
    return %c0_i32, %c0_i32_0 : i32, i32
  }
  func.func @transform_23(%arg0: i32) -> (i32, i32) {
    %c0_i32 = arith.constant 0 : i32
    %c0_i32_0 = arith.constant 0 : i32
    %c0_i32_1 = arith.constant 0 : i32
    return %c0_i32, %c0_i32_0 : i32, i32
  }
  func.func @transform_24(%arg0: i32) -> (i32, i32) {
    %c0_i32 = arith.constant 0 : i32
    %c0_i32_0 = arith.constant 0 : i32
    %c0_i32_1 = arith.constant 0 : i32
    return %c0_i32, %c0_i32_0 : i32, i32
  }
  func.func @transform_25(%arg0: i32) -> (i32, i32) {
    %c0_i32 = arith.constant 0 : i32
    %c0_i32_0 = arith.constant 0 : i32
    %c0_i32_1 = arith.constant 0 : i32
    return %c0_i32, %c0_i32_0 : i32, i32
  }
  func.func @transform_26(%arg0: i32) -> (i32, i32, i32, i32) {
    %c0_i32 = arith.constant 0 : i32
    %c0_i32_0 = arith.constant 0 : i32
    %c0_i32_1 = arith.constant 0 : i32
    %c0_i32_2 = arith.constant 0 : i32
    %c0_i32_3 = arith.constant 0 : i32
    return %c0_i32, %c0_i32_0, %c0_i32_1, %c0_i32_2 : i32, i32, i32, i32
  }
}

</mosaic_0001>

<llo_original>
// kernel: middle_block.1
$region0: #{middle_block.1}
  #allocation0 [shape = 'u32[]', space=smem, size = 0x4, offset = 0x4, fixed_abs, tag = 'smem constant byte address 0x4 - core index']
  #allocation1 [shape = 'u32[144,128]{1,0:T(1,128)}', space=vmem, size = 0x12000, scoped, tag = 'internal scratch']
  #allocation2 [shape = 'f32[2,10,10,32]{3,2,1,0:T(8,128)}', space=vmem, size = 0x28000, scoped, tag = 'scratch operand']
  %s0 = inlined_call_operand.hbm [shape: f32[2,8,8,32], index: 0, kind: input, shape index: {}]
  %s1 = inlined_call_operand.vmem [shape: f32[2,16], index: 1, kind: input, shape index: {}]
  %s2 = inlined_call_operand.vmem [shape: f32[1,32], index: 2, kind: input, shape index: {}]
  %s3 = inlined_call_operand.vmem [shape: f32[1,32], index: 3, kind: input, shape index: {}]
  %s4 = inlined_call_operand.hbm [shape: f32[288,32], index: 4, kind: input, shape index: {}]
  %s5 = inlined_call_operand.vmem [shape: f32[1,32], index: 5, kind: input, shape index: {}]
  %s6 = inlined_call_operand.vmem [shape: f32[16,32], index: 6, kind: input, shape index: {}]
  %s7 = inlined_call_operand.vmem [shape: f32[1,32], index: 7, kind: input, shape index: {}]
  %s8 = inlined_call_operand.vmem [shape: f32[1,32], index: 8, kind: input, shape index: {}]
  %s9 = inlined_call_operand.vmem [shape: f32[1,32], index: 9, kind: input, shape index: {}]
  %s10 = inlined_call_operand.hbm [shape: f32[288,32], index: 10, kind: input, shape index: {}]
  %s11 = inlined_call_operand.vmem [shape: f32[1,32], index: 11, kind: input, shape index: {}]
  %s12 = inlined_call_operand.vmem [shape: f32[32,96], index: 12, kind: input, shape index: {}]
  %s13 = inlined_call_operand.hbm [shape: f32[1,96], index: 13, kind: input, shape index: {}]
  %s14 = inlined_call_operand.vmem [shape: f32[32,32], index: 14, kind: input, shape index: {}]
  %s15 = inlined_call_operand.hbm [shape: f32[1,32], index: 15, kind: input, shape index: {}]
  %s16 = inlined_call_operand.vmem [shape: f32[1,32], index: 16, kind: input, shape index: {}]
  %s17 = inlined_call_operand.vmem [shape: f32[1,32], index: 17, kind: input, shape index: {}]
  %s18 = inlined_call_operand.hbm [shape: f32[288,32], index: 18, kind: input, shape index: {}]
  %s19 = inlined_call_operand.vmem [shape: f32[1,32], index: 19, kind: input, shape index: {}]
  %s20 = inlined_call_operand.vmem [shape: f32[16,32], index: 20, kind: input, shape index: {}]
  %s21 = inlined_call_operand.vmem [shape: f32[1,32], index: 21, kind: input, shape index: {}]
  %s22 = inlined_call_operand.vmem [shape: f32[1,32], index: 22, kind: input, shape index: {}]
  %s23 = inlined_call_operand.vmem [shape: f32[1,32], index: 23, kind: input, shape index: {}]
  %s24 = inlined_call_operand.hbm [shape: f32[288,32], index: 24, kind: input, shape index: {}]
  %s25 = inlined_call_operand.vmem [shape: f32[1,32], index: 25, kind: input, shape index: {}]
  %s26 = inlined_call_operand.hbm [shape: f32[2,8,8,32], index: 26, kind: output, shape index: {}]
  %s27 = sld [smem:[#allocation0]]
  $region142: #{middle_block.1} parent=0
    _
  %s29 = ssub.s32 1, %s27
  %s30 = scalar_select 0, %s29, %s27
  $region1: #{middle_block.1} parent=0
    #allocation3 [shape = 'u8[65536]{0}', space=vmem, size = 0x10000, scoped, tag = 'input window, operand 0, single buffered']
    #allocation4 [shape = 's32[1]{0}', space=sflag, size = 0x4, scoped, tag = 'scoped memory for middle_block.1']
    #allocation5 [shape = 's32[1]{0}', space=sflag, size = 0x4, scoped, tag = 'scoped memory for middle_block.1']
    #allocation6 [shape = 'u8[147456]{0}', space=vmem, size = 0x24000, scoped, tag = 'input window, operand 4, single buffered']
    #allocation7 [shape = 's32[1]{0}', space=sflag, size = 0x4, scoped, tag = 'scoped memory for middle_block.1']
    #allocation8 [shape = 'u8[147456]{0}', space=vmem, size = 0x24000, scoped, tag = 'input window, operand 10, single buffered']
    #allocation9 [shape = 'u8[512]{0}', space=vmem, size = 0x400, scoped, tag = 'input window, operand 13, single buffered']
    #allocation10 [shape = 's32[1]{0}', space=sflag, size = 0x4, scoped, tag = 'scoped memory for middle_block.1']
    #allocation11 [shape = 'u8[512]{0}', space=vmem, size = 0x400, scoped, tag = 'input window, operand 15, single buffered']
    #allocation12 [shape = 'u8[147456]{0}', space=vmem, size = 0x24000, scoped, tag = 'input window, operand 18, single buffered']
    #allocation13 [shape = 's32[1]{0}', space=sflag, size = 0x4, scoped, tag = 'scoped memory for middle_block.1']
    #allocation14 [shape = 'u8[147456]{0}', space=vmem, size = 0x24000, scoped, tag = 'input window, operand 24, single buffered']
    #allocation15 [shape = 'u8[65536]{0}', space=vmem, size = 0x10000, scoped, tag = 'output window, operand 0, single buffered']
    %31 = vsyncpa [#allocation4], 0
    %32 = vsyncpa [#allocation7], 0
    %33 = vsyncpa [#allocation10], 0
    %34 = vsyncpa [#allocation13], 0
    %35 = vsyncpa [#allocation5], 0
    // Predicated region
    $region2: #{middle_block.1} parent=1 // pred_check
      _
    $region3: #{middle_block.1} parent=1 // pred_check_branch
      %37 = sbr.rel (0) target = $region5
    $region4: #{middle_block.1} parent=1 // pred_region
      %s39 = ssub.s32 2048, 2048
      %40 = vsyncadd [#allocation4], %s39
      %s41 = sshll.u32 [#allocation3], 4
      %s42 = int_to_ptr.vmem [resolvable:$true] %s41
      %47 = dma.hbm_to_vmem [thread:$0]  %s0, 2048, %s42, [#allocation4], 128, 128, 8
    $region5: #{middle_block.1} parent=1 // pred_fallthru
      _
    // Predicated region
    $region6: #{middle_block.1} parent=1 // pred_check
      _
    $region7: #{middle_block.1} parent=1 // pred_check_branch
      %49 = sbr.rel (0) target = $region9
    $region8: #{middle_block.1} parent=1 // pred_region
      _
    $region9: #{middle_block.1} parent=1 // pred_fallthru
      _
    // Predicated region
    $region10: #{middle_block.1} parent=1 // pred_check
      _
    $region11: #{middle_block.1} parent=1 // pred_check_branch
      %51 = sbr.rel (0) target = $region13
    $region12: #{middle_block.1} parent=1 // pred_region
      _
    $region13: #{middle_block.1} parent=1 // pred_fallthru
      _
    // Predicated region
    $region14: #{middle_block.1} parent=1 // pred_check
      _
    $region15: #{middle_block.1} parent=1 // pred_check_branch
      %53 = sbr.rel (0) target = $region17
    $region16: #{middle_block.1} parent=1 // pred_region
      _
    $region17: #{middle_block.1} parent=1 // pred_fallthru
      _
    // Predicated region
    $region18: #{middle_block.1} parent=1 // pred_check
      _
    $region19: #{middle_block.1} parent=1 // pred_check_branch
      %55 = sbr.rel (0) target = $region21
    $region20: #{middle_block.1} parent=1 // pred_region
      %s57 = ssub.s32 4608, 4608
      %58 = vsyncadd [#allocation7], %s57
      %s59 = sshll.u32 [#allocation6], 4
      %s60 = int_to_ptr.vmem [resolvable:$true] %s59
      %65 = dma.hbm_to_vmem [thread:$0]  %s4, 4608, %s60, [#allocation7], 128, 128, 8
    $region21: #{middle_block.1} parent=1 // pred_fallthru
      _
    // Predicated region
    $region22: #{middle_block.1} parent=1 // pred_check
      _
    $region23: #{middle_block.1} parent=1 // pred_check_branch
      %67 = sbr.rel (0) target = $region25
    $region24: #{middle_block.1} parent=1 // pred_region
      _
    $region25: #{middle_block.1} parent=1 // pred_fallthru
      _
    // Predicated region
    $region26: #{middle_block.1} parent=1 // pred_check
      _
    $region27: #{middle_block.1} parent=1 // pred_check_branch
      %69 = sbr.rel (0) target = $region29
    $region28: #{middle_block.1} parent=1 // pred_region
      _
    $region29: #{middle_block.1} parent=1 // pred_fallthru
      _
    // Predicated region
    $region30: #{middle_block.1} parent=1 // pred_check
      _
    $region31: #{middle_block.1} parent=1 // pred_check_branch
      %71 = sbr.rel (0) target = $region33
    $region32: #{middle_block.1} parent=1 // pred_region
      _
    $region33: #{middle_block.1} parent=1 // pred_fallthru
      _
    // Predicated region
    $region34: #{middle_block.1} parent=1 // pred_check
      _
    $region35: #{middle_block.1} parent=1 // pred_check_branch
      %73 = sbr.rel (0) target = $region37
    $region36: #{middle_block.1} parent=1 // pred_region
      _
    $region37: #{middle_block.1} parent=1 // pred_fallthru
      _
    // Predicated region
    $region38: #{middle_block.1} parent=1 // pred_check
      _
    $region39: #{middle_block.1} parent=1 // pred_check_branch
      %75 = sbr.rel (0) target = $region41
    $region40: #{middle_block.1} parent=1 // pred_region
      _
    $region41: #{middle_block.1} parent=1 // pred_fallthru
      _
    // Predicated region
    $region42: #{middle_block.1} parent=1 // pred_check
      _
    $region43: #{middle_block.1} parent=1 // pred_check_branch
      %77 = sbr.rel (0) target = $region45
    $region44: #{middle_block.1} parent=1 // pred_region
      %s79 = ssub.s32 4608, 4608
      %80 = vsyncadd [#allocation7], %s79
      %s81 = sshll.u32 [#allocation8], 4
      %s82 = int_to_ptr.vmem [resolvable:$true] %s81
      %87 = dma.hbm_to_vmem [thread:$0]  %s10, 4608, %s82, [#allocation7], 128, 128, 8
    $region45: #{middle_block.1} parent=1 // pred_fallthru
      _
    // Predicated region
    $region46: #{middle_block.1} parent=1 // pred_check
      _
    $region47: #{middle_block.1} parent=1 // pred_check_branch
      %89 = sbr.rel (0) target = $region49
    $region48: #{middle_block.1} parent=1 // pred_region
      _
    $region49: #{middle_block.1} parent=1 // pred_fallthru
      _
    // Predicated region
    $region50: #{middle_block.1} parent=1 // pred_check
      _
    $region51: #{middle_block.1} parent=1 // pred_check_branch
      %91 = sbr.rel (0) target = $region53
    $region52: #{middle_block.1} parent=1 // pred_region
      _
    $region53: #{middle_block.1} parent=1 // pred_fallthru
      _
    // Predicated region
    $region54: #{middle_block.1} parent=1 // pred_check
      _
    $region55: #{middle_block.1} parent=1 // pred_check_branch
      %93 = sbr.rel (0) target = $region57
    $region56: #{middle_block.1} parent=1 // pred_region
      %s95 = ssub.s32 16, 16
      %96 = vsyncadd [#allocation10], %s95
      %s98 = sshll.u32 [#allocation9], 4
      %s99 = int_to_ptr.vmem [resolvable:$true] %s98
      %101 = dma.hbm_to_vmem [thread:$0]  %s13, 16, %s99, [#allocation10]
    $region57: #{middle_block.1} parent=1 // pred_fallthru
      _
    // Predicated region
    $region58: #{middle_block.1} parent=1 // pred_check
      _
    $region59: #{middle_block.1} parent=1 // pred_check_branch
      %103 = sbr.rel (0) target = $region61
    $region60: #{middle_block.1} parent=1 // pred_region
      _
    $region61: #{middle_block.1} parent=1 // pred_fallthru
      _
    // Predicated region
    $region62: #{middle_block.1} parent=1 // pred_check
      _
    $region63: #{middle_block.1} parent=1 // pred_check_branch
      %105 = sbr.rel (0) target = $region65
    $region64: #{middle_block.1} parent=1 // pred_region
      %s107 = ssub.s32 16, 16
      %108 = vsyncadd [#allocation10], %s107
      %s110 = sshll.u32 [#allocation11], 4
      %s111 = int_to_ptr.vmem [resolvable:$true] %s110
      %113 = dma.hbm_to_vmem [thread:$0]  %s15, 16, %s111, [#allocation10]
    $region65: #{middle_block.1} parent=1 // pred_fallthru
      _
    // Predicated region
    $region66: #{middle_block.1} parent=1 // pred_check
      _
    $region67: #{middle_block.1} parent=1 // pred_check_branch
      %115 = sbr.rel (0) target = $region69
    $region68: #{middle_block.1} parent=1 // pred_region
      _
    $region69: #{middle_block.1} parent=1 // pred_fallthru
      _
    // Predicated region
    $region70: #{middle_block.1} parent=1 // pred_check
      _
    $region71: #{middle_block.1} parent=1 // pred_check_branch
      %117 = sbr.rel (0) target = $region73
    $region72: #{middle_block.1} parent=1 // pred_region
      _
    $region73: #{middle_block.1} parent=1 // pred_fallthru
      _
    // Predicated region
    $region74: #{middle_block.1} parent=1 // pred_check
      _
    $region75: #{middle_block.1} parent=1 // pred_check_branch
      %119 = sbr.rel (0) target = $region77
    $region76: #{middle_block.1} parent=1 // pred_region
      %s121 = ssub.s32 4608, 4608
      %122 = vsyncadd [#allocation13], %s121
      %s123 = sshll.u32 [#allocation12], 4
      %s124 = int_to_ptr.vmem [resolvable:$true] %s123
      %129 = dma.hbm_to_vmem [thread:$0]  %s18, 4608, %s124, [#allocation13], 128, 128, 8
    $region77: #{middle_block.1} parent=1 // pred_fallthru
      _
    // Predicated region
    $region78: #{middle_block.1} parent=1 // pred_check
      _
    $region79: #{middle_block.1} parent=1 // pred_check_branch
      %131 = sbr.rel (0) target = $region81
    $region80: #{middle_block.1} parent=1 // pred_region
      _
    $region81: #{middle_block.1} parent=1 // pred_fallthru
      _
    // Predicated region
    $region82: #{middle_block.1} parent=1 // pred_check
      _
    $region83: #{middle_block.1} parent=1 // pred_check_branch
      %133 = sbr.rel (0) target = $region85
    $region84: #{middle_block.1} parent=1 // pred_region
      _
    $region85: #{middle_block.1} parent=1 // pred_fallthru
      _
    // Predicated region
    $region86: #{middle_block.1} parent=1 // pred_check
      _
    $region87: #{middle_block.1} parent=1 // pred_check_branch
      %135 = sbr.rel (0) target = $region89
    $region88: #{middle_block.1} parent=1 // pred_region
      _
    $region89: #{middle_block.1} parent=1 // pred_fallthru
      _
    // Predicated region
    $region90: #{middle_block.1} parent=1 // pred_check
      _
    $region91: #{middle_block.1} parent=1 // pred_check_branch
      %137 = sbr.rel (0) target = $region93
    $region92: #{middle_block.1} parent=1 // pred_region
      _
    $region93: #{middle_block.1} parent=1 // pred_fallthru
      _
    // Predicated region
    $region94: #{middle_block.1} parent=1 // pred_check
      _
    $region95: #{middle_block.1} parent=1 // pred_check_branch
      %139 = sbr.rel (0) target = $region97
    $region96: #{middle_block.1} parent=1 // pred_region
      _
    $region97: #{middle_block.1} parent=1 // pred_fallthru
      _
    // Predicated region
    $region98: #{middle_block.1} parent=1 // pred_check
      _
    $region99: #{middle_block.1} parent=1 // pred_check_branch
      %141 = sbr.rel (0) target = $region101
    $region100: #{middle_block.1} parent=1 // pred_region
      %s143 = ssub.s32 4608, 4608
      %144 = vsyncadd [#allocation13], %s143
      %s145 = sshll.u32 [#allocation14], 4
      %s146 = int_to_ptr.vmem [resolvable:$true] %s145
      %151 = dma.hbm_to_vmem [thread:$0]  %s24, 4608, %s146, [#allocation13], 128, 128, 8
    $region101: #{middle_block.1} parent=1 // pred_fallthru
      _
    // Predicated region
    $region102: #{middle_block.1} parent=1 // pred_check
      _
    $region103: #{middle_block.1} parent=1 // pred_check_branch
      %153 = sbr.rel (0) target = $region105
    $region104: #{middle_block.1} parent=1 // pred_region
      _
    $region105: #{middle_block.1} parent=1 // pred_fallthru
      _
    // Predicated region
    $region106: #{middle_block.1} parent=1 // pred_check
      _
    $region107: #{middle_block.1} parent=1 // pred_check_branch
      %155 = sbr.rel (0) target = $region109
    $region108: #{middle_block.1} parent=1 // pred_region
      %156 = dma.done [#allocation4], 2048
    $region109: #{middle_block.1} parent=1 // pred_fallthru
      _
    // Predicated region
    $region110: #{middle_block.1} parent=1 // pred_check
      _
    $region111: #{middle_block.1} parent=1 // pred_check_branch
      %158 = sbr.rel (0) target = $region113
    $region112: #{middle_block.1} parent=1 // pred_region
      %159 = dma.done [#allocation7], 4608
    $region113: #{middle_block.1} parent=1 // pred_fallthru
      _
    // Predicated region
    $region114: #{middle_block.1} parent=1 // pred_check
      _
    $region115: #{middle_block.1} parent=1 // pred_check_branch
      %161 = sbr.rel (0) target = $region117
    $region116: #{middle_block.1} parent=1 // pred_region
      %162 = dma.done [#allocation7], 4608
    $region117: #{middle_block.1} parent=1 // pred_fallthru
      _
    // Predicated region
    $region118: #{middle_block.1} parent=1 // pred_check
      _
    $region119: #{middle_block.1} parent=1 // pred_check_branch
      %164 = sbr.rel (0) target = $region121
    $region120: #{middle_block.1} parent=1 // pred_region
      %165 = dma.done [#allocation10], 16
    $region121: #{middle_block.1} parent=1 // pred_fallthru
      _
    // Predicated region
    $region122: #{middle_block.1} parent=1 // pred_check
      _
    $region123: #{middle_block.1} parent=1 // pred_check_branch
      %167 = sbr.rel (0) target = $region125
    $region124: #{middle_block.1} parent=1 // pred_region
      %168 = dma.done [#allocation10], 16
    $region125: #{middle_block.1} parent=1 // pred_fallthru
      _
    // Predicated region
    $region126: #{middle_block.1} parent=1 // pred_check
      _
    $region127: #{middle_block.1} parent=1 // pred_check_branch
      %170 = sbr.rel (0) target = $region129
    $region128: #{middle_block.1} parent=1 // pred_region
      %171 = dma.done [#allocation13], 4608
    $region129: #{middle_block.1} parent=1 // pred_fallthru
      _
    // Predicated region
    $region130: #{middle_block.1} parent=1 // pred_check
      _
    $region131: #{middle_block.1} parent=1 // pred_check_branch
      %173 = sbr.rel (0) target = $region133
    $region132: #{middle_block.1} parent=1 // pred_region
      %174 = dma.done [#allocation13], 4608
    $region133: #{middle_block.1} parent=1 // pred_fallthru
      _
    %vm175 = vcmask 261120
    %176 = vst.msk [vmem:[#allocation2] sm:$0xff] %vm175, 0.0
    %vm177 = vcmask 254976
    %178 = vst.msk [vmem:[#allocation2 + $0x8] sm:$0x3] %vm177, 0.0
    %179 = vst.msk [vmem:[#allocation2 + $0x10] sm:$0xff] %vm175, 0.0
    %180 = vst.msk [vmem:[#allocation2 + $0x18] sm:$0x3] %vm177, 0.0
    %181 = vst.msk [vmem:[#allocation2 + $0x20] sm:$0xff] %vm175, 0.0
    %182 = vst.msk [vmem:[#allocation2 + $0x28] sm:$0x3] %vm177, 0.0
    %183 = vst.msk [vmem:[#allocation2 + $0x30] sm:$0xff] %vm175, 0.0
    %184 = vst.msk [vmem:[#allocation2 + $0x38] sm:$0x3] %vm177, 0.0
    %185 = vst.msk [vmem:[#allocation2 + $0x40] sm:$0xff] %vm175, 0.0
    %186 = vst.msk [vmem:[#allocation2 + $0x48] sm:$0x3] %vm177, 0.0
    %187 = vst.msk [vmem:[#allocation2 + $0x50] sm:$0xff] %vm175, 0.0
    %188 = vst.msk [vmem:[#allocation2 + $0x58] sm:$0x3] %vm177, 0.0
    %189 = vst.msk [vmem:[#allocation2 + $0x60] sm:$0xff] %vm175, 0.0
    %190 = vst.msk [vmem:[#allocation2 + $0x68] sm:$0x3] %vm177, 0.0
    %191 = vst.msk [vmem:[#allocation2 + $0x70] sm:$0xff] %vm175, 0.0
    %192 = vst.msk [vmem:[#allocation2 + $0x78] sm:$0x3] %vm177, 0.0
    %193 = vst.msk [vmem:[#allocation2 + $0x80] sm:$0xff] %vm175, 0.0
    %194 = vst.msk [vmem:[#allocation2 + $0x88] sm:$0x3] %vm177, 0.0
    %195 = vst.msk [vmem:[#allocation2 + $0x90] sm:$0xff] %vm175, 0.0
    %196 = vst.msk [vmem:[#allocation2 + $0x98] sm:$0x3] %vm177, 0.0
    %197 = vst.msk [vmem:[#allocation2 + $0xa0] sm:$0xff] %vm175, 0.0
    %198 = vst.msk [vmem:[#allocation2 + $0xa8] sm:$0x3] %vm177, 0.0
    %199 = vst.msk [vmem:[#allocation2 + $0xb0] sm:$0xff] %vm175, 0.0
    %200 = vst.msk [vmem:[#allocation2 + $0xb8] sm:$0x3] %vm177, 0.0
    %201 = vst.msk [vmem:[#allocation2 + $0xc0] sm:$0xff] %vm175, 0.0
    %202 = vst.msk [vmem:[#allocation2 + $0xc8] sm:$0x3] %vm177, 0.0
    %203 = vst.msk [vmem:[#allocation2 + $0xd0] sm:$0xff] %vm175, 0.0
    %204 = vst.msk [vmem:[#allocation2 + $0xd8] sm:$0x3] %vm177, 0.0
    %205 = vst.msk [vmem:[#allocation2 + $0xe0] sm:$0xff] %vm175, 0.0
    %206 = vst.msk [vmem:[#allocation2 + $0xe8] sm:$0x3] %vm177, 0.0
    %207 = vst.msk [vmem:[#allocation2 + $0xf0] sm:$0xff] %vm175, 0.0
    %208 = vst.msk [vmem:[#allocation2 + $0xf8] sm:$0x3] %vm177, 0.0
    %209 = vst.msk [vmem:[#allocation2 + $0x100] sm:$0xff] %vm175, 0.0
    %210 = vst.msk [vmem:[#allocation2 + $0x108] sm:$0x3] %vm177, 0.0
    %211 = vst.msk [vmem:[#allocation2 + $0x110] sm:$0xff] %vm175, 0.0
    %212 = vst.msk [vmem:[#allocation2 + $0x118] sm:$0x3] %vm177, 0.0
    %213 = vst.msk [vmem:[#allocation2 + $0x120] sm:$0xff] %vm175, 0.0
    %214 = vst.msk [vmem:[#allocation2 + $0x128] sm:$0x3] %vm177, 0.0
    %215 = vst.msk [vmem:[#allocation2 + $0x130] sm:$0xff] %vm175, 0.0
    %216 = vst.msk [vmem:[#allocation2 + $0x138] sm:$0x3] %vm177, 0.0
    %v217 = vld [vmem:[#allocation3] sm:$0xff]
    %v218 = vld [vmem:[#allocation3 + $0x8] sm:$0xff]
    %v219 = vld [vmem:[#allocation3 + $0x10] sm:$0xff]
    %v220 = vld [vmem:[#allocation3 + $0x18] sm:$0xff]
    %v221 = vld [vmem:[#allocation3 + $0x20] sm:$0xff]
    %v222 = vld [vmem:[#allocation3 + $0x28] sm:$0xff]
    %v223 = vld [vmem:[#allocation3 + $0x30] sm:$0xff]
    %v224 = vld [vmem:[#allocation3 + $0x38] sm:$0xff]
    %v225 = vld [vmem:[#allocation3 + $0x40] sm:$0xff]
    %v226 = vld [vmem:[#allocation3 + $0x48] sm:$0xff]
    %v227 = vld [vmem:[#allocation3 + $0x50] sm:$0xff]
    %v228 = vld [vmem:[#allocation3 + $0x58] sm:$0xff]
    %v229 = vld [vmem:[#allocation3 + $0x60] sm:$0xff]
    %v230 = vld [vmem:[#allocation3 + $0x68] sm:$0xff]
    %v231 = vld [vmem:[#allocation3 + $0x70] sm:$0xff]
    %v232 = vld [vmem:[#allocation3 + $0x78] sm:$0xff]
    %v233 = vld [vmem:[%s1] sm:$0x3]
    %v234 = vld [vmem:[%s6] sm:$0xff]
    %v235 = vld [vmem:[%s6 + $0x8] sm:$0xff]
    %v236 = vld [vmem:[%s7] sm:$0x1]
    %v238 = vlaneseq
    %v239 = vshrl.u32 %v238, 7
    %v240 = vsub.s32 0, %v239
    %v241 = vrot.slane %v236, %v240
    %vm243 = vcmask 130048
    %v245 = vsel %vm243, %v233, 0
    %247 = vmatprep.subr.mxu0 0.0
    %248 = vmatpush1.msra.mxu0 %v234
    %249 = vmatprep.subr.mxu0 0.0
    %250 = vmatpush1.msra.mxu0 %v235
    %251 = vmatprep.subr.mxu0 0.0
    %252 = vmatpush1.msra.mxu0 0.0
    %253 = vmatprep.subr.mxu0 0.0
    %254 = vmatpush1.msra.mxu0 0.0
    %255 = vmatprep.subr.mxu0 0.0
    %256 = vmatpush1.msra.mxu0 0.0
    %257 = vmatprep.subr.mxu0 0.0
    %258 = vmatpush1.msra.mxu0 0.0
    %259 = vmatprep.subr.mxu0 0.0
    %260 = vmatpush1.msra.mxu0 0.0
    %261 = vmatprep.subr.mxu0 0.0
    %262 = vmatpush1.msra.mxu0 0.0
    %263 = vmatprep.subr.mxu0 0.0
    %264 = vmatpush1.msra.mxu0 0.0
    %265 = vmatprep.subr.mxu0 0.0
    %266 = vmatpush1.msra.mxu0 0.0
    %267 = vmatprep.subr.mxu0 0.0
    %268 = vmatpush1.msra.mxu0 0.0
    %269 = vmatprep.subr.mxu0 0.0
    %270 = vmatpush1.msra.mxu0 0.0
    %271 = vmatprep.subr.mxu0 0.0
    %272 = vmatpush1.msra.mxu0 0.0
    %273 = vmatprep.subr.mxu0 0.0
    %274 = vmatpush1.msra.mxu0 0.0
    %275 = vmatprep.subr.mxu0 0.0
    %276 = vmatpush1.msra.mxu0 0.0
    %277 = vmatprep.subr.mxu0 0.0
    %278 = vmatpush1.msra.mxu0 0.0
    %279 = vmatprep.subr.mxu0 0.0
    %280 = vmatpush1.msra.mxu0 0.0
    %281 = vmatprep.subr.mxu0 0.0
    %282 = vmatpush1.msra.mxu0 0.0
    %283 = vmatprep.subr.mxu0 0.0
    %284 = vmatpush1.msra.mxu0 0.0
    %285 = vmatprep.subr.mxu0 0.0
    %286 = vmatpush1.msra.mxu0 0.0
    %287 = vmatprep.subr.mxu0 0.0
    %288 = vmatpush1.msra.mxu0 0.0
    %289 = vmatprep.subr.mxu0 0.0
    %290 = vmatpush1.msra.mxu0 0.0
    %291 = vmatprep.subr.mxu0 0.0
    %292 = vmatpush1.msra.mxu0 0.0
    %293 = vmatprep.subr.mxu0 0.0
    %294 = vmatpush1.msra.mxu0 0.0
    %295 = vmatprep.subr.mxu0 0.0
    %296 = vmatpush1.msra.mxu0 0.0
    %297 = vmatprep.subr.mxu0 0.0
    %298 = vmatpush1.msra.mxu0 0.0
    %299 = vmatprep.subr.mxu0 0.0
    %300 = vmatpush1.msra.mxu0 0.0
    %301 = vmatprep.subr.mxu0 0.0
    %302 = vmatpush1.msra.mxu0 0.0
    %303 = vmatprep.subr.mxu0 0.0
    %304 = vmatpush1.msra.mxu0 0.0
    %305 = vmatprep.subr.mxu0 0.0
    %306 = vmatpush1.msra.mxu0 0.0
    %307 = vmatprep.subr.mxu0 0.0
    %308 = vmatpush1.msra.mxu0 0.0
    %309 = vmatprep.subr.mxu0 0.0
    %310 = vmatpush1.msra.mxu0 0.0
    %311 = vmatprep.mubr.f32.mxu0 0.0
    %312 = vmatmul.mubr.f32.gmra.mrb[0].mxu0 %v245
    %v313 = vpop.f32.mrb[0].mxu0
    %v314 = vadd.f32 %v241, %v313
    %v315 = vpop.f32.mrb[0].mxu0
    %316 = vdwg.mxu0
    %v317 = vld [vmem:[%s20] sm:$0xff]
    %v318 = vld [vmem:[%s20 + $0x8] sm:$0xff]
    %v319 = vld [vmem:[%s21] sm:$0x1]
    %v321 = vlaneseq
    %v322 = vshrl.u32 %v321, 7
    %v323 = vsub.s32 0, %v322
    %v324 = vrot.slane %v319, %v323
    %326 = vmatprep.subr.mxu0 0.0
    %327 = vmatpush1.msra.mxu0 %v317
    %328 = vmatprep.subr.mxu0 0.0
    %329 = vmatpush1.msra.mxu0 %v318
    %330 = vmatprep.subr.mxu0 0.0
    %331 = vmatpush1.msra.mxu0 0.0
    %332 = vmatprep.subr.mxu0 0.0
    %333 = vmatpush1.msra.mxu0 0.0
    %334 = vmatprep.subr.mxu0 0.0
    %335 = vmatpush1.msra.mxu0 0.0
    %336 = vmatprep.subr.mxu0 0.0
    %337 = vmatpush1.msra.mxu0 0.0
    %338 = vmatprep.subr.mxu0 0.0
    %339 = vmatpush1.msra.mxu0 0.0
    %340 = vmatprep.subr.mxu0 0.0
    %341 = vmatpush1.msra.mxu0 0.0
    %342 = vmatprep.subr.mxu0 0.0
    %343 = vmatpush1.msra.mxu0 0.0
    %344 = vmatprep.subr.mxu0 0.0
    %345 = vmatpush1.msra.mxu0 0.0
    %346 = vmatprep.subr.mxu0 0.0
    %347 = vmatpush1.msra.mxu0 0.0
    %348 = vmatprep.subr.mxu0 0.0
    %349 = vmatpush1.msra.mxu0 0.0
    %350 = vmatprep.subr.mxu0 0.0
    %351 = vmatpush1.msra.mxu0 0.0
    %352 = vmatprep.subr.mxu0 0.0
    %353 = vmatpush1.msra.mxu0 0.0
    %354 = vmatprep.subr.mxu0 0.0
    %355 = vmatpush1.msra.mxu0 0.0
    %356 = vmatprep.subr.mxu0 0.0
    %357 = vmatpush1.msra.mxu0 0.0
    %358 = vmatprep.subr.mxu0 0.0
    %359 = vmatpush1.msra.mxu0 0.0
    %360 = vmatprep.subr.mxu0 0.0
    %361 = vmatpush1.msra.mxu0 0.0
    %362 = vmatprep.subr.mxu0 0.0
    %363 = vmatpush1.msra.mxu0 0.0
    %364 = vmatprep.subr.mxu0 0.0
    %365 = vmatpush1.msra.mxu0 0.0
    %366 = vmatprep.subr.mxu0 0.0
    %367 = vmatpush1.msra.mxu0 0.0
    %368 = vmatprep.subr.mxu0 0.0
    %369 = vmatpush1.msra.mxu0 0.0
    %370 = vmatprep.subr.mxu0 0.0
    %371 = vmatpush1.msra.mxu0 0.0
    %372 = vmatprep.subr.mxu0 0.0
    %373 = vmatpush1.msra.mxu0 0.0
    %374 = vmatprep.subr.mxu0 0.0
    %375 = vmatpush1.msra.mxu0 0.0
    %376 = vmatprep.subr.mxu0 0.0
    %377 = vmatpush1.msra.mxu0 0.0
    %378 = vmatprep.subr.mxu0 0.0
    %379 = vmatpush1.msra.mxu0 0.0
    %380 = vmatprep.subr.mxu0 0.0
    %381 = vmatpush1.msra.mxu0 0.0
    %382 = vmatprep.subr.mxu0 0.0
    %383 = vmatpush1.msra.mxu0 0.0
    %384 = vmatprep.subr.mxu0 0.0
    %385 = vmatpush1.msra.mxu0 0.0
    %386 = vmatprep.subr.mxu0 0.0
    %387 = vmatpush1.msra.mxu0 0.0
    %388 = vmatprep.subr.mxu0 0.0
    %389 = vmatpush1.msra.mxu0 0.0
    %390 = vmatprep.mubr.f32.mxu0 0.0
    %391 = vmatmul.mubr.f32.gmra.mrb[0].mxu0 %v245
    %v392 = vpop.f32.mrb[0].mxu0
    %v393 = vadd.f32 %v324, %v392
    %v394 = vpop.f32.mrb[0].mxu0
    %395 = vdwg.mxu0
    %v396 = vsel %vm175, %v217, 0.0
    %v397 = vsel %vm175, %v218, 0.0
    %v398 = vadd.f32 %v396, %v397
    %v399 = vsel %vm175, %v219, 0.0
    %v400 = vadd.f32 %v398, %v399
    %v401 = vsel %vm175, %v220, 0.0
    %v402 = vadd.f32 %v400, %v401
    %v403 = vsel %vm175, %v221, 0.0
    %v404 = vadd.f32 %v402, %v403
    %v405 = vsel %vm175, %v222, 0.0
    %v406 = vadd.f32 %v404, %v405
    %v407 = vsel %vm175, %v223, 0.0
    %v408 = vadd.f32 %v406, %v407
    %v409 = vsel %vm175, %v224, 0.0
    %v410 = vadd.f32 %v408, %v409
    %v411 = vrot.slane %v410, 4
    %v412 = vadd.f32 %v410, %v411
    %v413 = vrot.slane %v412, 2
    %v414 = vadd.f32 %v412, %v413
    %v415 = vrot.slane %v414, 1
    %v416 = vadd.f32 %v414, %v415
    %v417 = vsel %vm175, %v225, 0.0
    %v418 = vsel %vm175, %v226, 0.0
    %v419 = vadd.f32 %v417, %v418
    %v420 = vsel %vm175, %v227, 0.0
    %v421 = vadd.f32 %v419, %v420
    %v422 = vsel %vm175, %v228, 0.0
    %v423 = vadd.f32 %v421, %v422
    %v424 = vsel %vm175, %v229, 0.0
    %v425 = vadd.f32 %v423, %v424
    %v426 = vsel %vm175, %v230, 0.0
    %v427 = vadd.f32 %v425, %v426
    %v428 = vsel %vm175, %v231, 0.0
    %v429 = vadd.f32 %v427, %v428
    %v430 = vsel %vm175, %v232, 0.0
    %v431 = vadd.f32 %v429, %v430
    %v432 = vrot.slane %v431, 4
    %v433 = vadd.f32 %v431, %v432
    %v434 = vrot.slane %v433, 2
    %v435 = vadd.f32 %v433, %v434
    %v436 = vrot.slane %v435, 1
    %v437 = vadd.f32 %v435, %v436
    %v438 = vrcp.pop 64.0
    %v439 = vmul.f32 %v416, %v438
    %v440 = vmul.f32 %v437, %v438
    %v441 = vsub.f32 %v217, %v439
    %v442 = vsub.f32 %v218, %v439
    %v443 = vsub.f32 %v219, %v439
    %v444 = vsub.f32 %v220, %v439
    %v445 = vsub.f32 %v221, %v439
    %v446 = vsub.f32 %v222, %v439
    %v447 = vsub.f32 %v223, %v439
    %v448 = vsub.f32 %v224, %v439
    %v449 = vsub.f32 %v225, %v440
    %v450 = vsub.f32 %v226, %v440
    %v451 = vsub.f32 %v227, %v440
    %v452 = vsub.f32 %v228, %v440
    %v453 = vsub.f32 %v229, %v440
    %v454 = vsub.f32 %v230, %v440
    %v455 = vsub.f32 %v231, %v440
    %v456 = vsub.f32 %v232, %v440
    %v457 = vmul.f32 %v441, %v441
    %v458 = vmul.f32 %v442, %v442
    %v459 = vmul.f32 %v443, %v443
    %v460 = vmul.f32 %v444, %v444
    %v461 = vmul.f32 %v445, %v445
    %v462 = vmul.f32 %v446, %v446
    %v463 = vmul.f32 %v447, %v447
    %v464 = vmul.f32 %v448, %v448
    %v465 = vmul.f32 %v449, %v449
    %v466 = vmul.f32 %v450, %v450
    %v467 = vmul.f32 %v451, %v451
    %v468 = vmul.f32 %v452, %v452
    %v469 = vmul.f32 %v453, %v453
    %v470 = vmul.f32 %v454, %v454
    %v471 = vmul.f32 %v455, %v455
    %v472 = vmul.f32 %v456, %v456
    %v473 = vsel %vm175, %v457, 0.0
    %v474 = vsel %vm175, %v458, 0.0
    %v475 = vadd.f32 %v473, %v474
    %v476 = vsel %vm175, %v459, 0.0
    %v477 = vadd.f32 %v475, %v476
    %v478 = vsel %vm175, %v460, 0.0
    %v479 = vadd.f32 %v477, %v478
    %v480 = vsel %vm175, %v461, 0.0
    %v481 = vadd.f32 %v479, %v480
    %v482 = vsel %vm175, %v462, 0.0
    %v483 = vadd.f32 %v481, %v482
    %v484 = vsel %vm175, %v463, 0.0
    %v485 = vadd.f32 %v483, %v484
    %v486 = vsel %vm175, %v464, 0.0
    %v487 = vadd.f32 %v485, %v486
    %v488 = vrot.slane %v487, 4
    %v489 = vadd.f32 %v487, %v488
    %v490 = vrot.slane %v489, 2
    %v491 = vadd.f32 %v489, %v490
    %v492 = vrot.slane %v491, 1
    %v493 = vadd.f32 %v491, %v492
    %v494 = vsel %vm175, %v465, 0.0
    %v495 = vsel %vm175, %v466, 0.0
    %v496 = vadd.f32 %v494, %v495
    %v497 = vsel %vm175, %v467, 0.0
    %v498 = vadd.f32 %v496, %v497
    %v499 = vsel %vm175, %v468, 0.0
    %v500 = vadd.f32 %v498, %v499
    %v501 = vsel %vm175, %v469, 0.0
    %v502 = vadd.f32 %v500, %v501
    %v503 = vsel %vm175, %v470, 0.0
    %v504 = vadd.f32 %v502, %v503
    %v505 = vsel %vm175, %v471, 0.0
    %v506 = vadd.f32 %v504, %v505
    %v507 = vsel %vm175, %v472, 0.0
    %v508 = vadd.f32 %v506, %v507
    %v509 = vrot.slane %v508, 4
    %v510 = vadd.f32 %v508, %v509
    %v511 = vrot.slane %v510, 2
    %v512 = vadd.f32 %v510, %v511
    %v513 = vrot.slane %v512, 1
    %v514 = vadd.f32 %v512, %v513
    %v515 = vmul.f32 %v493, %v438
    %v516 = vmul.f32 %v514, %v438
    %v517 = vadd.f32 %v515, 1e-05
    %v518 = vadd.f32 %v516, 1e-05
    %v519 = vrsqrt.pop %v517
    %v520 = vrsqrt.pop %v518
    %v521 = vmul.f32 %v441, %v519
    %v522 = vmul.f32 %v442, %v519
    %v523 = vmul.f32 %v443, %v519
    %v524 = vmul.f32 %v444, %v519
    %v525 = vmul.f32 %v445, %v519
    %v526 = vmul.f32 %v446, %v519
    %v527 = vmul.f32 %v447, %v519
    %v528 = vmul.f32 %v448, %v519
    %v529 = vmul.f32 %v449, %v520
    %v530 = vmul.f32 %v450, %v520
    %v531 = vmul.f32 %v451, %v520
    %v532 = vmul.f32 %v452, %v520
    %v533 = vmul.f32 %v453, %v520
    %v534 = vmul.f32 %v454, %v520
    %v535 = vmul.f32 %v455, %v520
    %v536 = vmul.f32 %v456, %v520
    %v537 = vld [vmem:[%s2] sm:$0x1]
    %v539 = vlaneseq
    %v540 = vshrl.u32 %v539, 7
    %v541 = vsub.s32 0, %v540
    %v542 = vrot.slane %v537, %v541
    %v544 = vmul.f32 %v521, %v542
    %v545 = vmul.f32 %v522, %v542
    %v546 = vmul.f32 %v523, %v542
    %v547 = vmul.f32 %v524, %v542
    %v548 = vmul.f32 %v525, %v542
    %v549 = vmul.f32 %v526, %v542
    %v550 = vmul.f32 %v527, %v542
    %v551 = vmul.f32 %v528, %v542
    %v552 = vmul.f32 %v529, %v542
    %v553 = vmul.f32 %v530, %v542
    %v554 = vmul.f32 %v531, %v542
    %v555 = vmul.f32 %v532, %v542
    %v556 = vmul.f32 %v533, %v542
    %v557 = vmul.f32 %v534, %v542
    %v558 = vmul.f32 %v535, %v542
    %v559 = vmul.f32 %v536, %v542
    %v560 = vld [vmem:[%s3] sm:$0x1]
    %v562 = vlaneseq
    %v563 = vshrl.u32 %v562, 7
    %v564 = vsub.s32 0, %v563
    %v565 = vrot.slane %v560, %v564
    %v567 = vadd.f32 %v544, %v565
    %v568 = vadd.f32 %v545, %v565
    %v569 = vadd.f32 %v546, %v565
    %v570 = vadd.f32 %v547, %v565
    %v571 = vadd.f32 %v548, %v565
    %v572 = vadd.f32 %v549, %v565
    %v573 = vadd.f32 %v550, %v565
    %v574 = vadd.f32 %v551, %v565
    %v575 = vadd.f32 %v552, %v565
    %v576 = vadd.f32 %v553, %v565
    %v577 = vadd.f32 %v554, %v565
    %v578 = vadd.f32 %v555, %v565
    %v579 = vadd.f32 %v556, %v565
    %v580 = vadd.f32 %v557, %v565
    %v581 = vadd.f32 %v558, %v565
    %v582 = vadd.f32 %v559, %v565
    %v583 = vxor.u32 %v567, 2147483648
    %v584 = vxor.u32 %v568, 2147483648
    %v585 = vxor.u32 %v569, 2147483648
    %v586 = vxor.u32 %v570, 2147483648
    %v587 = vxor.u32 %v571, 2147483648
    %v588 = vxor.u32 %v572, 2147483648
    %v589 = vxor.u32 %v573, 2147483648
    %v590 = vxor.u32 %v574, 2147483648
    %v591 = vxor.u32 %v575, 2147483648
    %v592 = vxor.u32 %v576, 2147483648
    %v593 = vxor.u32 %v577, 2147483648
    %v594 = vxor.u32 %v578, 2147483648
    %v595 = vxor.u32 %v579, 2147483648
    %v596 = vxor.u32 %v580, 2147483648
    %v597 = vxor.u32 %v581, 2147483648
    %v598 = vxor.u32 %v582, 2147483648
    %v599 = vmul.f32 %v583, 1.442695
    %v600 = vpow.pop %v599
    %v601 = vmul.f32 %v584, 1.442695
    %v602 = vpow.pop %v601
    %v603 = vmul.f32 %v585, 1.442695
    %v604 = vpow.pop %v603
    %v605 = vmul.f32 %v586, 1.442695
    %v606 = vpow.pop %v605
    %v607 = vmul.f32 %v587, 1.442695
    %v608 = vpow.pop %v607
    %v609 = vmul.f32 %v588, 1.442695
    %v610 = vpow.pop %v609
    %v611 = vmul.f32 %v589, 1.442695
    %v612 = vpow.pop %v611
    %v613 = vmul.f32 %v590, 1.442695
    %v614 = vpow.pop %v613
    %v615 = vmul.f32 %v591, 1.442695
    %v616 = vpow.pop %v615
    %v617 = vmul.f32 %v592, 1.442695
    %v618 = vpow.pop %v617
    %v619 = vmul.f32 %v593, 1.442695
    %v620 = vpow.pop %v619
    %v621 = vmul.f32 %v594, 1.442695
    %v622 = vpow.pop %v621
    %v623 = vmul.f32 %v595, 1.442695
    %v624 = vpow.pop %v623
    %v625 = vmul.f32 %v596, 1.442695
    %v626 = vpow.pop %v625
    %v627 = vmul.f32 %v597, 1.442695
    %v628 = vpow.pop %v627
    %v629 = vmul.f32 %v598, 1.442695
    %v630 = vpow.pop %v629
    %v631 = vadd.f32 %v600, 1.0
    %v632 = vadd.f32 %v602, 1.0
    %v633 = vadd.f32 %v604, 1.0
    %v634 = vadd.f32 %v606, 1.0
    %v635 = vadd.f32 %v608, 1.0
    %v636 = vadd.f32 %v610, 1.0
    %v637 = vadd.f32 %v612, 1.0
    %v638 = vadd.f32 %v614, 1.0
    %v639 = vadd.f32 %v616, 1.0
    %v640 = vadd.f32 %v618, 1.0
    %v641 = vadd.f32 %v620, 1.0
    %v642 = vadd.f32 %v622, 1.0
    %v643 = vadd.f32 %v624, 1.0
    %v644 = vadd.f32 %v626, 1.0
    %v645 = vadd.f32 %v628, 1.0
    %v646 = vadd.f32 %v630, 1.0
    %v647 = vrcp.pop %v631
    %v648 = vmul.f32 1.0, %v647
    %v649 = vrcp.pop %v632
    %v650 = vmul.f32 1.0, %v649
    %v651 = vrcp.pop %v633
    %v652 = vmul.f32 1.0, %v651
    %v653 = vrcp.pop %v634
    %v654 = vmul.f32 1.0, %v653
    %v655 = vrcp.pop %v635
    %v656 = vmul.f32 1.0, %v655
    %v657 = vrcp.pop %v636
    %v658 = vmul.f32 1.0, %v657
    %v659 = vrcp.pop %v637
    %v660 = vmul.f32 1.0, %v659
    %v661 = vrcp.pop %v638
    %v662 = vmul.f32 1.0, %v661
    %v663 = vrcp.pop %v639
    %v664 = vmul.f32 1.0, %v663
    %v665 = vrcp.pop %v640
    %v666 = vmul.f32 1.0, %v665
    %v667 = vrcp.pop %v641
    %v668 = vmul.f32 1.0, %v667
    %v669 = vrcp.pop %v642
    %v670 = vmul.f32 1.0, %v669
    %v671 = vrcp.pop %v643
    %v672 = vmul.f32 1.0, %v671
    %v673 = vrcp.pop %v644
    %v674 = vmul.f32 1.0, %v673
    %v675 = vrcp.pop %v645
    %v676 = vmul.f32 1.0, %v675
    %v677 = vrcp.pop %v646
    %v678 = vmul.f32 1.0, %v677
    %v679 = vmul.f32 %v567, %v648
    %v680 = vmul.f32 %v568, %v650
    %v681 = vmul.f32 %v569, %v652
    %v682 = vmul.f32 %v570, %v654
    %v683 = vmul.f32 %v571, %v656
    %v684 = vmul.f32 %v572, %v658
    %v685 = vmul.f32 %v573, %v660
    %v686 = vmul.f32 %v574, %v662
    %v687 = vmul.f32 %v575, %v664
    %v688 = vmul.f32 %v576, %v666
    %v689 = vmul.f32 %v577, %v668
    %v690 = vmul.f32 %v578, %v670
    %v691 = vmul.f32 %v579, %v672
    %v692 = vmul.f32 %v580, %v674
    %v693 = vmul.f32 %v581, %v676
    %v694 = vmul.f32 %v582, %v678
    %s695 = scalar_lea.vmem [#allocation2], 16
    %696 = vst.msk [vmem:[%s695 + $0x1] sm:$0xff] %vm175, %v679
    %697 = vst.msk [vmem:[%s695 + $0x11] sm:$0xff] %vm175, %v680
    %698 = vst.msk [vmem:[%s695 + $0x21] sm:$0xff] %vm175, %v681
    %699 = vst.msk [vmem:[%s695 + $0x31] sm:$0xff] %vm175, %v682
    %700 = vst.msk [vmem:[%s695 + $0x41] sm:$0xff] %vm175, %v683
    %701 = vst.msk [vmem:[%s695 + $0x51] sm:$0xff] %vm175, %v684
    %702 = vst.msk [vmem:[%s695 + $0x61] sm:$0xff] %vm175, %v685
    %703 = vst.msk [vmem:[%s695 + $0x71] sm:$0xff] %vm175, %v686
    %704 = vst.msk [vmem:[%s695 + $0xa1] sm:$0xff] %vm175, %v687
    %705 = vst.msk [vmem:[%s695 + $0xb1] sm:$0xff] %vm175, %v688
    %706 = vst.msk [vmem:[%s695 + $0xc1] sm:$0xff] %vm175, %v689
    %707 = vst.msk [vmem:[%s695 + $0xd1] sm:$0xff] %vm175, %v690
    %708 = vst.msk [vmem:[%s695 + $0xe1] sm:$0xff] %vm175, %v691
    %709 = vst.msk [vmem:[%s695 + $0xf1] sm:$0xff] %vm175, %v692
    %710 = vst.msk [vmem:[%s695 + $0x101] sm:$0xff] %vm175, %v693
    %711 = vst.msk [vmem:[%s695 + $0x111] sm:$0xff] %vm175, %v694
    %v712 = vld [vmem:[#allocation2] sm:$0xff]
    %v713 = vld [vmem:[#allocation2 + $0x10] sm:$0xff]
    %v714 = vld [vmem:[#allocation2 + $0x20] sm:$0xff]
    %v715 = vld [vmem:[#allocation2 + $0x30] sm:$0xff]
    %v716 = vld [vmem:[#allocation2 + $0x40] sm:$0xff]
    %v717 = vld [vmem:[#allocation2 + $0x50] sm:$0xff]
    %v718 = vld [vmem:[#allocation2 + $0x60] sm:$0xff]
    %v719 = vld [vmem:[#allocation2 + $0x70] sm:$0xff]
    %v720 = vld [vmem:[#allocation2 + $0xa0] sm:$0xff]
    %v721 = vld [vmem:[#allocation2 + $0xb0] sm:$0xff]
    %v722 = vld [vmem:[#allocation2 + $0xc0] sm:$0xff]
    %v723 = vld [vmem:[#allocation2 + $0xd0] sm:$0xff]
    %v724 = vld [vmem:[#allocation2 + $0xe0] sm:$0xff]
    %v725 = vld [vmem:[#allocation2 + $0xf0] sm:$0xff]
    %v726 = vld [vmem:[#allocation2 + $0x100] sm:$0xff]
    %v727 = vld [vmem:[#allocation2 + $0x110] sm:$0xff]
    %v728 = vld [vmem:[#allocation2 + $0x1] sm:$0xff]
    %v729 = vld [vmem:[#allocation2 + $0x11] sm:$0xff]
    %v730 = vld [vmem:[#allocation2 + $0x21] sm:$0xff]
    %v731 = vld [vmem:[#allocation2 + $0x31] sm:$0xff]
    %v732 = vld [vmem:[#allocation2 + $0x41] sm:$0xff]
    %v733 = vld [vmem:[#allocation2 + $0x51] sm:$0xff]
    %v734 = vld [vmem:[#allocation2 + $0x61] sm:$0xff]
    %v735 = vld [vmem:[#allocation2 + $0x71] sm:$0xff]
    %v736 = vld [vmem:[#allocation2 + $0xa1] sm:$0xff]
    %v737 = vld [vmem:[#allocation2 + $0xb1] sm:$0xff]
    %v738 = vld [vmem:[#allocation2 + $0xc1] sm:$0xff]
    %v739 = vld [vmem:[#allocation2 + $0xd1] sm:$0xff]
    %v740 = vld [vmem:[#allocation2 + $0xe1] sm:$0xff]
    %v741 = vld [vmem:[#allocation2 + $0xf1] sm:$0xff]
    %v742 = vld [vmem:[#allocation2 + $0x101] sm:$0xff]
    %v743 = vld [vmem:[#allocation2 + $0x111] sm:$0xff]
    %v744 = vld [vmem:[#allocation2 + $0x2] sm:$0xff]
    %v745 = vld [vmem:[#allocation2 + $0x12] sm:$0xff]
    %v746 = vld [vmem:[#allocation2 + $0x22] sm:$0xff]
    %v747 = vld [vmem:[#allocation2 + $0x32] sm:$0xff]
    %v748 = vld [vmem:[#allocation2 + $0x42] sm:$0xff]
    %v749 = vld [vmem:[#allocation2 + $0x52] sm:$0xff]
    %v750 = vld [vmem:[#allocation2 + $0x62] sm:$0xff]
    %v751 = vld [vmem:[#allocation2 + $0x72] sm:$0xff]
    %v752 = vld [vmem:[#allocation2 + $0xa2] sm:$0xff]
    %v753 = vld [vmem:[#allocation2 + $0xb2] sm:$0xff]
    %v754 = vld [vmem:[#allocation2 + $0xc2] sm:$0xff]
    %v755 = vld [vmem:[#allocation2 + $0xd2] sm:$0xff]
    %v756 = vld [vmem:[#allocation2 + $0xe2] sm:$0xff]
    %v757 = vld [vmem:[#allocation2 + $0xf2] sm:$0xff]
    %v758 = vld [vmem:[#allocation2 + $0x102] sm:$0xff]
    %v759 = vld [vmem:[#allocation2 + $0x112] sm:$0xff]
    %v760 = vld [vmem:[%s695] sm:$0xff]
    %v761 = vld [vmem:[%s695 + $0x10] sm:$0xff]
    %v762 = vld [vmem:[%s695 + $0x20] sm:$0xff]
    %v763 = vld [vmem:[%s695 + $0x30] sm:$0xff]
    %v764 = vld [vmem:[%s695 + $0x40] sm:$0xff]
    %v765 = vld [vmem:[%s695 + $0x50] sm:$0xff]
    %v766 = vld [vmem:[%s695 + $0x60] sm:$0xff]
    %v767 = vld [vmem:[%s695 + $0x70] sm:$0xff]
    %v768 = vld [vmem:[%s695 + $0xa0] sm:$0xff]
    %v769 = vld [vmem:[%s695 + $0xb0] sm:$0xff]
    %v770 = vld [vmem:[%s695 + $0xc0] sm:$0xff]
    %v771 = vld [vmem:[%s695 + $0xd0] sm:$0xff]
    %v772 = vld [vmem:[%s695 + $0xe0] sm:$0xff]
    %v773 = vld [vmem:[%s695 + $0xf0] sm:$0xff]
    %v774 = vld [vmem:[%s695 + $0x100] sm:$0xff]
    %v775 = vld [vmem:[%s695 + $0x110] sm:$0xff]
    %v776 = vld [vmem:[%s695 + $0x1] sm:$0xff]
    %v777 = vld [vmem:[%s695 + $0x11] sm:$0xff]
    %v778 = vld [vmem:[%s695 + $0x21] sm:$0xff]
    %v779 = vld [vmem:[%s695 + $0x31] sm:$0xff]
    %v780 = vld [vmem:[%s695 + $0x41] sm:$0xff]
    %v781 = vld [vmem:[%s695 + $0x51] sm:$0xff]
    %v782 = vld [vmem:[%s695 + $0x61] sm:$0xff]
    %v783 = vld [vmem:[%s695 + $0x71] sm:$0xff]
    %v784 = vld [vmem:[%s695 + $0xa1] sm:$0xff]
    %v785 = vld [vmem:[%s695 + $0xb1] sm:$0xff]
    %v786 = vld [vmem:[%s695 + $0xc1] sm:$0xff]
    %v787 = vld [vmem:[%s695 + $0xd1] sm:$0xff]
    %v788 = vld [vmem:[%s695 + $0xe1] sm:$0xff]
    %v789 = vld [vmem:[%s695 + $0xf1] sm:$0xff]
    %v790 = vld [vmem:[%s695 + $0x101] sm:$0xff]
    %v791 = vld [vmem:[%s695 + $0x111] sm:$0xff]
    %v792 = vld [vmem:[%s695 + $0x2] sm:$0xff]
    %v793 = vld [vmem:[%s695 + $0x12] sm:$0xff]
    %v794 = vld [vmem:[%s695 + $0x22] sm:$0xff]
    %v795 = vld [vmem:[%s695 + $0x32] sm:$0xff]
    %v796 = vld [vmem:[%s695 + $0x42] sm:$0xff]
    %v797 = vld [vmem:[%s695 + $0x52] sm:$0xff]
    %v798 = vld [vmem:[%s695 + $0x62] sm:$0xff]
    %v799 = vld [vmem:[%s695 + $0x72] sm:$0xff]
    %v800 = vld [vmem:[%s695 + $0xa2] sm:$0xff]
    %v801 = vld [vmem:[%s695 + $0xb2] sm:$0xff]
    %v802 = vld [vmem:[%s695 + $0xc2] sm:$0xff]
    %v803 = vld [vmem:[%s695 + $0xd2] sm:$0xff]
    %v804 = vld [vmem:[%s695 + $0xe2] sm:$0xff]
    %v805 = vld [vmem:[%s695 + $0xf2] sm:$0xff]
    %v806 = vld [vmem:[%s695 + $0x102] sm:$0xff]
    %v807 = vld [vmem:[%s695 + $0x112] sm:$0xff]
    %s808 = scalar_lea.vmem [#allocation2], 32
    %v809 = vld [vmem:[%s808] sm:$0xff]
    %v810 = vld [vmem:[%s808 + $0x10] sm:$0xff]
    %v811 = vld [vmem:[%s808 + $0x20] sm:$0xff]
    %v812 = vld [vmem:[%s808 + $0x30] sm:$0xff]
    %v813 = vld [vmem:[%s808 + $0x40] sm:$0xff]
    %v814 = vld [vmem:[%s808 + $0x50] sm:$0xff]
    %v815 = vld [vmem:[%s808 + $0x60] sm:$0xff]
    %v816 = vld [vmem:[%s808 + $0x70] sm:$0xff]
    %v817 = vld [vmem:[%s808 + $0xa0] sm:$0xff]
    %v818 = vld [vmem:[%s808 + $0xb0] sm:$0xff]
    %v819 = vld [vmem:[%s808 + $0xc0] sm:$0xff]
    %v820 = vld [vmem:[%s808 + $0xd0] sm:$0xff]
    %v821 = vld [vmem:[%s808 + $0xe0] sm:$0xff]
    %v822 = vld [vmem:[%s808 + $0xf0] sm:$0xff]
    %v823 = vld [vmem:[%s808 + $0x100] sm:$0xff]
    %v824 = vld [vmem:[%s808 + $0x110] sm:$0xff]
    %v825 = vld [vmem:[%s808 + $0x1] sm:$0xff]
    %v826 = vld [vmem:[%s808 + $0x11] sm:$0xff]
    %v827 = vld [vmem:[%s808 + $0x21] sm:$0xff]
    %v828 = vld [vmem:[%s808 + $0x31] sm:$0xff]
    %v829 = vld [vmem:[%s808 + $0x41] sm:$0xff]
    %v830 = vld [vmem:[%s808 + $0x51] sm:$0xff]
    %v831 = vld [vmem:[%s808 + $0x61] sm:$0xff]
    %v832 = vld [vmem:[%s808 + $0x71] sm:$0xff]
    %v833 = vld [vmem:[%s808 + $0xa1] sm:$0xff]
    %v834 = vld [vmem:[%s808 + $0xb1] sm:$0xff]
    %v835 = vld [vmem:[%s808 + $0xc1] sm:$0xff]
    %v836 = vld [vmem:[%s808 + $0xd1] sm:$0xff]
    %v837 = vld [vmem:[%s808 + $0xe1] sm:$0xff]
    %v838 = vld [vmem:[%s808 + $0xf1] sm:$0xff]
    %v839 = vld [vmem:[%s808 + $0x101] sm:$0xff]
    %v840 = vld [vmem:[%s808 + $0x111] sm:$0xff]
    %v841 = vld [vmem:[%s808 + $0x2] sm:$0xff]
    %v842 = vld [vmem:[%s808 + $0x12] sm:$0xff]
    %v843 = vld [vmem:[%s808 + $0x22] sm:$0xff]
    %v844 = vld [vmem:[%s808 + $0x32] sm:$0xff]
    %v845 = vld [vmem:[%s808 + $0x42] sm:$0xff]
    %v846 = vld [vmem:[%s808 + $0x52] sm:$0xff]
    %v847 = vld [vmem:[%s808 + $0x62] sm:$0xff]
    %v848 = vld [vmem:[%s808 + $0x72] sm:$0xff]
    %v849 = vld [vmem:[%s808 + $0xa2] sm:$0xff]
    %v850 = vld [vmem:[%s808 + $0xb2] sm:$0xff]
    %v851 = vld [vmem:[%s808 + $0xc2] sm:$0xff]
    %v852 = vld [vmem:[%s808 + $0xd2] sm:$0xff]
    %v853 = vld [vmem:[%s808 + $0xe2] sm:$0xff]
    %v854 = vld [vmem:[%s808 + $0xf2] sm:$0xff]
    %v855 = vld [vmem:[%s808 + $0x102] sm:$0xff]
    %v856 = vld [vmem:[%s808 + $0x112] sm:$0xff]
    %873 = vrot.lane.b32.xlu0 %v728, 32
    %v874 = vpop.permute.xlu0 %873
    %875 = vrot.lane.b32.xlu0 %v729, 32
    %v876 = vpop.permute.xlu0 %875
    %877 = vrot.lane.b32.xlu0 %v730, 32
    %v878 = vpop.permute.xlu0 %877
    %879 = vrot.lane.b32.xlu0 %v731, 32
    %v880 = vpop.permute.xlu0 %879
    %881 = vrot.lane.b32.xlu0 %v732, 32
    %v882 = vpop.permute.xlu0 %881
    %883 = vrot.lane.b32.xlu0 %v733, 32
    %v884 = vpop.permute.xlu0 %883
    %885 = vrot.lane.b32.xlu0 %v734, 32
    %v886 = vpop.permute.xlu0 %885
    %887 = vrot.lane.b32.xlu0 %v735, 32
    %v888 = vpop.permute.xlu0 %887
    %889 = vrot.lane.b32.xlu0 %v736, 32
    %v890 = vpop.permute.xlu0 %889
    %891 = vrot.lane.b32.xlu0 %v737, 32
    %v892 = vpop.permute.xlu0 %891
    %893 = vrot.lane.b32.xlu0 %v738, 32
    %v894 = vpop.permute.xlu0 %893
    %895 = vrot.lane.b32.xlu0 %v739, 32
    %v896 = vpop.permute.xlu0 %895
    %897 = vrot.lane.b32.xlu0 %v740, 32
    %v898 = vpop.permute.xlu0 %897
    %899 = vrot.lane.b32.xlu0 %v741, 32
    %v900 = vpop.permute.xlu0 %899
    %901 = vrot.lane.b32.xlu0 %v742, 32
    %v902 = vpop.permute.xlu0 %901
    %903 = vrot.lane.b32.xlu0 %v743, 32
    %v904 = vpop.permute.xlu0 %903
    %937 = vrot.lane.b32.xlu0 %v744, 64
    %v938 = vpop.permute.xlu0 %937
    %939 = vrot.lane.b32.xlu0 %v745, 64
    %v940 = vpop.permute.xlu0 %939
    %941 = vrot.lane.b32.xlu0 %v746, 64
    %v942 = vpop.permute.xlu0 %941
    %943 = vrot.lane.b32.xlu0 %v747, 64
    %v944 = vpop.permute.xlu0 %943
    %945 = vrot.lane.b32.xlu0 %v748, 64
    %v946 = vpop.permute.xlu0 %945
    %947 = vrot.lane.b32.xlu0 %v749, 64
    %v948 = vpop.permute.xlu0 %947
    %949 = vrot.lane.b32.xlu0 %v750, 64
    %v950 = vpop.permute.xlu0 %949
    %951 = vrot.lane.b32.xlu0 %v751, 64
    %v952 = vpop.permute.xlu0 %951
    %953 = vrot.lane.b32.xlu0 %v752, 64
    %v954 = vpop.permute.xlu0 %953
    %955 = vrot.lane.b32.xlu0 %v753, 64
    %v956 = vpop.permute.xlu0 %955
    %957 = vrot.lane.b32.xlu0 %v754, 64
    %v958 = vpop.permute.xlu0 %957
    %959 = vrot.lane.b32.xlu0 %v755, 64
    %v960 = vpop.permute.xlu0 %959
    %961 = vrot.lane.b32.xlu0 %v756, 64
    %v962 = vpop.permute.xlu0 %961
    %963 = vrot.lane.b32.xlu0 %v757, 64
    %v964 = vpop.permute.xlu0 %963
    %965 = vrot.lane.b32.xlu0 %v758, 64
    %v966 = vpop.permute.xlu0 %965
    %967 = vrot.lane.b32.xlu0 %v759, 64
    %v968 = vpop.permute.xlu0 %967
    %1001 = vrot.lane.b32.xlu0 %v760, 96
    %v1002 = vpop.permute.xlu0 %1001
    %1003 = vrot.lane.b32.xlu0 %v761, 96
    %v1004 = vpop.permute.xlu0 %1003
    %1005 = vrot.lane.b32.xlu0 %v762, 96
    %v1006 = vpop.permute.xlu0 %1005
    %1007 = vrot.lane.b32.xlu0 %v763, 96
    %v1008 = vpop.permute.xlu0 %1007
    %1009 = vrot.lane.b32.xlu0 %v764, 96
    %v1010 = vpop.permute.xlu0 %1009
    %1011 = vrot.lane.b32.xlu0 %v765, 96
    %v1012 = vpop.permute.xlu0 %1011
    %1013 = vrot.lane.b32.xlu0 %v766, 96
    %v1014 = vpop.permute.xlu0 %1013
    %1015 = vrot.lane.b32.xlu0 %v767, 96
    %v1016 = vpop.permute.xlu0 %1015
    %1017 = vrot.lane.b32.xlu0 %v768, 96
    %v1018 = vpop.permute.xlu0 %1017
    %1019 = vrot.lane.b32.xlu0 %v769, 96
    %v1020 = vpop.permute.xlu0 %1019
    %1021 = vrot.lane.b32.xlu0 %v770, 96
    %v1022 = vpop.permute.xlu0 %1021
    %1023 = vrot.lane.b32.xlu0 %v771, 96
    %v1024 = vpop.permute.xlu0 %1023
    %1025 = vrot.lane.b32.xlu0 %v772, 96
    %v1026 = vpop.permute.xlu0 %1025
    %1027 = vrot.lane.b32.xlu0 %v773, 96
    %v1028 = vpop.permute.xlu0 %1027
    %1029 = vrot.lane.b32.xlu0 %v774, 96
    %v1030 = vpop.permute.xlu0 %1029
    %1031 = vrot.lane.b32.xlu0 %v775, 96
    %v1032 = vpop.permute.xlu0 %1031
    %1065 = vrot.lane.b32.xlu0 %v792, 32
    %v1066 = vpop.permute.xlu0 %1065
    %1067 = vrot.lane.b32.xlu0 %v793, 32
    %v1068 = vpop.permute.xlu0 %1067
    %1069 = vrot.lane.b32.xlu0 %v794, 32
    %v1070 = vpop.permute.xlu0 %1069
    %1071 = vrot.lane.b32.xlu0 %v795, 32
    %v1072 = vpop.permute.xlu0 %1071
    %1073 = vrot.lane.b32.xlu0 %v796, 32
    %v1074 = vpop.permute.xlu0 %1073
    %1075 = vrot.lane.b32.xlu0 %v797, 32
    %v1076 = vpop.permute.xlu0 %1075
    %1077 = vrot.lane.b32.xlu0 %v798, 32
    %v1078 = vpop.permute.xlu0 %1077
    %1079 = vrot.lane.b32.xlu0 %v799, 32
    %v1080 = vpop.permute.xlu0 %1079
    %1081 = vrot.lane.b32.xlu0 %v800, 32
    %v1082 = vpop.permute.xlu0 %1081
    %1083 = vrot.lane.b32.xlu0 %v801, 32
    %v1084 = vpop.permute.xlu0 %1083
    %1085 = vrot.lane.b32.xlu0 %v802, 32
    %v1086 = vpop.permute.xlu0 %1085
    %1087 = vrot.lane.b32.xlu0 %v803, 32
    %v1088 = vpop.permute.xlu0 %1087
    %1089 = vrot.lane.b32.xlu0 %v804, 32
    %v1090 = vpop.permute.xlu0 %1089
    %1091 = vrot.lane.b32.xlu0 %v805, 32
    %v1092 = vpop.permute.xlu0 %1091
    %1093 = vrot.lane.b32.xlu0 %v806, 32
    %v1094 = vpop.permute.xlu0 %1093
    %1095 = vrot.lane.b32.xlu0 %v807, 32
    %v1096 = vpop.permute.xlu0 %1095
    %1129 = vrot.lane.b32.xlu0 %v809, 64
    %v1130 = vpop.permute.xlu0 %1129
    %1131 = vrot.lane.b32.xlu0 %v810, 64
    %v1132 = vpop.permute.xlu0 %1131
    %1133 = vrot.lane.b32.xlu0 %v811, 64
    %v1134 = vpop.permute.xlu0 %1133
    %1135 = vrot.lane.b32.xlu0 %v812, 64
    %v1136 = vpop.permute.xlu0 %1135
    %1137 = vrot.lane.b32.xlu0 %v813, 64
    %v1138 = vpop.permute.xlu0 %1137
    %1139 = vrot.lane.b32.xlu0 %v814, 64
    %v1140 = vpop.permute.xlu0 %1139
    %1141 = vrot.lane.b32.xlu0 %v815, 64
    %v1142 = vpop.permute.xlu0 %1141
    %1143 = vrot.lane.b32.xlu0 %v816, 64
    %v1144 = vpop.permute.xlu0 %1143
    %1145 = vrot.lane.b32.xlu0 %v817, 64
    %v1146 = vpop.permute.xlu0 %1145
    %1147 = vrot.lane.b32.xlu0 %v818, 64
    %v1148 = vpop.permute.xlu0 %1147
    %1149 = vrot.lane.b32.xlu0 %v819, 64
    %v1150 = vpop.permute.xlu0 %1149
    %1151 = vrot.lane.b32.xlu0 %v820, 64
    %v1152 = vpop.permute.xlu0 %1151
    %1153 = vrot.lane.b32.xlu0 %v821, 64
    %v1154 = vpop.permute.xlu0 %1153
    %1155 = vrot.lane.b32.xlu0 %v822, 64
    %v1156 = vpop.permute.xlu0 %1155
    %1157 = vrot.lane.b32.xlu0 %v823, 64
    %v1158 = vpop.permute.xlu0 %1157
    %1159 = vrot.lane.b32.xlu0 %v824, 64
    %v1160 = vpop.permute.xlu0 %1159
    %1193 = vrot.lane.b32.xlu0 %v825, 96
    %v1194 = vpop.permute.xlu0 %1193
    %1195 = vrot.lane.b32.xlu0 %v826, 96
    %v1196 = vpop.permute.xlu0 %1195
    %1197 = vrot.lane.b32.xlu0 %v827, 96
    %v1198 = vpop.permute.xlu0 %1197
    %1199 = vrot.lane.b32.xlu0 %v828, 96
    %v1200 = vpop.permute.xlu0 %1199
    %1201 = vrot.lane.b32.xlu0 %v829, 96
    %v1202 = vpop.permute.xlu0 %1201
    %1203 = vrot.lane.b32.xlu0 %v830, 96
    %v1204 = vpop.permute.xlu0 %1203
    %1205 = vrot.lane.b32.xlu0 %v831, 96
    %v1206 = vpop.permute.xlu0 %1205
    %1207 = vrot.lane.b32.xlu0 %v832, 96
    %v1208 = vpop.permute.xlu0 %1207
    %1209 = vrot.lane.b32.xlu0 %v833, 96
    %v1210 = vpop.permute.xlu0 %1209
    %1211 = vrot.lane.b32.xlu0 %v834, 96
    %v1212 = vpop.permute.xlu0 %1211
    %1213 = vrot.lane.b32.xlu0 %v835, 96
    %v1214 = vpop.permute.xlu0 %1213
    %1215 = vrot.lane.b32.xlu0 %v836, 96
    %v1216 = vpop.permute.xlu0 %1215
    %1217 = vrot.lane.b32.xlu0 %v837, 96
    %v1218 = vpop.permute.xlu0 %1217
    %1219 = vrot.lane.b32.xlu0 %v838, 96
    %v1220 = vpop.permute.xlu0 %1219
    %1221 = vrot.lane.b32.xlu0 %v839, 96
    %v1222 = vpop.permute.xlu0 %1221
    %1223 = vrot.lane.b32.xlu0 %v840, 96
    %v1224 = vpop.permute.xlu0 %1223
    %v1241 = vsel %vm175, %v712, %v874
    %v1242 = vsel %vm175, %v713, %v876
    %v1243 = vsel %vm175, %v714, %v878
    %v1244 = vsel %vm175, %v715, %v880
    %v1245 = vsel %vm175, %v716, %v882
    %v1246 = vsel %vm175, %v717, %v884
    %v1247 = vsel %vm175, %v718, %v886
    %v1248 = vsel %vm175, %v719, %v888
    %v1249 = vsel %vm175, %v720, %v890
    %v1250 = vsel %vm175, %v721, %v892
    %v1251 = vsel %vm175, %v722, %v894
    %v1252 = vsel %vm175, %v723, %v896
    %v1253 = vsel %vm175, %v724, %v898
    %v1254 = vsel %vm175, %v725, %v900
    %v1255 = vsel %vm175, %v726, %v902
    %v1256 = vsel %vm175, %v727, %v904
    %vm1257 = vcmask 523264
    %v1258 = vsel %vm1257, %v1241, %v938
    %v1259 = vsel %vm1257, %v1242, %v940
    %v1260 = vsel %vm1257, %v1243, %v942
    %v1261 = vsel %vm1257, %v1244, %v944
    %v1262 = vsel %vm1257, %v1245, %v946
    %v1263 = vsel %vm1257, %v1246, %v948
    %v1264 = vsel %vm1257, %v1247, %v950
    %v1265 = vsel %vm1257, %v1248, %v952
    %v1266 = vsel %vm1257, %v1249, %v954
    %v1267 = vsel %vm1257, %v1250, %v956
    %v1268 = vsel %vm1257, %v1251, %v958
    %v1269 = vsel %vm1257, %v1252, %v960
    %v1270 = vsel %vm1257, %v1253, %v962
    %v1271 = vsel %vm1257, %v1254, %v964
    %v1272 = vsel %vm1257, %v1255, %v966
    %v1273 = vsel %vm1257, %v1256, %v968
    %vm1274 = vcmask 785408
    %v1275 = vsel %vm1274, %v1258, %v1002
    %v1276 = vsel %vm1274, %v1259, %v1004
    %v1277 = vsel %vm1274, %v1260, %v1006
    %v1278 = vsel %vm1274, %v1261, %v1008
    %v1279 = vsel %vm1274, %v1262, %v1010
    %v1280 = vsel %vm1274, %v1263, %v1012
    %v1281 = vsel %vm1274, %v1264, %v1014
    %v1282 = vsel %vm1274, %v1265, %v1016
    %v1283 = vsel %vm1274, %v1266, %v1018
    %v1284 = vsel %vm1274, %v1267, %v1020
    %v1285 = vsel %vm1274, %v1268, %v1022
    %v1286 = vsel %vm1274, %v1269, %v1024
    %v1287 = vsel %vm1274, %v1270, %v1026
    %v1288 = vsel %vm1274, %v1271, %v1028
    %v1289 = vsel %vm1274, %v1272, %v1030
    %v1290 = vsel %vm1274, %v1273, %v1032
    %v1291 = vsel %vm175, %v776, %v1066
    %v1292 = vsel %vm175, %v777, %v1068
    %v1293 = vsel %vm175, %v778, %v1070
    %v1294 = vsel %vm175, %v779, %v1072
    %v1295 = vsel %vm175, %v780, %v1074
    %v1296 = vsel %vm175, %v781, %v1076
    %v1297 = vsel %vm175, %v782, %v1078
    %v1298 = vsel %vm175, %v783, %v1080
    %v1299 = vsel %vm175, %v784, %v1082
    %v1300 = vsel %vm175, %v785, %v1084
    %v1301 = vsel %vm175, %v786, %v1086
    %v1302 = vsel %vm175, %v787, %v1088
    %v1303 = vsel %vm175, %v788, %v1090
    %v1304 = vsel %vm175, %v789, %v1092
    %v1305 = vsel %vm175, %v790, %v1094
    %v1306 = vsel %vm175, %v791, %v1096
    %v1307 = vsel %vm1257, %v1291, %v1130
    %v1308 = vsel %vm1257, %v1292, %v1132
    %v1309 = vsel %vm1257, %v1293, %v1134
    %v1310 = vsel %vm1257, %v1294, %v1136
    %v1311 = vsel %vm1257, %v1295, %v1138
    %v1312 = vsel %vm1257, %v1296, %v1140
    %v1313 = vsel %vm1257, %v1297, %v1142
    %v1314 = vsel %vm1257, %v1298, %v1144
    %v1315 = vsel %vm1257, %v1299, %v1146
    %v1316 = vsel %vm1257, %v1300, %v1148
    %v1317 = vsel %vm1257, %v1301, %v1150
    %v1318 = vsel %vm1257, %v1302, %v1152
    %v1319 = vsel %vm1257, %v1303, %v1154
    %v1320 = vsel %vm1257, %v1304, %v1156
    %v1321 = vsel %vm1257, %v1305, %v1158
    %v1322 = vsel %vm1257, %v1306, %v1160
    %v1323 = vsel %vm1274, %v1307, %v1194
    %v1324 = vsel %vm1274, %v1308, %v1196
    %v1325 = vsel %vm1274, %v1309, %v1198
    %v1326 = vsel %vm1274, %v1310, %v1200
    %v1327 = vsel %vm1274, %v1311, %v1202
    %v1328 = vsel %vm1274, %v1312, %v1204
    %v1329 = vsel %vm1274, %v1313, %v1206
    %v1330 = vsel %vm1274, %v1314, %v1208
    %v1331 = vsel %vm1274, %v1315, %v1210
    %v1332 = vsel %vm1274, %v1316, %v1212
    %v1333 = vsel %vm1274, %v1317, %v1214
    %v1334 = vsel %vm1274, %v1318, %v1216
    %v1335 = vsel %vm1274, %v1319, %v1218
    %v1336 = vsel %vm1274, %v1320, %v1220
    %v1337 = vsel %vm1274, %v1321, %v1222
    %v1338 = vsel %vm1274, %v1322, %v1224
    %v1339 = vld [vmem:[#allocation6] sm:$0xff]
    %v1340 = vld [vmem:[#allocation6 + $0x8] sm:$0xff]
    %v1341 = vld [vmem:[#allocation6 + $0x10] sm:$0xff]
    %v1342 = vld [vmem:[#allocation6 + $0x18] sm:$0xff]
    %v1343 = vld [vmem:[#allocation6 + $0x20] sm:$0xff]
    %v1344 = vld [vmem:[#allocation6 + $0x28] sm:$0xff]
    %v1345 = vld [vmem:[#allocation6 + $0x30] sm:$0xff]
    %v1346 = vld [vmem:[#allocation6 + $0x38] sm:$0xff]
    %v1347 = vld [vmem:[#allocation6 + $0x40] sm:$0xff]
    %v1348 = vld [vmem:[#allocation6 + $0x48] sm:$0xff]
    %v1349 = vld [vmem:[#allocation6 + $0x50] sm:$0xff]
    %v1350 = vld [vmem:[#allocation6 + $0x58] sm:$0xff]
    %v1351 = vld [vmem:[#allocation6 + $0x60] sm:$0xff]
    %v1352 = vld [vmem:[#allocation6 + $0x68] sm:$0xff]
    %v1353 = vld [vmem:[#allocation6 + $0x70] sm:$0xff]
    %v1354 = vld [vmem:[#allocation6 + $0x78] sm:$0xff]
    %v1355 = vld [vmem:[#allocation6 + $0x80] sm:$0xff]
    %v1356 = vld [vmem:[#allocation6 + $0x88] sm:$0xff]
    %v1357 = vld [vmem:[#allocation6 + $0x90] sm:$0xff]
    %v1358 = vld [vmem:[#allocation6 + $0x98] sm:$0xff]
    %v1359 = vld [vmem:[#allocation6 + $0xa0] sm:$0xff]
    %v1360 = vld [vmem:[#allocation6 + $0xa8] sm:$0xff]
    %v1361 = vld [vmem:[#allocation6 + $0xb0] sm:$0xff]
    %v1362 = vld [vmem:[#allocation6 + $0xb8] sm:$0xff]
    %v1363 = vld [vmem:[#allocation6 + $0xc0] sm:$0xff]
    %v1364 = vld [vmem:[#allocation6 + $0xc8] sm:$0xff]
    %v1365 = vld [vmem:[#allocation6 + $0xd0] sm:$0xff]
    %v1366 = vld [vmem:[#allocation6 + $0xd8] sm:$0xff]
    %v1367 = vld [vmem:[#allocation6 + $0xe0] sm:$0xff]
    %v1368 = vld [vmem:[#allocation6 + $0xe8] sm:$0xff]
    %v1369 = vld [vmem:[#allocation6 + $0xf0] sm:$0xff]
    %v1370 = vld [vmem:[#allocation6 + $0xf8] sm:$0xff]
    %v1371 = vld [vmem:[#allocation6 + $0x100] sm:$0xff]
    %v1372 = vld [vmem:[#allocation6 + $0x108] sm:$0xff]
    %v1373 = vld [vmem:[#allocation6 + $0x110] sm:$0xff]
    %v1374 = vld [vmem:[#allocation6 + $0x118] sm:$0xff]
    %v1375 = vld [vmem:[%s5] sm:$0x1]
    %v1377 = vlaneseq
    %v1378 = vshrl.u32 %v1377, 7
    %v1379 = vsub.s32 0, %v1378
    %v1380 = vrot.slane %v1375, %v1379
    %v1383 = vsel %vm175, %v841, 0
    %v1386 = vsel %vm175, %v842, 0
    %v1389 = vsel %vm175, %v843, 0
    %v1392 = vsel %vm175, %v844, 0
    %v1395 = vsel %vm175, %v845, 0
    %v1398 = vsel %vm175, %v846, 0
    %v1401 = vsel %vm175, %v847, 0
    %v1404 = vsel %vm175, %v848, 0
    %v1407 = vsel %vm175, %v849, 0
    %v1410 = vsel %vm175, %v850, 0
    %v1413 = vsel %vm175, %v851, 0
    %v1416 = vsel %vm175, %v852, 0
    %v1419 = vsel %vm175, %v853, 0
    %v1422 = vsel %vm175, %v854, 0
    %v1425 = vsel %vm175, %v855, 0
    %v1428 = vsel %vm175, %v856, 0
    %1430 = vmatprep.subr.mxu0 0.0
    %1431 = vmatpush1.msra.mxu0 %v1339
    %1432 = vmatprep.subr.mxu0 0.0
    %1433 = vmatpush1.msra.mxu0 %v1340
    %1434 = vmatprep.subr.mxu0 0.0
    %1435 = vmatpush1.msra.mxu0 %v1341
    %1436 = vmatprep.subr.mxu0 0.0
    %1437 = vmatpush1.msra.mxu0 %v1342
    %1438 = vmatprep.subr.mxu0 0.0
    %1439 = vmatpush1.msra.mxu0 %v1343
    %1440 = vmatprep.subr.mxu0 0.0
    %1441 = vmatpush1.msra.mxu0 %v1344
    %1442 = vmatprep.subr.mxu0 0.0
    %1443 = vmatpush1.msra.mxu0 %v1345
    %1444 = vmatprep.subr.mxu0 0.0
    %1445 = vmatpush1.msra.mxu0 %v1346
    %1446 = vmatprep.subr.mxu0 0.0
    %1447 = vmatpush1.msra.mxu0 %v1347
    %1448 = vmatprep.subr.mxu0 0.0
    %1449 = vmatpush1.msra.mxu0 %v1348
    %1450 = vmatprep.subr.mxu0 0.0
    %1451 = vmatpush1.msra.mxu0 %v1349
    %1452 = vmatprep.subr.mxu0 0.0
    %1453 = vmatpush1.msra.mxu0 %v1350
    %1454 = vmatprep.subr.mxu0 0.0
    %1455 = vmatpush1.msra.mxu0 %v1351
    %1456 = vmatprep.subr.mxu0 0.0
    %1457 = vmatpush1.msra.mxu0 %v1352
    %1458 = vmatprep.subr.mxu0 0.0
    %1459 = vmatpush1.msra.mxu0 %v1353
    %1460 = vmatprep.subr.mxu0 0.0
    %1461 = vmatpush1.msra.mxu0 %v1354
    %1462 = vmatprep.subr.mxu0 0.0
    %1463 = vmatpush1.msra.mxu0 %v1355
    %1464 = vmatprep.subr.mxu0 0.0
    %1465 = vmatpush1.msra.mxu0 %v1356
    %1466 = vmatprep.subr.mxu0 0.0
    %1467 = vmatpush1.msra.mxu0 %v1357
    %1468 = vmatprep.subr.mxu0 0.0
    %1469 = vmatpush1.msra.mxu0 %v1358
    %1470 = vmatprep.subr.mxu0 0.0
    %1471 = vmatpush1.msra.mxu0 %v1359
    %1472 = vmatprep.subr.mxu0 0.0
    %1473 = vmatpush1.msra.mxu0 %v1360
    %1474 = vmatprep.subr.mxu0 0.0
    %1475 = vmatpush1.msra.mxu0 %v1361
    %1476 = vmatprep.subr.mxu0 0.0
    %1477 = vmatpush1.msra.mxu0 %v1362
    %1478 = vmatprep.subr.mxu0 0.0
    %1479 = vmatpush1.msra.mxu0 %v1363
    %1480 = vmatprep.subr.mxu0 0.0
    %1481 = vmatpush1.msra.mxu0 %v1364
    %1482 = vmatprep.subr.mxu0 0.0
    %1483 = vmatpush1.msra.mxu0 %v1365
    %1484 = vmatprep.subr.mxu0 0.0
    %1485 = vmatpush1.msra.mxu0 %v1366
    %1486 = vmatprep.subr.mxu0 0.0
    %1487 = vmatpush1.msra.mxu0 %v1367
    %1488 = vmatprep.subr.mxu0 0.0
    %1489 = vmatpush1.msra.mxu0 %v1368
    %1490 = vmatprep.subr.mxu0 0.0
    %1491 = vmatpush1.msra.mxu0 %v1369
    %1492 = vmatprep.subr.mxu0 0.0
    %1493 = vmatpush1.msra.mxu0 %v1370
    %1494 = vmatprep.mubr.f32.mxu0 %v1323
    %1495 = vmatmul.mubr.f32.gmra.mrb[0].mxu0 %v1275
    %v1496 = vpop.f32.mrb[0].mxu0
    %v1497 = vadd.f32 %v1380, %v1496
    %v1498 = vpop.f32.mrb[0].mxu0
    %1499 = vmatprep.mubr.f32.mxu0 %v1324
    %1500 = vmatmul.mubr.f32.gmra.mrb[0].mxu0 %v1276
    %v1501 = vpop.f32.mrb[0].mxu0
    %v1502 = vadd.f32 %v1380, %v1501
    %v1503 = vpop.f32.mrb[0].mxu0
    %1504 = vmatprep.mubr.f32.mxu0 %v1325
    %1505 = vmatmul.mubr.f32.gmra.mrb[0].mxu0 %v1277
    %v1506 = vpop.f32.mrb[0].mxu0
    %v1507 = vadd.f32 %v1380, %v1506
    %v1508 = vpop.f32.mrb[0].mxu0
    %1509 = vmatprep.mubr.f32.mxu0 %v1326
    %1510 = vmatmul.mubr.f32.gmra.mrb[0].mxu0 %v1278
    %v1511 = vpop.f32.mrb[0].mxu0
    %v1512 = vadd.f32 %v1380, %v1511
    %v1513 = vpop.f32.mrb[0].mxu0
    %1514 = vmatprep.mubr.f32.mxu0 %v1327
    %1515 = vmatmul.mubr.f32.gmra.mrb[0].mxu0 %v1279
    %v1516 = vpop.f32.mrb[0].mxu0
    %v1517 = vadd.f32 %v1380, %v1516
    %v1518 = vpop.f32.mrb[0].mxu0
    %1519 = vmatprep.mubr.f32.mxu0 %v1328
    %1520 = vmatmul.mubr.f32.gmra.mrb[0].mxu0 %v1280
    %v1521 = vpop.f32.mrb[0].mxu0
    %v1522 = vadd.f32 %v1380, %v1521
    %v1523 = vpop.f32.mrb[0].mxu0
    %1524 = vmatprep.mubr.f32.mxu0 %v1329
    %1525 = vmatmul.mubr.f32.gmra.mrb[0].mxu0 %v1281
    %v1526 = vpop.f32.mrb[0].mxu0
    %v1527 = vadd.f32 %v1380, %v1526
    %v1528 = vpop.f32.mrb[0].mxu0
    %1529 = vmatprep.mubr.f32.mxu0 %v1330
    %1530 = vmatmul.mubr.f32.gmra.mrb[0].mxu0 %v1282
    %v1531 = vpop.f32.mrb[0].mxu0
    %v1532 = vadd.f32 %v1380, %v1531
    %v1533 = vpop.f32.mrb[0].mxu0
    %1534 = vmatprep.mubr.f32.mxu0 %v1331
    %1535 = vmatmul.mubr.f32.gmra.mrb[0].mxu0 %v1283
    %v1536 = vpop.f32.mrb[0].mxu0
    %v1537 = vadd.f32 %v1380, %v1536
    %v1538 = vpop.f32.mrb[0].mxu0
    %1539 = vmatprep.mubr.f32.mxu0 %v1332
    %1540 = vmatmul.mubr.f32.gmra.mrb[0].mxu0 %v1284
    %v1541 = vpop.f32.mrb[0].mxu0
    %v1542 = vadd.f32 %v1380, %v1541
    %v1543 = vpop.f32.mrb[0].mxu0
    %1544 = vmatprep.mubr.f32.mxu0 %v1333
    %1545 = vmatmul.mubr.f32.gmra.mrb[0].mxu0 %v1285
    %v1546 = vpop.f32.mrb[0].mxu0
    %v1547 = vadd.f32 %v1380, %v1546
    %v1548 = vpop.f32.mrb[0].mxu0
    %1549 = vmatprep.mubr.f32.mxu0 %v1334
    %1550 = vmatmul.mubr.f32.gmra.mrb[0].mxu0 %v1286
    %v1551 = vpop.f32.mrb[0].mxu0
    %v1552 = vadd.f32 %v1380, %v1551
    %v1553 = vpop.f32.mrb[0].mxu0
    %1554 = vmatprep.mubr.f32.mxu0 %v1335
    %1555 = vmatmul.mubr.f32.gmra.mrb[0].mxu0 %v1287
    %v1556 = vpop.f32.mrb[0].mxu0
    %v1557 = vadd.f32 %v1380, %v1556
    %v1558 = vpop.f32.mrb[0].mxu0
    %1559 = vmatprep.mubr.f32.mxu0 %v1336
    %1560 = vmatmul.mubr.f32.gmra.mrb[0].mxu0 %v1288
    %v1561 = vpop.f32.mrb[0].mxu0
    %v1562 = vadd.f32 %v1380, %v1561
    %v1563 = vpop.f32.mrb[0].mxu0
    %1564 = vmatprep.mubr.f32.mxu0 %v1337
    %1565 = vmatmul.mubr.f32.gmra.mrb[0].mxu0 %v1289
    %v1566 = vpop.f32.mrb[0].mxu0
    %v1567 = vadd.f32 %v1380, %v1566
    %v1568 = vpop.f32.mrb[0].mxu0
    %1569 = vmatprep.mubr.f32.mxu0 %v1338
    %1570 = vmatmul.mubr.f32.gmra.mrb[0].mxu0 %v1290
    %v1571 = vpop.f32.mrb[0].mxu0
    %v1572 = vadd.f32 %v1380, %v1571
    %v1573 = vpop.f32.mrb[0].mxu0
    %1574 = vdwg.mxu0
    %1575 = vmatprep.subr.mxu0 0.0
    %1576 = vmatpush1.msra.mxu0 %v1371
    %1577 = vmatprep.subr.mxu0 0.0
    %1578 = vmatpush1.msra.mxu0 %v1372
    %1579 = vmatprep.subr.mxu0 0.0
    %1580 = vmatpush1.msra.mxu0 %v1373
    %1581 = vmatprep.subr.mxu0 0.0
    %1582 = vmatpush1.msra.mxu0 %v1374
    %1583 = vmatprep.subr.mxu0 0.0
    %1584 = vmatpush1.msra.mxu0 0.0
    %1585 = vmatprep.subr.mxu0 0.0
    %1586 = vmatpush1.msra.mxu0 0.0
    %1587 = vmatprep.subr.mxu0 0.0
    %1588 = vmatpush1.msra.mxu0 0.0
    %1589 = vmatprep.subr.mxu0 0.0
    %1590 = vmatpush1.msra.mxu0 0.0
    %1591 = vmatprep.subr.mxu0 0.0
    %1592 = vmatpush1.msra.mxu0 0.0
    %1593 = vmatprep.subr.mxu0 0.0
    %1594 = vmatpush1.msra.mxu0 0.0
    %1595 = vmatprep.subr.mxu0 0.0
    %1596 = vmatpush1.msra.mxu0 0.0
    %1597 = vmatprep.subr.mxu0 0.0
    %1598 = vmatpush1.msra.mxu0 0.0
    %1599 = vmatprep.subr.mxu0 0.0
    %1600 = vmatpush1.msra.mxu0 0.0
    %1601 = vmatprep.subr.mxu0 0.0
    %1602 = vmatpush1.msra.mxu0 0.0
    %1603 = vmatprep.subr.mxu0 0.0
    %1604 = vmatpush1.msra.mxu0 0.0
    %1605 = vmatprep.subr.mxu0 0.0
    %1606 = vmatpush1.msra.mxu0 0.0
    %1607 = vmatprep.subr.mxu0 0.0
    %1608 = vmatpush1.msra.mxu0 0.0
    %1609 = vmatprep.subr.mxu0 0.0
    %1610 = vmatpush1.msra.mxu0 0.0
    %1611 = vmatprep.subr.mxu0 0.0
    %1612 = vmatpush1.msra.mxu0 0.0
    %1613 = vmatprep.subr.mxu0 0.0
    %1614 = vmatpush1.msra.mxu0 0.0
    %1615 = vmatprep.subr.mxu0 0.0
    %1616 = vmatpush1.msra.mxu0 0.0
    %1617 = vmatprep.subr.mxu0 0.0
    %1618 = vmatpush1.msra.mxu0 0.0
    %1619 = vmatprep.subr.mxu0 0.0
    %1620 = vmatpush1.msra.mxu0 0.0
    %1621 = vmatprep.subr.mxu0 0.0
    %1622 = vmatpush1.msra.mxu0 0.0
    %1623 = vmatprep.subr.mxu0 0.0
    %1624 = vmatpush1.msra.mxu0 0.0
    %1625 = vmatprep.subr.mxu0 0.0
    %1626 = vmatpush1.msra.mxu0 0.0
    %1627 = vmatprep.subr.mxu0 0.0
    %1628 = vmatpush1.msra.mxu0 0.0
    %1629 = vmatprep.subr.mxu0 0.0
    %1630 = vmatpush1.msra.mxu0 0.0
    %1631 = vmatprep.subr.mxu0 0.0
    %1632 = vmatpush1.msra.mxu0 0.0
    %1633 = vmatprep.subr.mxu0 0.0
    %1634 = vmatpush1.msra.mxu0 0.0
    %1635 = vmatprep.subr.mxu0 0.0
    %1636 = vmatpush1.msra.mxu0 0.0
    %1637 = vmatprep.subr.mxu0 0.0
    %1638 = vmatpush1.msra.mxu0 0.0
    %1639 = vmatprep.mubr.f32.mxu0 0.0
    %1640 = vmatmul.mubr.f32.gmra.mrb[0].mxu0 %v1383
    %v1641 = vpop.f32.mrb[0].mxu0
    %v1642 = vadd.f32 %v1497, %v1641
    %v1643 = vpop.f32.mrb[0].mxu0
    %1644 = vmatprep.mubr.f32.mxu0 0.0
    %1645 = vmatmul.mubr.f32.gmra.mrb[0].mxu0 %v1386
    %v1646 = vpop.f32.mrb[0].mxu0
    %v1647 = vadd.f32 %v1502, %v1646
    %v1648 = vpop.f32.mrb[0].mxu0
    %1649 = vmatprep.mubr.f32.mxu0 0.0
    %1650 = vmatmul.mubr.f32.gmra.mrb[0].mxu0 %v1389
    %v1651 = vpop.f32.mrb[0].mxu0
    %v1652 = vadd.f32 %v1507, %v1651
    %v1653 = vpop.f32.mrb[0].mxu0
    %1654 = vmatprep.mubr.f32.mxu0 0.0
    %1655 = vmatmul.mubr.f32.gmra.mrb[0].mxu0 %v1392
    %v1656 = vpop.f32.mrb[0].mxu0
    %v1657 = vadd.f32 %v1512, %v1656
    %v1658 = vpop.f32.mrb[0].mxu0
    %1659 = vmatprep.mubr.f32.mxu0 0.0
    %1660 = vmatmul.mubr.f32.gmra.mrb[0].mxu0 %v1395
    %v1661 = vpop.f32.mrb[0].mxu0
    %v1662 = vadd.f32 %v1517, %v1661
    %v1663 = vpop.f32.mrb[0].mxu0
    %1664 = vmatprep.mubr.f32.mxu0 0.0
    %1665 = vmatmul.mubr.f32.gmra.mrb[0].mxu0 %v1398
    %v1666 = vpop.f32.mrb[0].mxu0
    %v1667 = vadd.f32 %v1522, %v1666
    %v1668 = vpop.f32.mrb[0].mxu0
    %1669 = vmatprep.mubr.f32.mxu0 0.0
    %1670 = vmatmul.mubr.f32.gmra.mrb[0].mxu0 %v1401
    %v1671 = vpop.f32.mrb[0].mxu0
    %v1672 = vadd.f32 %v1527, %v1671
    %v1673 = vpop.f32.mrb[0].mxu0
    %1674 = vmatprep.mubr.f32.mxu0 0.0
    %1675 = vmatmul.mubr.f32.gmra.mrb[0].mxu0 %v1404
    %v1676 = vpop.f32.mrb[0].mxu0
    %v1677 = vadd.f32 %v1532, %v1676
    %v1678 = vpop.f32.mrb[0].mxu0
    %1679 = vmatprep.mubr.f32.mxu0 0.0
    %1680 = vmatmul.mubr.f32.gmra.mrb[0].mxu0 %v1407
    %v1681 = vpop.f32.mrb[0].mxu0
    %v1682 = vadd.f32 %v1537, %v1681
    %v1683 = vpop.f32.mrb[0].mxu0
    %1684 = vmatprep.mubr.f32.mxu0 0.0
    %1685 = vmatmul.mubr.f32.gmra.mrb[0].mxu0 %v1410
    %v1686 = vpop.f32.mrb[0].mxu0
    %v1687 = vadd.f32 %v1542, %v1686
    %v1688 = vpop.f32.mrb[0].mxu0
    %1689 = vmatprep.mubr.f32.mxu0 0.0
    %1690 = vmatmul.mubr.f32.gmra.mrb[0].mxu0 %v1413
    %v1691 = vpop.f32.mrb[0].mxu0
    %v1692 = vadd.f32 %v1547, %v1691
    %v1693 = vpop.f32.mrb[0].mxu0
    %1694 = vmatprep.mubr.f32.mxu0 0.0
    %1695 = vmatmul.mubr.f32.gmra.mrb[0].mxu0 %v1416
    %v1696 = vpop.f32.mrb[0].mxu0
    %v1697 = vadd.f32 %v1552, %v1696
    %v1698 = vpop.f32.mrb[0].mxu0
    %1699 = vmatprep.mubr.f32.mxu0 0.0
    %1700 = vmatmul.mubr.f32.gmra.mrb[0].mxu0 %v1419
    %v1701 = vpop.f32.mrb[0].mxu0
    %v1702 = vadd.f32 %v1557, %v1701
    %v1703 = vpop.f32.mrb[0].mxu0
    %1704 = vmatprep.mubr.f32.mxu0 0.0
    %1705 = vmatmul.mubr.f32.gmra.mrb[0].mxu0 %v1422
    %v1706 = vpop.f32.mrb[0].mxu0
    %v1707 = vadd.f32 %v1562, %v1706
    %v1708 = vpop.f32.mrb[0].mxu0
    %1709 = vmatprep.mubr.f32.mxu0 0.0
    %1710 = vmatmul.mubr.f32.gmra.mrb[0].mxu0 %v1425
    %v1711 = vpop.f32.mrb[0].mxu0
    %v1712 = vadd.f32 %v1567, %v1711
    %v1713 = vpop.f32.mrb[0].mxu0
    %1714 = vmatprep.mubr.f32.mxu0 0.0
    %1715 = vmatmul.mubr.f32.gmra.mrb[0].mxu0 %v1428
    %v1716 = vpop.f32.mrb[0].mxu0
    %v1717 = vadd.f32 %v1572, %v1716
    %v1718 = vpop.f32.mrb[0].mxu0
    %1719 = vdwg.mxu0
    %v1722 = vunpack.c.l.s4 1966171168
    %v1723 = vunpack.c.0.s8 %v1722
    %v1724 = vlaneseq
    %v1725 = vshrl.u32 %v1724, 7
    %v1726 = vsub.s32 %v1723, %v1725
    %v1727 = vrot.slane %v314, %v1726
    %v1728 = vcombine.high %v1727, %v1727
    %v1730 = vunpack.c.l.s4 1966171168
    %v1731 = vunpack.c.0.s8 %v1730
    %v1732 = vlaneseq
    %v1733 = vshrl.u32 %v1732, 7
    %v1734 = vsub.s32 %v1731, %v1733
    %v1735 = vrot.slane %v1727, %v1734
    %v1737 = vunpack.c.l.s4 1966171168
    %v1738 = vunpack.c.0.s8 %v1737
    %v1739 = vlaneseq
    %v1740 = vshrl.u32 %v1739, 7
    %v1741 = vsub.s32 %v1738, %v1740
    %v1742 = vrot.slane %v1728, %v1741
    %v1743 = vlaneseq
    %v1744 = vshrl.u32 %v1743, 7
    %v1745 = vsub.s32 0, %v1744
    %v1746 = vrot.slane %v1735, %v1745
    %v1747 = vlaneseq
    %v1748 = vshrl.u32 %v1747, 7
    %v1749 = vsub.s32 0, %v1748
    %v1750 = vrot.slane %v1742, %v1749
    %v1753 = vadd.f32 %v1642, %v1746
    %v1754 = vadd.f32 %v1647, %v1746
    %v1755 = vadd.f32 %v1652, %v1746
    %v1756 = vadd.f32 %v1657, %v1746
    %v1757 = vadd.f32 %v1662, %v1746
    %v1758 = vadd.f32 %v1667, %v1746
    %v1759 = vadd.f32 %v1672, %v1746
    %v1760 = vadd.f32 %v1677, %v1746
    %v1761 = vadd.f32 %v1682, %v1750
    %v1762 = vadd.f32 %v1687, %v1750
    %v1763 = vadd.f32 %v1692, %v1750
    %v1764 = vadd.f32 %v1697, %v1750
    %v1765 = vadd.f32 %v1702, %v1750
    %v1766 = vadd.f32 %v1707, %v1750
    %v1767 = vadd.f32 %v1712, %v1750
    %v1768 = vadd.f32 %v1717, %v1750
    %v1769 = vsel %vm175, %v1753, 0.0
    %v1770 = vsel %vm175, %v1754, 0.0
    %v1771 = vadd.f32 %v1769, %v1770
    %v1772 = vsel %vm175, %v1755, 0.0
    %v1773 = vadd.f32 %v1771, %v1772
    %v1774 = vsel %vm175, %v1756, 0.0
    %v1775 = vadd.f32 %v1773, %v1774
    %v1776 = vsel %vm175, %v1757, 0.0
    %v1777 = vadd.f32 %v1775, %v1776
    %v1778 = vsel %vm175, %v1758, 0.0
    %v1779 = vadd.f32 %v1777, %v1778
    %v1780 = vsel %vm175, %v1759, 0.0
    %v1781 = vadd.f32 %v1779, %v1780
    %v1782 = vsel %vm175, %v1760, 0.0
    %v1783 = vadd.f32 %v1781, %v1782
    %v1784 = vrot.slane %v1783, 4
    %v1785 = vadd.f32 %v1783, %v1784
    %v1786 = vrot.slane %v1785, 2
    %v1787 = vadd.f32 %v1785, %v1786
    %v1788 = vrot.slane %v1787, 1
    %v1789 = vadd.f32 %v1787, %v1788
    %v1790 = vsel %vm175, %v1761, 0.0
    %v1791 = vsel %vm175, %v1762, 0.0
    %v1792 = vadd.f32 %v1790, %v1791
    %v1793 = vsel %vm175, %v1763, 0.0
    %v1794 = vadd.f32 %v1792, %v1793
    %v1795 = vsel %vm175, %v1764, 0.0
    %v1796 = vadd.f32 %v1794, %v1795
    %v1797 = vsel %vm175, %v1765, 0.0
    %v1798 = vadd.f32 %v1796, %v1797
    %v1799 = vsel %vm175, %v1766, 0.0
    %v1800 = vadd.f32 %v1798, %v1799
    %v1801 = vsel %vm175, %v1767, 0.0
    %v1802 = vadd.f32 %v1800, %v1801
    %v1803 = vsel %vm175, %v1768, 0.0
    %v1804 = vadd.f32 %v1802, %v1803
    %v1805 = vrot.slane %v1804, 4
    %v1806 = vadd.f32 %v1804, %v1805
    %v1807 = vrot.slane %v1806, 2
    %v1808 = vadd.f32 %v1806, %v1807
    %v1809 = vrot.slane %v1808, 1
    %v1810 = vadd.f32 %v1808, %v1809
    %v1811 = vmul.f32 %v1789, %v438
    %v1812 = vmul.f32 %v1810, %v438
    %v1813 = vsub.f32 %v1753, %v1811
    %v1814 = vsub.f32 %v1754, %v1811
    %v1815 = vsub.f32 %v1755, %v1811
    %v1816 = vsub.f32 %v1756, %v1811
    %v1817 = vsub.f32 %v1757, %v1811
    %v1818 = vsub.f32 %v1758, %v1811
    %v1819 = vsub.f32 %v1759, %v1811
    %v1820 = vsub.f32 %v1760, %v1811
    %v1821 = vsub.f32 %v1761, %v1812
    %v1822 = vsub.f32 %v1762, %v1812
    %v1823 = vsub.f32 %v1763, %v1812
    %v1824 = vsub.f32 %v1764, %v1812
    %v1825 = vsub.f32 %v1765, %v1812
    %v1826 = vsub.f32 %v1766, %v1812
    %v1827 = vsub.f32 %v1767, %v1812
    %v1828 = vsub.f32 %v1768, %v1812
    %v1829 = vmul.f32 %v1813, %v1813
    %v1830 = vmul.f32 %v1814, %v1814
    %v1831 = vmul.f32 %v1815, %v1815
    %v1832 = vmul.f32 %v1816, %v1816
    %v1833 = vmul.f32 %v1817, %v1817
    %v1834 = vmul.f32 %v1818, %v1818
    %v1835 = vmul.f32 %v1819, %v1819
    %v1836 = vmul.f32 %v1820, %v1820
    %v1837 = vmul.f32 %v1821, %v1821
    %v1838 = vmul.f32 %v1822, %v1822
    %v1839 = vmul.f32 %v1823, %v1823
    %v1840 = vmul.f32 %v1824, %v1824
    %v1841 = vmul.f32 %v1825, %v1825
    %v1842 = vmul.f32 %v1826, %v1826
    %v1843 = vmul.f32 %v1827, %v1827
    %v1844 = vmul.f32 %v1828, %v1828
    %v1845 = vsel %vm175, %v1829, 0.0
    %v1846 = vsel %vm175, %v1830, 0.0
    %v1847 = vadd.f32 %v1845, %v1846
    %v1848 = vsel %vm175, %v1831, 0.0
    %v1849 = vadd.f32 %v1847, %v1848
    %v1850 = vsel %vm175, %v1832, 0.0
    %v1851 = vadd.f32 %v1849, %v1850
    %v1852 = vsel %vm175, %v1833, 0.0
    %v1853 = vadd.f32 %v1851, %v1852
    %v1854 = vsel %vm175, %v1834, 0.0
    %v1855 = vadd.f32 %v1853, %v1854
    %v1856 = vsel %vm175, %v1835, 0.0
    %v1857 = vadd.f32 %v1855, %v1856
    %v1858 = vsel %vm175, %v1836, 0.0
    %v1859 = vadd.f32 %v1857, %v1858
    %v1860 = vrot.slane %v1859, 4
    %v1861 = vadd.f32 %v1859, %v1860
    %v1862 = vrot.slane %v1861, 2
    %v1863 = vadd.f32 %v1861, %v1862
    %v1864 = vrot.slane %v1863, 1
    %v1865 = vadd.f32 %v1863, %v1864
    %v1866 = vsel %vm175, %v1837, 0.0
    %v1867 = vsel %vm175, %v1838, 0.0
    %v1868 = vadd.f32 %v1866, %v1867
    %v1869 = vsel %vm175, %v1839, 0.0
    %v1870 = vadd.f32 %v1868, %v1869
    %v1871 = vsel %vm175, %v1840, 0.0
    %v1872 = vadd.f32 %v1870, %v1871
    %v1873 = vsel %vm175, %v1841, 0.0
    %v1874 = vadd.f32 %v1872, %v1873
    %v1875 = vsel %vm175, %v1842, 0.0
    %v1876 = vadd.f32 %v1874, %v1875
    %v1877 = vsel %vm175, %v1843, 0.0
    %v1878 = vadd.f32 %v1876, %v1877
    %v1879 = vsel %vm175, %v1844, 0.0
    %v1880 = vadd.f32 %v1878, %v1879
    %v1881 = vrot.slane %v1880, 4
    %v1882 = vadd.f32 %v1880, %v1881
    %v1883 = vrot.slane %v1882, 2
    %v1884 = vadd.f32 %v1882, %v1883
    %v1885 = vrot.slane %v1884, 1
    %v1886 = vadd.f32 %v1884, %v1885
    %v1887 = vmul.f32 %v1865, %v438
    %v1888 = vmul.f32 %v1886, %v438
    %v1889 = vadd.f32 %v1887, 1e-05
    %v1890 = vadd.f32 %v1888, 1e-05
    %v1891 = vrsqrt.pop %v1889
    %v1892 = vrsqrt.pop %v1890
    %v1893 = vmul.f32 %v1813, %v1891
    %v1894 = vmul.f32 %v1814, %v1891
    %v1895 = vmul.f32 %v1815, %v1891
    %v1896 = vmul.f32 %v1816, %v1891
    %v1897 = vmul.f32 %v1817, %v1891
    %v1898 = vmul.f32 %v1818, %v1891
    %v1899 = vmul.f32 %v1819, %v1891
    %v1900 = vmul.f32 %v1820, %v1891
    %v1901 = vmul.f32 %v1821, %v1892
    %v1902 = vmul.f32 %v1822, %v1892
    %v1903 = vmul.f32 %v1823, %v1892
    %v1904 = vmul.f32 %v1824, %v1892
    %v1905 = vmul.f32 %v1825, %v1892
    %v1906 = vmul.f32 %v1826, %v1892
    %v1907 = vmul.f32 %v1827, %v1892
    %v1908 = vmul.f32 %v1828, %v1892
    %v1909 = vld [vmem:[%s8] sm:$0x1]
    %v1911 = vlaneseq
    %v1912 = vshrl.u32 %v1911, 7
    %v1913 = vsub.s32 0, %v1912
    %v1914 = vrot.slane %v1909, %v1913
    %v1916 = vmul.f32 %v1893, %v1914
    %v1917 = vmul.f32 %v1894, %v1914
    %v1918 = vmul.f32 %v1895, %v1914
    %v1919 = vmul.f32 %v1896, %v1914
    %v1920 = vmul.f32 %v1897, %v1914
    %v1921 = vmul.f32 %v1898, %v1914
    %v1922 = vmul.f32 %v1899, %v1914
    %v1923 = vmul.f32 %v1900, %v1914
    %v1924 = vmul.f32 %v1901, %v1914
    %v1925 = vmul.f32 %v1902, %v1914
    %v1926 = vmul.f32 %v1903, %v1914
    %v1927 = vmul.f32 %v1904, %v1914
    %v1928 = vmul.f32 %v1905, %v1914
    %v1929 = vmul.f32 %v1906, %v1914
    %v1930 = vmul.f32 %v1907, %v1914
    %v1931 = vmul.f32 %v1908, %v1914
    %v1932 = vld [vmem:[%s9] sm:$0x1]
    %v1934 = vlaneseq
    %v1935 = vshrl.u32 %v1934, 7
    %v1936 = vsub.s32 0, %v1935
    %v1937 = vrot.slane %v1932, %v1936
    %v1939 = vadd.f32 %v1916, %v1937
    %v1940 = vadd.f32 %v1917, %v1937
    %v1941 = vadd.f32 %v1918, %v1937
    %v1942 = vadd.f32 %v1919, %v1937
    %v1943 = vadd.f32 %v1920, %v1937
    %v1944 = vadd.f32 %v1921, %v1937
    %v1945 = vadd.f32 %v1922, %v1937
    %v1946 = vadd.f32 %v1923, %v1937
    %v1947 = vadd.f32 %v1924, %v1937
    %v1948 = vadd.f32 %v1925, %v1937
    %v1949 = vadd.f32 %v1926, %v1937
    %v1950 = vadd.f32 %v1927, %v1937
    %v1951 = vadd.f32 %v1928, %v1937
    %v1952 = vadd.f32 %v1929, %v1937
    %v1953 = vadd.f32 %v1930, %v1937
    %v1954 = vadd.f32 %v1931, %v1937
    %v1955 = vxor.u32 %v1939, 2147483648
    %v1956 = vxor.u32 %v1940, 2147483648
    %v1957 = vxor.u32 %v1941, 2147483648
    %v1958 = vxor.u32 %v1942, 2147483648
    %v1959 = vxor.u32 %v1943, 2147483648
    %v1960 = vxor.u32 %v1944, 2147483648
    %v1961 = vxor.u32 %v1945, 2147483648
    %v1962 = vxor.u32 %v1946, 2147483648
    %v1963 = vxor.u32 %v1947, 2147483648
    %v1964 = vxor.u32 %v1948, 2147483648
    %v1965 = vxor.u32 %v1949, 2147483648
    %v1966 = vxor.u32 %v1950, 2147483648
    %v1967 = vxor.u32 %v1951, 2147483648
    %v1968 = vxor.u32 %v1952, 2147483648
    %v1969 = vxor.u32 %v1953, 2147483648
    %v1970 = vxor.u32 %v1954, 2147483648
    %v1971 = vmul.f32 %v1955, 1.442695
    %v1972 = vpow.pop %v1971
    %v1973 = vmul.f32 %v1956, 1.442695
    %v1974 = vpow.pop %v1973
    %v1975 = vmul.f32 %v1957, 1.442695
    %v1976 = vpow.pop %v1975
    %v1977 = vmul.f32 %v1958, 1.442695
    %v1978 = vpow.pop %v1977
    %v1979 = vmul.f32 %v1959, 1.442695
    %v1980 = vpow.pop %v1979
    %v1981 = vmul.f32 %v1960, 1.442695
    %v1982 = vpow.pop %v1981
    %v1983 = vmul.f32 %v1961, 1.442695
    %v1984 = vpow.pop %v1983
    %v1985 = vmul.f32 %v1962, 1.442695
    %v1986 = vpow.pop %v1985
    %v1987 = vmul.f32 %v1963, 1.442695
    %v1988 = vpow.pop %v1987
    %v1989 = vmul.f32 %v1964, 1.442695
    %v1990 = vpow.pop %v1989
    %v1991 = vmul.f32 %v1965, 1.442695
    %v1992 = vpow.pop %v1991
    %v1993 = vmul.f32 %v1966, 1.442695
    %v1994 = vpow.pop %v1993
    %v1995 = vmul.f32 %v1967, 1.442695
    %v1996 = vpow.pop %v1995
    %v1997 = vmul.f32 %v1968, 1.442695
    %v1998 = vpow.pop %v1997
    %v1999 = vmul.f32 %v1969, 1.442695
    %v2000 = vpow.pop %v1999
    %v2001 = vmul.f32 %v1970, 1.442695
    %v2002 = vpow.pop %v2001
    %v2003 = vadd.f32 %v1972, 1.0
    %v2004 = vadd.f32 %v1974, 1.0
    %v2005 = vadd.f32 %v1976, 1.0
    %v2006 = vadd.f32 %v1978, 1.0
    %v2007 = vadd.f32 %v1980, 1.0
    %v2008 = vadd.f32 %v1982, 1.0
    %v2009 = vadd.f32 %v1984, 1.0
    %v2010 = vadd.f32 %v1986, 1.0
    %v2011 = vadd.f32 %v1988, 1.0
    %v2012 = vadd.f32 %v1990, 1.0
    %v2013 = vadd.f32 %v1992, 1.0
    %v2014 = vadd.f32 %v1994, 1.0
    %v2015 = vadd.f32 %v1996, 1.0
    %v2016 = vadd.f32 %v1998, 1.0
    %v2017 = vadd.f32 %v2000, 1.0
    %v2018 = vadd.f32 %v2002, 1.0
    %v2019 = vrcp.pop %v2003
    %v2020 = vmul.f32 1.0, %v2019
    %v2021 = vrcp.pop %v2004
    %v2022 = vmul.f32 1.0, %v2021
    %v2023 = vrcp.pop %v2005
    %v2024 = vmul.f32 1.0, %v2023
    %v2025 = vrcp.pop %v2006
    %v2026 = vmul.f32 1.0, %v2025
    %v2027 = vrcp.pop %v2007
    %v2028 = vmul.f32 1.0, %v2027
    %v2029 = vrcp.pop %v2008
    %v2030 = vmul.f32 1.0, %v2029
    %v2031 = vrcp.pop %v2009
    %v2032 = vmul.f32 1.0, %v2031
    %v2033 = vrcp.pop %v2010
    %v2034 = vmul.f32 1.0, %v2033
    %v2035 = vrcp.pop %v2011
    %v2036 = vmul.f32 1.0, %v2035
    %v2037 = vrcp.pop %v2012
    %v2038 = vmul.f32 1.0, %v2037
    %v2039 = vrcp.pop %v2013
    %v2040 = vmul.f32 1.0, %v2039
    %v2041 = vrcp.pop %v2014
    %v2042 = vmul.f32 1.0, %v2041
    %v2043 = vrcp.pop %v2015
    %v2044 = vmul.f32 1.0, %v2043
    %v2045 = vrcp.pop %v2016
    %v2046 = vmul.f32 1.0, %v2045
    %v2047 = vrcp.pop %v2017
    %v2048 = vmul.f32 1.0, %v2047
    %v2049 = vrcp.pop %v2018
    %v2050 = vmul.f32 1.0, %v2049
    %v2051 = vmul.f32 %v1939, %v2020
    %v2052 = vmul.f32 %v1940, %v2022
    %v2053 = vmul.f32 %v1941, %v2024
    %v2054 = vmul.f32 %v1942, %v2026
    %v2055 = vmul.f32 %v1943, %v2028
    %v2056 = vmul.f32 %v1944, %v2030
    %v2057 = vmul.f32 %v1945, %v2032
    %v2058 = vmul.f32 %v1946, %v2034
    %v2059 = vmul.f32 %v1947, %v2036
    %v2060 = vmul.f32 %v1948, %v2038
    %v2061 = vmul.f32 %v1949, %v2040
    %v2062 = vmul.f32 %v1950, %v2042
    %v2063 = vmul.f32 %v1951, %v2044
    %v2064 = vmul.f32 %v1952, %v2046
    %v2065 = vmul.f32 %v1953, %v2048
    %v2066 = vmul.f32 %v1954, %v2050
    %2067 = vst.msk [vmem:[%s695 + $0x1] sm:$0xff] %vm175, %v2051
    %2068 = vst.msk [vmem:[%s695 + $0x11] sm:$0xff] %vm175, %v2052
    %2069 = vst.msk [vmem:[%s695 + $0x21] sm:$0xff] %vm175, %v2053
    %2070 = vst.msk [vmem:[%s695 + $0x31] sm:$0xff] %vm175, %v2054
    %2071 = vst.msk [vmem:[%s695 + $0x41] sm:$0xff] %vm175, %v2055
    %2072 = vst.msk [vmem:[%s695 + $0x51] sm:$0xff] %vm175, %v2056
    %2073 = vst.msk [vmem:[%s695 + $0x61] sm:$0xff] %vm175, %v2057
    %2074 = vst.msk [vmem:[%s695 + $0x71] sm:$0xff] %vm175, %v2058
    %2075 = vst.msk [vmem:[%s695 + $0xa1] sm:$0xff] %vm175, %v2059
    %2076 = vst.msk [vmem:[%s695 + $0xb1] sm:$0xff] %vm175, %v2060
    %2077 = vst.msk [vmem:[%s695 + $0xc1] sm:$0xff] %vm175, %v2061
    %2078 = vst.msk [vmem:[%s695 + $0xd1] sm:$0xff] %vm175, %v2062
    %2079 = vst.msk [vmem:[%s695 + $0xe1] sm:$0xff] %vm175, %v2063
    %2080 = vst.msk [vmem:[%s695 + $0xf1] sm:$0xff] %vm175, %v2064
    %2081 = vst.msk [vmem:[%s695 + $0x101] sm:$0xff] %vm175, %v2065
    %2082 = vst.msk [vmem:[%s695 + $0x111] sm:$0xff] %vm175, %v2066
    %v2083 = vld [vmem:[#allocation2] sm:$0xff]
    %v2084 = vld [vmem:[#allocation2 + $0x10] sm:$0xff]
    %v2085 = vld [vmem:[#allocation2 + $0x20] sm:$0xff]
    %v2086 = vld [vmem:[#allocation2 + $0x30] sm:$0xff]
    %v2087 = vld [vmem:[#allocation2 + $0x40] sm:$0xff]
    %v2088 = vld [vmem:[#allocation2 + $0x50] sm:$0xff]
    %v2089 = vld [vmem:[#allocation2 + $0x60] sm:$0xff]
    %v2090 = vld [vmem:[#allocation2 + $0x70] sm:$0xff]
    %v2091 = vld [vmem:[#allocation2 + $0xa0] sm:$0xff]
    %v2092 = vld [vmem:[#allocation2 + $0xb0] sm:$0xff]
    %v2093 = vld [vmem:[#allocation2 + $0xc0] sm:$0xff]
    %v2094 = vld [vmem:[#allocation2 + $0xd0] sm:$0xff]
    %v2095 = vld [vmem:[#allocation2 + $0xe0] sm:$0xff]
    %v2096 = vld [vmem:[#allocation2 + $0xf0] sm:$0xff]
    %v2097 = vld [vmem:[#allocation2 + $0x100] sm:$0xff]
    %v2098 = vld [vmem:[#allocation2 + $0x110] sm:$0xff]
    %v2099 = vld [vmem:[#allocation2 + $0x1] sm:$0xff]
    %v2100 = vld [vmem:[#allocation2 + $0x11] sm:$0xff]
    %v2101 = vld [vmem:[#allocation2 + $0x21] sm:$0xff]
    %v2102 = vld [vmem:[#allocation2 + $0x31] sm:$0xff]
    %v2103 = vld [vmem:[#allocation2 + $0x41] sm:$0xff]
    %v2104 = vld [vmem:[#allocation2 + $0x51] sm:$0xff]
    %v2105 = vld [vmem:[#allocation2 + $0x61] sm:$0xff]
    %v2106 = vld [vmem:[#allocation2 + $0x71] sm:$0xff]
    %v2107 = vld [vmem:[#allocation2 + $0xa1] sm:$0xff]
    %v2108 = vld [vmem:[#allocation2 + $0xb1] sm:$0xff]
    %v2109 = vld [vmem:[#allocation2 + $0xc1] sm:$0xff]
    %v2110 = vld [vmem:[#allocation2 + $0xd1] sm:$0xff]
    %v2111 = vld [vmem:[#allocation2 + $0xe1] sm:$0xff]
    %v2112 = vld [vmem:[#allocation2 + $0xf1] sm:$0xff]
    %v2113 = vld [vmem:[#allocation2 + $0x101] sm:$0xff]
    %v2114 = vld [vmem:[#allocation2 + $0x111] sm:$0xff]
    %v2115 = vld [vmem:[#allocation2 + $0x2] sm:$0xff]
    %v2116 = vld [vmem:[#allocation2 + $0x12] sm:$0xff]
    %v2117 = vld [vmem:[#allocation2 + $0x22] sm:$0xff]
    %v2118 = vld [vmem:[#allocation2 + $0x32] sm:$0xff]
    %v2119 = vld [vmem:[#allocation2 + $0x42] sm:$0xff]
    %v2120 = vld [vmem:[#allocation2 + $0x52] sm:$0xff]
    %v2121 = vld [vmem:[#allocation2 + $0x62] sm:$0xff]
    %v2122 = vld [vmem:[#allocation2 + $0x72] sm:$0xff]
    %v2123 = vld [vmem:[#allocation2 + $0xa2] sm:$0xff]
    %v2124 = vld [vmem:[#allocation2 + $0xb2] sm:$0xff]
    %v2125 = vld [vmem:[#allocation2 + $0xc2] sm:$0xff]
    %v2126 = vld [vmem:[#allocation2 + $0xd2] sm:$0xff]
    %v2127 = vld [vmem:[#allocation2 + $0xe2] sm:$0xff]
    %v2128 = vld [vmem:[#allocation2 + $0xf2] sm:$0xff]
    %v2129 = vld [vmem:[#allocation2 + $0x102] sm:$0xff]
    %v2130 = vld [vmem:[#allocation2 + $0x112] sm:$0xff]
    %v2131 = vld [vmem:[%s695] sm:$0xff]
    %v2132 = vld [vmem:[%s695 + $0x10] sm:$0xff]
    %v2133 = vld [vmem:[%s695 + $0x20] sm:$0xff]
    %v2134 = vld [vmem:[%s695 + $0x30] sm:$0xff]
    %v2135 = vld [vmem:[%s695 + $0x40] sm:$0xff]
    %v2136 = vld [vmem:[%s695 + $0x50] sm:$0xff]
    %v2137 = vld [vmem:[%s695 + $0x60] sm:$0xff]
    %v2138 = vld [vmem:[%s695 + $0x70] sm:$0xff]
    %v2139 = vld [vmem:[%s695 + $0xa0] sm:$0xff]
    %v2140 = vld [vmem:[%s695 + $0xb0] sm:$0xff]
    %v2141 = vld [vmem:[%s695 + $0xc0] sm:$0xff]
    %v2142 = vld [vmem:[%s695 + $0xd0] sm:$0xff]
    %v2143 = vld [vmem:[%s695 + $0xe0] sm:$0xff]
    %v2144 = vld [vmem:[%s695 + $0xf0] sm:$0xff]
    %v2145 = vld [vmem:[%s695 + $0x100] sm:$0xff]
    %v2146 = vld [vmem:[%s695 + $0x110] sm:$0xff]
    %v2147 = vld [vmem:[%s695 + $0x1] sm:$0xff]
    %v2148 = vld [vmem:[%s695 + $0x11] sm:$0xff]
    %v2149 = vld [vmem:[%s695 + $0x21] sm:$0xff]
    %v2150 = vld [vmem:[%s695 + $0x31] sm:$0xff]
    %v2151 = vld [vmem:[%s695 + $0x41] sm:$0xff]
    %v2152 = vld [vmem:[%s695 + $0x51] sm:$0xff]
    %v2153 = vld [vmem:[%s695 + $0x61] sm:$0xff]
    %v2154 = vld [vmem:[%s695 + $0x71] sm:$0xff]
    %v2155 = vld [vmem:[%s695 + $0xa1] sm:$0xff]
    %v2156 = vld [vmem:[%s695 + $0xb1] sm:$0xff]
    %v2157 = vld [vmem:[%s695 + $0xc1] sm:$0xff]
    %v2158 = vld [vmem:[%s695 + $0xd1] sm:$0xff]
    %v2159 = vld [vmem:[%s695 + $0xe1] sm:$0xff]
    %v2160 = vld [vmem:[%s695 + $0xf1] sm:$0xff]
    %v2161 = vld [vmem:[%s695 + $0x101] sm:$0xff]
    %v2162 = vld [vmem:[%s695 + $0x111] sm:$0xff]
    %v2163 = vld [vmem:[%s695 + $0x2] sm:$0xff]
    %v2164 = vld [vmem:[%s695 + $0x12] sm:$0xff]
    %v2165 = vld [vmem:[%s695 + $0x22] sm:$0xff]
    %v2166 = vld [vmem:[%s695 + $0x32] sm:$0xff]
    %v2167 = vld [vmem:[%s695 + $0x42] sm:$0xff]
    %v2168 = vld [vmem:[%s695 + $0x52] sm:$0xff]
    %v2169 = vld [vmem:[%s695 + $0x62] sm:$0xff]
    %v2170 = vld [vmem:[%s695 + $0x72] sm:$0xff]
    %v2171 = vld [vmem:[%s695 + $0xa2] sm:$0xff]
    %v2172 = vld [vmem:[%s695 + $0xb2] sm:$0xff]
    %v2173 = vld [vmem:[%s695 + $0xc2] sm:$0xff]
    %v2174 = vld [vmem:[%s695 + $0xd2] sm:$0xff]
    %v2175 = vld [vmem:[%s695 + $0xe2] sm:$0xff]
    %v2176 = vld [vmem:[%s695 + $0xf2] sm:$0xff]
    %v2177 = vld [vmem:[%s695 + $0x102] sm:$0xff]
    %v2178 = vld [vmem:[%s695 + $0x112] sm:$0xff]
    %v2179 = vld [vmem:[%s808] sm:$0xff]
    %v2180 = vld [vmem:[%s808 + $0x10] sm:$0xff]
    %v2181 = vld [vmem:[%s808 + $0x20] sm:$0xff]
    %v2182 = vld [vmem:[%s808 + $0x30] sm:$0xff]
    %v2183 = vld [vmem:[%s808 + $0x40] sm:$0xff]
    %v2184 = vld [vmem:[%s808 + $0x50] sm:$0xff]
    %v2185 = vld [vmem:[%s808 + $0x60] sm:$0xff]
    %v2186 = vld [vmem:[%s808 + $0x70] sm:$0xff]
    %v2187 = vld [vmem:[%s808 + $0xa0] sm:$0xff]
    %v2188 = vld [vmem:[%s808 + $0xb0] sm:$0xff]
    %v2189 = vld [vmem:[%s808 + $0xc0] sm:$0xff]
    %v2190 = vld [vmem:[%s808 + $0xd0] sm:$0xff]
    %v2191 = vld [vmem:[%s808 + $0xe0] sm:$0xff]
    %v2192 = vld [vmem:[%s808 + $0xf0] sm:$0xff]
    %v2193 = vld [vmem:[%s808 + $0x100] sm:$0xff]
    %v2194 = vld [vmem:[%s808 + $0x110] sm:$0xff]
    %v2195 = vld [vmem:[%s808 + $0x1] sm:$0xff]
    %v2196 = vld [vmem:[%s808 + $0x11] sm:$0xff]
    %v2197 = vld [vmem:[%s808 + $0x21] sm:$0xff]
    %v2198 = vld [vmem:[%s808 + $0x31] sm:$0xff]
    %v2199 = vld [vmem:[%s808 + $0x41] sm:$0xff]
    %v2200 = vld [vmem:[%s808 + $0x51] sm:$0xff]
    %v2201 = vld [vmem:[%s808 + $0x61] sm:$0xff]
    %v2202 = vld [vmem:[%s808 + $0x71] sm:$0xff]
    %v2203 = vld [vmem:[%s808 + $0xa1] sm:$0xff]
    %v2204 = vld [vmem:[%s808 + $0xb1] sm:$0xff]
    %v2205 = vld [vmem:[%s808 + $0xc1] sm:$0xff]
    %v2206 = vld [vmem:[%s808 + $0xd1] sm:$0xff]
    %v2207 = vld [vmem:[%s808 + $0xe1] sm:$0xff]
    %v2208 = vld [vmem:[%s808 + $0xf1] sm:$0xff]
    %v2209 = vld [vmem:[%s808 + $0x101] sm:$0xff]
    %v2210 = vld [vmem:[%s808 + $0x111] sm:$0xff]
    %v2211 = vld [vmem:[%s808 + $0x2] sm:$0xff]
    %v2212 = vld [vmem:[%s808 + $0x12] sm:$0xff]
    %v2213 = vld [vmem:[%s808 + $0x22] sm:$0xff]
    %v2214 = vld [vmem:[%s808 + $0x32] sm:$0xff]
    %v2215 = vld [vmem:[%s808 + $0x42] sm:$0xff]
    %v2216 = vld [vmem:[%s808 + $0x52] sm:$0xff]
    %v2217 = vld [vmem:[%s808 + $0x62] sm:$0xff]
    %v2218 = vld [vmem:[%s808 + $0x72] sm:$0xff]
    %v2219 = vld [vmem:[%s808 + $0xa2] sm:$0xff]
    %v2220 = vld [vmem:[%s808 + $0xb2] sm:$0xff]
    %v2221 = vld [vmem:[%s808 + $0xc2] sm:$0xff]
    %v2222 = vld [vmem:[%s808 + $0xd2] sm:$0xff]
    %v2223 = vld [vmem:[%s808 + $0xe2] sm:$0xff]
    %v2224 = vld [vmem:[%s808 + $0xf2] sm:$0xff]
    %v2225 = vld [vmem:[%s808 + $0x102] sm:$0xff]
    %v2226 = vld [vmem:[%s808 + $0x112] sm:$0xff]
    %2243 = vrot.lane.b32.xlu0 %v2099, 32
    %v2244 = vpop.permute.xlu0 %2243
    %2245 = vrot.lane.b32.xlu0 %v2100, 32
    %v2246 = vpop.permute.xlu0 %2245
    %2247 = vrot.lane.b32.xlu0 %v2101, 32
    %v2248 = vpop.permute.xlu0 %2247
    %2249 = vrot.lane.b32.xlu0 %v2102, 32
    %v2250 = vpop.permute.xlu0 %2249
    %2251 = vrot.lane.b32.xlu0 %v2103, 32
    %v2252 = vpop.permute.xlu0 %2251
    %2253 = vrot.lane.b32.xlu0 %v2104, 32
    %v2254 = vpop.permute.xlu0 %2253
    %2255 = vrot.lane.b32.xlu0 %v2105, 32
    %v2256 = vpop.permute.xlu0 %2255
    %2257 = vrot.lane.b32.xlu0 %v2106, 32
    %v2258 = vpop.permute.xlu0 %2257
    %2259 = vrot.lane.b32.xlu0 %v2107, 32
    %v2260 = vpop.permute.xlu0 %2259
    %2261 = vrot.lane.b32.xlu0 %v2108, 32
    %v2262 = vpop.permute.xlu0 %2261
    %2263 = vrot.lane.b32.xlu0 %v2109, 32
    %v2264 = vpop.permute.xlu0 %2263
    %2265 = vrot.lane.b32.xlu0 %v2110, 32
    %v2266 = vpop.permute.xlu0 %2265
    %2267 = vrot.lane.b32.xlu0 %v2111, 32
    %v2268 = vpop.permute.xlu0 %2267
    %2269 = vrot.lane.b32.xlu0 %v2112, 32
    %v2270 = vpop.permute.xlu0 %2269
    %2271 = vrot.lane.b32.xlu0 %v2113, 32
    %v2272 = vpop.permute.xlu0 %2271
    %2273 = vrot.lane.b32.xlu0 %v2114, 32
    %v2274 = vpop.permute.xlu0 %2273
    %2307 = vrot.lane.b32.xlu0 %v2115, 64
    %v2308 = vpop.permute.xlu0 %2307
    %2309 = vrot.lane.b32.xlu0 %v2116, 64
    %v2310 = vpop.permute.xlu0 %2309
    %2311 = vrot.lane.b32.xlu0 %v2117, 64
    %v2312 = vpop.permute.xlu0 %2311
    %2313 = vrot.lane.b32.xlu0 %v2118, 64
    %v2314 = vpop.permute.xlu0 %2313
    %2315 = vrot.lane.b32.xlu0 %v2119, 64
    %v2316 = vpop.permute.xlu0 %2315
    %2317 = vrot.lane.b32.xlu0 %v2120, 64
    %v2318 = vpop.permute.xlu0 %2317
    %2319 = vrot.lane.b32.xlu0 %v2121, 64
    %v2320 = vpop.permute.xlu0 %2319
    %2321 = vrot.lane.b32.xlu0 %v2122, 64
    %v2322 = vpop.permute.xlu0 %2321
    %2323 = vrot.lane.b32.xlu0 %v2123, 64
    %v2324 = vpop.permute.xlu0 %2323
    %2325 = vrot.lane.b32.xlu0 %v2124, 64
    %v2326 = vpop.permute.xlu0 %2325
    %2327 = vrot.lane.b32.xlu0 %v2125, 64
    %v2328 = vpop.permute.xlu0 %2327
    %2329 = vrot.lane.b32.xlu0 %v2126, 64
    %v2330 = vpop.permute.xlu0 %2329
    %2331 = vrot.lane.b32.xlu0 %v2127, 64
    %v2332 = vpop.permute.xlu0 %2331
    %2333 = vrot.lane.b32.xlu0 %v2128, 64
    %v2334 = vpop.permute.xlu0 %2333
    %2335 = vrot.lane.b32.xlu0 %v2129, 64
    %v2336 = vpop.permute.xlu0 %2335
    %2337 = vrot.lane.b32.xlu0 %v2130, 64
    %v2338 = vpop.permute.xlu0 %2337
    %2371 = vrot.lane.b32.xlu0 %v2131, 96
    %v2372 = vpop.permute.xlu0 %2371
    %2373 = vrot.lane.b32.xlu0 %v2132, 96
    %v2374 = vpop.permute.xlu0 %2373
    %2375 = vrot.lane.b32.xlu0 %v2133, 96
    %v2376 = vpop.permute.xlu0 %2375
    %2377 = vrot.lane.b32.xlu0 %v2134, 96
    %v2378 = vpop.permute.xlu0 %2377
    %2379 = vrot.lane.b32.xlu0 %v2135, 96
    %v2380 = vpop.permute.xlu0 %2379
    %2381 = vrot.lane.b32.xlu0 %v2136, 96
    %v2382 = vpop.permute.xlu0 %2381
    %2383 = vrot.lane.b32.xlu0 %v2137, 96
    %v2384 = vpop.permute.xlu0 %2383
    %2385 = vrot.lane.b32.xlu0 %v2138, 96
    %v2386 = vpop.permute.xlu0 %2385
    %2387 = vrot.lane.b32.xlu0 %v2139, 96
    %v2388 = vpop.permute.xlu0 %2387
    %2389 = vrot.lane.b32.xlu0 %v2140, 96
    %v2390 = vpop.permute.xlu0 %2389
    %2391 = vrot.lane.b32.xlu0 %v2141, 96
    %v2392 = vpop.permute.xlu0 %2391
    %2393 = vrot.lane.b32.xlu0 %v2142, 96
    %v2394 = vpop.permute.xlu0 %2393
    %2395 = vrot.lane.b32.xlu0 %v2143, 96
    %v2396 = vpop.permute.xlu0 %2395
    %2397 = vrot.lane.b32.xlu0 %v2144, 96
    %v2398 = vpop.permute.xlu0 %2397
    %2399 = vrot.lane.b32.xlu0 %v2145, 96
    %v2400 = vpop.permute.xlu0 %2399
    %2401 = vrot.lane.b32.xlu0 %v2146, 96
    %v2402 = vpop.permute.xlu0 %2401
    %2435 = vrot.lane.b32.xlu0 %v2163, 32
    %v2436 = vpop.permute.xlu0 %2435
    %2437 = vrot.lane.b32.xlu0 %v2164, 32
    %v2438 = vpop.permute.xlu0 %2437
    %2439 = vrot.lane.b32.xlu0 %v2165, 32
    %v2440 = vpop.permute.xlu0 %2439
    %2441 = vrot.lane.b32.xlu0 %v2166, 32
    %v2442 = vpop.permute.xlu0 %2441
    %2443 = vrot.lane.b32.xlu0 %v2167, 32
    %v2444 = vpop.permute.xlu0 %2443
    %2445 = vrot.lane.b32.xlu0 %v2168, 32
    %v2446 = vpop.permute.xlu0 %2445
    %2447 = vrot.lane.b32.xlu0 %v2169, 32
    %v2448 = vpop.permute.xlu0 %2447
    %2449 = vrot.lane.b32.xlu0 %v2170, 32
    %v2450 = vpop.permute.xlu0 %2449
    %2451 = vrot.lane.b32.xlu0 %v2171, 32
    %v2452 = vpop.permute.xlu0 %2451
    %2453 = vrot.lane.b32.xlu0 %v2172, 32
    %v2454 = vpop.permute.xlu0 %2453
    %2455 = vrot.lane.b32.xlu0 %v2173, 32
    %v2456 = vpop.permute.xlu0 %2455
    %2457 = vrot.lane.b32.xlu0 %v2174, 32
    %v2458 = vpop.permute.xlu0 %2457
    %2459 = vrot.lane.b32.xlu0 %v2175, 32
    %v2460 = vpop.permute.xlu0 %2459
    %2461 = vrot.lane.b32.xlu0 %v2176, 32
    %v2462 = vpop.permute.xlu0 %2461
    %2463 = vrot.lane.b32.xlu0 %v2177, 32
    %v2464 = vpop.permute.xlu0 %2463
    %2465 = vrot.lane.b32.xlu0 %v2178, 32
    %v2466 = vpop.permute.xlu0 %2465
    %2499 = vrot.lane.b32.xlu0 %v2179, 64
    %v2500 = vpop.permute.xlu0 %2499
    %2501 = vrot.lane.b32.xlu0 %v2180, 64
    %v2502 = vpop.permute.xlu0 %2501
    %2503 = vrot.lane.b32.xlu0 %v2181, 64
    %v2504 = vpop.permute.xlu0 %2503
    %2505 = vrot.lane.b32.xlu0 %v2182, 64
    %v2506 = vpop.permute.xlu0 %2505
    %2507 = vrot.lane.b32.xlu0 %v2183, 64
    %v2508 = vpop.permute.xlu0 %2507
    %2509 = vrot.lane.b32.xlu0 %v2184, 64
    %v2510 = vpop.permute.xlu0 %2509
    %2511 = vrot.lane.b32.xlu0 %v2185, 64
    %v2512 = vpop.permute.xlu0 %2511
    %2513 = vrot.lane.b32.xlu0 %v2186, 64
    %v2514 = vpop.permute.xlu0 %2513
    %2515 = vrot.lane.b32.xlu0 %v2187, 64
    %v2516 = vpop.permute.xlu0 %2515
    %2517 = vrot.lane.b32.xlu0 %v2188, 64
    %v2518 = vpop.permute.xlu0 %2517
    %2519 = vrot.lane.b32.xlu0 %v2189, 64
    %v2520 = vpop.permute.xlu0 %2519
    %2521 = vrot.lane.b32.xlu0 %v2190, 64
    %v2522 = vpop.permute.xlu0 %2521
    %2523 = vrot.lane.b32.xlu0 %v2191, 64
    %v2524 = vpop.permute.xlu0 %2523
    %2525 = vrot.lane.b32.xlu0 %v2192, 64
    %v2526 = vpop.permute.xlu0 %2525
    %2527 = vrot.lane.b32.xlu0 %v2193, 64
    %v2528 = vpop.permute.xlu0 %2527
    %2529 = vrot.lane.b32.xlu0 %v2194, 64
    %v2530 = vpop.permute.xlu0 %2529
    %2563 = vrot.lane.b32.xlu0 %v2195, 96
    %v2564 = vpop.permute.xlu0 %2563
    %2565 = vrot.lane.b32.xlu0 %v2196, 96
    %v2566 = vpop.permute.xlu0 %2565
    %2567 = vrot.lane.b32.xlu0 %v2197, 96
    %v2568 = vpop.permute.xlu0 %2567
    %2569 = vrot.lane.b32.xlu0 %v2198, 96
    %v2570 = vpop.permute.xlu0 %2569
    %2571 = vrot.lane.b32.xlu0 %v2199, 96
    %v2572 = vpop.permute.xlu0 %2571
    %2573 = vrot.lane.b32.xlu0 %v2200, 96
    %v2574 = vpop.permute.xlu0 %2573
    %2575 = vrot.lane.b32.xlu0 %v2201, 96
    %v2576 = vpop.permute.xlu0 %2575
    %2577 = vrot.lane.b32.xlu0 %v2202, 96
    %v2578 = vpop.permute.xlu0 %2577
    %2579 = vrot.lane.b32.xlu0 %v2203, 96
    %v2580 = vpop.permute.xlu0 %2579
    %2581 = vrot.lane.b32.xlu0 %v2204, 96
    %v2582 = vpop.permute.xlu0 %2581
    %2583 = vrot.lane.b32.xlu0 %v2205, 96
    %v2584 = vpop.permute.xlu0 %2583
    %2585 = vrot.lane.b32.xlu0 %v2206, 96
    %v2586 = vpop.permute.xlu0 %2585
    %2587 = vrot.lane.b32.xlu0 %v2207, 96
    %v2588 = vpop.permute.xlu0 %2587
    %2589 = vrot.lane.b32.xlu0 %v2208, 96
    %v2590 = vpop.permute.xlu0 %2589
    %2591 = vrot.lane.b32.xlu0 %v2209, 96
    %v2592 = vpop.permute.xlu0 %2591
    %2593 = vrot.lane.b32.xlu0 %v2210, 96
    %v2594 = vpop.permute.xlu0 %2593
    %v2611 = vsel %vm175, %v2083, %v2244
    %v2612 = vsel %vm175, %v2084, %v2246
    %v2613 = vsel %vm175, %v2085, %v2248
    %v2614 = vsel %vm175, %v2086, %v2250
    %v2615 = vsel %vm175, %v2087, %v2252
    %v2616 = vsel %vm175, %v2088, %v2254
    %v2617 = vsel %vm175, %v2089, %v2256
    %v2618 = vsel %vm175, %v2090, %v2258
    %v2619 = vsel %vm175, %v2091, %v2260
    %v2620 = vsel %vm175, %v2092, %v2262
    %v2621 = vsel %vm175, %v2093, %v2264
    %v2622 = vsel %vm175, %v2094, %v2266
    %v2623 = vsel %vm175, %v2095, %v2268
    %v2624 = vsel %vm175, %v2096, %v2270
    %v2625 = vsel %vm175, %v2097, %v2272
    %v2626 = vsel %vm175, %v2098, %v2274
    %v2627 = vsel %vm1257, %v2611, %v2308
    %v2628 = vsel %vm1257, %v2612, %v2310
    %v2629 = vsel %vm1257, %v2613, %v2312
    %v2630 = vsel %vm1257, %v2614, %v2314
    %v2631 = vsel %vm1257, %v2615, %v2316
    %v2632 = vsel %vm1257, %v2616, %v2318
    %v2633 = vsel %vm1257, %v2617, %v2320
    %v2634 = vsel %vm1257, %v2618, %v2322
    %v2635 = vsel %vm1257, %v2619, %v2324
    %v2636 = vsel %vm1257, %v2620, %v2326
    %v2637 = vsel %vm1257, %v2621, %v2328
    %v2638 = vsel %vm1257, %v2622, %v2330
    %v2639 = vsel %vm1257, %v2623, %v2332
    %v2640 = vsel %vm1257, %v2624, %v2334
    %v2641 = vsel %vm1257, %v2625, %v2336
    %v2642 = vsel %vm1257, %v2626, %v2338
    %v2643 = vsel %vm1274, %v2627, %v2372
    %v2644 = vsel %vm1274, %v2628, %v2374
    %v2645 = vsel %vm1274, %v2629, %v2376
    %v2646 = vsel %vm1274, %v2630, %v2378
    %v2647 = vsel %vm1274, %v2631, %v2380
    %v2648 = vsel %vm1274, %v2632, %v2382
    %v2649 = vsel %vm1274, %v2633, %v2384
    %v2650 = vsel %vm1274, %v2634, %v2386
    %v2651 = vsel %vm1274, %v2635, %v2388
    %v2652 = vsel %vm1274, %v2636, %v2390
    %v2653 = vsel %vm1274, %v2637, %v2392
    %v2654 = vsel %vm1274, %v2638, %v2394
    %v2655 = vsel %vm1274, %v2639, %v2396
    %v2656 = vsel %vm1274, %v2640, %v2398
    %v2657 = vsel %vm1274, %v2641, %v2400
    %v2658 = vsel %vm1274, %v2642, %v2402
    %v2659 = vsel %vm175, %v2147, %v2436
    %v2660 = vsel %vm175, %v2148, %v2438
    %v2661 = vsel %vm175, %v2149, %v2440
    %v2662 = vsel %vm175, %v2150, %v2442
    %v2663 = vsel %vm175, %v2151, %v2444
    %v2664 = vsel %vm175, %v2152, %v2446
    %v2665 = vsel %vm175, %v2153, %v2448
    %v2666 = vsel %vm175, %v2154, %v2450
    %v2667 = vsel %vm175, %v2155, %v2452
    %v2668 = vsel %vm175, %v2156, %v2454
    %v2669 = vsel %vm175, %v2157, %v2456
    %v2670 = vsel %vm175, %v2158, %v2458
    %v2671 = vsel %vm175, %v2159, %v2460
    %v2672 = vsel %vm175, %v2160, %v2462
    %v2673 = vsel %vm175, %v2161, %v2464
    %v2674 = vsel %vm175, %v2162, %v2466
    %v2675 = vsel %vm1257, %v2659, %v2500
    %v2676 = vsel %vm1257, %v2660, %v2502
    %v2677 = vsel %vm1257, %v2661, %v2504
    %v2678 = vsel %vm1257, %v2662, %v2506
    %v2679 = vsel %vm1257, %v2663, %v2508
    %v2680 = vsel %vm1257, %v2664, %v2510
    %v2681 = vsel %vm1257, %v2665, %v2512
    %v2682 = vsel %vm1257, %v2666, %v2514
    %v2683 = vsel %vm1257, %v2667, %v2516
    %v2684 = vsel %vm1257, %v2668, %v2518
    %v2685 = vsel %vm1257, %v2669, %v2520
    %v2686 = vsel %vm1257, %v2670, %v2522
    %v2687 = vsel %vm1257, %v2671, %v2524
    %v2688 = vsel %vm1257, %v2672, %v2526
    %v2689 = vsel %vm1257, %v2673, %v2528
    %v2690 = vsel %vm1257, %v2674, %v2530
    %v2691 = vsel %vm1274, %v2675, %v2564
    %v2692 = vsel %vm1274, %v2676, %v2566
    %v2693 = vsel %vm1274, %v2677, %v2568
    %v2694 = vsel %vm1274, %v2678, %v2570
    %v2695 = vsel %vm1274, %v2679, %v2572
    %v2696 = vsel %vm1274, %v2680, %v2574
    %v2697 = vsel %vm1274, %v2681, %v2576
    %v2698 = vsel %vm1274, %v2682, %v2578
    %v2699 = vsel %vm1274, %v2683, %v2580
    %v2700 = vsel %vm1274, %v2684, %v2582
    %v2701 = vsel %vm1274, %v2685, %v2584
    %v2702 = vsel %vm1274, %v2686, %v2586
    %v2703 = vsel %vm1274, %v2687, %v2588
    %v2704 = vsel %vm1274, %v2688, %v2590
    %v2705 = vsel %vm1274, %v2689, %v2592
    %v2706 = vsel %vm1274, %v2690, %v2594
    %v2707 = vld [vmem:[#allocation8] sm:$0xff]
    %v2708 = vld [vmem:[#allocation8 + $0x8] sm:$0xff]
    %v2709 = vld [vmem:[#allocation8 + $0x10] sm:$0xff]
    %v2710 = vld [vmem:[#allocation8 + $0x18] sm:$0xff]
    %v2711 = vld [vmem:[#allocation8 + $0x20] sm:$0xff]
    %v2712 = vld [vmem:[#allocation8 + $0x28] sm:$0xff]
    %v2713 = vld [vmem:[#allocation8 + $0x30] sm:$0xff]
    %v2714 = vld [vmem:[#allocation8 + $0x38] sm:$0xff]
    %v2715 = vld [vmem:[#allocation8 + $0x40] sm:$0xff]
    %v2716 = vld [vmem:[#allocation8 + $0x48] sm:$0xff]
    %v2717 = vld [vmem:[#allocation8 + $0x50] sm:$0xff]
    %v2718 = vld [vmem:[#allocation8 + $0x58] sm:$0xff]
    %v2719 = vld [vmem:[#allocation8 + $0x60] sm:$0xff]
    %v2720 = vld [vmem:[#allocation8 + $0x68] sm:$0xff]
    %v2721 = vld [vmem:[#allocation8 + $0x70] sm:$0xff]
    %v2722 = vld [vmem:[#allocation8 + $0x78] sm:$0xff]
    %v2723 = vld [vmem:[#allocation8 + $0x80] sm:$0xff]
    %v2724 = vld [vmem:[#allocation8 + $0x88] sm:$0xff]
    %v2725 = vld [vmem:[#allocation8 + $0x90] sm:$0xff]
    %v2726 = vld [vmem:[#allocation8 + $0x98] sm:$0xff]
    %v2727 = vld [vmem:[#allocation8 + $0xa0] sm:$0xff]
    %v2728 = vld [vmem:[#allocation8 + $0xa8] sm:$0xff]
    %v2729 = vld [vmem:[#allocation8 + $0xb0] sm:$0xff]
    %v2730 = vld [vmem:[#allocation8 + $0xb8] sm:$0xff]
    %v2731 = vld [vmem:[#allocation8 + $0xc0] sm:$0xff]
    %v2732 = vld [vmem:[#allocation8 + $0xc8] sm:$0xff]
    %v2733 = vld [vmem:[#allocation8 + $0xd0] sm:$0xff]
    %v2734 = vld [vmem:[#allocation8 + $0xd8] sm:$0xff]
    %v2735 = vld [vmem:[#allocation8 + $0xe0] sm:$0xff]
    %v2736 = vld [vmem:[#allocation8 + $0xe8] sm:$0xff]
    %v2737 = vld [vmem:[#allocation8 + $0xf0] sm:$0xff]
    %v2738 = vld [vmem:[#allocation8 + $0xf8] sm:$0xff]
    %v2739 = vld [vmem:[#allocation8 + $0x100] sm:$0xff]
    %v2740 = vld [vmem:[#allocation8 + $0x108] sm:$0xff]
    %v2741 = vld [vmem:[#allocation8 + $0x110] sm:$0xff]
    %v2742 = vld [vmem:[#allocation8 + $0x118] sm:$0xff]
    %v2743 = vld [vmem:[%s11] sm:$0x1]
    %v2745 = vlaneseq
    %v2746 = vshrl.u32 %v2745, 7
    %v2747 = vsub.s32 0, %v2746
    %v2748 = vrot.slane %v2743, %v2747
    %v2751 = vsel %vm175, %v2211, 0
    %v2754 = vsel %vm175, %v2212, 0
    %v2757 = vsel %vm175, %v2213, 0
    %v2760 = vsel %vm175, %v2214, 0
    %v2763 = vsel %vm175, %v2215, 0
    %v2766 = vsel %vm175, %v2216, 0
    %v2769 = vsel %vm175, %v2217, 0
    %v2772 = vsel %vm175, %v2218, 0
    %v2775 = vsel %vm175, %v2219, 0
    %v2778 = vsel %vm175, %v2220, 0
    %v2781 = vsel %vm175, %v2221, 0
    %v2784 = vsel %vm175, %v2222, 0
    %v2787 = vsel %vm175, %v2223, 0
    %v2790 = vsel %vm175, %v2224, 0
    %v2793 = vsel %vm175, %v2225, 0
    %v2796 = vsel %vm175, %v2226, 0
    %2798 = vmatprep.subr.mxu0 0.0
    %2799 = vmatpush1.msra.mxu0 %v2707
    %2800 = vmatprep.subr.mxu0 0.0
    %2801 = vmatpush1.msra.mxu0 %v2708
    %2802 = vmatprep.subr.mxu0 0.0
    %2803 = vmatpush1.msra.mxu0 %v2709
    %2804 = vmatprep.subr.mxu0 0.0
    %2805 = vmatpush1.msra.mxu0 %v2710
    %2806 = vmatprep.subr.mxu0 0.0
    %2807 = vmatpush1.msra.mxu0 %v2711
    %2808 = vmatprep.subr.mxu0 0.0
    %2809 = vmatpush1.msra.mxu0 %v2712
    %2810 = vmatprep.subr.mxu0 0.0
    %2811 = vmatpush1.msra.mxu0 %v2713
    %2812 = vmatprep.subr.mxu0 0.0
    %2813 = vmatpush1.msra.mxu0 %v2714
    %2814 = vmatprep.subr.mxu0 0.0
    %2815 = vmatpush1.msra.mxu0 %v2715
    %2816 = vmatprep.subr.mxu0 0.0
    %2817 = vmatpush1.msra.mxu0 %v2716
    %2818 = vmatprep.subr.mxu0 0.0
    %2819 = vmatpush1.msra.mxu0 %v2717
    %2820 = vmatprep.subr.mxu0 0.0
    %2821 = vmatpush1.msra.mxu0 %v2718
    %2822 = vmatprep.subr.mxu0 0.0
    %2823 = vmatpush1.msra.mxu0 %v2719
    %2824 = vmatprep.subr.mxu0 0.0
    %2825 = vmatpush1.msra.mxu0 %v2720
    %2826 = vmatprep.subr.mxu0 0.0
    %2827 = vmatpush1.msra.mxu0 %v2721
    %2828 = vmatprep.subr.mxu0 0.0
    %2829 = vmatpush1.msra.mxu0 %v2722
    %2830 = vmatprep.subr.mxu0 0.0
    %2831 = vmatpush1.msra.mxu0 %v2723
    %2832 = vmatprep.subr.mxu0 0.0
    %2833 = vmatpush1.msra.mxu0 %v2724
    %2834 = vmatprep.subr.mxu0 0.0
    %2835 = vmatpush1.msra.mxu0 %v2725
    %2836 = vmatprep.subr.mxu0 0.0
    %2837 = vmatpush1.msra.mxu0 %v2726
    %2838 = vmatprep.subr.mxu0 0.0
    %2839 = vmatpush1.msra.mxu0 %v2727
    %2840 = vmatprep.subr.mxu0 0.0
    %2841 = vmatpush1.msra.mxu0 %v2728
    %2842 = vmatprep.subr.mxu0 0.0
    %2843 = vmatpush1.msra.mxu0 %v2729
    %2844 = vmatprep.subr.mxu0 0.0
    %2845 = vmatpush1.msra.mxu0 %v2730
    %2846 = vmatprep.subr.mxu0 0.0
    %2847 = vmatpush1.msra.mxu0 %v2731
    %2848 = vmatprep.subr.mxu0 0.0
    %2849 = vmatpush1.msra.mxu0 %v2732
    %2850 = vmatprep.subr.mxu0 0.0
    %2851 = vmatpush1.msra.mxu0 %v2733
    %2852 = vmatprep.subr.mxu0 0.0
    %2853 = vmatpush1.msra.mxu0 %v2734
    %2854 = vmatprep.subr.mxu0 0.0
    %2855 = vmatpush1.msra.mxu0 %v2735
    %2856 = vmatprep.subr.mxu0 0.0
    %2857 = vmatpush1.msra.mxu0 %v2736
    %2858 = vmatprep.subr.mxu0 0.0
    %2859 = vmatpush1.msra.mxu0 %v2737
    %2860 = vmatprep.subr.mxu0 0.0
    %2861 = vmatpush1.msra.mxu0 %v2738
    %2862 = vmatprep.mubr.f32.mxu0 %v2691
    %2863 = vmatmul.mubr.f32.gmra.mrb[0].mxu0 %v2643
    %v2864 = vpop.f32.mrb[0].mxu0
    %v2865 = vadd.f32 %v2748, %v2864
    %v2866 = vpop.f32.mrb[0].mxu0
    %2867 = vmatprep.mubr.f32.mxu0 %v2692
    %2868 = vmatmul.mubr.f32.gmra.mrb[0].mxu0 %v2644
    %v2869 = vpop.f32.mrb[0].mxu0
    %v2870 = vadd.f32 %v2748, %v2869
    %v2871 = vpop.f32.mrb[0].mxu0
    %2872 = vmatprep.mubr.f32.mxu0 %v2693
    %2873 = vmatmul.mubr.f32.gmra.mrb[0].mxu0 %v2645
    %v2874 = vpop.f32.mrb[0].mxu0
    %v2875 = vadd.f32 %v2748, %v2874
    %v2876 = vpop.f32.mrb[0].mxu0
    %2877 = vmatprep.mubr.f32.mxu0 %v2694
    %2878 = vmatmul.mubr.f32.gmra.mrb[0].mxu0 %v2646
    %v2879 = vpop.f32.mrb[0].mxu0
    %v2880 = vadd.f32 %v2748, %v2879
    %v2881 = vpop.f32.mrb[0].mxu0
    %2882 = vmatprep.mubr.f32.mxu0 %v2695
    %2883 = vmatmul.mubr.f32.gmra.mrb[0].mxu0 %v2647
    %v2884 = vpop.f32.mrb[0].mxu0
    %v2885 = vadd.f32 %v2748, %v2884
    %v2886 = vpop.f32.mrb[0].mxu0
    %2887 = vmatprep.mubr.f32.mxu0 %v2696
    %2888 = vmatmul.mubr.f32.gmra.mrb[0].mxu0 %v2648
    %v2889 = vpop.f32.mrb[0].mxu0
    %v2890 = vadd.f32 %v2748, %v2889
    %v2891 = vpop.f32.mrb[0].mxu0
    %2892 = vmatprep.mubr.f32.mxu0 %v2697
    %2893 = vmatmul.mubr.f32.gmra.mrb[0].mxu0 %v2649
    %v2894 = vpop.f32.mrb[0].mxu0
    %v2895 = vadd.f32 %v2748, %v2894
    %v2896 = vpop.f32.mrb[0].mxu0
    %2897 = vmatprep.mubr.f32.mxu0 %v2698
    %2898 = vmatmul.mubr.f32.gmra.mrb[0].mxu0 %v2650
    %v2899 = vpop.f32.mrb[0].mxu0
    %v2900 = vadd.f32 %v2748, %v2899
    %v2901 = vpop.f32.mrb[0].mxu0
    %2902 = vmatprep.mubr.f32.mxu0 %v2699
    %2903 = vmatmul.mubr.f32.gmra.mrb[0].mxu0 %v2651
    %v2904 = vpop.f32.mrb[0].mxu0
    %v2905 = vadd.f32 %v2748, %v2904
    %v2906 = vpop.f32.mrb[0].mxu0
    %2907 = vmatprep.mubr.f32.mxu0 %v2700
    %2908 = vmatmul.mubr.f32.gmra.mrb[0].mxu0 %v2652
    %v2909 = vpop.f32.mrb[0].mxu0
    %v2910 = vadd.f32 %v2748, %v2909
    %v2911 = vpop.f32.mrb[0].mxu0
    %2912 = vmatprep.mubr.f32.mxu0 %v2701
    %2913 = vmatmul.mubr.f32.gmra.mrb[0].mxu0 %v2653
    %v2914 = vpop.f32.mrb[0].mxu0
    %v2915 = vadd.f32 %v2748, %v2914
    %v2916 = vpop.f32.mrb[0].mxu0
    %2917 = vmatprep.mubr.f32.mxu0 %v2702
    %2918 = vmatmul.mubr.f32.gmra.mrb[0].mxu0 %v2654
    %v2919 = vpop.f32.mrb[0].mxu0
    %v2920 = vadd.f32 %v2748, %v2919
    %v2921 = vpop.f32.mrb[0].mxu0
    %2922 = vmatprep.mubr.f32.mxu0 %v2703
    %2923 = vmatmul.mubr.f32.gmra.mrb[0].mxu0 %v2655
    %v2924 = vpop.f32.mrb[0].mxu0
    %v2925 = vadd.f32 %v2748, %v2924
    %v2926 = vpop.f32.mrb[0].mxu0
    %2927 = vmatprep.mubr.f32.mxu0 %v2704
    %2928 = vmatmul.mubr.f32.gmra.mrb[0].mxu0 %v2656
    %v2929 = vpop.f32.mrb[0].mxu0
    %v2930 = vadd.f32 %v2748, %v2929
    %v2931 = vpop.f32.mrb[0].mxu0
    %2932 = vmatprep.mubr.f32.mxu0 %v2705
    %2933 = vmatmul.mubr.f32.gmra.mrb[0].mxu0 %v2657
    %v2934 = vpop.f32.mrb[0].mxu0
    %v2935 = vadd.f32 %v2748, %v2934
    %v2936 = vpop.f32.mrb[0].mxu0
    %2937 = vmatprep.mubr.f32.mxu0 %v2706
    %2938 = vmatmul.mubr.f32.gmra.mrb[0].mxu0 %v2658
    %v2939 = vpop.f32.mrb[0].mxu0
    %v2940 = vadd.f32 %v2748, %v2939
    %v2941 = vpop.f32.mrb[0].mxu0
    %2942 = vdwg.mxu0
    %2943 = vmatprep.subr.mxu0 0.0
    %2944 = vmatpush1.msra.mxu0 %v2739
    %2945 = vmatprep.subr.mxu0 0.0
    %2946 = vmatpush1.msra.mxu0 %v2740
    %2947 = vmatprep.subr.mxu0 0.0
    %2948 = vmatpush1.msra.mxu0 %v2741
    %2949 = vmatprep.subr.mxu0 0.0
    %2950 = vmatpush1.msra.mxu0 %v2742
    %2951 = vmatprep.subr.mxu0 0.0
    %2952 = vmatpush1.msra.mxu0 0.0
    %2953 = vmatprep.subr.mxu0 0.0
    %2954 = vmatpush1.msra.mxu0 0.0
    %2955 = vmatprep.subr.mxu0 0.0
    %2956 = vmatpush1.msra.mxu0 0.0
    %2957 = vmatprep.subr.mxu0 0.0
    %2958 = vmatpush1.msra.mxu0 0.0
    %2959 = vmatprep.subr.mxu0 0.0
    %2960 = vmatpush1.msra.mxu0 0.0
    %2961 = vmatprep.subr.mxu0 0.0
    %2962 = vmatpush1.msra.mxu0 0.0
    %2963 = vmatprep.subr.mxu0 0.0
    %2964 = vmatpush1.msra.mxu0 0.0
    %2965 = vmatprep.subr.mxu0 0.0
    %2966 = vmatpush1.msra.mxu0 0.0
    %2967 = vmatprep.subr.mxu0 0.0
    %2968 = vmatpush1.msra.mxu0 0.0
    %2969 = vmatprep.subr.mxu0 0.0
    %2970 = vmatpush1.msra.mxu0 0.0
    %2971 = vmatprep.subr.mxu0 0.0
    %2972 = vmatpush1.msra.mxu0 0.0
    %2973 = vmatprep.subr.mxu0 0.0
    %2974 = vmatpush1.msra.mxu0 0.0
    %2975 = vmatprep.subr.mxu0 0.0
    %2976 = vmatpush1.msra.mxu0 0.0
    %2977 = vmatprep.subr.mxu0 0.0
    %2978 = vmatpush1.msra.mxu0 0.0
    %2979 = vmatprep.subr.mxu0 0.0
    %2980 = vmatpush1.msra.mxu0 0.0
    %2981 = vmatprep.subr.mxu0 0.0
    %2982 = vmatpush1.msra.mxu0 0.0
    %2983 = vmatprep.subr.mxu0 0.0
    %2984 = vmatpush1.msra.mxu0 0.0
    %2985 = vmatprep.subr.mxu0 0.0
    %2986 = vmatpush1.msra.mxu0 0.0
    %2987 = vmatprep.subr.mxu0 0.0
    %2988 = vmatpush1.msra.mxu0 0.0
    %2989 = vmatprep.subr.mxu0 0.0
    %2990 = vmatpush1.msra.mxu0 0.0
    %2991 = vmatprep.subr.mxu0 0.0
    %2992 = vmatpush1.msra.mxu0 0.0
    %2993 = vmatprep.subr.mxu0 0.0
    %2994 = vmatpush1.msra.mxu0 0.0
    %2995 = vmatprep.subr.mxu0 0.0
    %2996 = vmatpush1.msra.mxu0 0.0
    %2997 = vmatprep.subr.mxu0 0.0
    %2998 = vmatpush1.msra.mxu0 0.0
    %2999 = vmatprep.subr.mxu0 0.0
    %3000 = vmatpush1.msra.mxu0 0.0
    %3001 = vmatprep.subr.mxu0 0.0
    %3002 = vmatpush1.msra.mxu0 0.0
    %3003 = vmatprep.subr.mxu0 0.0
    %3004 = vmatpush1.msra.mxu0 0.0
    %3005 = vmatprep.subr.mxu0 0.0
    %3006 = vmatpush1.msra.mxu0 0.0
    %3007 = vmatprep.mubr.f32.mxu0 0.0
    %3008 = vmatmul.mubr.f32.gmra.mrb[0].mxu0 %v2751
    %v3009 = vpop.f32.mrb[0].mxu0
    %v3010 = vadd.f32 %v2865, %v3009
    %v3011 = vpop.f32.mrb[0].mxu0
    %3012 = vmatprep.mubr.f32.mxu0 0.0
    %3013 = vmatmul.mubr.f32.gmra.mrb[0].mxu0 %v2754
    %v3014 = vpop.f32.mrb[0].mxu0
    %v3015 = vadd.f32 %v2870, %v3014
    %v3016 = vpop.f32.mrb[0].mxu0
    %3017 = vmatprep.mubr.f32.mxu0 0.0
    %3018 = vmatmul.mubr.f32.gmra.mrb[0].mxu0 %v2757
    %v3019 = vpop.f32.mrb[0].mxu0
    %v3020 = vadd.f32 %v2875, %v3019
    %v3021 = vpop.f32.mrb[0].mxu0
    %3022 = vmatprep.mubr.f32.mxu0 0.0
    %3023 = vmatmul.mubr.f32.gmra.mrb[0].mxu0 %v2760
    %v3024 = vpop.f32.mrb[0].mxu0
    %v3025 = vadd.f32 %v2880, %v3024
    %v3026 = vpop.f32.mrb[0].mxu0
    %3027 = vmatprep.mubr.f32.mxu0 0.0
    %3028 = vmatmul.mubr.f32.gmra.mrb[0].mxu0 %v2763
    %v3029 = vpop.f32.mrb[0].mxu0
    %v3030 = vadd.f32 %v2885, %v3029
    %v3031 = vpop.f32.mrb[0].mxu0
    %3032 = vmatprep.mubr.f32.mxu0 0.0
    %3033 = vmatmul.mubr.f32.gmra.mrb[0].mxu0 %v2766
    %v3034 = vpop.f32.mrb[0].mxu0
    %v3035 = vadd.f32 %v2890, %v3034
    %v3036 = vpop.f32.mrb[0].mxu0
    %3037 = vmatprep.mubr.f32.mxu0 0.0
    %3038 = vmatmul.mubr.f32.gmra.mrb[0].mxu0 %v2769
    %v3039 = vpop.f32.mrb[0].mxu0
    %v3040 = vadd.f32 %v2895, %v3039
    %v3041 = vpop.f32.mrb[0].mxu0
    %3042 = vmatprep.mubr.f32.mxu0 0.0
    %3043 = vmatmul.mubr.f32.gmra.mrb[0].mxu0 %v2772
    %v3044 = vpop.f32.mrb[0].mxu0
    %v3045 = vadd.f32 %v2900, %v3044
    %v3046 = vpop.f32.mrb[0].mxu0
    %3047 = vmatprep.mubr.f32.mxu0 0.0
    %3048 = vmatmul.mubr.f32.gmra.mrb[0].mxu0 %v2775
    %v3049 = vpop.f32.mrb[0].mxu0
    %v3050 = vadd.f32 %v2905, %v3049
    %v3051 = vpop.f32.mrb[0].mxu0
    %3052 = vmatprep.mubr.f32.mxu0 0.0
    %3053 = vmatmul.mubr.f32.gmra.mrb[0].mxu0 %v2778
    %v3054 = vpop.f32.mrb[0].mxu0
    %v3055 = vadd.f32 %v2910, %v3054
    %v3056 = vpop.f32.mrb[0].mxu0
    %3057 = vmatprep.mubr.f32.mxu0 0.0
    %3058 = vmatmul.mubr.f32.gmra.mrb[0].mxu0 %v2781
    %v3059 = vpop.f32.mrb[0].mxu0
    %v3060 = vadd.f32 %v2915, %v3059
    %v3061 = vpop.f32.mrb[0].mxu0
    %3062 = vmatprep.mubr.f32.mxu0 0.0
    %3063 = vmatmul.mubr.f32.gmra.mrb[0].mxu0 %v2784
    %v3064 = vpop.f32.mrb[0].mxu0
    %v3065 = vadd.f32 %v2920, %v3064
    %v3066 = vpop.f32.mrb[0].mxu0
    %3067 = vmatprep.mubr.f32.mxu0 0.0
    %3068 = vmatmul.mubr.f32.gmra.mrb[0].mxu0 %v2787
    %v3069 = vpop.f32.mrb[0].mxu0
    %v3070 = vadd.f32 %v2925, %v3069
    %v3071 = vpop.f32.mrb[0].mxu0
    %3072 = vmatprep.mubr.f32.mxu0 0.0
    %3073 = vmatmul.mubr.f32.gmra.mrb[0].mxu0 %v2790
    %v3074 = vpop.f32.mrb[0].mxu0
    %v3075 = vadd.f32 %v2930, %v3074
    %v3076 = vpop.f32.mrb[0].mxu0
    %3077 = vmatprep.mubr.f32.mxu0 0.0
    %3078 = vmatmul.mubr.f32.gmra.mrb[0].mxu0 %v2793
    %v3079 = vpop.f32.mrb[0].mxu0
    %v3080 = vadd.f32 %v2935, %v3079
    %v3081 = vpop.f32.mrb[0].mxu0
    %3082 = vmatprep.mubr.f32.mxu0 0.0
    %3083 = vmatmul.mubr.f32.gmra.mrb[0].mxu0 %v2796
    %v3084 = vpop.f32.mrb[0].mxu0
    %v3085 = vadd.f32 %v2940, %v3084
    %v3086 = vpop.f32.mrb[0].mxu0
    %3087 = vdwg.mxu0
    %v3088 = vadd.f32 %v3010, %v217
    %v3089 = vadd.f32 %v3015, %v218
    %v3090 = vadd.f32 %v3020, %v219
    %v3091 = vadd.f32 %v3025, %v220
    %v3092 = vadd.f32 %v3030, %v221
    %v3093 = vadd.f32 %v3035, %v222
    %v3094 = vadd.f32 %v3040, %v223
    %v3095 = vadd.f32 %v3045, %v224
    %v3096 = vadd.f32 %v3050, %v225
    %v3097 = vadd.f32 %v3055, %v226
    %v3098 = vadd.f32 %v3060, %v227
    %v3099 = vadd.f32 %v3065, %v228
    %v3100 = vadd.f32 %v3070, %v229
    %v3101 = vadd.f32 %v3075, %v230
    %v3102 = vadd.f32 %v3080, %v231
    %v3103 = vadd.f32 %v3085, %v232
    %v3104 = vld [vmem:[%s12] sm:$0xff]
    %v3105 = vld [vmem:[%s12 + $0x8] sm:$0xff]
    %v3106 = vld [vmem:[%s12 + $0x10] sm:$0xff]
    %v3107 = vld [vmem:[%s12 + $0x18] sm:$0xff]
    %v3108 = vld [vmem:[#allocation9] sm:$0x1]
    %v3110 = vlaneseq
    %v3111 = vshrl.u32 %v3110, 7
    %v3112 = vsub.s32 0, %v3111
    %v3113 = vrot.slane %v3108, %v3112
    %v3116 = vsel %vm175, %v3088, 0
    %v3119 = vsel %vm175, %v3089, 0
    %v3122 = vsel %vm175, %v3090, 0
    %v3125 = vsel %vm175, %v3091, 0
    %v3128 = vsel %vm175, %v3092, 0
    %v3131 = vsel %vm175, %v3093, 0
    %v3134 = vsel %vm175, %v3094, 0
    %v3137 = vsel %vm175, %v3095, 0
    %v3140 = vsel %vm175, %v3096, 0
    %v3143 = vsel %vm175, %v3097, 0
    %v3146 = vsel %vm175, %v3098, 0
    %v3149 = vsel %vm175, %v3099, 0
    %v3152 = vsel %vm175, %v3100, 0
    %v3155 = vsel %vm175, %v3101, 0
    %v3158 = vsel %vm175, %v3102, 0
    %v3161 = vsel %vm175, %v3103, 0
    %3163 = vmatprep.subr.mxu0 0.0
    %3164 = vmatpush1.msra.mxu0 %v3104
    %3165 = vmatprep.subr.mxu0 0.0
    %3166 = vmatpush1.msra.mxu0 %v3105
    %3167 = vmatprep.subr.mxu0 0.0
    %3168 = vmatpush1.msra.mxu0 %v3106
    %3169 = vmatprep.subr.mxu0 0.0
    %3170 = vmatpush1.msra.mxu0 %v3107
    %3171 = vmatprep.subr.mxu0 0.0
    %3172 = vmatpush1.msra.mxu0 0.0
    %3173 = vmatprep.subr.mxu0 0.0
    %3174 = vmatpush1.msra.mxu0 0.0
    %3175 = vmatprep.subr.mxu0 0.0
    %3176 = vmatpush1.msra.mxu0 0.0
    %3177 = vmatprep.subr.mxu0 0.0
    %3178 = vmatpush1.msra.mxu0 0.0
    %3179 = vmatprep.subr.mxu0 0.0
    %3180 = vmatpush1.msra.mxu0 0.0
    %3181 = vmatprep.subr.mxu0 0.0
    %3182 = vmatpush1.msra.mxu0 0.0
    %3183 = vmatprep.subr.mxu0 0.0
    %3184 = vmatpush1.msra.mxu0 0.0
    %3185 = vmatprep.subr.mxu0 0.0
    %3186 = vmatpush1.msra.mxu0 0.0
    %3187 = vmatprep.subr.mxu0 0.0
    %3188 = vmatpush1.msra.mxu0 0.0
    %3189 = vmatprep.subr.mxu0 0.0
    %3190 = vmatpush1.msra.mxu0 0.0
    %3191 = vmatprep.subr.mxu0 0.0
    %3192 = vmatpush1.msra.mxu0 0.0
    %3193 = vmatprep.subr.mxu0 0.0
    %3194 = vmatpush1.msra.mxu0 0.0
    %3195 = vmatprep.subr.mxu0 0.0
    %3196 = vmatpush1.msra.mxu0 0.0
    %3197 = vmatprep.subr.mxu0 0.0
    %3198 = vmatpush1.msra.mxu0 0.0
    %3199 = vmatprep.subr.mxu0 0.0
    %3200 = vmatpush1.msra.mxu0 0.0
    %3201 = vmatprep.subr.mxu0 0.0
    %3202 = vmatpush1.msra.mxu0 0.0
    %3203 = vmatprep.subr.mxu0 0.0
    %3204 = vmatpush1.msra.mxu0 0.0
    %3205 = vmatprep.subr.mxu0 0.0
    %3206 = vmatpush1.msra.mxu0 0.0
    %3207 = vmatprep.subr.mxu0 0.0
    %3208 = vmatpush1.msra.mxu0 0.0
    %3209 = vmatprep.subr.mxu0 0.0
    %3210 = vmatpush1.msra.mxu0 0.0
    %3211 = vmatprep.subr.mxu0 0.0
    %3212 = vmatpush1.msra.mxu0 0.0
    %3213 = vmatprep.subr.mxu0 0.0
    %3214 = vmatpush1.msra.mxu0 0.0
    %3215 = vmatprep.subr.mxu0 0.0
    %3216 = vmatpush1.msra.mxu0 0.0
    %3217 = vmatprep.subr.mxu0 0.0
    %3218 = vmatpush1.msra.mxu0 0.0
    %3219 = vmatprep.subr.mxu0 0.0
    %3220 = vmatpush1.msra.mxu0 0.0
    %3221 = vmatprep.subr.mxu0 0.0
    %3222 = vmatpush1.msra.mxu0 0.0
    %3223 = vmatprep.subr.mxu0 0.0
    %3224 = vmatpush1.msra.mxu0 0.0
    %3225 = vmatprep.subr.mxu0 0.0
    %3226 = vmatpush1.msra.mxu0 0.0
    %3227 = vmatprep.mubr.f32.mxu0 0.0
    %3228 = vmatmul.mubr.f32.gmra.mrb[0].mxu0 %v3116
    %v3229 = vpop.f32.mrb[0].mxu0
    %v3230 = vadd.f32 %v3113, %v3229
    %v3231 = vpop.f32.mrb[0].mxu0
    %3232 = vmatprep.mubr.f32.mxu0 0.0
    %3233 = vmatmul.mubr.f32.gmra.mrb[0].mxu0 %v3119
    %v3234 = vpop.f32.mrb[0].mxu0
    %v3235 = vadd.f32 %v3113, %v3234
    %v3236 = vpop.f32.mrb[0].mxu0
    %3237 = vmatprep.mubr.f32.mxu0 0.0
    %3238 = vmatmul.mubr.f32.gmra.mrb[0].mxu0 %v3122
    %v3239 = vpop.f32.mrb[0].mxu0
    %v3240 = vadd.f32 %v3113, %v3239
    %v3241 = vpop.f32.mrb[0].mxu0
    %3242 = vmatprep.mubr.f32.mxu0 0.0
    %3243 = vmatmul.mubr.f32.gmra.mrb[0].mxu0 %v3125
    %v3244 = vpop.f32.mrb[0].mxu0
    %v3245 = vadd.f32 %v3113, %v3244
    %v3246 = vpop.f32.mrb[0].mxu0
    %3247 = vmatprep.mubr.f32.mxu0 0.0
    %3248 = vmatmul.mubr.f32.gmra.mrb[0].mxu0 %v3128
    %v3249 = vpop.f32.mrb[0].mxu0
    %v3250 = vadd.f32 %v3113, %v3249
    %v3251 = vpop.f32.mrb[0].mxu0
    %3252 = vmatprep.mubr.f32.mxu0 0.0
    %3253 = vmatmul.mubr.f32.gmra.mrb[0].mxu0 %v3131
    %v3254 = vpop.f32.mrb[0].mxu0
    %v3255 = vadd.f32 %v3113, %v3254
    %v3256 = vpop.f32.mrb[0].mxu0
    %3257 = vmatprep.mubr.f32.mxu0 0.0
    %3258 = vmatmul.mubr.f32.gmra.mrb[0].mxu0 %v3134
    %v3259 = vpop.f32.mrb[0].mxu0
    %v3260 = vadd.f32 %v3113, %v3259
    %v3261 = vpop.f32.mrb[0].mxu0
    %3262 = vmatprep.mubr.f32.mxu0 0.0
    %3263 = vmatmul.mubr.f32.gmra.mrb[0].mxu0 %v3137
    %v3264 = vpop.f32.mrb[0].mxu0
    %v3265 = vadd.f32 %v3113, %v3264
    %v3266 = vpop.f32.mrb[0].mxu0
    %3267 = vmatprep.mubr.f32.mxu0 0.0
    %3268 = vmatmul.mubr.f32.gmra.mrb[0].mxu0 %v3140
    %v3269 = vpop.f32.mrb[0].mxu0
    %v3270 = vadd.f32 %v3113, %v3269
    %v3271 = vpop.f32.mrb[0].mxu0
    %3272 = vmatprep.mubr.f32.mxu0 0.0
    %3273 = vmatmul.mubr.f32.gmra.mrb[0].mxu0 %v3143
    %v3274 = vpop.f32.mrb[0].mxu0
    %v3275 = vadd.f32 %v3113, %v3274
    %v3276 = vpop.f32.mrb[0].mxu0
    %3277 = vmatprep.mubr.f32.mxu0 0.0
    %3278 = vmatmul.mubr.f32.gmra.mrb[0].mxu0 %v3146
    %v3279 = vpop.f32.mrb[0].mxu0
    %v3280 = vadd.f32 %v3113, %v3279
    %v3281 = vpop.f32.mrb[0].mxu0
    %3282 = vmatprep.mubr.f32.mxu0 0.0
    %3283 = vmatmul.mubr.f32.gmra.mrb[0].mxu0 %v3149
    %v3284 = vpop.f32.mrb[0].mxu0
    %v3285 = vadd.f32 %v3113, %v3284
    %v3286 = vpop.f32.mrb[0].mxu0
    %3287 = vmatprep.mubr.f32.mxu0 0.0
    %3288 = vmatmul.mubr.f32.gmra.mrb[0].mxu0 %v3152
    %v3289 = vpop.f32.mrb[0].mxu0
    %v3290 = vadd.f32 %v3113, %v3289
    %v3291 = vpop.f32.mrb[0].mxu0
    %3292 = vmatprep.mubr.f32.mxu0 0.0
    %3293 = vmatmul.mubr.f32.gmra.mrb[0].mxu0 %v3155
    %v3294 = vpop.f32.mrb[0].mxu0
    %v3295 = vadd.f32 %v3113, %v3294
    %v3296 = vpop.f32.mrb[0].mxu0
    %3297 = vmatprep.mubr.f32.mxu0 0.0
    %3298 = vmatmul.mubr.f32.gmra.mrb[0].mxu0 %v3158
    %v3299 = vpop.f32.mrb[0].mxu0
    %v3300 = vadd.f32 %v3113, %v3299
    %v3301 = vpop.f32.mrb[0].mxu0
    %3302 = vmatprep.mubr.f32.mxu0 0.0
    %3303 = vmatmul.mubr.f32.gmra.mrb[0].mxu0 %v3161
    %v3304 = vpop.f32.mrb[0].mxu0
    %v3305 = vadd.f32 %v3113, %v3304
    %v3306 = vpop.f32.mrb[0].mxu0
    %3307 = vdwg.mxu0
    %3316 = vrot.lane.b32.xlu0 %v3230, 96
    %v3317 = vpop.permute.xlu0 %3316
    %3318 = vrot.lane.b32.xlu0 %v3235, 96
    %v3319 = vpop.permute.xlu0 %3318
    %3320 = vrot.lane.b32.xlu0 %v3240, 96
    %v3321 = vpop.permute.xlu0 %3320
    %3322 = vrot.lane.b32.xlu0 %v3245, 96
    %v3323 = vpop.permute.xlu0 %3322
    %3324 = vrot.lane.b32.xlu0 %v3250, 96
    %v3325 = vpop.permute.xlu0 %3324
    %3326 = vrot.lane.b32.xlu0 %v3255, 96
    %v3327 = vpop.permute.xlu0 %3326
    %3328 = vrot.lane.b32.xlu0 %v3260, 96
    %v3329 = vpop.permute.xlu0 %3328
    %3330 = vrot.lane.b32.xlu0 %v3265, 96
    %v3331 = vpop.permute.xlu0 %3330
    %v3332 = vsel %vm175, %v3230, 0
    %v3334 = vsel %vm175, %v3235, 0
    %v3336 = vsel %vm175, %v3240, 0
    %v3338 = vsel %vm175, %v3245, 0
    %v3340 = vsel %vm175, %v3250, 0
    %v3342 = vsel %vm175, %v3255, 0
    %v3344 = vsel %vm175, %v3260, 0
    %v3346 = vsel %vm175, %v3265, 0
    %v3348 = vsel %vm175, %v3317, 0
    %v3350 = vsel %vm175, %v3319, 0
    %v3352 = vsel %vm175, %v3321, 0
    %v3354 = vsel %vm175, %v3323, 0
    %v3356 = vsel %vm175, %v3325, 0
    %v3358 = vsel %vm175, %v3327, 0
    %v3360 = vsel %vm175, %v3329, 0
    %v3362 = vsel %vm175, %v3331, 0
    %3364 = vmatprep.subr.mxu0 0.0
    %3365 = vmatpush1.xpose.msra.mxu0 %v3348
    %3366 = vmatprep.subr.mxu0 0.0
    %3367 = vmatpush1.xpose.msra.mxu0 %v3350
    %3368 = vmatprep.subr.mxu0 0.0
    %3369 = vmatpush1.xpose.msra.mxu0 %v3352
    %3370 = vmatprep.subr.mxu0 0.0
    %3371 = vmatpush1.xpose.msra.mxu0 %v3354
    %3372 = vmatprep.subr.mxu0 0.0
    %3373 = vmatpush1.xpose.msra.mxu0 %v3356
    %3374 = vmatprep.subr.mxu0 0.0
    %3375 = vmatpush1.xpose.msra.mxu0 %v3358
    %3376 = vmatprep.subr.mxu0 0.0
    %3377 = vmatpush1.xpose.msra.mxu0 %v3360
    %3378 = vmatprep.subr.mxu0 0.0
    %3379 = vmatpush1.xpose.msra.mxu0 %v3362
    %3380 = vmatprep.subr.mxu0 0.0
    %3381 = vmatpush1.xpose.msra.mxu0 0.0
    %3382 = vmatprep.subr.mxu0 0.0
    %3383 = vmatpush1.xpose.msra.mxu0 0.0
    %3384 = vmatprep.subr.mxu0 0.0
    %3385 = vmatpush1.xpose.msra.mxu0 0.0
    %3386 = vmatprep.subr.mxu0 0.0
    %3387 = vmatpush1.xpose.msra.mxu0 0.0
    %3388 = vmatprep.subr.mxu0 0.0
    %3389 = vmatpush1.xpose.msra.mxu0 0.0
    %3390 = vmatprep.subr.mxu0 0.0
    %3391 = vmatpush1.xpose.msra.mxu0 0.0
    %3392 = vmatprep.subr.mxu0 0.0
    %3393 = vmatpush1.xpose.msra.mxu0 0.0
    %3394 = vmatprep.subr.mxu0 0.0
    %3395 = vmatpush1.xpose.msra.mxu0 0.0
    %3396 = vmatprep.subr.mxu0 0.0
    %3397 = vmatpush1.xpose.msra.mxu0 0.0
    %3398 = vmatprep.subr.mxu0 0.0
    %3399 = vmatpush1.xpose.msra.mxu0 0.0
    %3400 = vmatprep.subr.mxu0 0.0
    %3401 = vmatpush1.xpose.msra.mxu0 0.0
    %3402 = vmatprep.subr.mxu0 0.0
    %3403 = vmatpush1.xpose.msra.mxu0 0.0
    %3404 = vmatprep.subr.mxu0 0.0
    %3405 = vmatpush1.xpose.msra.mxu0 0.0
    %3406 = vmatprep.subr.mxu0 0.0
    %3407 = vmatpush1.xpose.msra.mxu0 0.0
    %3408 = vmatprep.subr.mxu0 0.0
    %3409 = vmatpush1.xpose.msra.mxu0 0.0
    %3410 = vmatprep.subr.mxu0 0.0
    %3411 = vmatpush1.xpose.msra.mxu0 0.0
    %3412 = vmatprep.subr.mxu0 0.0
    %3413 = vmatpush1.xpose.msra.mxu0 0.0
    %3414 = vmatprep.subr.mxu0 0.0
    %3415 = vmatpush1.xpose.msra.mxu0 0.0
    %3416 = vmatprep.subr.mxu0 0.0
    %3417 = vmatpush1.xpose.msra.mxu0 0.0
    %3418 = vmatprep.subr.mxu0 0.0
    %3419 = vmatpush1.xpose.msra.mxu0 0.0
    %3420 = vmatprep.subr.mxu0 0.0
    %3421 = vmatpush1.xpose.msra.mxu0 0.0
    %3422 = vmatprep.subr.mxu0 0.0
    %3423 = vmatpush1.xpose.msra.mxu0 0.0
    %3424 = vmatprep.subr.mxu0 0.0
    %3425 = vmatpush1.xpose.msra.mxu0 0.0
    %3426 = vmatprep.subr.mxu0 0.0
    %3427 = vmatpush1.xpose.msra.mxu0 0.0
    %3428 = vmatprep.mubr.f32.mxu0 0.0
    %3429 = vmatmul.mubr.f32.gmra.mrb[0].mxu0 %v3332
    %v3430 = vpop.f32.mrb[0].mxu0
    %v3431 = vadd.f32 0.0, %v3430
    %v3432 = vpop.f32.mrb[0].mxu0
    %3433 = vmatprep.mubr.f32.mxu0 0.0
    %3434 = vmatmul.mubr.f32.gmra.mrb[0].mxu0 %v3334
    %v3435 = vpop.f32.mrb[0].mxu0
    %v3436 = vadd.f32 0.0, %v3435
    %v3437 = vpop.f32.mrb[0].mxu0
    %3438 = vmatprep.mubr.f32.mxu0 0.0
    %3439 = vmatmul.mubr.f32.gmra.mrb[0].mxu0 %v3336
    %v3440 = vpop.f32.mrb[0].mxu0
    %v3441 = vadd.f32 0.0, %v3440
    %v3442 = vpop.f32.mrb[0].mxu0
    %3443 = vmatprep.mubr.f32.mxu0 0.0
    %3444 = vmatmul.mubr.f32.gmra.mrb[0].mxu0 %v3338
    %v3445 = vpop.f32.mrb[0].mxu0
    %v3446 = vadd.f32 0.0, %v3445
    %v3447 = vpop.f32.mrb[0].mxu0
    %3448 = vmatprep.mubr.f32.mxu0 0.0
    %3449 = vmatmul.mubr.f32.gmra.mrb[0].mxu0 %v3340
    %v3450 = vpop.f32.mrb[0].mxu0
    %v3451 = vadd.f32 0.0, %v3450
    %v3452 = vpop.f32.mrb[0].mxu0
    %3453 = vmatprep.mubr.f32.mxu0 0.0
    %3454 = vmatmul.mubr.f32.gmra.mrb[0].mxu0 %v3342
    %v3455 = vpop.f32.mrb[0].mxu0
    %v3456 = vadd.f32 0.0, %v3455
    %v3457 = vpop.f32.mrb[0].mxu0
    %3458 = vmatprep.mubr.f32.mxu0 0.0
    %3459 = vmatmul.mubr.f32.gmra.mrb[0].mxu0 %v3344
    %v3460 = vpop.f32.mrb[0].mxu0
    %v3461 = vadd.f32 0.0, %v3460
    %v3462 = vpop.f32.mrb[0].mxu0
    %3463 = vmatprep.mubr.f32.mxu0 0.0
    %3464 = vmatmul.mubr.f32.gmra.mrb[0].mxu0 %v3346
    %v3465 = vpop.f32.mrb[0].mxu0
    %v3466 = vadd.f32 0.0, %v3465
    %v3467 = vpop.f32.mrb[0].mxu0
    %3468 = vdwg.mxu0
    %3477 = vrot.lane.b32.xlu0 %v3270, 96
    %v3478 = vpop.permute.xlu0 %3477
    %3479 = vrot.lane.b32.xlu0 %v3275, 96
    %v3480 = vpop.permute.xlu0 %3479
    %3481 = vrot.lane.b32.xlu0 %v3280, 96
    %v3482 = vpop.permute.xlu0 %3481
    %3483 = vrot.lane.b32.xlu0 %v3285, 96
    %v3484 = vpop.permute.xlu0 %3483
    %3485 = vrot.lane.b32.xlu0 %v3290, 96
    %v3486 = vpop.permute.xlu0 %3485
    %3487 = vrot.lane.b32.xlu0 %v3295, 96
    %v3488 = vpop.permute.xlu0 %3487
    %3489 = vrot.lane.b32.xlu0 %v3300, 96
    %v3490 = vpop.permute.xlu0 %3489
    %3491 = vrot.lane.b32.xlu0 %v3305, 96
    %v3492 = vpop.permute.xlu0 %3491
    %v3493 = vsel %vm175, %v3270, 0
    %v3495 = vsel %vm175, %v3275, 0
    %v3497 = vsel %vm175, %v3280, 0
    %v3499 = vsel %vm175, %v3285, 0
    %v3501 = vsel %vm175, %v3290, 0
    %v3503 = vsel %vm175, %v3295, 0
    %v3505 = vsel %vm175, %v3300, 0
    %v3507 = vsel %vm175, %v3305, 0
    %v3509 = vsel %vm175, %v3478, 0
    %v3511 = vsel %vm175, %v3480, 0
    %v3513 = vsel %vm175, %v3482, 0
    %v3515 = vsel %vm175, %v3484, 0
    %v3517 = vsel %vm175, %v3486, 0
    %v3519 = vsel %vm175, %v3488, 0
    %v3521 = vsel %vm175, %v3490, 0
    %v3523 = vsel %vm175, %v3492, 0
    %3525 = vmatprep.subr.mxu0 0.0
    %3526 = vmatpush1.xpose.msra.mxu0 %v3509
    %3527 = vmatprep.subr.mxu0 0.0
    %3528 = vmatpush1.xpose.msra.mxu0 %v3511
    %3529 = vmatprep.subr.mxu0 0.0
    %3530 = vmatpush1.xpose.msra.mxu0 %v3513
    %3531 = vmatprep.subr.mxu0 0.0
    %3532 = vmatpush1.xpose.msra.mxu0 %v3515
    %3533 = vmatprep.subr.mxu0 0.0
    %3534 = vmatpush1.xpose.msra.mxu0 %v3517
    %3535 = vmatprep.subr.mxu0 0.0
    %3536 = vmatpush1.xpose.msra.mxu0 %v3519
    %3537 = vmatprep.subr.mxu0 0.0
    %3538 = vmatpush1.xpose.msra.mxu0 %v3521
    %3539 = vmatprep.subr.mxu0 0.0
    %3540 = vmatpush1.xpose.msra.mxu0 %v3523
    %3541 = vmatprep.subr.mxu0 0.0
    %3542 = vmatpush1.xpose.msra.mxu0 0.0
    %3543 = vmatprep.subr.mxu0 0.0
    %3544 = vmatpush1.xpose.msra.mxu0 0.0
    %3545 = vmatprep.subr.mxu0 0.0
    %3546 = vmatpush1.xpose.msra.mxu0 0.0
    %3547 = vmatprep.subr.mxu0 0.0
    %3548 = vmatpush1.xpose.msra.mxu0 0.0
    %3549 = vmatprep.subr.mxu0 0.0
    %3550 = vmatpush1.xpose.msra.mxu0 0.0
    %3551 = vmatprep.subr.mxu0 0.0
    %3552 = vmatpush1.xpose.msra.mxu0 0.0
    %3553 = vmatprep.subr.mxu0 0.0
    %3554 = vmatpush1.xpose.msra.mxu0 0.0
    %3555 = vmatprep.subr.mxu0 0.0
    %3556 = vmatpush1.xpose.msra.mxu0 0.0
    %3557 = vmatprep.subr.mxu0 0.0
    %3558 = vmatpush1.xpose.msra.mxu0 0.0
    %3559 = vmatprep.subr.mxu0 0.0
    %3560 = vmatpush1.xpose.msra.mxu0 0.0
    %3561 = vmatprep.subr.mxu0 0.0
    %3562 = vmatpush1.xpose.msra.mxu0 0.0
    %3563 = vmatprep.subr.mxu0 0.0
    %3564 = vmatpush1.xpose.msra.mxu0 0.0
    %3565 = vmatprep.subr.mxu0 0.0
    %3566 = vmatpush1.xpose.msra.mxu0 0.0
    %3567 = vmatprep.subr.mxu0 0.0
    %3568 = vmatpush1.xpose.msra.mxu0 0.0
    %3569 = vmatprep.subr.mxu0 0.0
    %3570 = vmatpush1.xpose.msra.mxu0 0.0
    %3571 = vmatprep.subr.mxu0 0.0
    %3572 = vmatpush1.xpose.msra.mxu0 0.0
    %3573 = vmatprep.subr.mxu0 0.0
    %3574 = vmatpush1.xpose.msra.mxu0 0.0
    %3575 = vmatprep.subr.mxu0 0.0
    %3576 = vmatpush1.xpose.msra.mxu0 0.0
    %3577 = vmatprep.subr.mxu0 0.0
    %3578 = vmatpush1.xpose.msra.mxu0 0.0
    %3579 = vmatprep.subr.mxu0 0.0
    %3580 = vmatpush1.xpose.msra.mxu0 0.0
    %3581 = vmatprep.subr.mxu0 0.0
    %3582 = vmatpush1.xpose.msra.mxu0 0.0
    %3583 = vmatprep.subr.mxu0 0.0
    %3584 = vmatpush1.xpose.msra.mxu0 0.0
    %3585 = vmatprep.subr.mxu0 0.0
    %3586 = vmatpush1.xpose.msra.mxu0 0.0
    %3587 = vmatprep.subr.mxu0 0.0
    %3588 = vmatpush1.xpose.msra.mxu0 0.0
    %3589 = vmatprep.mubr.f32.mxu0 0.0
    %3590 = vmatmul.mubr.f32.gmra.mrb[0].mxu0 %v3493
    %v3591 = vpop.f32.mrb[0].mxu0
    %v3592 = vadd.f32 0.0, %v3591
    %v3593 = vpop.f32.mrb[0].mxu0
    %3594 = vmatprep.mubr.f32.mxu0 0.0
    %3595 = vmatmul.mubr.f32.gmra.mrb[0].mxu0 %v3495
    %v3596 = vpop.f32.mrb[0].mxu0
    %v3597 = vadd.f32 0.0, %v3596
    %v3598 = vpop.f32.mrb[0].mxu0
    %3599 = vmatprep.mubr.f32.mxu0 0.0
    %3600 = vmatmul.mubr.f32.gmra.mrb[0].mxu0 %v3497
    %v3601 = vpop.f32.mrb[0].mxu0
    %v3602 = vadd.f32 0.0, %v3601
    %v3603 = vpop.f32.mrb[0].mxu0
    %3604 = vmatprep.mubr.f32.mxu0 0.0
    %3605 = vmatmul.mubr.f32.gmra.mrb[0].mxu0 %v3499
    %v3606 = vpop.f32.mrb[0].mxu0
    %v3607 = vadd.f32 0.0, %v3606
    %v3608 = vpop.f32.mrb[0].mxu0
    %3609 = vmatprep.mubr.f32.mxu0 0.0
    %3610 = vmatmul.mubr.f32.gmra.mrb[0].mxu0 %v3501
    %v3611 = vpop.f32.mrb[0].mxu0
    %v3612 = vadd.f32 0.0, %v3611
    %v3613 = vpop.f32.mrb[0].mxu0
    %3614 = vmatprep.mubr.f32.mxu0 0.0
    %3615 = vmatmul.mubr.f32.gmra.mrb[0].mxu0 %v3503
    %v3616 = vpop.f32.mrb[0].mxu0
    %v3617 = vadd.f32 0.0, %v3616
    %v3618 = vpop.f32.mrb[0].mxu0
    %3619 = vmatprep.mubr.f32.mxu0 0.0
    %3620 = vmatmul.mubr.f32.gmra.mrb[0].mxu0 %v3505
    %v3621 = vpop.f32.mrb[0].mxu0
    %v3622 = vadd.f32 0.0, %v3621
    %v3623 = vpop.f32.mrb[0].mxu0
    %3624 = vmatprep.mubr.f32.mxu0 0.0
    %3625 = vmatmul.mubr.f32.gmra.mrb[0].mxu0 %v3507
    %v3626 = vpop.f32.mrb[0].mxu0
    %v3627 = vadd.f32 0.0, %v3626
    %v3628 = vpop.f32.mrb[0].mxu0
    %3629 = vdwg.mxu0
    %v3630 = vmul.f32 %v3431, 0.17677669
    %v3631 = vmul.f32 %v3436, 0.17677669
    %v3632 = vmul.f32 %v3441, 0.17677669
    %v3633 = vmul.f32 %v3446, 0.17677669
    %v3634 = vmul.f32 %v3451, 0.17677669
    %v3635 = vmul.f32 %v3456, 0.17677669
    %v3636 = vmul.f32 %v3461, 0.17677669
    %v3637 = vmul.f32 %v3466, 0.17677669
    %v3638 = vmul.f32 %v3592, 0.17677669
    %v3639 = vmul.f32 %v3597, 0.17677669
    %v3640 = vmul.f32 %v3602, 0.17677669
    %v3641 = vmul.f32 %v3607, 0.17677669
    %v3642 = vmul.f32 %v3612, 0.17677669
    %v3643 = vmul.f32 %v3617, 0.17677669
    %v3644 = vmul.f32 %v3622, 0.17677669
    %v3645 = vmul.f32 %v3627, 0.17677669
    %v3646 = vlaneseq
    %v3647 = vshrl.u32 %v3646, 7
    %v3648 = vadd.s32 %v3647, 8
    %v3649 = vadd.s32 %v3647, 16
    %v3650 = vadd.s32 %v3647, 24
    %v3651 = vadd.s32 %v3647, 32
    %v3652 = vadd.s32 %v3647, 40
    %v3653 = vadd.s32 %v3647, 48
    %v3654 = vadd.s32 %v3647, 56
    %v3655 = vlaneseq
    %v3656 = vand.u32 %v3655, 127
    %vm3657 = vcmp.le.s32.totalorder %v3656, %v3647
    %vm3658 = vcmp.le.s32.totalorder %v3656, %v3648
    %vm3659 = vcmp.le.s32.totalorder %v3656, %v3649
    %vm3660 = vcmp.le.s32.totalorder %v3656, %v3650
    %vm3661 = vcmp.le.s32.totalorder %v3656, %v3651
    %vm3662 = vcmp.le.s32.totalorder %v3656, %v3652
    %vm3663 = vcmp.le.s32.totalorder %v3656, %v3653
    %vm3664 = vcmp.le.s32.totalorder %v3656, %v3654
    %v3665 = vsel %vm3657, 1, 0
    %v3666 = vsel %vm3658, 1, 0
    %v3667 = vsel %vm3659, 1, 0
    %v3668 = vsel %vm3660, 1, 0
    %v3669 = vsel %vm3661, 1, 0
    %v3670 = vsel %vm3662, 1, 0
    %v3671 = vsel %vm3663, 1, 0
    %v3672 = vsel %vm3664, 1, 0
    %vm3673 = vcmp.eq.s32.totalorder %v3665, 1
    %vm3674 = vcmp.eq.s32.totalorder %v3666, 1
    %vm3675 = vcmp.eq.s32.totalorder %v3667, 1
    %vm3676 = vcmp.eq.s32.totalorder %v3668, 1
    %vm3677 = vcmp.eq.s32.totalorder %v3669, 1
    %vm3678 = vcmp.eq.s32.totalorder %v3670, 1
    %vm3679 = vcmp.eq.s32.totalorder %v3671, 1
    %vm3680 = vcmp.eq.s32.totalorder %v3672, 1
    %v3681 = vsel %vm3673, %v3630, -inf
    %v3682 = vsel %vm3674, %v3631, -inf
    %v3683 = vsel %vm3675, %v3632, -inf
    %v3684 = vsel %vm3676, %v3633, -inf
    %v3685 = vsel %vm3677, %v3634, -inf
    %v3686 = vsel %vm3678, %v3635, -inf
    %v3687 = vsel %vm3679, %v3636, -inf
    %v3688 = vsel %vm3680, %v3637, -inf
    %v3689 = vsel %vm3673, %v3638, -inf
    %v3690 = vsel %vm3674, %v3639, -inf
    %v3691 = vsel %vm3675, %v3640, -inf
    %v3692 = vsel %vm3676, %v3641, -inf
    %v3693 = vsel %vm3677, %v3642, -inf
    %v3694 = vsel %vm3678, %v3643, -inf
    %v3695 = vsel %vm3679, %v3644, -inf
    %v3696 = vsel %vm3680, %v3645, -inf
    %v3697 = vsel %vm1257, %v3681, -inf
    %3698 = vmax.xlane.f32.xlu0 %v3697
    %v3699 = vpop.xlane.xlu0 %3698
    %v3700 = vsel %vm1257, %v3682, -inf
    %3701 = vmax.xlane.f32.xlu0 %v3700
    %v3702 = vpop.xlane.xlu0 %3701
    %v3703 = vsel %vm1257, %v3683, -inf
    %3704 = vmax.xlane.f32.xlu0 %v3703
    %v3705 = vpop.xlane.xlu0 %3704
    %v3706 = vsel %vm1257, %v3684, -inf
    %3707 = vmax.xlane.f32.xlu0 %v3706
    %v3708 = vpop.xlane.xlu0 %3707
    %v3709 = vsel %vm1257, %v3685, -inf
    %3710 = vmax.xlane.f32.xlu0 %v3709
    %v3711 = vpop.xlane.xlu0 %3710
    %v3712 = vsel %vm1257, %v3686, -inf
    %3713 = vmax.xlane.f32.xlu0 %v3712
    %v3714 = vpop.xlane.xlu0 %3713
    %v3715 = vsel %vm1257, %v3687, -inf
    %3716 = vmax.xlane.f32.xlu0 %v3715
    %v3717 = vpop.xlane.xlu0 %3716
    %v3718 = vsel %vm1257, %v3688, -inf
    %3719 = vmax.xlane.f32.xlu0 %v3718
    %v3720 = vpop.xlane.xlu0 %3719
    %v3721 = vsel %vm1257, %v3689, -inf
    %3722 = vmax.xlane.f32.xlu0 %v3721
    %v3723 = vpop.xlane.xlu0 %3722
    %v3724 = vsel %vm1257, %v3690, -inf
    %3725 = vmax.xlane.f32.xlu0 %v3724
    %v3726 = vpop.xlane.xlu0 %3725
    %v3727 = vsel %vm1257, %v3691, -inf
    %3728 = vmax.xlane.f32.xlu0 %v3727
    %v3729 = vpop.xlane.xlu0 %3728
    %v3730 = vsel %vm1257, %v3692, -inf
    %3731 = vmax.xlane.f32.xlu0 %v3730
    %v3732 = vpop.xlane.xlu0 %3731
    %v3733 = vsel %vm1257, %v3693, -inf
    %3734 = vmax.xlane.f32.xlu0 %v3733
    %v3735 = vpop.xlane.xlu0 %3734
    %v3736 = vsel %vm1257, %v3694, -inf
    %3737 = vmax.xlane.f32.xlu0 %v3736
    %v3738 = vpop.xlane.xlu0 %3737
    %v3739 = vsel %vm1257, %v3695, -inf
    %3740 = vmax.xlane.f32.xlu0 %v3739
    %v3741 = vpop.xlane.xlu0 %3740
    %v3742 = vsel %vm1257, %v3696, -inf
    %3743 = vmax.xlane.f32.xlu0 %v3742
    %v3744 = vpop.xlane.xlu0 %3743
    %v3745 = vsub.f32 %v3681, %v3699
    %v3746 = vsub.f32 %v3682, %v3702
    %v3747 = vsub.f32 %v3683, %v3705
    %v3748 = vsub.f32 %v3684, %v3708
    %v3749 = vsub.f32 %v3685, %v3711
    %v3750 = vsub.f32 %v3686, %v3714
    %v3751 = vsub.f32 %v3687, %v3717
    %v3752 = vsub.f32 %v3688, %v3720
    %v3753 = vsub.f32 %v3689, %v3723
    %v3754 = vsub.f32 %v3690, %v3726
    %v3755 = vsub.f32 %v3691, %v3729
    %v3756 = vsub.f32 %v3692, %v3732
    %v3757 = vsub.f32 %v3693, %v3735
    %v3758 = vsub.f32 %v3694, %v3738
    %v3759 = vsub.f32 %v3695, %v3741
    %v3760 = vsub.f32 %v3696, %v3744
    %v3761 = vmul.f32 %v3745, 1.442695
    %v3762 = vpow.pop %v3761
    %v3763 = vmul.f32 %v3746, 1.442695
    %v3764 = vpow.pop %v3763
    %v3765 = vmul.f32 %v3747, 1.442695
    %v3766 = vpow.pop %v3765
    %v3767 = vmul.f32 %v3748, 1.442695
    %v3768 = vpow.pop %v3767
    %v3769 = vmul.f32 %v3749, 1.442695
    %v3770 = vpow.pop %v3769
    %v3771 = vmul.f32 %v3750, 1.442695
    %v3772 = vpow.pop %v3771
    %v3773 = vmul.f32 %v3751, 1.442695
    %v3774 = vpow.pop %v3773
    %v3775 = vmul.f32 %v3752, 1.442695
    %v3776 = vpow.pop %v3775
    %v3777 = vmul.f32 %v3753, 1.442695
    %v3778 = vpow.pop %v3777
    %v3779 = vmul.f32 %v3754, 1.442695
    %v3780 = vpow.pop %v3779
    %v3781 = vmul.f32 %v3755, 1.442695
    %v3782 = vpow.pop %v3781
    %v3783 = vmul.f32 %v3756, 1.442695
    %v3784 = vpow.pop %v3783
    %v3785 = vmul.f32 %v3757, 1.442695
    %v3786 = vpow.pop %v3785
    %v3787 = vmul.f32 %v3758, 1.442695
    %v3788 = vpow.pop %v3787
    %v3789 = vmul.f32 %v3759, 1.442695
    %v3790 = vpow.pop %v3789
    %v3791 = vmul.f32 %v3760, 1.442695
    %v3792 = vpow.pop %v3791
    %v3793 = vsel %vm1257, %v3762, 0.0
    %3794 = vadd.xlane.f32.xlu0 %v3793
    %v3795 = vpop.xlane.xlu0 %3794
    %v3796 = vsel %vm1257, %v3764, 0.0
    %3797 = vadd.xlane.f32.xlu0 %v3796
    %v3798 = vpop.xlane.xlu0 %3797
    %v3799 = vsel %vm1257, %v3766, 0.0
    %3800 = vadd.xlane.f32.xlu0 %v3799
    %v3801 = vpop.xlane.xlu0 %3800
    %v3802 = vsel %vm1257, %v3768, 0.0
    %3803 = vadd.xlane.f32.xlu0 %v3802
    %v3804 = vpop.xlane.xlu0 %3803
    %v3805 = vsel %vm1257, %v3770, 0.0
    %3806 = vadd.xlane.f32.xlu0 %v3805
    %v3807 = vpop.xlane.xlu0 %3806
    %v3808 = vsel %vm1257, %v3772, 0.0
    %3809 = vadd.xlane.f32.xlu0 %v3808
    %v3810 = vpop.xlane.xlu0 %3809
    %v3811 = vsel %vm1257, %v3774, 0.0
    %3812 = vadd.xlane.f32.xlu0 %v3811
    %v3813 = vpop.xlane.xlu0 %3812
    %v3814 = vsel %vm1257, %v3776, 0.0
    %3815 = vadd.xlane.f32.xlu0 %v3814
    %v3816 = vpop.xlane.xlu0 %3815
    %v3817 = vsel %vm1257, %v3778, 0.0
    %3818 = vadd.xlane.f32.xlu0 %v3817
    %v3819 = vpop.xlane.xlu0 %3818
    %v3820 = vsel %vm1257, %v3780, 0.0
    %3821 = vadd.xlane.f32.xlu0 %v3820
    %v3822 = vpop.xlane.xlu0 %3821
    %v3823 = vsel %vm1257, %v3782, 0.0
    %3824 = vadd.xlane.f32.xlu0 %v3823
    %v3825 = vpop.xlane.xlu0 %3824
    %v3826 = vsel %vm1257, %v3784, 0.0
    %3827 = vadd.xlane.f32.xlu0 %v3826
    %v3828 = vpop.xlane.xlu0 %3827
    %v3829 = vsel %vm1257, %v3786, 0.0
    %3830 = vadd.xlane.f32.xlu0 %v3829
    %v3831 = vpop.xlane.xlu0 %3830
    %v3832 = vsel %vm1257, %v3788, 0.0
    %3833 = vadd.xlane.f32.xlu0 %v3832
    %v3834 = vpop.xlane.xlu0 %3833
    %v3835 = vsel %vm1257, %v3790, 0.0
    %3836 = vadd.xlane.f32.xlu0 %v3835
    %v3837 = vpop.xlane.xlu0 %3836
    %v3838 = vsel %vm1257, %v3792, 0.0
    %3839 = vadd.xlane.f32.xlu0 %v3838
    %v3840 = vpop.xlane.xlu0 %3839
    %v3841 = vrcp.pop %v3795
    %v3842 = vrcp.pop %v3798
    %v3843 = vrcp.pop %v3801
    %v3844 = vrcp.pop %v3804
    %v3845 = vrcp.pop %v3807
    %v3846 = vrcp.pop %v3810
    %v3847 = vrcp.pop %v3813
    %v3848 = vrcp.pop %v3816
    %v3849 = vrcp.pop %v3819
    %v3850 = vrcp.pop %v3822
    %v3851 = vrcp.pop %v3825
    %v3852 = vrcp.pop %v3828
    %v3853 = vrcp.pop %v3831
    %v3854 = vrcp.pop %v3834
    %v3855 = vrcp.pop %v3837
    %v3856 = vrcp.pop %v3840
    %v3857 = vmul.f32 %v3762, %v3841
    %v3858 = vmul.f32 %v3764, %v3842
    %v3859 = vmul.f32 %v3766, %v3843
    %v3860 = vmul.f32 %v3768, %v3844
    %v3861 = vmul.f32 %v3770, %v3845
    %v3862 = vmul.f32 %v3772, %v3846
    %v3863 = vmul.f32 %v3774, %v3847
    %v3864 = vmul.f32 %v3776, %v3848
    %v3865 = vmul.f32 %v3778, %v3849
    %v3866 = vmul.f32 %v3780, %v3850
    %v3867 = vmul.f32 %v3782, %v3851
    %v3868 = vmul.f32 %v3784, %v3852
    %v3869 = vmul.f32 %v3786, %v3853
    %v3870 = vmul.f32 %v3788, %v3854
    %v3871 = vmul.f32 %v3790, %v3855
    %v3872 = vmul.f32 %v3792, %v3856
    %3873 = vrot.lane.b32.xlu0 %v3230, 64
    %v3874 = vpop.permute.xlu0 %3873
    %3875 = vrot.lane.b32.xlu0 %v3235, 64
    %v3876 = vpop.permute.xlu0 %3875
    %3877 = vrot.lane.b32.xlu0 %v3240, 64
    %v3878 = vpop.permute.xlu0 %3877
    %3879 = vrot.lane.b32.xlu0 %v3245, 64
    %v3880 = vpop.permute.xlu0 %3879
    %3881 = vrot.lane.b32.xlu0 %v3250, 64
    %v3882 = vpop.permute.xlu0 %3881
    %3883 = vrot.lane.b32.xlu0 %v3255, 64
    %v3884 = vpop.permute.xlu0 %3883
    %3885 = vrot.lane.b32.xlu0 %v3260, 64
    %v3886 = vpop.permute.xlu0 %3885
    %3887 = vrot.lane.b32.xlu0 %v3265, 64
    %v3888 = vpop.permute.xlu0 %3887
    %v3898 = vsel %vm1257, %v3857, 0
    %v3901 = vsel %vm1257, %v3858, 0
    %v3904 = vsel %vm1257, %v3859, 0
    %v3907 = vsel %vm1257, %v3860, 0
    %v3910 = vsel %vm1257, %v3861, 0
    %v3913 = vsel %vm1257, %v3862, 0
    %v3916 = vsel %vm1257, %v3863, 0
    %v3919 = vsel %vm1257, %v3864, 0
    %3921 = vmatprep.subr.mxu0 0.0
    %3922 = vmatpush1.msra.mxu0 %v3874
    %3923 = vmatprep.subr.mxu0 0.0
    %3924 = vmatpush1.msra.mxu0 %v3876
    %3925 = vmatprep.subr.mxu0 0.0
    %3926 = vmatpush1.msra.mxu0 %v3878
    %3927 = vmatprep.subr.mxu0 0.0
    %3928 = vmatpush1.msra.mxu0 %v3880
    %3929 = vmatprep.subr.mxu0 0.0
    %3930 = vmatpush1.msra.mxu0 %v3882
    %3931 = vmatprep.subr.mxu0 0.0
    %3932 = vmatpush1.msra.mxu0 %v3884
    %3933 = vmatprep.subr.mxu0 0.0
    %3934 = vmatpush1.msra.mxu0 %v3886
    %3935 = vmatprep.subr.mxu0 0.0
    %3936 = vmatpush1.msra.mxu0 %v3888
    %3937 = vmatprep.subr.mxu0 0.0
    %3938 = vmatpush1.msra.mxu0 0.0
    %3939 = vmatprep.subr.mxu0 0.0
    %3940 = vmatpush1.msra.mxu0 0.0
    %3941 = vmatprep.subr.mxu0 0.0
    %3942 = vmatpush1.msra.mxu0 0.0
    %3943 = vmatprep.subr.mxu0 0.0
    %3944 = vmatpush1.msra.mxu0 0.0
    %3945 = vmatprep.subr.mxu0 0.0
    %3946 = vmatpush1.msra.mxu0 0.0
    %3947 = vmatprep.subr.mxu0 0.0
    %3948 = vmatpush1.msra.mxu0 0.0
    %3949 = vmatprep.subr.mxu0 0.0
    %3950 = vmatpush1.msra.mxu0 0.0
    %3951 = vmatprep.subr.mxu0 0.0
    %3952 = vmatpush1.msra.mxu0 0.0
    %3953 = vmatprep.subr.mxu0 0.0
    %3954 = vmatpush1.msra.mxu0 0.0
    %3955 = vmatprep.subr.mxu0 0.0
    %3956 = vmatpush1.msra.mxu0 0.0
    %3957 = vmatprep.subr.mxu0 0.0
    %3958 = vmatpush1.msra.mxu0 0.0
    %3959 = vmatprep.subr.mxu0 0.0
    %3960 = vmatpush1.msra.mxu0 0.0
    %3961 = vmatprep.subr.mxu0 0.0
    %3962 = vmatpush1.msra.mxu0 0.0
    %3963 = vmatprep.subr.mxu0 0.0
    %3964 = vmatpush1.msra.mxu0 0.0
    %3965 = vmatprep.subr.mxu0 0.0
    %3966 = vmatpush1.msra.mxu0 0.0
    %3967 = vmatprep.subr.mxu0 0.0
    %3968 = vmatpush1.msra.mxu0 0.0
    %3969 = vmatprep.subr.mxu0 0.0
    %3970 = vmatpush1.msra.mxu0 0.0
    %3971 = vmatprep.subr.mxu0 0.0
    %3972 = vmatpush1.msra.mxu0 0.0
    %3973 = vmatprep.subr.mxu0 0.0
    %3974 = vmatpush1.msra.mxu0 0.0
    %3975 = vmatprep.subr.mxu0 0.0
    %3976 = vmatpush1.msra.mxu0 0.0
    %3977 = vmatprep.subr.mxu0 0.0
    %3978 = vmatpush1.msra.mxu0 0.0
    %3979 = vmatprep.subr.mxu0 0.0
    %3980 = vmatpush1.msra.mxu0 0.0
    %3981 = vmatprep.subr.mxu0 0.0
    %3982 = vmatpush1.msra.mxu0 0.0
    %3983 = vmatprep.subr.mxu0 0.0
    %3984 = vmatpush1.msra.mxu0 0.0
    %3985 = vmatprep.mubr.f32.mxu0 0.0
    %3986 = vmatmul.mubr.f32.gmra.mrb[0].mxu0 %v3898
    %v3987 = vpop.f32.mrb[0].mxu0
    %v3988 = vadd.f32 0.0, %v3987
    %v3989 = vpop.f32.mrb[0].mxu0
    %3990 = vmatprep.mubr.f32.mxu0 0.0
    %3991 = vmatmul.mubr.f32.gmra.mrb[0].mxu0 %v3901
    %v3992 = vpop.f32.mrb[0].mxu0
    %v3993 = vadd.f32 0.0, %v3992
    %v3994 = vpop.f32.mrb[0].mxu0
    %3995 = vmatprep.mubr.f32.mxu0 0.0
    %3996 = vmatmul.mubr.f32.gmra.mrb[0].mxu0 %v3904
    %v3997 = vpop.f32.mrb[0].mxu0
    %v3998 = vadd.f32 0.0, %v3997
    %v3999 = vpop.f32.mrb[0].mxu0
    %4000 = vmatprep.mubr.f32.mxu0 0.0
    %4001 = vmatmul.mubr.f32.gmra.mrb[0].mxu0 %v3907
    %v4002 = vpop.f32.mrb[0].mxu0
    %v4003 = vadd.f32 0.0, %v4002
    %v4004 = vpop.f32.mrb[0].mxu0
    %4005 = vmatprep.mubr.f32.mxu0 0.0
    %4006 = vmatmul.mubr.f32.gmra.mrb[0].mxu0 %v3910
    %v4007 = vpop.f32.mrb[0].mxu0
    %v4008 = vadd.f32 0.0, %v4007
    %v4009 = vpop.f32.mrb[0].mxu0
    %4010 = vmatprep.mubr.f32.mxu0 0.0
    %4011 = vmatmul.mubr.f32.gmra.mrb[0].mxu0 %v3913
    %v4012 = vpop.f32.mrb[0].mxu0
    %v4013 = vadd.f32 0.0, %v4012
    %v4014 = vpop.f32.mrb[0].mxu0
    %4015 = vmatprep.mubr.f32.mxu0 0.0
    %4016 = vmatmul.mubr.f32.gmra.mrb[0].mxu0 %v3916
    %v4017 = vpop.f32.mrb[0].mxu0
    %v4018 = vadd.f32 0.0, %v4017
    %v4019 = vpop.f32.mrb[0].mxu0
    %4020 = vmatprep.mubr.f32.mxu0 0.0
    %4021 = vmatmul.mubr.f32.gmra.mrb[0].mxu0 %v3919
    %v4022 = vpop.f32.mrb[0].mxu0
    %v4023 = vadd.f32 0.0, %v4022
    %v4024 = vpop.f32.mrb[0].mxu0
    %4025 = vdwg.mxu0
    %4026 = vrot.lane.b32.xlu0 %v3270, 64
    %v4027 = vpop.permute.xlu0 %4026
    %4028 = vrot.lane.b32.xlu0 %v3275, 64
    %v4029 = vpop.permute.xlu0 %4028
    %4030 = vrot.lane.b32.xlu0 %v3280, 64
    %v4031 = vpop.permute.xlu0 %4030
    %4032 = vrot.lane.b32.xlu0 %v3285, 64
    %v4033 = vpop.permute.xlu0 %4032
    %4034 = vrot.lane.b32.xlu0 %v3290, 64
    %v4035 = vpop.permute.xlu0 %4034
    %4036 = vrot.lane.b32.xlu0 %v3295, 64
    %v4037 = vpop.permute.xlu0 %4036
    %4038 = vrot.lane.b32.xlu0 %v3300, 64
    %v4039 = vpop.permute.xlu0 %4038
    %4040 = vrot.lane.b32.xlu0 %v3305, 64
    %v4041 = vpop.permute.xlu0 %4040
    %v4051 = vsel %vm1257, %v3865, 0
    %v4054 = vsel %vm1257, %v3866, 0
    %v4057 = vsel %vm1257, %v3867, 0
    %v4060 = vsel %vm1257, %v3868, 0
    %v4063 = vsel %vm1257, %v3869, 0
    %v4066 = vsel %vm1257, %v3870, 0
    %v4069 = vsel %vm1257, %v3871, 0
    %v4072 = vsel %vm1257, %v3872, 0
    %4074 = vmatprep.subr.mxu0 0.0
    %4075 = vmatpush1.msra.mxu0 %v4027
    %4076 = vmatprep.subr.mxu0 0.0
    %4077 = vmatpush1.msra.mxu0 %v4029
    %4078 = vmatprep.subr.mxu0 0.0
    %4079 = vmatpush1.msra.mxu0 %v4031
    %4080 = vmatprep.subr.mxu0 0.0
    %4081 = vmatpush1.msra.mxu0 %v4033
    %4082 = vmatprep.subr.mxu0 0.0
    %4083 = vmatpush1.msra.mxu0 %v4035
    %4084 = vmatprep.subr.mxu0 0.0
    %4085 = vmatpush1.msra.mxu0 %v4037
    %4086 = vmatprep.subr.mxu0 0.0
    %4087 = vmatpush1.msra.mxu0 %v4039
    %4088 = vmatprep.subr.mxu0 0.0
    %4089 = vmatpush1.msra.mxu0 %v4041
    %4090 = vmatprep.subr.mxu0 0.0
    %4091 = vmatpush1.msra.mxu0 0.0
    %4092 = vmatprep.subr.mxu0 0.0
    %4093 = vmatpush1.msra.mxu0 0.0
    %4094 = vmatprep.subr.mxu0 0.0
    %4095 = vmatpush1.msra.mxu0 0.0
    %4096 = vmatprep.subr.mxu0 0.0
    %4097 = vmatpush1.msra.mxu0 0.0
    %4098 = vmatprep.subr.mxu0 0.0
    %4099 = vmatpush1.msra.mxu0 0.0
    %4100 = vmatprep.subr.mxu0 0.0
    %4101 = vmatpush1.msra.mxu0 0.0
    %4102 = vmatprep.subr.mxu0 0.0
    %4103 = vmatpush1.msra.mxu0 0.0
    %4104 = vmatprep.subr.mxu0 0.0
    %4105 = vmatpush1.msra.mxu0 0.0
    %4106 = vmatprep.subr.mxu0 0.0
    %4107 = vmatpush1.msra.mxu0 0.0
    %4108 = vmatprep.subr.mxu0 0.0
    %4109 = vmatpush1.msra.mxu0 0.0
    %4110 = vmatprep.subr.mxu0 0.0
    %4111 = vmatpush1.msra.mxu0 0.0
    %4112 = vmatprep.subr.mxu0 0.0
    %4113 = vmatpush1.msra.mxu0 0.0
    %4114 = vmatprep.subr.mxu0 0.0
    %4115 = vmatpush1.msra.mxu0 0.0
    %4116 = vmatprep.subr.mxu0 0.0
    %4117 = vmatpush1.msra.mxu0 0.0
    %4118 = vmatprep.subr.mxu0 0.0
    %4119 = vmatpush1.msra.mxu0 0.0
    %4120 = vmatprep.subr.mxu0 0.0
    %4121 = vmatpush1.msra.mxu0 0.0
    %4122 = vmatprep.subr.mxu0 0.0
    %4123 = vmatpush1.msra.mxu0 0.0
    %4124 = vmatprep.subr.mxu0 0.0
    %4125 = vmatpush1.msra.mxu0 0.0
    %4126 = vmatprep.subr.mxu0 0.0
    %4127 = vmatpush1.msra.mxu0 0.0
    %4128 = vmatprep.subr.mxu0 0.0
    %4129 = vmatpush1.msra.mxu0 0.0
    %4130 = vmatprep.subr.mxu0 0.0
    %4131 = vmatpush1.msra.mxu0 0.0
    %4132 = vmatprep.subr.mxu0 0.0
    %4133 = vmatpush1.msra.mxu0 0.0
    %4134 = vmatprep.subr.mxu0 0.0
    %4135 = vmatpush1.msra.mxu0 0.0
    %4136 = vmatprep.subr.mxu0 0.0
    %4137 = vmatpush1.msra.mxu0 0.0
    %4138 = vmatprep.mubr.f32.mxu0 0.0
    %4139 = vmatmul.mubr.f32.gmra.mrb[0].mxu0 %v4051
    %v4140 = vpop.f32.mrb[0].mxu0
    %v4141 = vadd.f32 0.0, %v4140
    %v4142 = vpop.f32.mrb[0].mxu0
    %4143 = vmatprep.mubr.f32.mxu0 0.0
    %4144 = vmatmul.mubr.f32.gmra.mrb[0].mxu0 %v4054
    %v4145 = vpop.f32.mrb[0].mxu0
    %v4146 = vadd.f32 0.0, %v4145
    %v4147 = vpop.f32.mrb[0].mxu0
    %4148 = vmatprep.mubr.f32.mxu0 0.0
    %4149 = vmatmul.mubr.f32.gmra.mrb[0].mxu0 %v4057
    %v4150 = vpop.f32.mrb[0].mxu0
    %v4151 = vadd.f32 0.0, %v4150
    %v4152 = vpop.f32.mrb[0].mxu0
    %4153 = vmatprep.mubr.f32.mxu0 0.0
    %4154 = vmatmul.mubr.f32.gmra.mrb[0].mxu0 %v4060
    %v4155 = vpop.f32.mrb[0].mxu0
    %v4156 = vadd.f32 0.0, %v4155
    %v4157 = vpop.f32.mrb[0].mxu0
    %4158 = vmatprep.mubr.f32.mxu0 0.0
    %4159 = vmatmul.mubr.f32.gmra.mrb[0].mxu0 %v4063
    %v4160 = vpop.f32.mrb[0].mxu0
    %v4161 = vadd.f32 0.0, %v4160
    %v4162 = vpop.f32.mrb[0].mxu0
    %4163 = vmatprep.mubr.f32.mxu0 0.0
    %4164 = vmatmul.mubr.f32.gmra.mrb[0].mxu0 %v4066
    %v4165 = vpop.f32.mrb[0].mxu0
    %v4166 = vadd.f32 0.0, %v4165
    %v4167 = vpop.f32.mrb[0].mxu0
    %4168 = vmatprep.mubr.f32.mxu0 0.0
    %4169 = vmatmul.mubr.f32.gmra.mrb[0].mxu0 %v4069
    %v4170 = vpop.f32.mrb[0].mxu0
    %v4171 = vadd.f32 0.0, %v4170
    %v4172 = vpop.f32.mrb[0].mxu0
    %4173 = vmatprep.mubr.f32.mxu0 0.0
    %4174 = vmatmul.mubr.f32.gmra.mrb[0].mxu0 %v4072
    %v4175 = vpop.f32.mrb[0].mxu0
    %v4176 = vadd.f32 0.0, %v4175
    %v4177 = vpop.f32.mrb[0].mxu0
    %4178 = vdwg.mxu0
    %v4179 = vld [vmem:[%s14] sm:$0xff]
    %v4180 = vld [vmem:[%s14 + $0x8] sm:$0xff]
    %v4181 = vld [vmem:[%s14 + $0x10] sm:$0xff]
    %v4182 = vld [vmem:[%s14 + $0x18] sm:$0xff]
    %v4183 = vld [vmem:[#allocation11] sm:$0x1]
    %v4185 = vlaneseq
    %v4186 = vshrl.u32 %v4185, 7
    %v4187 = vsub.s32 0, %v4186
    %v4188 = vrot.slane %v4183, %v4187
    %v4191 = vsel %vm175, %v3988, 0
    %v4194 = vsel %vm175, %v3993, 0
    %v4197 = vsel %vm175, %v3998, 0
    %v4200 = vsel %vm175, %v4003, 0
    %v4203 = vsel %vm175, %v4008, 0
    %v4206 = vsel %vm175, %v4013, 0
    %v4209 = vsel %vm175, %v4018, 0
    %v4212 = vsel %vm175, %v4023, 0
    %v4215 = vsel %vm175, %v4141, 0
    %v4218 = vsel %vm175, %v4146, 0
    %v4221 = vsel %vm175, %v4151, 0
    %v4224 = vsel %vm175, %v4156, 0
    %v4227 = vsel %vm175, %v4161, 0
    %v4230 = vsel %vm175, %v4166, 0
    %v4233 = vsel %vm175, %v4171, 0
    %v4236 = vsel %vm175, %v4176, 0
    %4238 = vmatprep.subr.mxu0 0.0
    %4239 = vmatpush1.msra.mxu0 %v4179
    %4240 = vmatprep.subr.mxu0 0.0
    %4241 = vmatpush1.msra.mxu0 %v4180
    %4242 = vmatprep.subr.mxu0 0.0
    %4243 = vmatpush1.msra.mxu0 %v4181
    %4244 = vmatprep.subr.mxu0 0.0
    %4245 = vmatpush1.msra.mxu0 %v4182
    %4246 = vmatprep.subr.mxu0 0.0
    %4247 = vmatpush1.msra.mxu0 0.0
    %4248 = vmatprep.subr.mxu0 0.0
    %4249 = vmatpush1.msra.mxu0 0.0
    %4250 = vmatprep.subr.mxu0 0.0
    %4251 = vmatpush1.msra.mxu0 0.0
    %4252 = vmatprep.subr.mxu0 0.0
    %4253 = vmatpush1.msra.mxu0 0.0
    %4254 = vmatprep.subr.mxu0 0.0
    %4255 = vmatpush1.msra.mxu0 0.0
    %4256 = vmatprep.subr.mxu0 0.0
    %4257 = vmatpush1.msra.mxu0 0.0
    %4258 = vmatprep.subr.mxu0 0.0
    %4259 = vmatpush1.msra.mxu0 0.0
    %4260 = vmatprep.subr.mxu0 0.0
    %4261 = vmatpush1.msra.mxu0 0.0
    %4262 = vmatprep.subr.mxu0 0.0
    %4263 = vmatpush1.msra.mxu0 0.0
    %4264 = vmatprep.subr.mxu0 0.0
    %4265 = vmatpush1.msra.mxu0 0.0
    %4266 = vmatprep.subr.mxu0 0.0
    %4267 = vmatpush1.msra.mxu0 0.0
    %4268 = vmatprep.subr.mxu0 0.0
    %4269 = vmatpush1.msra.mxu0 0.0
    %4270 = vmatprep.subr.mxu0 0.0
    %4271 = vmatpush1.msra.mxu0 0.0
    %4272 = vmatprep.subr.mxu0 0.0
    %4273 = vmatpush1.msra.mxu0 0.0
    %4274 = vmatprep.subr.mxu0 0.0
    %4275 = vmatpush1.msra.mxu0 0.0
    %4276 = vmatprep.subr.mxu0 0.0
    %4277 = vmatpush1.msra.mxu0 0.0
    %4278 = vmatprep.subr.mxu0 0.0
    %4279 = vmatpush1.msra.mxu0 0.0
    %4280 = vmatprep.subr.mxu0 0.0
    %4281 = vmatpush1.msra.mxu0 0.0
    %4282 = vmatprep.subr.mxu0 0.0
    %4283 = vmatpush1.msra.mxu0 0.0
    %4284 = vmatprep.subr.mxu0 0.0
    %4285 = vmatpush1.msra.mxu0 0.0
    %4286 = vmatprep.subr.mxu0 0.0
    %4287 = vmatpush1.msra.mxu0 0.0
    %4288 = vmatprep.subr.mxu0 0.0
    %4289 = vmatpush1.msra.mxu0 0.0
    %4290 = vmatprep.subr.mxu0 0.0
    %4291 = vmatpush1.msra.mxu0 0.0
    %4292 = vmatprep.subr.mxu0 0.0
    %4293 = vmatpush1.msra.mxu0 0.0
    %4294 = vmatprep.subr.mxu0 0.0
    %4295 = vmatpush1.msra.mxu0 0.0
    %4296 = vmatprep.subr.mxu0 0.0
    %4297 = vmatpush1.msra.mxu0 0.0
    %4298 = vmatprep.subr.mxu0 0.0
    %4299 = vmatpush1.msra.mxu0 0.0
    %4300 = vmatprep.subr.mxu0 0.0
    %4301 = vmatpush1.msra.mxu0 0.0
    %4302 = vmatprep.mubr.f32.mxu0 0.0
    %4303 = vmatmul.mubr.f32.gmra.mrb[0].mxu0 %v4191
    %v4304 = vpop.f32.mrb[0].mxu0
    %v4305 = vadd.f32 %v4188, %v4304
    %v4306 = vpop.f32.mrb[0].mxu0
    %4307 = vmatprep.mubr.f32.mxu0 0.0
    %4308 = vmatmul.mubr.f32.gmra.mrb[0].mxu0 %v4194
    %v4309 = vpop.f32.mrb[0].mxu0
    %v4310 = vadd.f32 %v4188, %v4309
    %v4311 = vpop.f32.mrb[0].mxu0
    %4312 = vmatprep.mubr.f32.mxu0 0.0
    %4313 = vmatmul.mubr.f32.gmra.mrb[0].mxu0 %v4197
    %v4314 = vpop.f32.mrb[0].mxu0
    %v4315 = vadd.f32 %v4188, %v4314
    %v4316 = vpop.f32.mrb[0].mxu0
    %4317 = vmatprep.mubr.f32.mxu0 0.0
    %4318 = vmatmul.mubr.f32.gmra.mrb[0].mxu0 %v4200
    %v4319 = vpop.f32.mrb[0].mxu0
    %v4320 = vadd.f32 %v4188, %v4319
    %v4321 = vpop.f32.mrb[0].mxu0
    %4322 = vmatprep.mubr.f32.mxu0 0.0
    %4323 = vmatmul.mubr.f32.gmra.mrb[0].mxu0 %v4203
    %v4324 = vpop.f32.mrb[0].mxu0
    %v4325 = vadd.f32 %v4188, %v4324
    %v4326 = vpop.f32.mrb[0].mxu0
    %4327 = vmatprep.mubr.f32.mxu0 0.0
    %4328 = vmatmul.mubr.f32.gmra.mrb[0].mxu0 %v4206
    %v4329 = vpop.f32.mrb[0].mxu0
    %v4330 = vadd.f32 %v4188, %v4329
    %v4331 = vpop.f32.mrb[0].mxu0
    %4332 = vmatprep.mubr.f32.mxu0 0.0
    %4333 = vmatmul.mubr.f32.gmra.mrb[0].mxu0 %v4209
    %v4334 = vpop.f32.mrb[0].mxu0
    %v4335 = vadd.f32 %v4188, %v4334
    %v4336 = vpop.f32.mrb[0].mxu0
    %4337 = vmatprep.mubr.f32.mxu0 0.0
    %4338 = vmatmul.mubr.f32.gmra.mrb[0].mxu0 %v4212
    %v4339 = vpop.f32.mrb[0].mxu0
    %v4340 = vadd.f32 %v4188, %v4339
    %v4341 = vpop.f32.mrb[0].mxu0
    %4342 = vmatprep.mubr.f32.mxu0 0.0
    %4343 = vmatmul.mubr.f32.gmra.mrb[0].mxu0 %v4215
    %v4344 = vpop.f32.mrb[0].mxu0
    %v4345 = vadd.f32 %v4188, %v4344
    %v4346 = vpop.f32.mrb[0].mxu0
    %4347 = vmatprep.mubr.f32.mxu0 0.0
    %4348 = vmatmul.mubr.f32.gmra.mrb[0].mxu0 %v4218
    %v4349 = vpop.f32.mrb[0].mxu0
    %v4350 = vadd.f32 %v4188, %v4349
    %v4351 = vpop.f32.mrb[0].mxu0
    %4352 = vmatprep.mubr.f32.mxu0 0.0
    %4353 = vmatmul.mubr.f32.gmra.mrb[0].mxu0 %v4221
    %v4354 = vpop.f32.mrb[0].mxu0
    %v4355 = vadd.f32 %v4188, %v4354
    %v4356 = vpop.f32.mrb[0].mxu0
    %4357 = vmatprep.mubr.f32.mxu0 0.0
    %4358 = vmatmul.mubr.f32.gmra.mrb[0].mxu0 %v4224
    %v4359 = vpop.f32.mrb[0].mxu0
    %v4360 = vadd.f32 %v4188, %v4359
    %v4361 = vpop.f32.mrb[0].mxu0
    %4362 = vmatprep.mubr.f32.mxu0 0.0
    %4363 = vmatmul.mubr.f32.gmra.mrb[0].mxu0 %v4227
    %v4364 = vpop.f32.mrb[0].mxu0
    %v4365 = vadd.f32 %v4188, %v4364
    %v4366 = vpop.f32.mrb[0].mxu0
    %4367 = vmatprep.mubr.f32.mxu0 0.0
    %4368 = vmatmul.mubr.f32.gmra.mrb[0].mxu0 %v4230
    %v4369 = vpop.f32.mrb[0].mxu0
    %v4370 = vadd.f32 %v4188, %v4369
    %v4371 = vpop.f32.mrb[0].mxu0
    %4372 = vmatprep.mubr.f32.mxu0 0.0
    %4373 = vmatmul.mubr.f32.gmra.mrb[0].mxu0 %v4233
    %v4374 = vpop.f32.mrb[0].mxu0
    %v4375 = vadd.f32 %v4188, %v4374
    %v4376 = vpop.f32.mrb[0].mxu0
    %4377 = vmatprep.mubr.f32.mxu0 0.0
    %4378 = vmatmul.mubr.f32.gmra.mrb[0].mxu0 %v4236
    %v4379 = vpop.f32.mrb[0].mxu0
    %v4380 = vadd.f32 %v4188, %v4379
    %v4381 = vpop.f32.mrb[0].mxu0
    %4382 = vdwg.mxu0
    %v4383 = vadd.f32 %v3088, %v4305
    %v4384 = vadd.f32 %v3089, %v4310
    %v4385 = vadd.f32 %v3090, %v4315
    %v4386 = vadd.f32 %v3091, %v4320
    %v4387 = vadd.f32 %v3092, %v4325
    %v4388 = vadd.f32 %v3093, %v4330
    %v4389 = vadd.f32 %v3094, %v4335
    %v4390 = vadd.f32 %v3095, %v4340
    %v4391 = vadd.f32 %v3096, %v4345
    %v4392 = vadd.f32 %v3097, %v4350
    %v4393 = vadd.f32 %v3098, %v4355
    %v4394 = vadd.f32 %v3099, %v4360
    %v4395 = vadd.f32 %v3100, %v4365
    %v4396 = vadd.f32 %v3101, %v4370
    %v4397 = vadd.f32 %v3102, %v4375
    %v4398 = vadd.f32 %v3103, %v4380
    %v4399 = vsel %vm175, %v4383, 0.0
    %v4400 = vsel %vm175, %v4384, 0.0
    %v4401 = vadd.f32 %v4399, %v4400
    %v4402 = vsel %vm175, %v4385, 0.0
    %v4403 = vadd.f32 %v4401, %v4402
    %v4404 = vsel %vm175, %v4386, 0.0
    %v4405 = vadd.f32 %v4403, %v4404
    %v4406 = vsel %vm175, %v4387, 0.0
    %v4407 = vadd.f32 %v4405, %v4406
    %v4408 = vsel %vm175, %v4388, 0.0
    %v4409 = vadd.f32 %v4407, %v4408
    %v4410 = vsel %vm175, %v4389, 0.0
    %v4411 = vadd.f32 %v4409, %v4410
    %v4412 = vsel %vm175, %v4390, 0.0
    %v4413 = vadd.f32 %v4411, %v4412
    %v4414 = vrot.slane %v4413, 4
    %v4415 = vadd.f32 %v4413, %v4414
    %v4416 = vrot.slane %v4415, 2
    %v4417 = vadd.f32 %v4415, %v4416
    %v4418 = vrot.slane %v4417, 1
    %v4419 = vadd.f32 %v4417, %v4418
    %v4420 = vsel %vm175, %v4391, 0.0
    %v4421 = vsel %vm175, %v4392, 0.0
    %v4422 = vadd.f32 %v4420, %v4421
    %v4423 = vsel %vm175, %v4393, 0.0
    %v4424 = vadd.f32 %v4422, %v4423
    %v4425 = vsel %vm175, %v4394, 0.0
    %v4426 = vadd.f32 %v4424, %v4425
    %v4427 = vsel %vm175, %v4395, 0.0
    %v4428 = vadd.f32 %v4426, %v4427
    %v4429 = vsel %vm175, %v4396, 0.0
    %v4430 = vadd.f32 %v4428, %v4429
    %v4431 = vsel %vm175, %v4397, 0.0
    %v4432 = vadd.f32 %v4430, %v4431
    %v4433 = vsel %vm175, %v4398, 0.0
    %v4434 = vadd.f32 %v4432, %v4433
    %v4435 = vrot.slane %v4434, 4
    %v4436 = vadd.f32 %v4434, %v4435
    %v4437 = vrot.slane %v4436, 2
    %v4438 = vadd.f32 %v4436, %v4437
    %v4439 = vrot.slane %v4438, 1
    %v4440 = vadd.f32 %v4438, %v4439
    %v4441 = vmul.f32 %v4419, %v438
    %v4442 = vmul.f32 %v4440, %v438
    %v4443 = vsub.f32 %v4383, %v4441
    %v4444 = vsub.f32 %v4384, %v4441
    %v4445 = vsub.f32 %v4385, %v4441
    %v4446 = vsub.f32 %v4386, %v4441
    %v4447 = vsub.f32 %v4387, %v4441
    %v4448 = vsub.f32 %v4388, %v4441
    %v4449 = vsub.f32 %v4389, %v4441
    %v4450 = vsub.f32 %v4390, %v4441
    %v4451 = vsub.f32 %v4391, %v4442
    %v4452 = vsub.f32 %v4392, %v4442
    %v4453 = vsub.f32 %v4393, %v4442
    %v4454 = vsub.f32 %v4394, %v4442
    %v4455 = vsub.f32 %v4395, %v4442
    %v4456 = vsub.f32 %v4396, %v4442
    %v4457 = vsub.f32 %v4397, %v4442
    %v4458 = vsub.f32 %v4398, %v4442
    %v4459 = vmul.f32 %v4443, %v4443
    %v4460 = vmul.f32 %v4444, %v4444
    %v4461 = vmul.f32 %v4445, %v4445
    %v4462 = vmul.f32 %v4446, %v4446
    %v4463 = vmul.f32 %v4447, %v4447
    %v4464 = vmul.f32 %v4448, %v4448
    %v4465 = vmul.f32 %v4449, %v4449
    %v4466 = vmul.f32 %v4450, %v4450
    %v4467 = vmul.f32 %v4451, %v4451
    %v4468 = vmul.f32 %v4452, %v4452
    %v4469 = vmul.f32 %v4453, %v4453
    %v4470 = vmul.f32 %v4454, %v4454
    %v4471 = vmul.f32 %v4455, %v4455
    %v4472 = vmul.f32 %v4456, %v4456
    %v4473 = vmul.f32 %v4457, %v4457
    %v4474 = vmul.f32 %v4458, %v4458
    %v4475 = vsel %vm175, %v4459, 0.0
    %v4476 = vsel %vm175, %v4460, 0.0
    %v4477 = vadd.f32 %v4475, %v4476
    %v4478 = vsel %vm175, %v4461, 0.0
    %v4479 = vadd.f32 %v4477, %v4478
    %v4480 = vsel %vm175, %v4462, 0.0
    %v4481 = vadd.f32 %v4479, %v4480
    %v4482 = vsel %vm175, %v4463, 0.0
    %v4483 = vadd.f32 %v4481, %v4482
    %v4484 = vsel %vm175, %v4464, 0.0
    %v4485 = vadd.f32 %v4483, %v4484
    %v4486 = vsel %vm175, %v4465, 0.0
    %v4487 = vadd.f32 %v4485, %v4486
    %v4488 = vsel %vm175, %v4466, 0.0
    %v4489 = vadd.f32 %v4487, %v4488
    %v4490 = vrot.slane %v4489, 4
    %v4491 = vadd.f32 %v4489, %v4490
    %v4492 = vrot.slane %v4491, 2
    %v4493 = vadd.f32 %v4491, %v4492
    %v4494 = vrot.slane %v4493, 1
    %v4495 = vadd.f32 %v4493, %v4494
    %v4496 = vsel %vm175, %v4467, 0.0
    %v4497 = vsel %vm175, %v4468, 0.0
    %v4498 = vadd.f32 %v4496, %v4497
    %v4499 = vsel %vm175, %v4469, 0.0
    %v4500 = vadd.f32 %v4498, %v4499
    %v4501 = vsel %vm175, %v4470, 0.0
    %v4502 = vadd.f32 %v4500, %v4501
    %v4503 = vsel %vm175, %v4471, 0.0
    %v4504 = vadd.f32 %v4502, %v4503
    %v4505 = vsel %vm175, %v4472, 0.0
    %v4506 = vadd.f32 %v4504, %v4505
    %v4507 = vsel %vm175, %v4473, 0.0
    %v4508 = vadd.f32 %v4506, %v4507
    %v4509 = vsel %vm175, %v4474, 0.0
    %v4510 = vadd.f32 %v4508, %v4509
    %v4511 = vrot.slane %v4510, 4
    %v4512 = vadd.f32 %v4510, %v4511
    %v4513 = vrot.slane %v4512, 2
    %v4514 = vadd.f32 %v4512, %v4513
    %v4515 = vrot.slane %v4514, 1
    %v4516 = vadd.f32 %v4514, %v4515
    %v4517 = vmul.f32 %v4495, %v438
    %v4518 = vmul.f32 %v4516, %v438
    %v4519 = vadd.f32 %v4517, 1e-05
    %v4520 = vadd.f32 %v4518, 1e-05
    %v4521 = vrsqrt.pop %v4519
    %v4522 = vrsqrt.pop %v4520
    %v4523 = vmul.f32 %v4443, %v4521
    %v4524 = vmul.f32 %v4444, %v4521
    %v4525 = vmul.f32 %v4445, %v4521
    %v4526 = vmul.f32 %v4446, %v4521
    %v4527 = vmul.f32 %v4447, %v4521
    %v4528 = vmul.f32 %v4448, %v4521
    %v4529 = vmul.f32 %v4449, %v4521
    %v4530 = vmul.f32 %v4450, %v4521
    %v4531 = vmul.f32 %v4451, %v4522
    %v4532 = vmul.f32 %v4452, %v4522
    %v4533 = vmul.f32 %v4453, %v4522
    %v4534 = vmul.f32 %v4454, %v4522
    %v4535 = vmul.f32 %v4455, %v4522
    %v4536 = vmul.f32 %v4456, %v4522
    %v4537 = vmul.f32 %v4457, %v4522
    %v4538 = vmul.f32 %v4458, %v4522
    %v4539 = vld [vmem:[%s16] sm:$0x1]
    %v4541 = vlaneseq
    %v4542 = vshrl.u32 %v4541, 7
    %v4543 = vsub.s32 0, %v4542
    %v4544 = vrot.slane %v4539, %v4543
    %v4546 = vmul.f32 %v4523, %v4544
    %v4547 = vmul.f32 %v4524, %v4544
    %v4548 = vmul.f32 %v4525, %v4544
    %v4549 = vmul.f32 %v4526, %v4544
    %v4550 = vmul.f32 %v4527, %v4544
    %v4551 = vmul.f32 %v4528, %v4544
    %v4552 = vmul.f32 %v4529, %v4544
    %v4553 = vmul.f32 %v4530, %v4544
    %v4554 = vmul.f32 %v4531, %v4544
    %v4555 = vmul.f32 %v4532, %v4544
    %v4556 = vmul.f32 %v4533, %v4544
    %v4557 = vmul.f32 %v4534, %v4544
    %v4558 = vmul.f32 %v4535, %v4544
    %v4559 = vmul.f32 %v4536, %v4544
    %v4560 = vmul.f32 %v4537, %v4544
    %v4561 = vmul.f32 %v4538, %v4544
    %v4562 = vld [vmem:[%s17] sm:$0x1]
    %v4564 = vlaneseq
    %v4565 = vshrl.u32 %v4564, 7
    %v4566 = vsub.s32 0, %v4565
    %v4567 = vrot.slane %v4562, %v4566
    %v4569 = vadd.f32 %v4546, %v4567
    %v4570 = vadd.f32 %v4547, %v4567
    %v4571 = vadd.f32 %v4548, %v4567
    %v4572 = vadd.f32 %v4549, %v4567
    %v4573 = vadd.f32 %v4550, %v4567
    %v4574 = vadd.f32 %v4551, %v4567
    %v4575 = vadd.f32 %v4552, %v4567
    %v4576 = vadd.f32 %v4553, %v4567
    %v4577 = vadd.f32 %v4554, %v4567
    %v4578 = vadd.f32 %v4555, %v4567
    %v4579 = vadd.f32 %v4556, %v4567
    %v4580 = vadd.f32 %v4557, %v4567
    %v4581 = vadd.f32 %v4558, %v4567
    %v4582 = vadd.f32 %v4559, %v4567
    %v4583 = vadd.f32 %v4560, %v4567
    %v4584 = vadd.f32 %v4561, %v4567
    %v4585 = vxor.u32 %v4569, 2147483648
    %v4586 = vxor.u32 %v4570, 2147483648
    %v4587 = vxor.u32 %v4571, 2147483648
    %v4588 = vxor.u32 %v4572, 2147483648
    %v4589 = vxor.u32 %v4573, 2147483648
    %v4590 = vxor.u32 %v4574, 2147483648
    %v4591 = vxor.u32 %v4575, 2147483648
    %v4592 = vxor.u32 %v4576, 2147483648
    %v4593 = vxor.u32 %v4577, 2147483648
    %v4594 = vxor.u32 %v4578, 2147483648
    %v4595 = vxor.u32 %v4579, 2147483648
    %v4596 = vxor.u32 %v4580, 2147483648
    %v4597 = vxor.u32 %v4581, 2147483648
    %v4598 = vxor.u32 %v4582, 2147483648
    %v4599 = vxor.u32 %v4583, 2147483648
    %v4600 = vxor.u32 %v4584, 2147483648
    %v4601 = vmul.f32 %v4585, 1.442695
    %v4602 = vpow.pop %v4601
    %v4603 = vmul.f32 %v4586, 1.442695
    %v4604 = vpow.pop %v4603
    %v4605 = vmul.f32 %v4587, 1.442695
    %v4606 = vpow.pop %v4605
    %v4607 = vmul.f32 %v4588, 1.442695
    %v4608 = vpow.pop %v4607
    %v4609 = vmul.f32 %v4589, 1.442695
    %v4610 = vpow.pop %v4609
    %v4611 = vmul.f32 %v4590, 1.442695
    %v4612 = vpow.pop %v4611
    %v4613 = vmul.f32 %v4591, 1.442695
    %v4614 = vpow.pop %v4613
    %v4615 = vmul.f32 %v4592, 1.442695
    %v4616 = vpow.pop %v4615
    %v4617 = vmul.f32 %v4593, 1.442695
    %v4618 = vpow.pop %v4617
    %v4619 = vmul.f32 %v4594, 1.442695
    %v4620 = vpow.pop %v4619
    %v4621 = vmul.f32 %v4595, 1.442695
    %v4622 = vpow.pop %v4621
    %v4623 = vmul.f32 %v4596, 1.442695
    %v4624 = vpow.pop %v4623
    %v4625 = vmul.f32 %v4597, 1.442695
    %v4626 = vpow.pop %v4625
    %v4627 = vmul.f32 %v4598, 1.442695
    %v4628 = vpow.pop %v4627
    %v4629 = vmul.f32 %v4599, 1.442695
    %v4630 = vpow.pop %v4629
    %v4631 = vmul.f32 %v4600, 1.442695
    %v4632 = vpow.pop %v4631
    %v4633 = vadd.f32 %v4602, 1.0
    %v4634 = vadd.f32 %v4604, 1.0
    %v4635 = vadd.f32 %v4606, 1.0
    %v4636 = vadd.f32 %v4608, 1.0
    %v4637 = vadd.f32 %v4610, 1.0
    %v4638 = vadd.f32 %v4612, 1.0
    %v4639 = vadd.f32 %v4614, 1.0
    %v4640 = vadd.f32 %v4616, 1.0
    %v4641 = vadd.f32 %v4618, 1.0
    %v4642 = vadd.f32 %v4620, 1.0
    %v4643 = vadd.f32 %v4622, 1.0
    %v4644 = vadd.f32 %v4624, 1.0
    %v4645 = vadd.f32 %v4626, 1.0
    %v4646 = vadd.f32 %v4628, 1.0
    %v4647 = vadd.f32 %v4630, 1.0
    %v4648 = vadd.f32 %v4632, 1.0
    %v4649 = vrcp.pop %v4633
    %v4650 = vmul.f32 1.0, %v4649
    %v4651 = vrcp.pop %v4634
    %v4652 = vmul.f32 1.0, %v4651
    %v4653 = vrcp.pop %v4635
    %v4654 = vmul.f32 1.0, %v4653
    %v4655 = vrcp.pop %v4636
    %v4656 = vmul.f32 1.0, %v4655
    %v4657 = vrcp.pop %v4637
    %v4658 = vmul.f32 1.0, %v4657
    %v4659 = vrcp.pop %v4638
    %v4660 = vmul.f32 1.0, %v4659
    %v4661 = vrcp.pop %v4639
    %v4662 = vmul.f32 1.0, %v4661
    %v4663 = vrcp.pop %v4640
    %v4664 = vmul.f32 1.0, %v4663
    %v4665 = vrcp.pop %v4641
    %v4666 = vmul.f32 1.0, %v4665
    %v4667 = vrcp.pop %v4642
    %v4668 = vmul.f32 1.0, %v4667
    %v4669 = vrcp.pop %v4643
    %v4670 = vmul.f32 1.0, %v4669
    %v4671 = vrcp.pop %v4644
    %v4672 = vmul.f32 1.0, %v4671
    %v4673 = vrcp.pop %v4645
    %v4674 = vmul.f32 1.0, %v4673
    %v4675 = vrcp.pop %v4646
    %v4676 = vmul.f32 1.0, %v4675
    %v4677 = vrcp.pop %v4647
    %v4678 = vmul.f32 1.0, %v4677
    %v4679 = vrcp.pop %v4648
    %v4680 = vmul.f32 1.0, %v4679
    %v4681 = vmul.f32 %v4569, %v4650
    %v4682 = vmul.f32 %v4570, %v4652
    %v4683 = vmul.f32 %v4571, %v4654
    %v4684 = vmul.f32 %v4572, %v4656
    %v4685 = vmul.f32 %v4573, %v4658
    %v4686 = vmul.f32 %v4574, %v4660
    %v4687 = vmul.f32 %v4575, %v4662
    %v4688 = vmul.f32 %v4576, %v4664
    %v4689 = vmul.f32 %v4577, %v4666
    %v4690 = vmul.f32 %v4578, %v4668
    %v4691 = vmul.f32 %v4579, %v4670
    %v4692 = vmul.f32 %v4580, %v4672
    %v4693 = vmul.f32 %v4581, %v4674
    %v4694 = vmul.f32 %v4582, %v4676
    %v4695 = vmul.f32 %v4583, %v4678
    %v4696 = vmul.f32 %v4584, %v4680
    %4697 = vst.msk [vmem:[%s695 + $0x1] sm:$0xff] %vm175, %v4681
    %4698 = vst.msk [vmem:[%s695 + $0x11] sm:$0xff] %vm175, %v4682
    %4699 = vst.msk [vmem:[%s695 + $0x21] sm:$0xff] %vm175, %v4683
    %4700 = vst.msk [vmem:[%s695 + $0x31] sm:$0xff] %vm175, %v4684
    %4701 = vst.msk [vmem:[%s695 + $0x41] sm:$0xff] %vm175, %v4685
    %4702 = vst.msk [vmem:[%s695 + $0x51] sm:$0xff] %vm175, %v4686
    %4703 = vst.msk [vmem:[%s695 + $0x61] sm:$0xff] %vm175, %v4687
    %4704 = vst.msk [vmem:[%s695 + $0x71] sm:$0xff] %vm175, %v4688
    %4705 = vst.msk [vmem:[%s695 + $0xa1] sm:$0xff] %vm175, %v4689
    %4706 = vst.msk [vmem:[%s695 + $0xb1] sm:$0xff] %vm175, %v4690
    %4707 = vst.msk [vmem:[%s695 + $0xc1] sm:$0xff] %vm175, %v4691
    %4708 = vst.msk [vmem:[%s695 + $0xd1] sm:$0xff] %vm175, %v4692
    %4709 = vst.msk [vmem:[%s695 + $0xe1] sm:$0xff] %vm175, %v4693
    %4710 = vst.msk [vmem:[%s695 + $0xf1] sm:$0xff] %vm175, %v4694
    %4711 = vst.msk [vmem:[%s695 + $0x101] sm:$0xff] %vm175, %v4695
    %4712 = vst.msk [vmem:[%s695 + $0x111] sm:$0xff] %vm175, %v4696
    %v4713 = vld [vmem:[#allocation2] sm:$0xff]
    %v4714 = vld [vmem:[#allocation2 + $0x10] sm:$0xff]
    %v4715 = vld [vmem:[#allocation2 + $0x20] sm:$0xff]
    %v4716 = vld [vmem:[#allocation2 + $0x30] sm:$0xff]
    %v4717 = vld [vmem:[#allocation2 + $0x40] sm:$0xff]
    %v4718 = vld [vmem:[#allocation2 + $0x50] sm:$0xff]
    %v4719 = vld [vmem:[#allocation2 + $0x60] sm:$0xff]
    %v4720 = vld [vmem:[#allocation2 + $0x70] sm:$0xff]
    %v4721 = vld [vmem:[#allocation2 + $0xa0] sm:$0xff]
    %v4722 = vld [vmem:[#allocation2 + $0xb0] sm:$0xff]
    %v4723 = vld [vmem:[#allocation2 + $0xc0] sm:$0xff]
    %v4724 = vld [vmem:[#allocation2 + $0xd0] sm:$0xff]
    %v4725 = vld [vmem:[#allocation2 + $0xe0] sm:$0xff]
    %v4726 = vld [vmem:[#allocation2 + $0xf0] sm:$0xff]
    %v4727 = vld [vmem:[#allocation2 + $0x100] sm:$0xff]
    %v4728 = vld [vmem:[#allocation2 + $0x110] sm:$0xff]
    %v4729 = vld [vmem:[#allocation2 + $0x1] sm:$0xff]
    %v4730 = vld [vmem:[#allocation2 + $0x11] sm:$0xff]
    %v4731 = vld [vmem:[#allocation2 + $0x21] sm:$0xff]
    %v4732 = vld [vmem:[#allocation2 + $0x31] sm:$0xff]
    %v4733 = vld [vmem:[#allocation2 + $0x41] sm:$0xff]
    %v4734 = vld [vmem:[#allocation2 + $0x51] sm:$0xff]
    %v4735 = vld [vmem:[#allocation2 + $0x61] sm:$0xff]
    %v4736 = vld [vmem:[#allocation2 + $0x71] sm:$0xff]
    %v4737 = vld [vmem:[#allocation2 + $0xa1] sm:$0xff]
    %v4738 = vld [vmem:[#allocation2 + $0xb1] sm:$0xff]
    %v4739 = vld [vmem:[#allocation2 + $0xc1] sm:$0xff]
    %v4740 = vld [vmem:[#allocation2 + $0xd1] sm:$0xff]
    %v4741 = vld [vmem:[#allocation2 + $0xe1] sm:$0xff]
    %v4742 = vld [vmem:[#allocation2 + $0xf1] sm:$0xff]
    %v4743 = vld [vmem:[#allocation2 + $0x101] sm:$0xff]
    %v4744 = vld [vmem:[#allocation2 + $0x111] sm:$0xff]
    %v4745 = vld [vmem:[#allocation2 + $0x2] sm:$0xff]
    %v4746 = vld [vmem:[#allocation2 + $0x12] sm:$0xff]
    %v4747 = vld [vmem:[#allocation2 + $0x22] sm:$0xff]
    %v4748 = vld [vmem:[#allocation2 + $0x32] sm:$0xff]
    %v4749 = vld [vmem:[#allocation2 + $0x42] sm:$0xff]
    %v4750 = vld [vmem:[#allocation2 + $0x52] sm:$0xff]
    %v4751 = vld [vmem:[#allocation2 + $0x62] sm:$0xff]
    %v4752 = vld [vmem:[#allocation2 + $0x72] sm:$0xff]
    %v4753 = vld [vmem:[#allocation2 + $0xa2] sm:$0xff]
    %v4754 = vld [vmem:[#allocation2 + $0xb2] sm:$0xff]
    %v4755 = vld [vmem:[#allocation2 + $0xc2] sm:$0xff]
    %v4756 = vld [vmem:[#allocation2 + $0xd2] sm:$0xff]
    %v4757 = vld [vmem:[#allocation2 + $0xe2] sm:$0xff]
    %v4758 = vld [vmem:[#allocation2 + $0xf2] sm:$0xff]
    %v4759 = vld [vmem:[#allocation2 + $0x102] sm:$0xff]
    %v4760 = vld [vmem:[#allocation2 + $0x112] sm:$0xff]
    %v4761 = vld [vmem:[%s695] sm:$0xff]
    %v4762 = vld [vmem:[%s695 + $0x10] sm:$0xff]
    %v4763 = vld [vmem:[%s695 + $0x20] sm:$0xff]
    %v4764 = vld [vmem:[%s695 + $0x30] sm:$0xff]
    %v4765 = vld [vmem:[%s695 + $0x40] sm:$0xff]
    %v4766 = vld [vmem:[%s695 + $0x50] sm:$0xff]
    %v4767 = vld [vmem:[%s695 + $0x60] sm:$0xff]
    %v4768 = vld [vmem:[%s695 + $0x70] sm:$0xff]
    %v4769 = vld [vmem:[%s695 + $0xa0] sm:$0xff]
    %v4770 = vld [vmem:[%s695 + $0xb0] sm:$0xff]
    %v4771 = vld [vmem:[%s695 + $0xc0] sm:$0xff]
    %v4772 = vld [vmem:[%s695 + $0xd0] sm:$0xff]
    %v4773 = vld [vmem:[%s695 + $0xe0] sm:$0xff]
    %v4774 = vld [vmem:[%s695 + $0xf0] sm:$0xff]
    %v4775 = vld [vmem:[%s695 + $0x100] sm:$0xff]
    %v4776 = vld [vmem:[%s695 + $0x110] sm:$0xff]
    %v4777 = vld [vmem:[%s695 + $0x1] sm:$0xff]
    %v4778 = vld [vmem:[%s695 + $0x11] sm:$0xff]
    %v4779 = vld [vmem:[%s695 + $0x21] sm:$0xff]
    %v4780 = vld [vmem:[%s695 + $0x31] sm:$0xff]
    %v4781 = vld [vmem:[%s695 + $0x41] sm:$0xff]
    %v4782 = vld [vmem:[%s695 + $0x51] sm:$0xff]
    %v4783 = vld [vmem:[%s695 + $0x61] sm:$0xff]
    %v4784 = vld [vmem:[%s695 + $0x71] sm:$0xff]
    %v4785 = vld [vmem:[%s695 + $0xa1] sm:$0xff]
    %v4786 = vld [vmem:[%s695 + $0xb1] sm:$0xff]
    %v4787 = vld [vmem:[%s695 + $0xc1] sm:$0xff]
    %v4788 = vld [vmem:[%s695 + $0xd1] sm:$0xff]
    %v4789 = vld [vmem:[%s695 + $0xe1] sm:$0xff]
    %v4790 = vld [vmem:[%s695 + $0xf1] sm:$0xff]
    %v4791 = vld [vmem:[%s695 + $0x101] sm:$0xff]
    %v4792 = vld [vmem:[%s695 + $0x111] sm:$0xff]
    %v4793 = vld [vmem:[%s695 + $0x2] sm:$0xff]
    %v4794 = vld [vmem:[%s695 + $0x12] sm:$0xff]
    %v4795 = vld [vmem:[%s695 + $0x22] sm:$0xff]
    %v4796 = vld [vmem:[%s695 + $0x32] sm:$0xff]
    %v4797 = vld [vmem:[%s695 + $0x42] sm:$0xff]
    %v4798 = vld [vmem:[%s695 + $0x52] sm:$0xff]
    %v4799 = vld [vmem:[%s695 + $0x62] sm:$0xff]
    %v4800 = vld [vmem:[%s695 + $0x72] sm:$0xff]
    %v4801 = vld [vmem:[%s695 + $0xa2] sm:$0xff]
    %v4802 = vld [vmem:[%s695 + $0xb2] sm:$0xff]
    %v4803 = vld [vmem:[%s695 + $0xc2] sm:$0xff]
    %v4804 = vld [vmem:[%s695 + $0xd2] sm:$0xff]
    %v4805 = vld [vmem:[%s695 + $0xe2] sm:$0xff]
    %v4806 = vld [vmem:[%s695 + $0xf2] sm:$0xff]
    %v4807 = vld [vmem:[%s695 + $0x102] sm:$0xff]
    %v4808 = vld [vmem:[%s695 + $0x112] sm:$0xff]
    %v4809 = vld [vmem:[%s808] sm:$0xff]
    %v4810 = vld [vmem:[%s808 + $0x10] sm:$0xff]
    %v4811 = vld [vmem:[%s808 + $0x20] sm:$0xff]
    %v4812 = vld [vmem:[%s808 + $0x30] sm:$0xff]
    %v4813 = vld [vmem:[%s808 + $0x40] sm:$0xff]
    %v4814 = vld [vmem:[%s808 + $0x50] sm:$0xff]
    %v4815 = vld [vmem:[%s808 + $0x60] sm:$0xff]
    %v4816 = vld [vmem:[%s808 + $0x70] sm:$0xff]
    %v4817 = vld [vmem:[%s808 + $0xa0] sm:$0xff]
    %v4818 = vld [vmem:[%s808 + $0xb0] sm:$0xff]
    %v4819 = vld [vmem:[%s808 + $0xc0] sm:$0xff]
    %v4820 = vld [vmem:[%s808 + $0xd0] sm:$0xff]
    %v4821 = vld [vmem:[%s808 + $0xe0] sm:$0xff]
    %v4822 = vld [vmem:[%s808 + $0xf0] sm:$0xff]
    %v4823 = vld [vmem:[%s808 + $0x100] sm:$0xff]
    %v4824 = vld [vmem:[%s808 + $0x110] sm:$0xff]
    %v4825 = vld [vmem:[%s808 + $0x1] sm:$0xff]
    %v4826 = vld [vmem:[%s808 + $0x11] sm:$0xff]
    %v4827 = vld [vmem:[%s808 + $0x21] sm:$0xff]
    %v4828 = vld [vmem:[%s808 + $0x31] sm:$0xff]
    %v4829 = vld [vmem:[%s808 + $0x41] sm:$0xff]
    %v4830 = vld [vmem:[%s808 + $0x51] sm:$0xff]
    %v4831 = vld [vmem:[%s808 + $0x61] sm:$0xff]
    %v4832 = vld [vmem:[%s808 + $0x71] sm:$0xff]
    %v4833 = vld [vmem:[%s808 + $0xa1] sm:$0xff]
    %v4834 = vld [vmem:[%s808 + $0xb1] sm:$0xff]
    %v4835 = vld [vmem:[%s808 + $0xc1] sm:$0xff]
    %v4836 = vld [vmem:[%s808 + $0xd1] sm:$0xff]
    %v4837 = vld [vmem:[%s808 + $0xe1] sm:$0xff]
    %v4838 = vld [vmem:[%s808 + $0xf1] sm:$0xff]
    %v4839 = vld [vmem:[%s808 + $0x101] sm:$0xff]
    %v4840 = vld [vmem:[%s808 + $0x111] sm:$0xff]
    %v4841 = vld [vmem:[%s808 + $0x2] sm:$0xff]
    %v4842 = vld [vmem:[%s808 + $0x12] sm:$0xff]
    %v4843 = vld [vmem:[%s808 + $0x22] sm:$0xff]
    %v4844 = vld [vmem:[%s808 + $0x32] sm:$0xff]
    %v4845 = vld [vmem:[%s808 + $0x42] sm:$0xff]
    %v4846 = vld [vmem:[%s808 + $0x52] sm:$0xff]
    %v4847 = vld [vmem:[%s808 + $0x62] sm:$0xff]
    %v4848 = vld [vmem:[%s808 + $0x72] sm:$0xff]
    %v4849 = vld [vmem:[%s808 + $0xa2] sm:$0xff]
    %v4850 = vld [vmem:[%s808 + $0xb2] sm:$0xff]
    %v4851 = vld [vmem:[%s808 + $0xc2] sm:$0xff]
    %v4852 = vld [vmem:[%s808 + $0xd2] sm:$0xff]
    %v4853 = vld [vmem:[%s808 + $0xe2] sm:$0xff]
    %v4854 = vld [vmem:[%s808 + $0xf2] sm:$0xff]
    %v4855 = vld [vmem:[%s808 + $0x102] sm:$0xff]
    %v4856 = vld [vmem:[%s808 + $0x112] sm:$0xff]
    %4873 = vrot.lane.b32.xlu0 %v4729, 32
    %v4874 = vpop.permute.xlu0 %4873
    %4875 = vrot.lane.b32.xlu0 %v4730, 32
    %v4876 = vpop.permute.xlu0 %4875
    %4877 = vrot.lane.b32.xlu0 %v4731, 32
    %v4878 = vpop.permute.xlu0 %4877
    %4879 = vrot.lane.b32.xlu0 %v4732, 32
    %v4880 = vpop.permute.xlu0 %4879
    %4881 = vrot.lane.b32.xlu0 %v4733, 32
    %v4882 = vpop.permute.xlu0 %4881
    %4883 = vrot.lane.b32.xlu0 %v4734, 32
    %v4884 = vpop.permute.xlu0 %4883
    %4885 = vrot.lane.b32.xlu0 %v4735, 32
    %v4886 = vpop.permute.xlu0 %4885
    %4887 = vrot.lane.b32.xlu0 %v4736, 32
    %v4888 = vpop.permute.xlu0 %4887
    %4889 = vrot.lane.b32.xlu0 %v4737, 32
    %v4890 = vpop.permute.xlu0 %4889
    %4891 = vrot.lane.b32.xlu0 %v4738, 32
    %v4892 = vpop.permute.xlu0 %4891
    %4893 = vrot.lane.b32.xlu0 %v4739, 32
    %v4894 = vpop.permute.xlu0 %4893
    %4895 = vrot.lane.b32.xlu0 %v4740, 32
    %v4896 = vpop.permute.xlu0 %4895
    %4897 = vrot.lane.b32.xlu0 %v4741, 32
    %v4898 = vpop.permute.xlu0 %4897
    %4899 = vrot.lane.b32.xlu0 %v4742, 32
    %v4900 = vpop.permute.xlu0 %4899
    %4901 = vrot.lane.b32.xlu0 %v4743, 32
    %v4902 = vpop.permute.xlu0 %4901
    %4903 = vrot.lane.b32.xlu0 %v4744, 32
    %v4904 = vpop.permute.xlu0 %4903
    %4937 = vrot.lane.b32.xlu0 %v4745, 64
    %v4938 = vpop.permute.xlu0 %4937
    %4939 = vrot.lane.b32.xlu0 %v4746, 64
    %v4940 = vpop.permute.xlu0 %4939
    %4941 = vrot.lane.b32.xlu0 %v4747, 64
    %v4942 = vpop.permute.xlu0 %4941
    %4943 = vrot.lane.b32.xlu0 %v4748, 64
    %v4944 = vpop.permute.xlu0 %4943
    %4945 = vrot.lane.b32.xlu0 %v4749, 64
    %v4946 = vpop.permute.xlu0 %4945
    %4947 = vrot.lane.b32.xlu0 %v4750, 64
    %v4948 = vpop.permute.xlu0 %4947
    %4949 = vrot.lane.b32.xlu0 %v4751, 64
    %v4950 = vpop.permute.xlu0 %4949
    %4951 = vrot.lane.b32.xlu0 %v4752, 64
    %v4952 = vpop.permute.xlu0 %4951
    %4953 = vrot.lane.b32.xlu0 %v4753, 64
    %v4954 = vpop.permute.xlu0 %4953
    %4955 = vrot.lane.b32.xlu0 %v4754, 64
    %v4956 = vpop.permute.xlu0 %4955
    %4957 = vrot.lane.b32.xlu0 %v4755, 64
    %v4958 = vpop.permute.xlu0 %4957
    %4959 = vrot.lane.b32.xlu0 %v4756, 64
    %v4960 = vpop.permute.xlu0 %4959
    %4961 = vrot.lane.b32.xlu0 %v4757, 64
    %v4962 = vpop.permute.xlu0 %4961
    %4963 = vrot.lane.b32.xlu0 %v4758, 64
    %v4964 = vpop.permute.xlu0 %4963
    %4965 = vrot.lane.b32.xlu0 %v4759, 64
    %v4966 = vpop.permute.xlu0 %4965
    %4967 = vrot.lane.b32.xlu0 %v4760, 64
    %v4968 = vpop.permute.xlu0 %4967
    %5001 = vrot.lane.b32.xlu0 %v4761, 96
    %v5002 = vpop.permute.xlu0 %5001
    %5003 = vrot.lane.b32.xlu0 %v4762, 96
    %v5004 = vpop.permute.xlu0 %5003
    %5005 = vrot.lane.b32.xlu0 %v4763, 96
    %v5006 = vpop.permute.xlu0 %5005
    %5007 = vrot.lane.b32.xlu0 %v4764, 96
    %v5008 = vpop.permute.xlu0 %5007
    %5009 = vrot.lane.b32.xlu0 %v4765, 96
    %v5010 = vpop.permute.xlu0 %5009
    %5011 = vrot.lane.b32.xlu0 %v4766, 96
    %v5012 = vpop.permute.xlu0 %5011
    %5013 = vrot.lane.b32.xlu0 %v4767, 96
    %v5014 = vpop.permute.xlu0 %5013
    %5015 = vrot.lane.b32.xlu0 %v4768, 96
    %v5016 = vpop.permute.xlu0 %5015
    %5017 = vrot.lane.b32.xlu0 %v4769, 96
    %v5018 = vpop.permute.xlu0 %5017
    %5019 = vrot.lane.b32.xlu0 %v4770, 96
    %v5020 = vpop.permute.xlu0 %5019
    %5021 = vrot.lane.b32.xlu0 %v4771, 96
    %v5022 = vpop.permute.xlu0 %5021
    %5023 = vrot.lane.b32.xlu0 %v4772, 96
    %v5024 = vpop.permute.xlu0 %5023
    %5025 = vrot.lane.b32.xlu0 %v4773, 96
    %v5026 = vpop.permute.xlu0 %5025
    %5027 = vrot.lane.b32.xlu0 %v4774, 96
    %v5028 = vpop.permute.xlu0 %5027
    %5029 = vrot.lane.b32.xlu0 %v4775, 96
    %v5030 = vpop.permute.xlu0 %5029
    %5031 = vrot.lane.b32.xlu0 %v4776, 96
    %v5032 = vpop.permute.xlu0 %5031
    %5065 = vrot.lane.b32.xlu0 %v4793, 32
    %v5066 = vpop.permute.xlu0 %5065
    %5067 = vrot.lane.b32.xlu0 %v4794, 32
    %v5068 = vpop.permute.xlu0 %5067
    %5069 = vrot.lane.b32.xlu0 %v4795, 32
    %v5070 = vpop.permute.xlu0 %5069
    %5071 = vrot.lane.b32.xlu0 %v4796, 32
    %v5072 = vpop.permute.xlu0 %5071
    %5073 = vrot.lane.b32.xlu0 %v4797, 32
    %v5074 = vpop.permute.xlu0 %5073
    %5075 = vrot.lane.b32.xlu0 %v4798, 32
    %v5076 = vpop.permute.xlu0 %5075
    %5077 = vrot.lane.b32.xlu0 %v4799, 32
    %v5078 = vpop.permute.xlu0 %5077
    %5079 = vrot.lane.b32.xlu0 %v4800, 32
    %v5080 = vpop.permute.xlu0 %5079
    %5081 = vrot.lane.b32.xlu0 %v4801, 32
    %v5082 = vpop.permute.xlu0 %5081
    %5083 = vrot.lane.b32.xlu0 %v4802, 32
    %v5084 = vpop.permute.xlu0 %5083
    %5085 = vrot.lane.b32.xlu0 %v4803, 32
    %v5086 = vpop.permute.xlu0 %5085
    %5087 = vrot.lane.b32.xlu0 %v4804, 32
    %v5088 = vpop.permute.xlu0 %5087
    %5089 = vrot.lane.b32.xlu0 %v4805, 32
    %v5090 = vpop.permute.xlu0 %5089
    %5091 = vrot.lane.b32.xlu0 %v4806, 32
    %v5092 = vpop.permute.xlu0 %5091
    %5093 = vrot.lane.b32.xlu0 %v4807, 32
    %v5094 = vpop.permute.xlu0 %5093
    %5095 = vrot.lane.b32.xlu0 %v4808, 32
    %v5096 = vpop.permute.xlu0 %5095
    %5129 = vrot.lane.b32.xlu0 %v4809, 64
    %v5130 = vpop.permute.xlu0 %5129
    %5131 = vrot.lane.b32.xlu0 %v4810, 64
    %v5132 = vpop.permute.xlu0 %5131
    %5133 = vrot.lane.b32.xlu0 %v4811, 64
    %v5134 = vpop.permute.xlu0 %5133
    %5135 = vrot.lane.b32.xlu0 %v4812, 64
    %v5136 = vpop.permute.xlu0 %5135
    %5137 = vrot.lane.b32.xlu0 %v4813, 64
    %v5138 = vpop.permute.xlu0 %5137
    %5139 = vrot.lane.b32.xlu0 %v4814, 64
    %v5140 = vpop.permute.xlu0 %5139
    %5141 = vrot.lane.b32.xlu0 %v4815, 64
    %v5142 = vpop.permute.xlu0 %5141
    %5143 = vrot.lane.b32.xlu0 %v4816, 64
    %v5144 = vpop.permute.xlu0 %5143
    %5145 = vrot.lane.b32.xlu0 %v4817, 64
    %v5146 = vpop.permute.xlu0 %5145
    %5147 = vrot.lane.b32.xlu0 %v4818, 64
    %v5148 = vpop.permute.xlu0 %5147
    %5149 = vrot.lane.b32.xlu0 %v4819, 64
    %v5150 = vpop.permute.xlu0 %5149
    %5151 = vrot.lane.b32.xlu0 %v4820, 64
    %v5152 = vpop.permute.xlu0 %5151
    %5153 = vrot.lane.b32.xlu0 %v4821, 64
    %v5154 = vpop.permute.xlu0 %5153
    %5155 = vrot.lane.b32.xlu0 %v4822, 64
    %v5156 = vpop.permute.xlu0 %5155
    %5157 = vrot.lane.b32.xlu0 %v4823, 64
    %v5158 = vpop.permute.xlu0 %5157
    %5159 = vrot.lane.b32.xlu0 %v4824, 64
    %v5160 = vpop.permute.xlu0 %5159
    %5193 = vrot.lane.b32.xlu0 %v4825, 96
    %v5194 = vpop.permute.xlu0 %5193
    %5195 = vrot.lane.b32.xlu0 %v4826, 96
    %v5196 = vpop.permute.xlu0 %5195
    %5197 = vrot.lane.b32.xlu0 %v4827, 96
    %v5198 = vpop.permute.xlu0 %5197
    %5199 = vrot.lane.b32.xlu0 %v4828, 96
    %v5200 = vpop.permute.xlu0 %5199
    %5201 = vrot.lane.b32.xlu0 %v4829, 96
    %v5202 = vpop.permute.xlu0 %5201
    %5203 = vrot.lane.b32.xlu0 %v4830, 96
    %v5204 = vpop.permute.xlu0 %5203
    %5205 = vrot.lane.b32.xlu0 %v4831, 96
    %v5206 = vpop.permute.xlu0 %5205
    %5207 = vrot.lane.b32.xlu0 %v4832, 96
    %v5208 = vpop.permute.xlu0 %5207
    %5209 = vrot.lane.b32.xlu0 %v4833, 96
    %v5210 = vpop.permute.xlu0 %5209
    %5211 = vrot.lane.b32.xlu0 %v4834, 96
    %v5212 = vpop.permute.xlu0 %5211
    %5213 = vrot.lane.b32.xlu0 %v4835, 96
    %v5214 = vpop.permute.xlu0 %5213
    %5215 = vrot.lane.b32.xlu0 %v4836, 96
    %v5216 = vpop.permute.xlu0 %5215
    %5217 = vrot.lane.b32.xlu0 %v4837, 96
    %v5218 = vpop.permute.xlu0 %5217
    %5219 = vrot.lane.b32.xlu0 %v4838, 96
    %v5220 = vpop.permute.xlu0 %5219
    %5221 = vrot.lane.b32.xlu0 %v4839, 96
    %v5222 = vpop.permute.xlu0 %5221
    %5223 = vrot.lane.b32.xlu0 %v4840, 96
    %v5224 = vpop.permute.xlu0 %5223
    %v5241 = vsel %vm175, %v4713, %v4874
    %v5242 = vsel %vm175, %v4714, %v4876
    %v5243 = vsel %vm175, %v4715, %v4878
    %v5244 = vsel %vm175, %v4716, %v4880
    %v5245 = vsel %vm175, %v4717, %v4882
    %v5246 = vsel %vm175, %v4718, %v4884
    %v5247 = vsel %vm175, %v4719, %v4886
    %v5248 = vsel %vm175, %v4720, %v4888
    %v5249 = vsel %vm175, %v4721, %v4890
    %v5250 = vsel %vm175, %v4722, %v4892
    %v5251 = vsel %vm175, %v4723, %v4894
    %v5252 = vsel %vm175, %v4724, %v4896
    %v5253 = vsel %vm175, %v4725, %v4898
    %v5254 = vsel %vm175, %v4726, %v4900
    %v5255 = vsel %vm175, %v4727, %v4902
    %v5256 = vsel %vm175, %v4728, %v4904
    %v5257 = vsel %vm1257, %v5241, %v4938
    %v5258 = vsel %vm1257, %v5242, %v4940
    %v5259 = vsel %vm1257, %v5243, %v4942
    %v5260 = vsel %vm1257, %v5244, %v4944
    %v5261 = vsel %vm1257, %v5245, %v4946
    %v5262 = vsel %vm1257, %v5246, %v4948
    %v5263 = vsel %vm1257, %v5247, %v4950
    %v5264 = vsel %vm1257, %v5248, %v4952
    %v5265 = vsel %vm1257, %v5249, %v4954
    %v5266 = vsel %vm1257, %v5250, %v4956
    %v5267 = vsel %vm1257, %v5251, %v4958
    %v5268 = vsel %vm1257, %v5252, %v4960
    %v5269 = vsel %vm1257, %v5253, %v4962
    %v5270 = vsel %vm1257, %v5254, %v4964
    %v5271 = vsel %vm1257, %v5255, %v4966
    %v5272 = vsel %vm1257, %v5256, %v4968
    %v5273 = vsel %vm1274, %v5257, %v5002
    %v5274 = vsel %vm1274, %v5258, %v5004
    %v5275 = vsel %vm1274, %v5259, %v5006
    %v5276 = vsel %vm1274, %v5260, %v5008
    %v5277 = vsel %vm1274, %v5261, %v5010
    %v5278 = vsel %vm1274, %v5262, %v5012
    %v5279 = vsel %vm1274, %v5263, %v5014
    %v5280 = vsel %vm1274, %v5264, %v5016
    %v5281 = vsel %vm1274, %v5265, %v5018
    %v5282 = vsel %vm1274, %v5266, %v5020
    %v5283 = vsel %vm1274, %v5267, %v5022
    %v5284 = vsel %vm1274, %v5268, %v5024
    %v5285 = vsel %vm1274, %v5269, %v5026
    %v5286 = vsel %vm1274, %v5270, %v5028
    %v5287 = vsel %vm1274, %v5271, %v5030
    %v5288 = vsel %vm1274, %v5272, %v5032
    %v5289 = vsel %vm175, %v4777, %v5066
    %v5290 = vsel %vm175, %v4778, %v5068
    %v5291 = vsel %vm175, %v4779, %v5070
    %v5292 = vsel %vm175, %v4780, %v5072
    %v5293 = vsel %vm175, %v4781, %v5074
    %v5294 = vsel %vm175, %v4782, %v5076
    %v5295 = vsel %vm175, %v4783, %v5078
    %v5296 = vsel %vm175, %v4784, %v5080
    %v5297 = vsel %vm175, %v4785, %v5082
    %v5298 = vsel %vm175, %v4786, %v5084
    %v5299 = vsel %vm175, %v4787, %v5086
    %v5300 = vsel %vm175, %v4788, %v5088
    %v5301 = vsel %vm175, %v4789, %v5090
    %v5302 = vsel %vm175, %v4790, %v5092
    %v5303 = vsel %vm175, %v4791, %v5094
    %v5304 = vsel %vm175, %v4792, %v5096
    %v5305 = vsel %vm1257, %v5289, %v5130
    %v5306 = vsel %vm1257, %v5290, %v5132
    %v5307 = vsel %vm1257, %v5291, %v5134
    %v5308 = vsel %vm1257, %v5292, %v5136
    %v5309 = vsel %vm1257, %v5293, %v5138
    %v5310 = vsel %vm1257, %v5294, %v5140
    %v5311 = vsel %vm1257, %v5295, %v5142
    %v5312 = vsel %vm1257, %v5296, %v5144
    %v5313 = vsel %vm1257, %v5297, %v5146
    %v5314 = vsel %vm1257, %v5298, %v5148
    %v5315 = vsel %vm1257, %v5299, %v5150
    %v5316 = vsel %vm1257, %v5300, %v5152
    %v5317 = vsel %vm1257, %v5301, %v5154
    %v5318 = vsel %vm1257, %v5302, %v5156
    %v5319 = vsel %vm1257, %v5303, %v5158
    %v5320 = vsel %vm1257, %v5304, %v5160
    %v5321 = vsel %vm1274, %v5305, %v5194
    %v5322 = vsel %vm1274, %v5306, %v5196
    %v5323 = vsel %vm1274, %v5307, %v5198
    %v5324 = vsel %vm1274, %v5308, %v5200
    %v5325 = vsel %vm1274, %v5309, %v5202
    %v5326 = vsel %vm1274, %v5310, %v5204
    %v5327 = vsel %vm1274, %v5311, %v5206
    %v5328 = vsel %vm1274, %v5312, %v5208
    %v5329 = vsel %vm1274, %v5313, %v5210
    %v5330 = vsel %vm1274, %v5314, %v5212
    %v5331 = vsel %vm1274, %v5315, %v5214
    %v5332 = vsel %vm1274, %v5316, %v5216
    %v5333 = vsel %vm1274, %v5317, %v5218
    %v5334 = vsel %vm1274, %v5318, %v5220
    %v5335 = vsel %vm1274, %v5319, %v5222
    %v5336 = vsel %vm1274, %v5320, %v5224
    %v5337 = vld [vmem:[#allocation12] sm:$0xff]
    %v5338 = vld [vmem:[#allocation12 + $0x8] sm:$0xff]
    %v5339 = vld [vmem:[#allocation12 + $0x10] sm:$0xff]
    %v5340 = vld [vmem:[#allocation12 + $0x18] sm:$0xff]
    %v5341 = vld [vmem:[#allocation12 + $0x20] sm:$0xff]
    %v5342 = vld [vmem:[#allocation12 + $0x28] sm:$0xff]
    %v5343 = vld [vmem:[#allocation12 + $0x30] sm:$0xff]
    %v5344 = vld [vmem:[#allocation12 + $0x38] sm:$0xff]
    %v5345 = vld [vmem:[#allocation12 + $0x40] sm:$0xff]
    %v5346 = vld [vmem:[#allocation12 + $0x48] sm:$0xff]
    %v5347 = vld [vmem:[#allocation12 + $0x50] sm:$0xff]
    %v5348 = vld [vmem:[#allocation12 + $0x58] sm:$0xff]
    %v5349 = vld [vmem:[#allocation12 + $0x60] sm:$0xff]
    %v5350 = vld [vmem:[#allocation12 + $0x68] sm:$0xff]
    %v5351 = vld [vmem:[#allocation12 + $0x70] sm:$0xff]
    %v5352 = vld [vmem:[#allocation12 + $0x78] sm:$0xff]
    %v5353 = vld [vmem:[#allocation12 + $0x80] sm:$0xff]
    %v5354 = vld [vmem:[#allocation12 + $0x88] sm:$0xff]
    %v5355 = vld [vmem:[#allocation12 + $0x90] sm:$0xff]
    %v5356 = vld [vmem:[#allocation12 + $0x98] sm:$0xff]
    %v5357 = vld [vmem:[#allocation12 + $0xa0] sm:$0xff]
    %v5358 = vld [vmem:[#allocation12 + $0xa8] sm:$0xff]
    %v5359 = vld [vmem:[#allocation12 + $0xb0] sm:$0xff]
    %v5360 = vld [vmem:[#allocation12 + $0xb8] sm:$0xff]
    %v5361 = vld [vmem:[#allocation12 + $0xc0] sm:$0xff]
    %v5362 = vld [vmem:[#allocation12 + $0xc8] sm:$0xff]
    %v5363 = vld [vmem:[#allocation12 + $0xd0] sm:$0xff]
    %v5364 = vld [vmem:[#allocation12 + $0xd8] sm:$0xff]
    %v5365 = vld [vmem:[#allocation12 + $0xe0] sm:$0xff]
    %v5366 = vld [vmem:[#allocation12 + $0xe8] sm:$0xff]
    %v5367 = vld [vmem:[#allocation12 + $0xf0] sm:$0xff]
    %v5368 = vld [vmem:[#allocation12 + $0xf8] sm:$0xff]
    %v5369 = vld [vmem:[#allocation12 + $0x100] sm:$0xff]
    %v5370 = vld [vmem:[#allocation12 + $0x108] sm:$0xff]
    %v5371 = vld [vmem:[#allocation12 + $0x110] sm:$0xff]
    %v5372 = vld [vmem:[#allocation12 + $0x118] sm:$0xff]
    %v5373 = vld [vmem:[%s19] sm:$0x1]
    %v5375 = vlaneseq
    %v5376 = vshrl.u32 %v5375, 7
    %v5377 = vsub.s32 0, %v5376
    %v5378 = vrot.slane %v5373, %v5377
    %v5381 = vsel %vm175, %v4841, 0
    %v5384 = vsel %vm175, %v4842, 0
    %v5387 = vsel %vm175, %v4843, 0
    %v5390 = vsel %vm175, %v4844, 0
    %v5393 = vsel %vm175, %v4845, 0
    %v5396 = vsel %vm175, %v4846, 0
    %v5399 = vsel %vm175, %v4847, 0
    %v5402 = vsel %vm175, %v4848, 0
    %v5405 = vsel %vm175, %v4849, 0
    %v5408 = vsel %vm175, %v4850, 0
    %v5411 = vsel %vm175, %v4851, 0
    %v5414 = vsel %vm175, %v4852, 0
    %v5417 = vsel %vm175, %v4853, 0
    %v5420 = vsel %vm175, %v4854, 0
    %v5423 = vsel %vm175, %v4855, 0
    %v5426 = vsel %vm175, %v4856, 0
    %5428 = vmatprep.subr.mxu0 0.0
    %5429 = vmatpush1.msra.mxu0 %v5337
    %5430 = vmatprep.subr.mxu0 0.0
    %5431 = vmatpush1.msra.mxu0 %v5338
    %5432 = vmatprep.subr.mxu0 0.0
    %5433 = vmatpush1.msra.mxu0 %v5339
    %5434 = vmatprep.subr.mxu0 0.0
    %5435 = vmatpush1.msra.mxu0 %v5340
    %5436 = vmatprep.subr.mxu0 0.0
    %5437 = vmatpush1.msra.mxu0 %v5341
    %5438 = vmatprep.subr.mxu0 0.0
    %5439 = vmatpush1.msra.mxu0 %v5342
    %5440 = vmatprep.subr.mxu0 0.0
    %5441 = vmatpush1.msra.mxu0 %v5343
    %5442 = vmatprep.subr.mxu0 0.0
    %5443 = vmatpush1.msra.mxu0 %v5344
    %5444 = vmatprep.subr.mxu0 0.0
    %5445 = vmatpush1.msra.mxu0 %v5345
    %5446 = vmatprep.subr.mxu0 0.0
    %5447 = vmatpush1.msra.mxu0 %v5346
    %5448 = vmatprep.subr.mxu0 0.0
    %5449 = vmatpush1.msra.mxu0 %v5347
    %5450 = vmatprep.subr.mxu0 0.0
    %5451 = vmatpush1.msra.mxu0 %v5348
    %5452 = vmatprep.subr.mxu0 0.0
    %5453 = vmatpush1.msra.mxu0 %v5349
    %5454 = vmatprep.subr.mxu0 0.0
    %5455 = vmatpush1.msra.mxu0 %v5350
    %5456 = vmatprep.subr.mxu0 0.0
    %5457 = vmatpush1.msra.mxu0 %v5351
    %5458 = vmatprep.subr.mxu0 0.0
    %5459 = vmatpush1.msra.mxu0 %v5352
    %5460 = vmatprep.subr.mxu0 0.0
    %5461 = vmatpush1.msra.mxu0 %v5353
    %5462 = vmatprep.subr.mxu0 0.0
    %5463 = vmatpush1.msra.mxu0 %v5354
    %5464 = vmatprep.subr.mxu0 0.0
    %5465 = vmatpush1.msra.mxu0 %v5355
    %5466 = vmatprep.subr.mxu0 0.0
    %5467 = vmatpush1.msra.mxu0 %v5356
    %5468 = vmatprep.subr.mxu0 0.0
    %5469 = vmatpush1.msra.mxu0 %v5357
    %5470 = vmatprep.subr.mxu0 0.0
    %5471 = vmatpush1.msra.mxu0 %v5358
    %5472 = vmatprep.subr.mxu0 0.0
    %5473 = vmatpush1.msra.mxu0 %v5359
    %5474 = vmatprep.subr.mxu0 0.0
    %5475 = vmatpush1.msra.mxu0 %v5360
    %5476 = vmatprep.subr.mxu0 0.0
    %5477 = vmatpush1.msra.mxu0 %v5361
    %5478 = vmatprep.subr.mxu0 0.0
    %5479 = vmatpush1.msra.mxu0 %v5362
    %5480 = vmatprep.subr.mxu0 0.0
    %5481 = vmatpush1.msra.mxu0 %v5363
    %5482 = vmatprep.subr.mxu0 0.0
    %5483 = vmatpush1.msra.mxu0 %v5364
    %5484 = vmatprep.subr.mxu0 0.0
    %5485 = vmatpush1.msra.mxu0 %v5365
    %5486 = vmatprep.subr.mxu0 0.0
    %5487 = vmatpush1.msra.mxu0 %v5366
    %5488 = vmatprep.subr.mxu0 0.0
    %5489 = vmatpush1.msra.mxu0 %v5367
    %5490 = vmatprep.subr.mxu0 0.0
    %5491 = vmatpush1.msra.mxu0 %v5368
    %5492 = vmatprep.mubr.f32.mxu0 %v5321
    %5493 = vmatmul.mubr.f32.gmra.mrb[0].mxu0 %v5273
    %v5494 = vpop.f32.mrb[0].mxu0
    %v5495 = vadd.f32 %v5378, %v5494
    %v5496 = vpop.f32.mrb[0].mxu0
    %5497 = vmatprep.mubr.f32.mxu0 %v5322
    %5498 = vmatmul.mubr.f32.gmra.mrb[0].mxu0 %v5274
    %v5499 = vpop.f32.mrb[0].mxu0
    %v5500 = vadd.f32 %v5378, %v5499
    %v5501 = vpop.f32.mrb[0].mxu0
    %5502 = vmatprep.mubr.f32.mxu0 %v5323
    %5503 = vmatmul.mubr.f32.gmra.mrb[0].mxu0 %v5275
    %v5504 = vpop.f32.mrb[0].mxu0
    %v5505 = vadd.f32 %v5378, %v5504
    %v5506 = vpop.f32.mrb[0].mxu0
    %5507 = vmatprep.mubr.f32.mxu0 %v5324
    %5508 = vmatmul.mubr.f32.gmra.mrb[0].mxu0 %v5276
    %v5509 = vpop.f32.mrb[0].mxu0
    %v5510 = vadd.f32 %v5378, %v5509
    %v5511 = vpop.f32.mrb[0].mxu0
    %5512 = vmatprep.mubr.f32.mxu0 %v5325
    %5513 = vmatmul.mubr.f32.gmra.mrb[0].mxu0 %v5277
    %v5514 = vpop.f32.mrb[0].mxu0
    %v5515 = vadd.f32 %v5378, %v5514
    %v5516 = vpop.f32.mrb[0].mxu0
    %5517 = vmatprep.mubr.f32.mxu0 %v5326
    %5518 = vmatmul.mubr.f32.gmra.mrb[0].mxu0 %v5278
    %v5519 = vpop.f32.mrb[0].mxu0
    %v5520 = vadd.f32 %v5378, %v5519
    %v5521 = vpop.f32.mrb[0].mxu0
    %5522 = vmatprep.mubr.f32.mxu0 %v5327
    %5523 = vmatmul.mubr.f32.gmra.mrb[0].mxu0 %v5279
    %v5524 = vpop.f32.mrb[0].mxu0
    %v5525 = vadd.f32 %v5378, %v5524
    %v5526 = vpop.f32.mrb[0].mxu0
    %5527 = vmatprep.mubr.f32.mxu0 %v5328
    %5528 = vmatmul.mubr.f32.gmra.mrb[0].mxu0 %v5280
    %v5529 = vpop.f32.mrb[0].mxu0
    %v5530 = vadd.f32 %v5378, %v5529
    %v5531 = vpop.f32.mrb[0].mxu0
    %5532 = vmatprep.mubr.f32.mxu0 %v5329
    %5533 = vmatmul.mubr.f32.gmra.mrb[0].mxu0 %v5281
    %v5534 = vpop.f32.mrb[0].mxu0
    %v5535 = vadd.f32 %v5378, %v5534
    %v5536 = vpop.f32.mrb[0].mxu0
    %5537 = vmatprep.mubr.f32.mxu0 %v5330
    %5538 = vmatmul.mubr.f32.gmra.mrb[0].mxu0 %v5282
    %v5539 = vpop.f32.mrb[0].mxu0
    %v5540 = vadd.f32 %v5378, %v5539
    %v5541 = vpop.f32.mrb[0].mxu0
    %5542 = vmatprep.mubr.f32.mxu0 %v5331
    %5543 = vmatmul.mubr.f32.gmra.mrb[0].mxu0 %v5283
    %v5544 = vpop.f32.mrb[0].mxu0
    %v5545 = vadd.f32 %v5378, %v5544
    %v5546 = vpop.f32.mrb[0].mxu0
    %5547 = vmatprep.mubr.f32.mxu0 %v5332
    %5548 = vmatmul.mubr.f32.gmra.mrb[0].mxu0 %v5284
    %v5549 = vpop.f32.mrb[0].mxu0
    %v5550 = vadd.f32 %v5378, %v5549
    %v5551 = vpop.f32.mrb[0].mxu0
    %5552 = vmatprep.mubr.f32.mxu0 %v5333
    %5553 = vmatmul.mubr.f32.gmra.mrb[0].mxu0 %v5285
    %v5554 = vpop.f32.mrb[0].mxu0
    %v5555 = vadd.f32 %v5378, %v5554
    %v5556 = vpop.f32.mrb[0].mxu0
    %5557 = vmatprep.mubr.f32.mxu0 %v5334
    %5558 = vmatmul.mubr.f32.gmra.mrb[0].mxu0 %v5286
    %v5559 = vpop.f32.mrb[0].mxu0
    %v5560 = vadd.f32 %v5378, %v5559
    %v5561 = vpop.f32.mrb[0].mxu0
    %5562 = vmatprep.mubr.f32.mxu0 %v5335
    %5563 = vmatmul.mubr.f32.gmra.mrb[0].mxu0 %v5287
    %v5564 = vpop.f32.mrb[0].mxu0
    %v5565 = vadd.f32 %v5378, %v5564
    %v5566 = vpop.f32.mrb[0].mxu0
    %5567 = vmatprep.mubr.f32.mxu0 %v5336
    %5568 = vmatmul.mubr.f32.gmra.mrb[0].mxu0 %v5288
    %v5569 = vpop.f32.mrb[0].mxu0
    %v5570 = vadd.f32 %v5378, %v5569
    %v5571 = vpop.f32.mrb[0].mxu0
    %5572 = vdwg.mxu0
    %5573 = vmatprep.subr.mxu0 0.0
    %5574 = vmatpush1.msra.mxu0 %v5369
    %5575 = vmatprep.subr.mxu0 0.0
    %5576 = vmatpush1.msra.mxu0 %v5370
    %5577 = vmatprep.subr.mxu0 0.0
    %5578 = vmatpush1.msra.mxu0 %v5371
    %5579 = vmatprep.subr.mxu0 0.0
    %5580 = vmatpush1.msra.mxu0 %v5372
    %5581 = vmatprep.subr.mxu0 0.0
    %5582 = vmatpush1.msra.mxu0 0.0
    %5583 = vmatprep.subr.mxu0 0.0
    %5584 = vmatpush1.msra.mxu0 0.0
    %5585 = vmatprep.subr.mxu0 0.0
    %5586 = vmatpush1.msra.mxu0 0.0
    %5587 = vmatprep.subr.mxu0 0.0
    %5588 = vmatpush1.msra.mxu0 0.0
    %5589 = vmatprep.subr.mxu0 0.0
    %5590 = vmatpush1.msra.mxu0 0.0
    %5591 = vmatprep.subr.mxu0 0.0
    %5592 = vmatpush1.msra.mxu0 0.0
    %5593 = vmatprep.subr.mxu0 0.0
    %5594 = vmatpush1.msra.mxu0 0.0
    %5595 = vmatprep.subr.mxu0 0.0
    %5596 = vmatpush1.msra.mxu0 0.0
    %5597 = vmatprep.subr.mxu0 0.0
    %5598 = vmatpush1.msra.mxu0 0.0
    %5599 = vmatprep.subr.mxu0 0.0
    %5600 = vmatpush1.msra.mxu0 0.0
    %5601 = vmatprep.subr.mxu0 0.0
    %5602 = vmatpush1.msra.mxu0 0.0
    %5603 = vmatprep.subr.mxu0 0.0
    %5604 = vmatpush1.msra.mxu0 0.0
    %5605 = vmatprep.subr.mxu0 0.0
    %5606 = vmatpush1.msra.mxu0 0.0
    %5607 = vmatprep.subr.mxu0 0.0
    %5608 = vmatpush1.msra.mxu0 0.0
    %5609 = vmatprep.subr.mxu0 0.0
    %5610 = vmatpush1.msra.mxu0 0.0
    %5611 = vmatprep.subr.mxu0 0.0
    %5612 = vmatpush1.msra.mxu0 0.0
    %5613 = vmatprep.subr.mxu0 0.0
    %5614 = vmatpush1.msra.mxu0 0.0
    %5615 = vmatprep.subr.mxu0 0.0
    %5616 = vmatpush1.msra.mxu0 0.0
    %5617 = vmatprep.subr.mxu0 0.0
    %5618 = vmatpush1.msra.mxu0 0.0
    %5619 = vmatprep.subr.mxu0 0.0
    %5620 = vmatpush1.msra.mxu0 0.0
    %5621 = vmatprep.subr.mxu0 0.0
    %5622 = vmatpush1.msra.mxu0 0.0
    %5623 = vmatprep.subr.mxu0 0.0
    %5624 = vmatpush1.msra.mxu0 0.0
    %5625 = vmatprep.subr.mxu0 0.0
    %5626 = vmatpush1.msra.mxu0 0.0
    %5627 = vmatprep.subr.mxu0 0.0
    %5628 = vmatpush1.msra.mxu0 0.0
    %5629 = vmatprep.subr.mxu0 0.0
    %5630 = vmatpush1.msra.mxu0 0.0
    %5631 = vmatprep.subr.mxu0 0.0
    %5632 = vmatpush1.msra.mxu0 0.0
    %5633 = vmatprep.subr.mxu0 0.0
    %5634 = vmatpush1.msra.mxu0 0.0
    %5635 = vmatprep.subr.mxu0 0.0
    %5636 = vmatpush1.msra.mxu0 0.0
    %5637 = vmatprep.mubr.f32.mxu0 0.0
    %5638 = vmatmul.mubr.f32.gmra.mrb[0].mxu0 %v5381
    %v5639 = vpop.f32.mrb[0].mxu0
    %v5640 = vadd.f32 %v5495, %v5639
    %v5641 = vpop.f32.mrb[0].mxu0
    %5642 = vmatprep.mubr.f32.mxu0 0.0
    %5643 = vmatmul.mubr.f32.gmra.mrb[0].mxu0 %v5384
    %v5644 = vpop.f32.mrb[0].mxu0
    %v5645 = vadd.f32 %v5500, %v5644
    %v5646 = vpop.f32.mrb[0].mxu0
    %5647 = vmatprep.mubr.f32.mxu0 0.0
    %5648 = vmatmul.mubr.f32.gmra.mrb[0].mxu0 %v5387
    %v5649 = vpop.f32.mrb[0].mxu0
    %v5650 = vadd.f32 %v5505, %v5649
    %v5651 = vpop.f32.mrb[0].mxu0
    %5652 = vmatprep.mubr.f32.mxu0 0.0
    %5653 = vmatmul.mubr.f32.gmra.mrb[0].mxu0 %v5390
    %v5654 = vpop.f32.mrb[0].mxu0
    %v5655 = vadd.f32 %v5510, %v5654
    %v5656 = vpop.f32.mrb[0].mxu0
    %5657 = vmatprep.mubr.f32.mxu0 0.0
    %5658 = vmatmul.mubr.f32.gmra.mrb[0].mxu0 %v5393
    %v5659 = vpop.f32.mrb[0].mxu0
    %v5660 = vadd.f32 %v5515, %v5659
    %v5661 = vpop.f32.mrb[0].mxu0
    %5662 = vmatprep.mubr.f32.mxu0 0.0
    %5663 = vmatmul.mubr.f32.gmra.mrb[0].mxu0 %v5396
    %v5664 = vpop.f32.mrb[0].mxu0
    %v5665 = vadd.f32 %v5520, %v5664
    %v5666 = vpop.f32.mrb[0].mxu0
    %5667 = vmatprep.mubr.f32.mxu0 0.0
    %5668 = vmatmul.mubr.f32.gmra.mrb[0].mxu0 %v5399
    %v5669 = vpop.f32.mrb[0].mxu0
    %v5670 = vadd.f32 %v5525, %v5669
    %v5671 = vpop.f32.mrb[0].mxu0
    %5672 = vmatprep.mubr.f32.mxu0 0.0
    %5673 = vmatmul.mubr.f32.gmra.mrb[0].mxu0 %v5402
    %v5674 = vpop.f32.mrb[0].mxu0
    %v5675 = vadd.f32 %v5530, %v5674
    %v5676 = vpop.f32.mrb[0].mxu0
    %5677 = vmatprep.mubr.f32.mxu0 0.0
    %5678 = vmatmul.mubr.f32.gmra.mrb[0].mxu0 %v5405
    %v5679 = vpop.f32.mrb[0].mxu0
    %v5680 = vadd.f32 %v5535, %v5679
    %v5681 = vpop.f32.mrb[0].mxu0
    %5682 = vmatprep.mubr.f32.mxu0 0.0
    %5683 = vmatmul.mubr.f32.gmra.mrb[0].mxu0 %v5408
    %v5684 = vpop.f32.mrb[0].mxu0
    %v5685 = vadd.f32 %v5540, %v5684
    %v5686 = vpop.f32.mrb[0].mxu0
    %5687 = vmatprep.mubr.f32.mxu0 0.0
    %5688 = vmatmul.mubr.f32.gmra.mrb[0].mxu0 %v5411
    %v5689 = vpop.f32.mrb[0].mxu0
    %v5690 = vadd.f32 %v5545, %v5689
    %v5691 = vpop.f32.mrb[0].mxu0
    %5692 = vmatprep.mubr.f32.mxu0 0.0
    %5693 = vmatmul.mubr.f32.gmra.mrb[0].mxu0 %v5414
    %v5694 = vpop.f32.mrb[0].mxu0
    %v5695 = vadd.f32 %v5550, %v5694
    %v5696 = vpop.f32.mrb[0].mxu0
    %5697 = vmatprep.mubr.f32.mxu0 0.0
    %5698 = vmatmul.mubr.f32.gmra.mrb[0].mxu0 %v5417
    %v5699 = vpop.f32.mrb[0].mxu0
    %v5700 = vadd.f32 %v5555, %v5699
    %v5701 = vpop.f32.mrb[0].mxu0
    %5702 = vmatprep.mubr.f32.mxu0 0.0
    %5703 = vmatmul.mubr.f32.gmra.mrb[0].mxu0 %v5420
    %v5704 = vpop.f32.mrb[0].mxu0
    %v5705 = vadd.f32 %v5560, %v5704
    %v5706 = vpop.f32.mrb[0].mxu0
    %5707 = vmatprep.mubr.f32.mxu0 0.0
    %5708 = vmatmul.mubr.f32.gmra.mrb[0].mxu0 %v5423
    %v5709 = vpop.f32.mrb[0].mxu0
    %v5710 = vadd.f32 %v5565, %v5709
    %v5711 = vpop.f32.mrb[0].mxu0
    %5712 = vmatprep.mubr.f32.mxu0 0.0
    %5713 = vmatmul.mubr.f32.gmra.mrb[0].mxu0 %v5426
    %v5714 = vpop.f32.mrb[0].mxu0
    %v5715 = vadd.f32 %v5570, %v5714
    %v5716 = vpop.f32.mrb[0].mxu0
    %5717 = vdwg.mxu0
    %v5720 = vunpack.c.l.s4 1966171168
    %v5721 = vunpack.c.0.s8 %v5720
    %v5722 = vlaneseq
    %v5723 = vshrl.u32 %v5722, 7
    %v5724 = vsub.s32 %v5721, %v5723
    %v5725 = vrot.slane %v393, %v5724
    %v5726 = vcombine.high %v5725, %v5725
    %v5728 = vunpack.c.l.s4 1966171168
    %v5729 = vunpack.c.0.s8 %v5728
    %v5730 = vlaneseq
    %v5731 = vshrl.u32 %v5730, 7
    %v5732 = vsub.s32 %v5729, %v5731
    %v5733 = vrot.slane %v5725, %v5732
    %v5735 = vunpack.c.l.s4 1966171168
    %v5736 = vunpack.c.0.s8 %v5735
    %v5737 = vlaneseq
    %v5738 = vshrl.u32 %v5737, 7
    %v5739 = vsub.s32 %v5736, %v5738
    %v5740 = vrot.slane %v5726, %v5739
    %v5741 = vlaneseq
    %v5742 = vshrl.u32 %v5741, 7
    %v5743 = vsub.s32 0, %v5742
    %v5744 = vrot.slane %v5733, %v5743
    %v5745 = vlaneseq
    %v5746 = vshrl.u32 %v5745, 7
    %v5747 = vsub.s32 0, %v5746
    %v5748 = vrot.slane %v5740, %v5747
    %v5751 = vadd.f32 %v5640, %v5744
    %v5752 = vadd.f32 %v5645, %v5744
    %v5753 = vadd.f32 %v5650, %v5744
    %v5754 = vadd.f32 %v5655, %v5744
    %v5755 = vadd.f32 %v5660, %v5744
    %v5756 = vadd.f32 %v5665, %v5744
    %v5757 = vadd.f32 %v5670, %v5744
    %v5758 = vadd.f32 %v5675, %v5744
    %v5759 = vadd.f32 %v5680, %v5748
    %v5760 = vadd.f32 %v5685, %v5748
    %v5761 = vadd.f32 %v5690, %v5748
    %v5762 = vadd.f32 %v5695, %v5748
    %v5763 = vadd.f32 %v5700, %v5748
    %v5764 = vadd.f32 %v5705, %v5748
    %v5765 = vadd.f32 %v5710, %v5748
    %v5766 = vadd.f32 %v5715, %v5748
    %v5767 = vsel %vm175, %v5751, 0.0
    %v5768 = vsel %vm175, %v5752, 0.0
    %v5769 = vadd.f32 %v5767, %v5768
    %v5770 = vsel %vm175, %v5753, 0.0
    %v5771 = vadd.f32 %v5769, %v5770
    %v5772 = vsel %vm175, %v5754, 0.0
    %v5773 = vadd.f32 %v5771, %v5772
    %v5774 = vsel %vm175, %v5755, 0.0
    %v5775 = vadd.f32 %v5773, %v5774
    %v5776 = vsel %vm175, %v5756, 0.0
    %v5777 = vadd.f32 %v5775, %v5776
    %v5778 = vsel %vm175, %v5757, 0.0
    %v5779 = vadd.f32 %v5777, %v5778
    %v5780 = vsel %vm175, %v5758, 0.0
    %v5781 = vadd.f32 %v5779, %v5780
    %v5782 = vrot.slane %v5781, 4
    %v5783 = vadd.f32 %v5781, %v5782
    %v5784 = vrot.slane %v5783, 2
    %v5785 = vadd.f32 %v5783, %v5784
    %v5786 = vrot.slane %v5785, 1
    %v5787 = vadd.f32 %v5785, %v5786
    %v5788 = vsel %vm175, %v5759, 0.0
    %v5789 = vsel %vm175, %v5760, 0.0
    %v5790 = vadd.f32 %v5788, %v5789
    %v5791 = vsel %vm175, %v5761, 0.0
    %v5792 = vadd.f32 %v5790, %v5791
    %v5793 = vsel %vm175, %v5762, 0.0
    %v5794 = vadd.f32 %v5792, %v5793
    %v5795 = vsel %vm175, %v5763, 0.0
    %v5796 = vadd.f32 %v5794, %v5795
    %v5797 = vsel %vm175, %v5764, 0.0
    %v5798 = vadd.f32 %v5796, %v5797
    %v5799 = vsel %vm175, %v5765, 0.0
    %v5800 = vadd.f32 %v5798, %v5799
    %v5801 = vsel %vm175, %v5766, 0.0
    %v5802 = vadd.f32 %v5800, %v5801
    %v5803 = vrot.slane %v5802, 4
    %v5804 = vadd.f32 %v5802, %v5803
    %v5805 = vrot.slane %v5804, 2
    %v5806 = vadd.f32 %v5804, %v5805
    %v5807 = vrot.slane %v5806, 1
    %v5808 = vadd.f32 %v5806, %v5807
    %v5809 = vmul.f32 %v5787, %v438
    %v5810 = vmul.f32 %v5808, %v438
    %v5811 = vsub.f32 %v5751, %v5809
    %v5812 = vsub.f32 %v5752, %v5809
    %v5813 = vsub.f32 %v5753, %v5809
    %v5814 = vsub.f32 %v5754, %v5809
    %v5815 = vsub.f32 %v5755, %v5809
    %v5816 = vsub.f32 %v5756, %v5809
    %v5817 = vsub.f32 %v5757, %v5809
    %v5818 = vsub.f32 %v5758, %v5809
    %v5819 = vsub.f32 %v5759, %v5810
    %v5820 = vsub.f32 %v5760, %v5810
    %v5821 = vsub.f32 %v5761, %v5810
    %v5822 = vsub.f32 %v5762, %v5810
    %v5823 = vsub.f32 %v5763, %v5810
    %v5824 = vsub.f32 %v5764, %v5810
    %v5825 = vsub.f32 %v5765, %v5810
    %v5826 = vsub.f32 %v5766, %v5810
    %v5827 = vmul.f32 %v5811, %v5811
    %v5828 = vmul.f32 %v5812, %v5812
    %v5829 = vmul.f32 %v5813, %v5813
    %v5830 = vmul.f32 %v5814, %v5814
    %v5831 = vmul.f32 %v5815, %v5815
    %v5832 = vmul.f32 %v5816, %v5816
    %v5833 = vmul.f32 %v5817, %v5817
    %v5834 = vmul.f32 %v5818, %v5818
    %v5835 = vmul.f32 %v5819, %v5819
    %v5836 = vmul.f32 %v5820, %v5820
    %v5837 = vmul.f32 %v5821, %v5821
    %v5838 = vmul.f32 %v5822, %v5822
    %v5839 = vmul.f32 %v5823, %v5823
    %v5840 = vmul.f32 %v5824, %v5824
    %v5841 = vmul.f32 %v5825, %v5825
    %v5842 = vmul.f32 %v5826, %v5826
    %v5843 = vsel %vm175, %v5827, 0.0
    %v5844 = vsel %vm175, %v5828, 0.0
    %v5845 = vadd.f32 %v5843, %v5844
    %v5846 = vsel %vm175, %v5829, 0.0
    %v5847 = vadd.f32 %v5845, %v5846
    %v5848 = vsel %vm175, %v5830, 0.0
    %v5849 = vadd.f32 %v5847, %v5848
    %v5850 = vsel %vm175, %v5831, 0.0
    %v5851 = vadd.f32 %v5849, %v5850
    %v5852 = vsel %vm175, %v5832, 0.0
    %v5853 = vadd.f32 %v5851, %v5852
    %v5854 = vsel %vm175, %v5833, 0.0
    %v5855 = vadd.f32 %v5853, %v5854
    %v5856 = vsel %vm175, %v5834, 0.0
    %v5857 = vadd.f32 %v5855, %v5856
    %v5858 = vrot.slane %v5857, 4
    %v5859 = vadd.f32 %v5857, %v5858
    %v5860 = vrot.slane %v5859, 2
    %v5861 = vadd.f32 %v5859, %v5860
    %v5862 = vrot.slane %v5861, 1
    %v5863 = vadd.f32 %v5861, %v5862
    %v5864 = vsel %vm175, %v5835, 0.0
    %v5865 = vsel %vm175, %v5836, 0.0
    %v5866 = vadd.f32 %v5864, %v5865
    %v5867 = vsel %vm175, %v5837, 0.0
    %v5868 = vadd.f32 %v5866, %v5867
    %v5869 = vsel %vm175, %v5838, 0.0
    %v5870 = vadd.f32 %v5868, %v5869
    %v5871 = vsel %vm175, %v5839, 0.0
    %v5872 = vadd.f32 %v5870, %v5871
    %v5873 = vsel %vm175, %v5840, 0.0
    %v5874 = vadd.f32 %v5872, %v5873
    %v5875 = vsel %vm175, %v5841, 0.0
    %v5876 = vadd.f32 %v5874, %v5875
    %v5877 = vsel %vm175, %v5842, 0.0
    %v5878 = vadd.f32 %v5876, %v5877
    %v5879 = vrot.slane %v5878, 4
    %v5880 = vadd.f32 %v5878, %v5879
    %v5881 = vrot.slane %v5880, 2
    %v5882 = vadd.f32 %v5880, %v5881
    %v5883 = vrot.slane %v5882, 1
    %v5884 = vadd.f32 %v5882, %v5883
    %v5885 = vmul.f32 %v5863, %v438
    %v5886 = vmul.f32 %v5884, %v438
    %v5887 = vadd.f32 %v5885, 1e-05
    %v5888 = vadd.f32 %v5886, 1e-05
    %v5889 = vrsqrt.pop %v5887
    %v5890 = vrsqrt.pop %v5888
    %v5891 = vmul.f32 %v5811, %v5889
    %v5892 = vmul.f32 %v5812, %v5889
    %v5893 = vmul.f32 %v5813, %v5889
    %v5894 = vmul.f32 %v5814, %v5889
    %v5895 = vmul.f32 %v5815, %v5889
    %v5896 = vmul.f32 %v5816, %v5889
    %v5897 = vmul.f32 %v5817, %v5889
    %v5898 = vmul.f32 %v5818, %v5889
    %v5899 = vmul.f32 %v5819, %v5890
    %v5900 = vmul.f32 %v5820, %v5890
    %v5901 = vmul.f32 %v5821, %v5890
    %v5902 = vmul.f32 %v5822, %v5890
    %v5903 = vmul.f32 %v5823, %v5890
    %v5904 = vmul.f32 %v5824, %v5890
    %v5905 = vmul.f32 %v5825, %v5890
    %v5906 = vmul.f32 %v5826, %v5890
    %v5907 = vld [vmem:[%s22] sm:$0x1]
    %v5909 = vlaneseq
    %v5910 = vshrl.u32 %v5909, 7
    %v5911 = vsub.s32 0, %v5910
    %v5912 = vrot.slane %v5907, %v5911
    %v5914 = vmul.f32 %v5891, %v5912
    %v5915 = vmul.f32 %v5892, %v5912
    %v5916 = vmul.f32 %v5893, %v5912
    %v5917 = vmul.f32 %v5894, %v5912
    %v5918 = vmul.f32 %v5895, %v5912
    %v5919 = vmul.f32 %v5896, %v5912
    %v5920 = vmul.f32 %v5897, %v5912
    %v5921 = vmul.f32 %v5898, %v5912
    %v5922 = vmul.f32 %v5899, %v5912
    %v5923 = vmul.f32 %v5900, %v5912
    %v5924 = vmul.f32 %v5901, %v5912
    %v5925 = vmul.f32 %v5902, %v5912
    %v5926 = vmul.f32 %v5903, %v5912
    %v5927 = vmul.f32 %v5904, %v5912
    %v5928 = vmul.f32 %v5905, %v5912
    %v5929 = vmul.f32 %v5906, %v5912
    %v5930 = vld [vmem:[%s23] sm:$0x1]
    %v5932 = vlaneseq
    %v5933 = vshrl.u32 %v5932, 7
    %v5934 = vsub.s32 0, %v5933
    %v5935 = vrot.slane %v5930, %v5934
    %v5937 = vadd.f32 %v5914, %v5935
    %v5938 = vadd.f32 %v5915, %v5935
    %v5939 = vadd.f32 %v5916, %v5935
    %v5940 = vadd.f32 %v5917, %v5935
    %v5941 = vadd.f32 %v5918, %v5935
    %v5942 = vadd.f32 %v5919, %v5935
    %v5943 = vadd.f32 %v5920, %v5935
    %v5944 = vadd.f32 %v5921, %v5935
    %v5945 = vadd.f32 %v5922, %v5935
    %v5946 = vadd.f32 %v5923, %v5935
    %v5947 = vadd.f32 %v5924, %v5935
    %v5948 = vadd.f32 %v5925, %v5935
    %v5949 = vadd.f32 %v5926, %v5935
    %v5950 = vadd.f32 %v5927, %v5935
    %v5951 = vadd.f32 %v5928, %v5935
    %v5952 = vadd.f32 %v5929, %v5935
    %v5953 = vxor.u32 %v5937, 2147483648
    %v5954 = vxor.u32 %v5938, 2147483648
    %v5955 = vxor.u32 %v5939, 2147483648
    %v5956 = vxor.u32 %v5940, 2147483648
    %v5957 = vxor.u32 %v5941, 2147483648
    %v5958 = vxor.u32 %v5942, 2147483648
    %v5959 = vxor.u32 %v5943, 2147483648
    %v5960 = vxor.u32 %v5944, 2147483648
    %v5961 = vxor.u32 %v5945, 2147483648
    %v5962 = vxor.u32 %v5946, 2147483648
    %v5963 = vxor.u32 %v5947, 2147483648
    %v5964 = vxor.u32 %v5948, 2147483648
    %v5965 = vxor.u32 %v5949, 2147483648
    %v5966 = vxor.u32 %v5950, 2147483648
    %v5967 = vxor.u32 %v5951, 2147483648
    %v5968 = vxor.u32 %v5952, 2147483648
    %v5969 = vmul.f32 %v5953, 1.442695
    %v5970 = vpow.pop %v5969
    %v5971 = vmul.f32 %v5954, 1.442695
    %v5972 = vpow.pop %v5971
    %v5973 = vmul.f32 %v5955, 1.442695
    %v5974 = vpow.pop %v5973
    %v5975 = vmul.f32 %v5956, 1.442695
    %v5976 = vpow.pop %v5975
    %v5977 = vmul.f32 %v5957, 1.442695
    %v5978 = vpow.pop %v5977
    %v5979 = vmul.f32 %v5958, 1.442695
    %v5980 = vpow.pop %v5979
    %v5981 = vmul.f32 %v5959, 1.442695
    %v5982 = vpow.pop %v5981
    %v5983 = vmul.f32 %v5960, 1.442695
    %v5984 = vpow.pop %v5983
    %v5985 = vmul.f32 %v5961, 1.442695
    %v5986 = vpow.pop %v5985
    %v5987 = vmul.f32 %v5962, 1.442695
    %v5988 = vpow.pop %v5987
    %v5989 = vmul.f32 %v5963, 1.442695
    %v5990 = vpow.pop %v5989
    %v5991 = vmul.f32 %v5964, 1.442695
    %v5992 = vpow.pop %v5991
    %v5993 = vmul.f32 %v5965, 1.442695
    %v5994 = vpow.pop %v5993
    %v5995 = vmul.f32 %v5966, 1.442695
    %v5996 = vpow.pop %v5995
    %v5997 = vmul.f32 %v5967, 1.442695
    %v5998 = vpow.pop %v5997
    %v5999 = vmul.f32 %v5968, 1.442695
    %v6000 = vpow.pop %v5999
    %v6001 = vadd.f32 %v5970, 1.0
    %v6002 = vadd.f32 %v5972, 1.0
    %v6003 = vadd.f32 %v5974, 1.0
    %v6004 = vadd.f32 %v5976, 1.0
    %v6005 = vadd.f32 %v5978, 1.0
    %v6006 = vadd.f32 %v5980, 1.0
    %v6007 = vadd.f32 %v5982, 1.0
    %v6008 = vadd.f32 %v5984, 1.0
    %v6009 = vadd.f32 %v5986, 1.0
    %v6010 = vadd.f32 %v5988, 1.0
    %v6011 = vadd.f32 %v5990, 1.0
    %v6012 = vadd.f32 %v5992, 1.0
    %v6013 = vadd.f32 %v5994, 1.0
    %v6014 = vadd.f32 %v5996, 1.0
    %v6015 = vadd.f32 %v5998, 1.0
    %v6016 = vadd.f32 %v6000, 1.0
    %v6017 = vrcp.pop %v6001
    %v6018 = vmul.f32 1.0, %v6017
    %v6019 = vrcp.pop %v6002
    %v6020 = vmul.f32 1.0, %v6019
    %v6021 = vrcp.pop %v6003
    %v6022 = vmul.f32 1.0, %v6021
    %v6023 = vrcp.pop %v6004
    %v6024 = vmul.f32 1.0, %v6023
    %v6025 = vrcp.pop %v6005
    %v6026 = vmul.f32 1.0, %v6025
    %v6027 = vrcp.pop %v6006
    %v6028 = vmul.f32 1.0, %v6027
    %v6029 = vrcp.pop %v6007
    %v6030 = vmul.f32 1.0, %v6029
    %v6031 = vrcp.pop %v6008
    %v6032 = vmul.f32 1.0, %v6031
    %v6033 = vrcp.pop %v6009
    %v6034 = vmul.f32 1.0, %v6033
    %v6035 = vrcp.pop %v6010
    %v6036 = vmul.f32 1.0, %v6035
    %v6037 = vrcp.pop %v6011
    %v6038 = vmul.f32 1.0, %v6037
    %v6039 = vrcp.pop %v6012
    %v6040 = vmul.f32 1.0, %v6039
    %v6041 = vrcp.pop %v6013
    %v6042 = vmul.f32 1.0, %v6041
    %v6043 = vrcp.pop %v6014
    %v6044 = vmul.f32 1.0, %v6043
    %v6045 = vrcp.pop %v6015
    %v6046 = vmul.f32 1.0, %v6045
    %v6047 = vrcp.pop %v6016
    %v6048 = vmul.f32 1.0, %v6047
    %v6049 = vmul.f32 %v5937, %v6018
    %v6050 = vmul.f32 %v5938, %v6020
    %v6051 = vmul.f32 %v5939, %v6022
    %v6052 = vmul.f32 %v5940, %v6024
    %v6053 = vmul.f32 %v5941, %v6026
    %v6054 = vmul.f32 %v5942, %v6028
    %v6055 = vmul.f32 %v5943, %v6030
    %v6056 = vmul.f32 %v5944, %v6032
    %v6057 = vmul.f32 %v5945, %v6034
    %v6058 = vmul.f32 %v5946, %v6036
    %v6059 = vmul.f32 %v5947, %v6038
    %v6060 = vmul.f32 %v5948, %v6040
    %v6061 = vmul.f32 %v5949, %v6042
    %v6062 = vmul.f32 %v5950, %v6044
    %v6063 = vmul.f32 %v5951, %v6046
    %v6064 = vmul.f32 %v5952, %v6048
    %6065 = vst.msk [vmem:[%s695 + $0x1] sm:$0xff] %vm175, %v6049
    %6066 = vst.msk [vmem:[%s695 + $0x11] sm:$0xff] %vm175, %v6050
    %6067 = vst.msk [vmem:[%s695 + $0x21] sm:$0xff] %vm175, %v6051
    %6068 = vst.msk [vmem:[%s695 + $0x31] sm:$0xff] %vm175, %v6052
    %6069 = vst.msk [vmem:[%s695 + $0x41] sm:$0xff] %vm175, %v6053
    %6070 = vst.msk [vmem:[%s695 + $0x51] sm:$0xff] %vm175, %v6054
    %6071 = vst.msk [vmem:[%s695 + $0x61] sm:$0xff] %vm175, %v6055
    %6072 = vst.msk [vmem:[%s695 + $0x71] sm:$0xff] %vm175, %v6056
    %6073 = vst.msk [vmem:[%s695 + $0xa1] sm:$0xff] %vm175, %v6057
    %6074 = vst.msk [vmem:[%s695 + $0xb1] sm:$0xff] %vm175, %v6058
    %6075 = vst.msk [vmem:[%s695 + $0xc1] sm:$0xff] %vm175, %v6059
    %6076 = vst.msk [vmem:[%s695 + $0xd1] sm:$0xff] %vm175, %v6060
    %6077 = vst.msk [vmem:[%s695 + $0xe1] sm:$0xff] %vm175, %v6061
    %6078 = vst.msk [vmem:[%s695 + $0xf1] sm:$0xff] %vm175, %v6062
    %6079 = vst.msk [vmem:[%s695 + $0x101] sm:$0xff] %vm175, %v6063
    %6080 = vst.msk [vmem:[%s695 + $0x111] sm:$0xff] %vm175, %v6064
    %v6081 = vld [vmem:[#allocation2] sm:$0xff]
    %v6082 = vld [vmem:[#allocation2 + $0x10] sm:$0xff]
    %v6083 = vld [vmem:[#allocation2 + $0x20] sm:$0xff]
    %v6084 = vld [vmem:[#allocation2 + $0x30] sm:$0xff]
    %v6085 = vld [vmem:[#allocation2 + $0x40] sm:$0xff]
    %v6086 = vld [vmem:[#allocation2 + $0x50] sm:$0xff]
    %v6087 = vld [vmem:[#allocation2 + $0x60] sm:$0xff]
    %v6088 = vld [vmem:[#allocation2 + $0x70] sm:$0xff]
    %v6089 = vld [vmem:[#allocation2 + $0xa0] sm:$0xff]
    %v6090 = vld [vmem:[#allocation2 + $0xb0] sm:$0xff]
    %v6091 = vld [vmem:[#allocation2 + $0xc0] sm:$0xff]
    %v6092 = vld [vmem:[#allocation2 + $0xd0] sm:$0xff]
    %v6093 = vld [vmem:[#allocation2 + $0xe0] sm:$0xff]
    %v6094 = vld [vmem:[#allocation2 + $0xf0] sm:$0xff]
    %v6095 = vld [vmem:[#allocation2 + $0x100] sm:$0xff]
    %v6096 = vld [vmem:[#allocation2 + $0x110] sm:$0xff]
    %v6097 = vld [vmem:[#allocation2 + $0x1] sm:$0xff]
    %v6098 = vld [vmem:[#allocation2 + $0x11] sm:$0xff]
    %v6099 = vld [vmem:[#allocation2 + $0x21] sm:$0xff]
    %v6100 = vld [vmem:[#allocation2 + $0x31] sm:$0xff]
    %v6101 = vld [vmem:[#allocation2 + $0x41] sm:$0xff]
    %v6102 = vld [vmem:[#allocation2 + $0x51] sm:$0xff]
    %v6103 = vld [vmem:[#allocation2 + $0x61] sm:$0xff]
    %v6104 = vld [vmem:[#allocation2 + $0x71] sm:$0xff]
    %v6105 = vld [vmem:[#allocation2 + $0xa1] sm:$0xff]
    %v6106 = vld [vmem:[#allocation2 + $0xb1] sm:$0xff]
    %v6107 = vld [vmem:[#allocation2 + $0xc1] sm:$0xff]
    %v6108 = vld [vmem:[#allocation2 + $0xd1] sm:$0xff]
    %v6109 = vld [vmem:[#allocation2 + $0xe1] sm:$0xff]
    %v6110 = vld [vmem:[#allocation2 + $0xf1] sm:$0xff]
    %v6111 = vld [vmem:[#allocation2 + $0x101] sm:$0xff]
    %v6112 = vld [vmem:[#allocation2 + $0x111] sm:$0xff]
    %v6113 = vld [vmem:[#allocation2 + $0x2] sm:$0xff]
    %v6114 = vld [vmem:[#allocation2 + $0x12] sm:$0xff]
    %v6115 = vld [vmem:[#allocation2 + $0x22] sm:$0xff]
    %v6116 = vld [vmem:[#allocation2 + $0x32] sm:$0xff]
    %v6117 = vld [vmem:[#allocation2 + $0x42] sm:$0xff]
    %v6118 = vld [vmem:[#allocation2 + $0x52] sm:$0xff]
    %v6119 = vld [vmem:[#allocation2 + $0x62] sm:$0xff]
    %v6120 = vld [vmem:[#allocation2 + $0x72] sm:$0xff]
    %v6121 = vld [vmem:[#allocation2 + $0xa2] sm:$0xff]
    %v6122 = vld [vmem:[#allocation2 + $0xb2] sm:$0xff]
    %v6123 = vld [vmem:[#allocation2 + $0xc2] sm:$0xff]
    %v6124 = vld [vmem:[#allocation2 + $0xd2] sm:$0xff]
    %v6125 = vld [vmem:[#allocation2 + $0xe2] sm:$0xff]
    %v6126 = vld [vmem:[#allocation2 + $0xf2] sm:$0xff]
    %v6127 = vld [vmem:[#allocation2 + $0x102] sm:$0xff]
    %v6128 = vld [vmem:[#allocation2 + $0x112] sm:$0xff]
    %v6129 = vld [vmem:[%s695] sm:$0xff]
    %v6130 = vld [vmem:[%s695 + $0x10] sm:$0xff]
    %v6131 = vld [vmem:[%s695 + $0x20] sm:$0xff]
    %v6132 = vld [vmem:[%s695 + $0x30] sm:$0xff]
    %v6133 = vld [vmem:[%s695 + $0x40] sm:$0xff]
    %v6134 = vld [vmem:[%s695 + $0x50] sm:$0xff]
    %v6135 = vld [vmem:[%s695 + $0x60] sm:$0xff]
    %v6136 = vld [vmem:[%s695 + $0x70] sm:$0xff]
    %v6137 = vld [vmem:[%s695 + $0xa0] sm:$0xff]
    %v6138 = vld [vmem:[%s695 + $0xb0] sm:$0xff]
    %v6139 = vld [vmem:[%s695 + $0xc0] sm:$0xff]
    %v6140 = vld [vmem:[%s695 + $0xd0] sm:$0xff]
    %v6141 = vld [vmem:[%s695 + $0xe0] sm:$0xff]
    %v6142 = vld [vmem:[%s695 + $0xf0] sm:$0xff]
    %v6143 = vld [vmem:[%s695 + $0x100] sm:$0xff]
    %v6144 = vld [vmem:[%s695 + $0x110] sm:$0xff]
    %v6145 = vld [vmem:[%s695 + $0x1] sm:$0xff]
    %v6146 = vld [vmem:[%s695 + $0x11] sm:$0xff]
    %v6147 = vld [vmem:[%s695 + $0x21] sm:$0xff]
    %v6148 = vld [vmem:[%s695 + $0x31] sm:$0xff]
    %v6149 = vld [vmem:[%s695 + $0x41] sm:$0xff]
    %v6150 = vld [vmem:[%s695 + $0x51] sm:$0xff]
    %v6151 = vld [vmem:[%s695 + $0x61] sm:$0xff]
    %v6152 = vld [vmem:[%s695 + $0x71] sm:$0xff]
    %v6153 = vld [vmem:[%s695 + $0xa1] sm:$0xff]
    %v6154 = vld [vmem:[%s695 + $0xb1] sm:$0xff]
    %v6155 = vld [vmem:[%s695 + $0xc1] sm:$0xff]
    %v6156 = vld [vmem:[%s695 + $0xd1] sm:$0xff]
    %v6157 = vld [vmem:[%s695 + $0xe1] sm:$0xff]
    %v6158 = vld [vmem:[%s695 + $0xf1] sm:$0xff]
    %v6159 = vld [vmem:[%s695 + $0x101] sm:$0xff]
    %v6160 = vld [vmem:[%s695 + $0x111] sm:$0xff]
    %v6161 = vld [vmem:[%s695 + $0x2] sm:$0xff]
    %v6162 = vld [vmem:[%s695 + $0x12] sm:$0xff]
    %v6163 = vld [vmem:[%s695 + $0x22] sm:$0xff]
    %v6164 = vld [vmem:[%s695 + $0x32] sm:$0xff]
    %v6165 = vld [vmem:[%s695 + $0x42] sm:$0xff]
    %v6166 = vld [vmem:[%s695 + $0x52] sm:$0xff]
    %v6167 = vld [vmem:[%s695 + $0x62] sm:$0xff]
    %v6168 = vld [vmem:[%s695 + $0x72] sm:$0xff]
    %v6169 = vld [vmem:[%s695 + $0xa2] sm:$0xff]
    %v6170 = vld [vmem:[%s695 + $0xb2] sm:$0xff]
    %v6171 = vld [vmem:[%s695 + $0xc2] sm:$0xff]
    %v6172 = vld [vmem:[%s695 + $0xd2] sm:$0xff]
    %v6173 = vld [vmem:[%s695 + $0xe2] sm:$0xff]
    %v6174 = vld [vmem:[%s695 + $0xf2] sm:$0xff]
    %v6175 = vld [vmem:[%s695 + $0x102] sm:$0xff]
    %v6176 = vld [vmem:[%s695 + $0x112] sm:$0xff]
    %v6177 = vld [vmem:[%s808] sm:$0xff]
    %v6178 = vld [vmem:[%s808 + $0x10] sm:$0xff]
    %v6179 = vld [vmem:[%s808 + $0x20] sm:$0xff]
    %v6180 = vld [vmem:[%s808 + $0x30] sm:$0xff]
    %v6181 = vld [vmem:[%s808 + $0x40] sm:$0xff]
    %v6182 = vld [vmem:[%s808 + $0x50] sm:$0xff]
    %v6183 = vld [vmem:[%s808 + $0x60] sm:$0xff]
    %v6184 = vld [vmem:[%s808 + $0x70] sm:$0xff]
    %v6185 = vld [vmem:[%s808 + $0xa0] sm:$0xff]
    %v6186 = vld [vmem:[%s808 + $0xb0] sm:$0xff]
    %v6187 = vld [vmem:[%s808 + $0xc0] sm:$0xff]
    %v6188 = vld [vmem:[%s808 + $0xd0] sm:$0xff]
    %v6189 = vld [vmem:[%s808 + $0xe0] sm:$0xff]
    %v6190 = vld [vmem:[%s808 + $0xf0] sm:$0xff]
    %v6191 = vld [vmem:[%s808 + $0x100] sm:$0xff]
    %v6192 = vld [vmem:[%s808 + $0x110] sm:$0xff]
    %v6193 = vld [vmem:[%s808 + $0x1] sm:$0xff]
    %v6194 = vld [vmem:[%s808 + $0x11] sm:$0xff]
    %v6195 = vld [vmem:[%s808 + $0x21] sm:$0xff]
    %v6196 = vld [vmem:[%s808 + $0x31] sm:$0xff]
    %v6197 = vld [vmem:[%s808 + $0x41] sm:$0xff]
    %v6198 = vld [vmem:[%s808 + $0x51] sm:$0xff]
    %v6199 = vld [vmem:[%s808 + $0x61] sm:$0xff]
    %v6200 = vld [vmem:[%s808 + $0x71] sm:$0xff]
    %v6201 = vld [vmem:[%s808 + $0xa1] sm:$0xff]
    %v6202 = vld [vmem:[%s808 + $0xb1] sm:$0xff]
    %v6203 = vld [vmem:[%s808 + $0xc1] sm:$0xff]
    %v6204 = vld [vmem:[%s808 + $0xd1] sm:$0xff]
    %v6205 = vld [vmem:[%s808 + $0xe1] sm:$0xff]
    %v6206 = vld [vmem:[%s808 + $0xf1] sm:$0xff]
    %v6207 = vld [vmem:[%s808 + $0x101] sm:$0xff]
    %v6208 = vld [vmem:[%s808 + $0x111] sm:$0xff]
    %v6209 = vld [vmem:[%s808 + $0x2] sm:$0xff]
    %v6210 = vld [vmem:[%s808 + $0x12] sm:$0xff]
    %v6211 = vld [vmem:[%s808 + $0x22] sm:$0xff]
    %v6212 = vld [vmem:[%s808 + $0x32] sm:$0xff]
    %v6213 = vld [vmem:[%s808 + $0x42] sm:$0xff]
    %v6214 = vld [vmem:[%s808 + $0x52] sm:$0xff]
    %v6215 = vld [vmem:[%s808 + $0x62] sm:$0xff]
    %v6216 = vld [vmem:[%s808 + $0x72] sm:$0xff]
    %v6217 = vld [vmem:[%s808 + $0xa2] sm:$0xff]
    %v6218 = vld [vmem:[%s808 + $0xb2] sm:$0xff]
    %v6219 = vld [vmem:[%s808 + $0xc2] sm:$0xff]
    %v6220 = vld [vmem:[%s808 + $0xd2] sm:$0xff]
    %v6221 = vld [vmem:[%s808 + $0xe2] sm:$0xff]
    %v6222 = vld [vmem:[%s808 + $0xf2] sm:$0xff]
    %v6223 = vld [vmem:[%s808 + $0x102] sm:$0xff]
    %v6224 = vld [vmem:[%s808 + $0x112] sm:$0xff]
    %6241 = vrot.lane.b32.xlu0 %v6097, 32
    %v6242 = vpop.permute.xlu0 %6241
    %6243 = vrot.lane.b32.xlu0 %v6098, 32
    %v6244 = vpop.permute.xlu0 %6243
    %6245 = vrot.lane.b32.xlu0 %v6099, 32
    %v6246 = vpop.permute.xlu0 %6245
    %6247 = vrot.lane.b32.xlu0 %v6100, 32
    %v6248 = vpop.permute.xlu0 %6247
    %6249 = vrot.lane.b32.xlu0 %v6101, 32
    %v6250 = vpop.permute.xlu0 %6249
    %6251 = vrot.lane.b32.xlu0 %v6102, 32
    %v6252 = vpop.permute.xlu0 %6251
    %6253 = vrot.lane.b32.xlu0 %v6103, 32
    %v6254 = vpop.permute.xlu0 %6253
    %6255 = vrot.lane.b32.xlu0 %v6104, 32
    %v6256 = vpop.permute.xlu0 %6255
    %6257 = vrot.lane.b32.xlu0 %v6105, 32
    %v6258 = vpop.permute.xlu0 %6257
    %6259 = vrot.lane.b32.xlu0 %v6106, 32
    %v6260 = vpop.permute.xlu0 %6259
    %6261 = vrot.lane.b32.xlu0 %v6107, 32
    %v6262 = vpop.permute.xlu0 %6261
    %6263 = vrot.lane.b32.xlu0 %v6108, 32
    %v6264 = vpop.permute.xlu0 %6263
    %6265 = vrot.lane.b32.xlu0 %v6109, 32
    %v6266 = vpop.permute.xlu0 %6265
    %6267 = vrot.lane.b32.xlu0 %v6110, 32
    %v6268 = vpop.permute.xlu0 %6267
    %6269 = vrot.lane.b32.xlu0 %v6111, 32
    %v6270 = vpop.permute.xlu0 %6269
    %6271 = vrot.lane.b32.xlu0 %v6112, 32
    %v6272 = vpop.permute.xlu0 %6271
    %6305 = vrot.lane.b32.xlu0 %v6113, 64
    %v6306 = vpop.permute.xlu0 %6305
    %6307 = vrot.lane.b32.xlu0 %v6114, 64
    %v6308 = vpop.permute.xlu0 %6307
    %6309 = vrot.lane.b32.xlu0 %v6115, 64
    %v6310 = vpop.permute.xlu0 %6309
    %6311 = vrot.lane.b32.xlu0 %v6116, 64
    %v6312 = vpop.permute.xlu0 %6311
    %6313 = vrot.lane.b32.xlu0 %v6117, 64
    %v6314 = vpop.permute.xlu0 %6313
    %6315 = vrot.lane.b32.xlu0 %v6118, 64
    %v6316 = vpop.permute.xlu0 %6315
    %6317 = vrot.lane.b32.xlu0 %v6119, 64
    %v6318 = vpop.permute.xlu0 %6317
    %6319 = vrot.lane.b32.xlu0 %v6120, 64
    %v6320 = vpop.permute.xlu0 %6319
    %6321 = vrot.lane.b32.xlu0 %v6121, 64
    %v6322 = vpop.permute.xlu0 %6321
    %6323 = vrot.lane.b32.xlu0 %v6122, 64
    %v6324 = vpop.permute.xlu0 %6323
    %6325 = vrot.lane.b32.xlu0 %v6123, 64
    %v6326 = vpop.permute.xlu0 %6325
    %6327 = vrot.lane.b32.xlu0 %v6124, 64
    %v6328 = vpop.permute.xlu0 %6327
    %6329 = vrot.lane.b32.xlu0 %v6125, 64
    %v6330 = vpop.permute.xlu0 %6329
    %6331 = vrot.lane.b32.xlu0 %v6126, 64
    %v6332 = vpop.permute.xlu0 %6331
    %6333 = vrot.lane.b32.xlu0 %v6127, 64
    %v6334 = vpop.permute.xlu0 %6333
    %6335 = vrot.lane.b32.xlu0 %v6128, 64
    %v6336 = vpop.permute.xlu0 %6335
    %6369 = vrot.lane.b32.xlu0 %v6129, 96
    %v6370 = vpop.permute.xlu0 %6369
    %6371 = vrot.lane.b32.xlu0 %v6130, 96
    %v6372 = vpop.permute.xlu0 %6371
    %6373 = vrot.lane.b32.xlu0 %v6131, 96
    %v6374 = vpop.permute.xlu0 %6373
    %6375 = vrot.lane.b32.xlu0 %v6132, 96
    %v6376 = vpop.permute.xlu0 %6375
    %6377 = vrot.lane.b32.xlu0 %v6133, 96
    %v6378 = vpop.permute.xlu0 %6377
    %6379 = vrot.lane.b32.xlu0 %v6134, 96
    %v6380 = vpop.permute.xlu0 %6379
    %6381 = vrot.lane.b32.xlu0 %v6135, 96
    %v6382 = vpop.permute.xlu0 %6381
    %6383 = vrot.lane.b32.xlu0 %v6136, 96
    %v6384 = vpop.permute.xlu0 %6383
    %6385 = vrot.lane.b32.xlu0 %v6137, 96
    %v6386 = vpop.permute.xlu0 %6385
    %6387 = vrot.lane.b32.xlu0 %v6138, 96
    %v6388 = vpop.permute.xlu0 %6387
    %6389 = vrot.lane.b32.xlu0 %v6139, 96
    %v6390 = vpop.permute.xlu0 %6389
    %6391 = vrot.lane.b32.xlu0 %v6140, 96
    %v6392 = vpop.permute.xlu0 %6391
    %6393 = vrot.lane.b32.xlu0 %v6141, 96
    %v6394 = vpop.permute.xlu0 %6393
    %6395 = vrot.lane.b32.xlu0 %v6142, 96
    %v6396 = vpop.permute.xlu0 %6395
    %6397 = vrot.lane.b32.xlu0 %v6143, 96
    %v6398 = vpop.permute.xlu0 %6397
    %6399 = vrot.lane.b32.xlu0 %v6144, 96
    %v6400 = vpop.permute.xlu0 %6399
    %6433 = vrot.lane.b32.xlu0 %v6161, 32
    %v6434 = vpop.permute.xlu0 %6433
    %6435 = vrot.lane.b32.xlu0 %v6162, 32
    %v6436 = vpop.permute.xlu0 %6435
    %6437 = vrot.lane.b32.xlu0 %v6163, 32
    %v6438 = vpop.permute.xlu0 %6437
    %6439 = vrot.lane.b32.xlu0 %v6164, 32
    %v6440 = vpop.permute.xlu0 %6439
    %6441 = vrot.lane.b32.xlu0 %v6165, 32
    %v6442 = vpop.permute.xlu0 %6441
    %6443 = vrot.lane.b32.xlu0 %v6166, 32
    %v6444 = vpop.permute.xlu0 %6443
    %6445 = vrot.lane.b32.xlu0 %v6167, 32
    %v6446 = vpop.permute.xlu0 %6445
    %6447 = vrot.lane.b32.xlu0 %v6168, 32
    %v6448 = vpop.permute.xlu0 %6447
    %6449 = vrot.lane.b32.xlu0 %v6169, 32
    %v6450 = vpop.permute.xlu0 %6449
    %6451 = vrot.lane.b32.xlu0 %v6170, 32
    %v6452 = vpop.permute.xlu0 %6451
    %6453 = vrot.lane.b32.xlu0 %v6171, 32
    %v6454 = vpop.permute.xlu0 %6453
    %6455 = vrot.lane.b32.xlu0 %v6172, 32
    %v6456 = vpop.permute.xlu0 %6455
    %6457 = vrot.lane.b32.xlu0 %v6173, 32
    %v6458 = vpop.permute.xlu0 %6457
    %6459 = vrot.lane.b32.xlu0 %v6174, 32
    %v6460 = vpop.permute.xlu0 %6459
    %6461 = vrot.lane.b32.xlu0 %v6175, 32
    %v6462 = vpop.permute.xlu0 %6461
    %6463 = vrot.lane.b32.xlu0 %v6176, 32
    %v6464 = vpop.permute.xlu0 %6463
    %6497 = vrot.lane.b32.xlu0 %v6177, 64
    %v6498 = vpop.permute.xlu0 %6497
    %6499 = vrot.lane.b32.xlu0 %v6178, 64
    %v6500 = vpop.permute.xlu0 %6499
    %6501 = vrot.lane.b32.xlu0 %v6179, 64
    %v6502 = vpop.permute.xlu0 %6501
    %6503 = vrot.lane.b32.xlu0 %v6180, 64
    %v6504 = vpop.permute.xlu0 %6503
    %6505 = vrot.lane.b32.xlu0 %v6181, 64
    %v6506 = vpop.permute.xlu0 %6505
    %6507 = vrot.lane.b32.xlu0 %v6182, 64
    %v6508 = vpop.permute.xlu0 %6507
    %6509 = vrot.lane.b32.xlu0 %v6183, 64
    %v6510 = vpop.permute.xlu0 %6509
    %6511 = vrot.lane.b32.xlu0 %v6184, 64
    %v6512 = vpop.permute.xlu0 %6511
    %6513 = vrot.lane.b32.xlu0 %v6185, 64
    %v6514 = vpop.permute.xlu0 %6513
    %6515 = vrot.lane.b32.xlu0 %v6186, 64
    %v6516 = vpop.permute.xlu0 %6515
    %6517 = vrot.lane.b32.xlu0 %v6187, 64
    %v6518 = vpop.permute.xlu0 %6517
    %6519 = vrot.lane.b32.xlu0 %v6188, 64
    %v6520 = vpop.permute.xlu0 %6519
    %6521 = vrot.lane.b32.xlu0 %v6189, 64
    %v6522 = vpop.permute.xlu0 %6521
    %6523 = vrot.lane.b32.xlu0 %v6190, 64
    %v6524 = vpop.permute.xlu0 %6523
    %6525 = vrot.lane.b32.xlu0 %v6191, 64
    %v6526 = vpop.permute.xlu0 %6525
    %6527 = vrot.lane.b32.xlu0 %v6192, 64
    %v6528 = vpop.permute.xlu0 %6527
    %6561 = vrot.lane.b32.xlu0 %v6193, 96
    %v6562 = vpop.permute.xlu0 %6561
    %6563 = vrot.lane.b32.xlu0 %v6194, 96
    %v6564 = vpop.permute.xlu0 %6563
    %6565 = vrot.lane.b32.xlu0 %v6195, 96
    %v6566 = vpop.permute.xlu0 %6565
    %6567 = vrot.lane.b32.xlu0 %v6196, 96
    %v6568 = vpop.permute.xlu0 %6567
    %6569 = vrot.lane.b32.xlu0 %v6197, 96
    %v6570 = vpop.permute.xlu0 %6569
    %6571 = vrot.lane.b32.xlu0 %v6198, 96
    %v6572 = vpop.permute.xlu0 %6571
    %6573 = vrot.lane.b32.xlu0 %v6199, 96
    %v6574 = vpop.permute.xlu0 %6573
    %6575 = vrot.lane.b32.xlu0 %v6200, 96
    %v6576 = vpop.permute.xlu0 %6575
    %6577 = vrot.lane.b32.xlu0 %v6201, 96
    %v6578 = vpop.permute.xlu0 %6577
    %6579 = vrot.lane.b32.xlu0 %v6202, 96
    %v6580 = vpop.permute.xlu0 %6579
    %6581 = vrot.lane.b32.xlu0 %v6203, 96
    %v6582 = vpop.permute.xlu0 %6581
    %6583 = vrot.lane.b32.xlu0 %v6204, 96
    %v6584 = vpop.permute.xlu0 %6583
    %6585 = vrot.lane.b32.xlu0 %v6205, 96
    %v6586 = vpop.permute.xlu0 %6585
    %6587 = vrot.lane.b32.xlu0 %v6206, 96
    %v6588 = vpop.permute.xlu0 %6587
    %6589 = vrot.lane.b32.xlu0 %v6207, 96
    %v6590 = vpop.permute.xlu0 %6589
    %6591 = vrot.lane.b32.xlu0 %v6208, 96
    %v6592 = vpop.permute.xlu0 %6591
    %v6609 = vsel %vm175, %v6081, %v6242
    %v6610 = vsel %vm175, %v6082, %v6244
    %v6611 = vsel %vm175, %v6083, %v6246
    %v6612 = vsel %vm175, %v6084, %v6248
    %v6613 = vsel %vm175, %v6085, %v6250
    %v6614 = vsel %vm175, %v6086, %v6252
    %v6615 = vsel %vm175, %v6087, %v6254
    %v6616 = vsel %vm175, %v6088, %v6256
    %v6617 = vsel %vm175, %v6089, %v6258
    %v6618 = vsel %vm175, %v6090, %v6260
    %v6619 = vsel %vm175, %v6091, %v6262
    %v6620 = vsel %vm175, %v6092, %v6264
    %v6621 = vsel %vm175, %v6093, %v6266
    %v6622 = vsel %vm175, %v6094, %v6268
    %v6623 = vsel %vm175, %v6095, %v6270
    %v6624 = vsel %vm175, %v6096, %v6272
    %v6625 = vsel %vm1257, %v6609, %v6306
    %v6626 = vsel %vm1257, %v6610, %v6308
    %v6627 = vsel %vm1257, %v6611, %v6310
    %v6628 = vsel %vm1257, %v6612, %v6312
    %v6629 = vsel %vm1257, %v6613, %v6314
    %v6630 = vsel %vm1257, %v6614, %v6316
    %v6631 = vsel %vm1257, %v6615, %v6318
    %v6632 = vsel %vm1257, %v6616, %v6320
    %v6633 = vsel %vm1257, %v6617, %v6322
    %v6634 = vsel %vm1257, %v6618, %v6324
    %v6635 = vsel %vm1257, %v6619, %v6326
    %v6636 = vsel %vm1257, %v6620, %v6328
    %v6637 = vsel %vm1257, %v6621, %v6330
    %v6638 = vsel %vm1257, %v6622, %v6332
    %v6639 = vsel %vm1257, %v6623, %v6334
    %v6640 = vsel %vm1257, %v6624, %v6336
    %v6641 = vsel %vm1274, %v6625, %v6370
    %v6642 = vsel %vm1274, %v6626, %v6372
    %v6643 = vsel %vm1274, %v6627, %v6374
    %v6644 = vsel %vm1274, %v6628, %v6376
    %v6645 = vsel %vm1274, %v6629, %v6378
    %v6646 = vsel %vm1274, %v6630, %v6380
    %v6647 = vsel %vm1274, %v6631, %v6382
    %v6648 = vsel %vm1274, %v6632, %v6384
    %v6649 = vsel %vm1274, %v6633, %v6386
    %v6650 = vsel %vm1274, %v6634, %v6388
    %v6651 = vsel %vm1274, %v6635, %v6390
    %v6652 = vsel %vm1274, %v6636, %v6392
    %v6653 = vsel %vm1274, %v6637, %v6394
    %v6654 = vsel %vm1274, %v6638, %v6396
    %v6655 = vsel %vm1274, %v6639, %v6398
    %v6656 = vsel %vm1274, %v6640, %v6400
    %v6657 = vsel %vm175, %v6145, %v6434
    %v6658 = vsel %vm175, %v6146, %v6436
    %v6659 = vsel %vm175, %v6147, %v6438
    %v6660 = vsel %vm175, %v6148, %v6440
    %v6661 = vsel %vm175, %v6149, %v6442
    %v6662 = vsel %vm175, %v6150, %v6444
    %v6663 = vsel %vm175, %v6151, %v6446
    %v6664 = vsel %vm175, %v6152, %v6448
    %v6665 = vsel %vm175, %v6153, %v6450
    %v6666 = vsel %vm175, %v6154, %v6452
    %v6667 = vsel %vm175, %v6155, %v6454
    %v6668 = vsel %vm175, %v6156, %v6456
    %v6669 = vsel %vm175, %v6157, %v6458
    %v6670 = vsel %vm175, %v6158, %v6460
    %v6671 = vsel %vm175, %v6159, %v6462
    %v6672 = vsel %vm175, %v6160, %v6464
    %v6673 = vsel %vm1257, %v6657, %v6498
    %v6674 = vsel %vm1257, %v6658, %v6500
    %v6675 = vsel %vm1257, %v6659, %v6502
    %v6676 = vsel %vm1257, %v6660, %v6504
    %v6677 = vsel %vm1257, %v6661, %v6506
    %v6678 = vsel %vm1257, %v6662, %v6508
    %v6679 = vsel %vm1257, %v6663, %v6510
    %v6680 = vsel %vm1257, %v6664, %v6512
    %v6681 = vsel %vm1257, %v6665, %v6514
    %v6682 = vsel %vm1257, %v6666, %v6516
    %v6683 = vsel %vm1257, %v6667, %v6518
    %v6684 = vsel %vm1257, %v6668, %v6520
    %v6685 = vsel %vm1257, %v6669, %v6522
    %v6686 = vsel %vm1257, %v6670, %v6524
    %v6687 = vsel %vm1257, %v6671, %v6526
    %v6688 = vsel %vm1257, %v6672, %v6528
    %v6689 = vsel %vm1274, %v6673, %v6562
    %v6690 = vsel %vm1274, %v6674, %v6564
    %v6691 = vsel %vm1274, %v6675, %v6566
    %v6692 = vsel %vm1274, %v6676, %v6568
    %v6693 = vsel %vm1274, %v6677, %v6570
    %v6694 = vsel %vm1274, %v6678, %v6572
    %v6695 = vsel %vm1274, %v6679, %v6574
    %v6696 = vsel %vm1274, %v6680, %v6576
    %v6697 = vsel %vm1274, %v6681, %v6578
    %v6698 = vsel %vm1274, %v6682, %v6580
    %v6699 = vsel %vm1274, %v6683, %v6582
    %v6700 = vsel %vm1274, %v6684, %v6584
    %v6701 = vsel %vm1274, %v6685, %v6586
    %v6702 = vsel %vm1274, %v6686, %v6588
    %v6703 = vsel %vm1274, %v6687, %v6590
    %v6704 = vsel %vm1274, %v6688, %v6592
    %v6705 = vld [vmem:[#allocation14] sm:$0xff]
    %v6706 = vld [vmem:[#allocation14 + $0x8] sm:$0xff]
    %v6707 = vld [vmem:[#allocation14 + $0x10] sm:$0xff]
    %v6708 = vld [vmem:[#allocation14 + $0x18] sm:$0xff]
    %v6709 = vld [vmem:[#allocation14 + $0x20] sm:$0xff]
    %v6710 = vld [vmem:[#allocation14 + $0x28] sm:$0xff]
    %v6711 = vld [vmem:[#allocation14 + $0x30] sm:$0xff]
    %v6712 = vld [vmem:[#allocation14 + $0x38] sm:$0xff]
    %v6713 = vld [vmem:[#allocation14 + $0x40] sm:$0xff]
    %v6714 = vld [vmem:[#allocation14 + $0x48] sm:$0xff]
    %v6715 = vld [vmem:[#allocation14 + $0x50] sm:$0xff]
    %v6716 = vld [vmem:[#allocation14 + $0x58] sm:$0xff]
    %v6717 = vld [vmem:[#allocation14 + $0x60] sm:$0xff]
    %v6718 = vld [vmem:[#allocation14 + $0x68] sm:$0xff]
    %v6719 = vld [vmem:[#allocation14 + $0x70] sm:$0xff]
    %v6720 = vld [vmem:[#allocation14 + $0x78] sm:$0xff]
    %v6721 = vld [vmem:[#allocation14 + $0x80] sm:$0xff]
    %v6722 = vld [vmem:[#allocation14 + $0x88] sm:$0xff]
    %v6723 = vld [vmem:[#allocation14 + $0x90] sm:$0xff]
    %v6724 = vld [vmem:[#allocation14 + $0x98] sm:$0xff]
    %v6725 = vld [vmem:[#allocation14 + $0xa0] sm:$0xff]
    %v6726 = vld [vmem:[#allocation14 + $0xa8] sm:$0xff]
    %v6727 = vld [vmem:[#allocation14 + $0xb0] sm:$0xff]
    %v6728 = vld [vmem:[#allocation14 + $0xb8] sm:$0xff]
    %v6729 = vld [vmem:[#allocation14 + $0xc0] sm:$0xff]
    %v6730 = vld [vmem:[#allocation14 + $0xc8] sm:$0xff]
    %v6731 = vld [vmem:[#allocation14 + $0xd0] sm:$0xff]
    %v6732 = vld [vmem:[#allocation14 + $0xd8] sm:$0xff]
    %v6733 = vld [vmem:[#allocation14 + $0xe0] sm:$0xff]
    %v6734 = vld [vmem:[#allocation14 + $0xe8] sm:$0xff]
    %v6735 = vld [vmem:[#allocation14 + $0xf0] sm:$0xff]
    %v6736 = vld [vmem:[#allocation14 + $0xf8] sm:$0xff]
    %v6737 = vld [vmem:[#allocation14 + $0x100] sm:$0xff]
    %v6738 = vld [vmem:[#allocation14 + $0x108] sm:$0xff]
    %v6739 = vld [vmem:[#allocation14 + $0x110] sm:$0xff]
    %v6740 = vld [vmem:[#allocation14 + $0x118] sm:$0xff]
    %v6741 = vld [vmem:[%s25] sm:$0x1]
    %v6743 = vlaneseq
    %v6744 = vshrl.u32 %v6743, 7
    %v6745 = vsub.s32 0, %v6744
    %v6746 = vrot.slane %v6741, %v6745
    %v6749 = vsel %vm175, %v6209, 0
    %v6752 = vsel %vm175, %v6210, 0
    %v6755 = vsel %vm175, %v6211, 0
    %v6758 = vsel %vm175, %v6212, 0
    %v6761 = vsel %vm175, %v6213, 0
    %v6764 = vsel %vm175, %v6214, 0
    %v6767 = vsel %vm175, %v6215, 0
    %v6770 = vsel %vm175, %v6216, 0
    %v6773 = vsel %vm175, %v6217, 0
    %v6776 = vsel %vm175, %v6218, 0
    %v6779 = vsel %vm175, %v6219, 0
    %v6782 = vsel %vm175, %v6220, 0
    %v6785 = vsel %vm175, %v6221, 0
    %v6788 = vsel %vm175, %v6222, 0
    %v6791 = vsel %vm175, %v6223, 0
    %v6794 = vsel %vm175, %v6224, 0
    %6796 = vmatprep.subr.mxu0 0.0
    %6797 = vmatpush1.msra.mxu0 %v6705
    %6798 = vmatprep.subr.mxu0 0.0
    %6799 = vmatpush1.msra.mxu0 %v6706
    %6800 = vmatprep.subr.mxu0 0.0
    %6801 = vmatpush1.msra.mxu0 %v6707
    %6802 = vmatprep.subr.mxu0 0.0
    %6803 = vmatpush1.msra.mxu0 %v6708
    %6804 = vmatprep.subr.mxu0 0.0
    %6805 = vmatpush1.msra.mxu0 %v6709
    %6806 = vmatprep.subr.mxu0 0.0
    %6807 = vmatpush1.msra.mxu0 %v6710
    %6808 = vmatprep.subr.mxu0 0.0
    %6809 = vmatpush1.msra.mxu0 %v6711
    %6810 = vmatprep.subr.mxu0 0.0
    %6811 = vmatpush1.msra.mxu0 %v6712
    %6812 = vmatprep.subr.mxu0 0.0
    %6813 = vmatpush1.msra.mxu0 %v6713
    %6814 = vmatprep.subr.mxu0 0.0
    %6815 = vmatpush1.msra.mxu0 %v6714
    %6816 = vmatprep.subr.mxu0 0.0
    %6817 = vmatpush1.msra.mxu0 %v6715
    %6818 = vmatprep.subr.mxu0 0.0
    %6819 = vmatpush1.msra.mxu0 %v6716
    %6820 = vmatprep.subr.mxu0 0.0
    %6821 = vmatpush1.msra.mxu0 %v6717
    %6822 = vmatprep.subr.mxu0 0.0
    %6823 = vmatpush1.msra.mxu0 %v6718
    %6824 = vmatprep.subr.mxu0 0.0
    %6825 = vmatpush1.msra.mxu0 %v6719
    %6826 = vmatprep.subr.mxu0 0.0
    %6827 = vmatpush1.msra.mxu0 %v6720
    %6828 = vmatprep.subr.mxu0 0.0
    %6829 = vmatpush1.msra.mxu0 %v6721
    %6830 = vmatprep.subr.mxu0 0.0
    %6831 = vmatpush1.msra.mxu0 %v6722
    %6832 = vmatprep.subr.mxu0 0.0
    %6833 = vmatpush1.msra.mxu0 %v6723
    %6834 = vmatprep.subr.mxu0 0.0
    %6835 = vmatpush1.msra.mxu0 %v6724
    %6836 = vmatprep.subr.mxu0 0.0
    %6837 = vmatpush1.msra.mxu0 %v6725
    %6838 = vmatprep.subr.mxu0 0.0
    %6839 = vmatpush1.msra.mxu0 %v6726
    %6840 = vmatprep.subr.mxu0 0.0
    %6841 = vmatpush1.msra.mxu0 %v6727
    %6842 = vmatprep.subr.mxu0 0.0
    %6843 = vmatpush1.msra.mxu0 %v6728
    %6844 = vmatprep.subr.mxu0 0.0
    %6845 = vmatpush1.msra.mxu0 %v6729
    %6846 = vmatprep.subr.mxu0 0.0
    %6847 = vmatpush1.msra.mxu0 %v6730
    %6848 = vmatprep.subr.mxu0 0.0
    %6849 = vmatpush1.msra.mxu0 %v6731
    %6850 = vmatprep.subr.mxu0 0.0
    %6851 = vmatpush1.msra.mxu0 %v6732
    %6852 = vmatprep.subr.mxu0 0.0
    %6853 = vmatpush1.msra.mxu0 %v6733
    %6854 = vmatprep.subr.mxu0 0.0
    %6855 = vmatpush1.msra.mxu0 %v6734
    %6856 = vmatprep.subr.mxu0 0.0
    %6857 = vmatpush1.msra.mxu0 %v6735
    %6858 = vmatprep.subr.mxu0 0.0
    %6859 = vmatpush1.msra.mxu0 %v6736
    %6860 = vmatprep.mubr.f32.mxu0 %v6689
    %6861 = vmatmul.mubr.f32.gmra.mrb[0].mxu0 %v6641
    %v6862 = vpop.f32.mrb[0].mxu0
    %v6863 = vadd.f32 %v6746, %v6862
    %v6864 = vpop.f32.mrb[0].mxu0
    %6865 = vmatprep.mubr.f32.mxu0 %v6690
    %6866 = vmatmul.mubr.f32.gmra.mrb[0].mxu0 %v6642
    %v6867 = vpop.f32.mrb[0].mxu0
    %v6868 = vadd.f32 %v6746, %v6867
    %v6869 = vpop.f32.mrb[0].mxu0
    %6870 = vmatprep.mubr.f32.mxu0 %v6691
    %6871 = vmatmul.mubr.f32.gmra.mrb[0].mxu0 %v6643
    %v6872 = vpop.f32.mrb[0].mxu0
    %v6873 = vadd.f32 %v6746, %v6872
    %v6874 = vpop.f32.mrb[0].mxu0
    %6875 = vmatprep.mubr.f32.mxu0 %v6692
    %6876 = vmatmul.mubr.f32.gmra.mrb[0].mxu0 %v6644
    %v6877 = vpop.f32.mrb[0].mxu0
    %v6878 = vadd.f32 %v6746, %v6877
    %v6879 = vpop.f32.mrb[0].mxu0
    %6880 = vmatprep.mubr.f32.mxu0 %v6693
    %6881 = vmatmul.mubr.f32.gmra.mrb[0].mxu0 %v6645
    %v6882 = vpop.f32.mrb[0].mxu0
    %v6883 = vadd.f32 %v6746, %v6882
    %v6884 = vpop.f32.mrb[0].mxu0
    %6885 = vmatprep.mubr.f32.mxu0 %v6694
    %6886 = vmatmul.mubr.f32.gmra.mrb[0].mxu0 %v6646
    %v6887 = vpop.f32.mrb[0].mxu0
    %v6888 = vadd.f32 %v6746, %v6887
    %v6889 = vpop.f32.mrb[0].mxu0
    %6890 = vmatprep.mubr.f32.mxu0 %v6695
    %6891 = vmatmul.mubr.f32.gmra.mrb[0].mxu0 %v6647
    %v6892 = vpop.f32.mrb[0].mxu0
    %v6893 = vadd.f32 %v6746, %v6892
    %v6894 = vpop.f32.mrb[0].mxu0
    %6895 = vmatprep.mubr.f32.mxu0 %v6696
    %6896 = vmatmul.mubr.f32.gmra.mrb[0].mxu0 %v6648
    %v6897 = vpop.f32.mrb[0].mxu0
    %v6898 = vadd.f32 %v6746, %v6897
    %v6899 = vpop.f32.mrb[0].mxu0
    %6900 = vmatprep.mubr.f32.mxu0 %v6697
    %6901 = vmatmul.mubr.f32.gmra.mrb[0].mxu0 %v6649
    %v6902 = vpop.f32.mrb[0].mxu0
    %v6903 = vadd.f32 %v6746, %v6902
    %v6904 = vpop.f32.mrb[0].mxu0
    %6905 = vmatprep.mubr.f32.mxu0 %v6698
    %6906 = vmatmul.mubr.f32.gmra.mrb[0].mxu0 %v6650
    %v6907 = vpop.f32.mrb[0].mxu0
    %v6908 = vadd.f32 %v6746, %v6907
    %v6909 = vpop.f32.mrb[0].mxu0
    %6910 = vmatprep.mubr.f32.mxu0 %v6699
    %6911 = vmatmul.mubr.f32.gmra.mrb[0].mxu0 %v6651
    %v6912 = vpop.f32.mrb[0].mxu0
    %v6913 = vadd.f32 %v6746, %v6912
    %v6914 = vpop.f32.mrb[0].mxu0
    %6915 = vmatprep.mubr.f32.mxu0 %v6700
    %6916 = vmatmul.mubr.f32.gmra.mrb[0].mxu0 %v6652
    %v6917 = vpop.f32.mrb[0].mxu0
    %v6918 = vadd.f32 %v6746, %v6917
    %v6919 = vpop.f32.mrb[0].mxu0
    %6920 = vmatprep.mubr.f32.mxu0 %v6701
    %6921 = vmatmul.mubr.f32.gmra.mrb[0].mxu0 %v6653
    %v6922 = vpop.f32.mrb[0].mxu0
    %v6923 = vadd.f32 %v6746, %v6922
    %v6924 = vpop.f32.mrb[0].mxu0
    %6925 = vmatprep.mubr.f32.mxu0 %v6702
    %6926 = vmatmul.mubr.f32.gmra.mrb[0].mxu0 %v6654
    %v6927 = vpop.f32.mrb[0].mxu0
    %v6928 = vadd.f32 %v6746, %v6927
    %v6929 = vpop.f32.mrb[0].mxu0
    %6930 = vmatprep.mubr.f32.mxu0 %v6703
    %6931 = vmatmul.mubr.f32.gmra.mrb[0].mxu0 %v6655
    %v6932 = vpop.f32.mrb[0].mxu0
    %v6933 = vadd.f32 %v6746, %v6932
    %v6934 = vpop.f32.mrb[0].mxu0
    %6935 = vmatprep.mubr.f32.mxu0 %v6704
    %6936 = vmatmul.mubr.f32.gmra.mrb[0].mxu0 %v6656
    %v6937 = vpop.f32.mrb[0].mxu0
    %v6938 = vadd.f32 %v6746, %v6937
    %v6939 = vpop.f32.mrb[0].mxu0
    %6940 = vdwg.mxu0
    %6941 = vmatprep.subr.mxu0 0.0
    %6942 = vmatpush1.msra.mxu0 %v6737
    %6943 = vmatprep.subr.mxu0 0.0
    %6944 = vmatpush1.msra.mxu0 %v6738
    %6945 = vmatprep.subr.mxu0 0.0
    %6946 = vmatpush1.msra.mxu0 %v6739
    %6947 = vmatprep.subr.mxu0 0.0
    %6948 = vmatpush1.msra.mxu0 %v6740
    %6949 = vmatprep.subr.mxu0 0.0
    %6950 = vmatpush1.msra.mxu0 0.0
    %6951 = vmatprep.subr.mxu0 0.0
    %6952 = vmatpush1.msra.mxu0 0.0
    %6953 = vmatprep.subr.mxu0 0.0
    %6954 = vmatpush1.msra.mxu0 0.0
    %6955 = vmatprep.subr.mxu0 0.0
    %6956 = vmatpush1.msra.mxu0 0.0
    %6957 = vmatprep.subr.mxu0 0.0
    %6958 = vmatpush1.msra.mxu0 0.0
    %6959 = vmatprep.subr.mxu0 0.0
    %6960 = vmatpush1.msra.mxu0 0.0
    %6961 = vmatprep.subr.mxu0 0.0
    %6962 = vmatpush1.msra.mxu0 0.0
    %6963 = vmatprep.subr.mxu0 0.0
    %6964 = vmatpush1.msra.mxu0 0.0
    %6965 = vmatprep.subr.mxu0 0.0
    %6966 = vmatpush1.msra.mxu0 0.0
    %6967 = vmatprep.subr.mxu0 0.0
    %6968 = vmatpush1.msra.mxu0 0.0
    %6969 = vmatprep.subr.mxu0 0.0
    %6970 = vmatpush1.msra.mxu0 0.0
    %6971 = vmatprep.subr.mxu0 0.0
    %6972 = vmatpush1.msra.mxu0 0.0
    %6973 = vmatprep.subr.mxu0 0.0
    %6974 = vmatpush1.msra.mxu0 0.0
    %6975 = vmatprep.subr.mxu0 0.0
    %6976 = vmatpush1.msra.mxu0 0.0
    %6977 = vmatprep.subr.mxu0 0.0
    %6978 = vmatpush1.msra.mxu0 0.0
    %6979 = vmatprep.subr.mxu0 0.0
    %6980 = vmatpush1.msra.mxu0 0.0
    %6981 = vmatprep.subr.mxu0 0.0
    %6982 = vmatpush1.msra.mxu0 0.0
    %6983 = vmatprep.subr.mxu0 0.0
    %6984 = vmatpush1.msra.mxu0 0.0
    %6985 = vmatprep.subr.mxu0 0.0
    %6986 = vmatpush1.msra.mxu0 0.0
    %6987 = vmatprep.subr.mxu0 0.0
    %6988 = vmatpush1.msra.mxu0 0.0
    %6989 = vmatprep.subr.mxu0 0.0
    %6990 = vmatpush1.msra.mxu0 0.0
    %6991 = vmatprep.subr.mxu0 0.0
    %6992 = vmatpush1.msra.mxu0 0.0
    %6993 = vmatprep.subr.mxu0 0.0
    %6994 = vmatpush1.msra.mxu0 0.0
    %6995 = vmatprep.subr.mxu0 0.0
    %6996 = vmatpush1.msra.mxu0 0.0
    %6997 = vmatprep.subr.mxu0 0.0
    %6998 = vmatpush1.msra.mxu0 0.0
    %6999 = vmatprep.subr.mxu0 0.0
    %7000 = vmatpush1.msra.mxu0 0.0
    %7001 = vmatprep.subr.mxu0 0.0
    %7002 = vmatpush1.msra.mxu0 0.0
    %7003 = vmatprep.subr.mxu0 0.0
    %7004 = vmatpush1.msra.mxu0 0.0
    %7005 = vmatprep.mubr.f32.mxu0 0.0
    %7006 = vmatmul.mubr.f32.gmra.mrb[0].mxu0 %v6749
    %v7007 = vpop.f32.mrb[0].mxu0
    %v7008 = vadd.f32 %v6863, %v7007
    %v7009 = vpop.f32.mrb[0].mxu0
    %7010 = vmatprep.mubr.f32.mxu0 0.0
    %7011 = vmatmul.mubr.f32.gmra.mrb[0].mxu0 %v6752
    %v7012 = vpop.f32.mrb[0].mxu0
    %v7013 = vadd.f32 %v6868, %v7012
    %v7014 = vpop.f32.mrb[0].mxu0
    %7015 = vmatprep.mubr.f32.mxu0 0.0
    %7016 = vmatmul.mubr.f32.gmra.mrb[0].mxu0 %v6755
    %v7017 = vpop.f32.mrb[0].mxu0
    %v7018 = vadd.f32 %v6873, %v7017
    %v7019 = vpop.f32.mrb[0].mxu0
    %7020 = vmatprep.mubr.f32.mxu0 0.0
    %7021 = vmatmul.mubr.f32.gmra.mrb[0].mxu0 %v6758
    %v7022 = vpop.f32.mrb[0].mxu0
    %v7023 = vadd.f32 %v6878, %v7022
    %v7024 = vpop.f32.mrb[0].mxu0
    %7025 = vmatprep.mubr.f32.mxu0 0.0
    %7026 = vmatmul.mubr.f32.gmra.mrb[0].mxu0 %v6761
    %v7027 = vpop.f32.mrb[0].mxu0
    %v7028 = vadd.f32 %v6883, %v7027
    %v7029 = vpop.f32.mrb[0].mxu0
    %7030 = vmatprep.mubr.f32.mxu0 0.0
    %7031 = vmatmul.mubr.f32.gmra.mrb[0].mxu0 %v6764
    %v7032 = vpop.f32.mrb[0].mxu0
    %v7033 = vadd.f32 %v6888, %v7032
    %v7034 = vpop.f32.mrb[0].mxu0
    %7035 = vmatprep.mubr.f32.mxu0 0.0
    %7036 = vmatmul.mubr.f32.gmra.mrb[0].mxu0 %v6767
    %v7037 = vpop.f32.mrb[0].mxu0
    %v7038 = vadd.f32 %v6893, %v7037
    %v7039 = vpop.f32.mrb[0].mxu0
    %7040 = vmatprep.mubr.f32.mxu0 0.0
    %7041 = vmatmul.mubr.f32.gmra.mrb[0].mxu0 %v6770
    %v7042 = vpop.f32.mrb[0].mxu0
    %v7043 = vadd.f32 %v6898, %v7042
    %v7044 = vpop.f32.mrb[0].mxu0
    %7045 = vmatprep.mubr.f32.mxu0 0.0
    %7046 = vmatmul.mubr.f32.gmra.mrb[0].mxu0 %v6773
    %v7047 = vpop.f32.mrb[0].mxu0
    %v7048 = vadd.f32 %v6903, %v7047
    %v7049 = vpop.f32.mrb[0].mxu0
    %7050 = vmatprep.mubr.f32.mxu0 0.0
    %7051 = vmatmul.mubr.f32.gmra.mrb[0].mxu0 %v6776
    %v7052 = vpop.f32.mrb[0].mxu0
    %v7053 = vadd.f32 %v6908, %v7052
    %v7054 = vpop.f32.mrb[0].mxu0
    %7055 = vmatprep.mubr.f32.mxu0 0.0
    %7056 = vmatmul.mubr.f32.gmra.mrb[0].mxu0 %v6779
    %v7057 = vpop.f32.mrb[0].mxu0
    %v7058 = vadd.f32 %v6913, %v7057
    %v7059 = vpop.f32.mrb[0].mxu0
    %7060 = vmatprep.mubr.f32.mxu0 0.0
    %7061 = vmatmul.mubr.f32.gmra.mrb[0].mxu0 %v6782
    %v7062 = vpop.f32.mrb[0].mxu0
    %v7063 = vadd.f32 %v6918, %v7062
    %v7064 = vpop.f32.mrb[0].mxu0
    %7065 = vmatprep.mubr.f32.mxu0 0.0
    %7066 = vmatmul.mubr.f32.gmra.mrb[0].mxu0 %v6785
    %v7067 = vpop.f32.mrb[0].mxu0
    %v7068 = vadd.f32 %v6923, %v7067
    %v7069 = vpop.f32.mrb[0].mxu0
    %7070 = vmatprep.mubr.f32.mxu0 0.0
    %7071 = vmatmul.mubr.f32.gmra.mrb[0].mxu0 %v6788
    %v7072 = vpop.f32.mrb[0].mxu0
    %v7073 = vadd.f32 %v6928, %v7072
    %v7074 = vpop.f32.mrb[0].mxu0
    %7075 = vmatprep.mubr.f32.mxu0 0.0
    %7076 = vmatmul.mubr.f32.gmra.mrb[0].mxu0 %v6791
    %v7077 = vpop.f32.mrb[0].mxu0
    %v7078 = vadd.f32 %v6933, %v7077
    %v7079 = vpop.f32.mrb[0].mxu0
    %7080 = vmatprep.mubr.f32.mxu0 0.0
    %7081 = vmatmul.mubr.f32.gmra.mrb[0].mxu0 %v6794
    %v7082 = vpop.f32.mrb[0].mxu0
    %v7083 = vadd.f32 %v6938, %v7082
    %v7084 = vpop.f32.mrb[0].mxu0
    %7085 = vdwg.mxu0
    %v7086 = vadd.f32 %v7008, %v4383
    %v7087 = vadd.f32 %v7013, %v4384
    %v7088 = vadd.f32 %v7018, %v4385
    %v7089 = vadd.f32 %v7023, %v4386
    %v7090 = vadd.f32 %v7028, %v4387
    %v7091 = vadd.f32 %v7033, %v4388
    %v7092 = vadd.f32 %v7038, %v4389
    %v7093 = vadd.f32 %v7043, %v4390
    %v7094 = vadd.f32 %v7048, %v4391
    %v7095 = vadd.f32 %v7053, %v4392
    %v7096 = vadd.f32 %v7058, %v4393
    %v7097 = vadd.f32 %v7063, %v4394
    %v7098 = vadd.f32 %v7068, %v4395
    %v7099 = vadd.f32 %v7073, %v4396
    %v7100 = vadd.f32 %v7078, %v4397
    %v7101 = vadd.f32 %v7083, %v4398
    %7102 = vst.msk [vmem:[#allocation15] sm:$0xff] %vm175, %v7086
    %7103 = vst.msk [vmem:[#allocation15 + $0x8] sm:$0xff] %vm175, %v7087
    %7104 = vst.msk [vmem:[#allocation15 + $0x10] sm:$0xff] %vm175, %v7088
    %7105 = vst.msk [vmem:[#allocation15 + $0x18] sm:$0xff] %vm175, %v7089
    %7106 = vst.msk [vmem:[#allocation15 + $0x20] sm:$0xff] %vm175, %v7090
    %7107 = vst.msk [vmem:[#allocation15 + $0x28] sm:$0xff] %vm175, %v7091
    %7108 = vst.msk [vmem:[#allocation15 + $0x30] sm:$0xff] %vm175, %v7092
    %7109 = vst.msk [vmem:[#allocation15 + $0x38] sm:$0xff] %vm175, %v7093
    %7110 = vst.msk [vmem:[#allocation15 + $0x40] sm:$0xff] %vm175, %v7094
    %7111 = vst.msk [vmem:[#allocation15 + $0x48] sm:$0xff] %vm175, %v7095
    %7112 = vst.msk [vmem:[#allocation15 + $0x50] sm:$0xff] %vm175, %v7096
    %7113 = vst.msk [vmem:[#allocation15 + $0x58] sm:$0xff] %vm175, %v7097
    %7114 = vst.msk [vmem:[#allocation15 + $0x60] sm:$0xff] %vm175, %v7098
    %7115 = vst.msk [vmem:[#allocation15 + $0x68] sm:$0xff] %vm175, %v7099
    %7116 = vst.msk [vmem:[#allocation15 + $0x70] sm:$0xff] %vm175, %v7100
    %7117 = vst.msk [vmem:[#allocation15 + $0x78] sm:$0xff] %vm175, %v7101
    // Predicated region
    $region134: #{middle_block.1} parent=1 // pred_check
      _
    $region135: #{middle_block.1} parent=1 // pred_check_branch
      %7119 = sbr.rel (0) target = $region137
    $region136: #{middle_block.1} parent=1 // pred_region
      %s7121 = ssub.s32 2048, 2048
      %7122 = vsyncadd [#allocation5], %s7121
      %s7123 = sshll.u32 [#allocation15], 4
      %s7124 = int_to_ptr.vmem [resolvable:$true] %s7123
      %7129 = dma.vmem_to_hbm [thread:$0]  %s7124, 2048, %s26, [#allocation5], 128, 128, 8
    $region137: #{middle_block.1} parent=1 // pred_fallthru
      _
    // Predicated region
    $region138: #{middle_block.1} parent=1 // pred_check
      _
    $region139: #{middle_block.1} parent=1 // pred_check_branch
      %7131 = sbr.rel (0) target = $region141
    $region140: #{middle_block.1} parent=1 // pred_region
      %7132 = dma.done [#allocation5], 2048
    $region141: #{middle_block.1} parent=1 // pred_fallthru
      _
    %7133 = vsyncpa [#allocation4], 1
    %7134 = vsyncpa [#allocation7], 1
    %7135 = vsyncpa [#allocation10], 1
    %7136 = vsyncpa [#allocation13], 1
    %7137 = vsyncpa [#allocation5], 1

</llo_original>
